<compile_context>
chip_gen: v5e
topology: v5e:2x2
jax: 0.10.0
libtpu: 0.0.40
codegen_flags: <defaults>
</compile_context>

<pallas_src>
import functools
import math

import numpy as np
import jax
import jax.numpy as jnp
from jax import lax
from jax.experimental import pallas as pl
from jax.experimental.pallas import tpu as pltpu

INPUT_SIZE = 35
HIDDEN = 64
NUM_LAYERS = 9
NUM_CLASSES = 4
FC_PAD = 128            # lane-dense padded classifier width
MAX_TB = 512            # soft cap on rows per batch tile (vreg-pressure bound)
UNROLL_SEQ = 16         # fully unroll the time loop when seq <= this


def _round_up(x, m):
    return ((x + m - 1) // m) * m


def _vmem_capacity_bytes():
    """Per-core VMEM capacity, with conservative fallbacks."""
    try:
        info = pltpu.get_tpu_info()
        v = int(getattr(info, "vmem_capacity_bytes", 0))
        if v > 0:
            return v
    except Exception:
        pass
    try:
        kind = jax.devices()[0].device_kind.lower()
    except Exception:
        kind = ""
    if "v7" in kind:
        return 64 << 20
    if "v5" in kind or "v6" in kind:
        return 128 << 20
    return 64 << 20     # conservative default


def _num_tensorcores():
    try:
        kind = jax.devices()[0].device_kind.lower()
    except Exception:
        return 1
    return 2 if "v7" in kind else 1


def _weight_vmem_bytes():
    # All weight blocks are double-buffered by the pipeline.
    return 2 * (2 * NUM_LAYERS * HIDDEN * HIDDEN * 2   # w_ih + w_hh (bf16)
                + NUM_LAYERS * HIDDEN * 4              # combined bias (f32)
                + HIDDEN * FC_PAD * 2                  # fc weight (bf16)
                + FC_PAD * 4)                          # fc bias (f32)


def _select_tiling(batch, seq):
    """Pick (tb, num_tiles) from the VMEM budget and core count."""
    phys = max(_vmem_capacity_bytes(), 48 << 20)
    budget = phys - (16 << 20)                         # headroom for compiler scratch
    # Per padded batch row: x bf16 (double-buffered) + seq_buf bf16 + proj_buf f32
    # + projection temporary f32 + operand-copy slack + out f32 (double-buffered).
    per_row = seq * HIDDEN * (2 * 2 + 2 + 4 + 4 + 2) + 2 * FC_PAD * 4
    avail = budget - _weight_vmem_bytes() - (2 << 20)
    max_tb = max(32, (avail // max(per_row, 1)) // 32 * 32)
    max_tb = min(max_tb, MAX_TB)

    n_cores = _num_tensorcores()
    # One tile per TensorCore (v7x megacore) only if each tile gets real rows.
    min_tiles = n_cores if batch >= 32 * n_cores else 1

    num_tiles = min_tiles
    while True:
        tb = _round_up(max(-(-batch // num_tiles), 32), 32)
        if tb <= max_tb:
            break
        num_tiles += 1
    return tb, num_tiles, phys


def _vmem_limit_bytes(tb, seq, phys):
    needed = (2 * seq * tb * HIDDEN * 2      # x blocks (bf16, double-buffered)
              + seq * tb * HIDDEN * 2        # seq_buf (bf16)
              + seq * tb * HIDDEN * 4        # proj_buf (f32)
              + seq * tb * HIDDEN * 4        # projection temporary (f32)
              + 2 * tb * FC_PAD * 4          # out blocks (f32, double-buffered)
              + _weight_vmem_bytes())
    return int(min(phys - (2 << 20), max(needed + (8 << 20), 32 << 20)))


def rnn_classifier_kernel(x_ref, w_ih_ref, w_hh_ref, b_ref, w_fc_ref, b_fc_ref,
                          out_ref, seq_buf, proj_buf, *, num_sub):
    """One batch tile of the full forward pass.

    x_ref    : (seq, TB, HIDDEN) bf16   time-major, feature-padded input tile
    w_ih_ref : (NUM_LAYERS, HIDDEN, HIDDEN) bf16  pre-transposed, layer 0 zero-padded
    w_hh_ref : (NUM_LAYERS, HIDDEN, HIDDEN) bf16  pre-transposed
    b_ref    : (NUM_LAYERS, 1, HIDDEN) f32        b_ih + b_hh combined
    w_fc_ref : (HIDDEN, FC_PAD) bf16              pre-transposed, zero-padded 4 -> 128
    b_fc_ref : (1, FC_PAD) f32
    out_ref  : (TB, FC_PAD) f32
    seq_buf  : VMEM (seq*TB, HIDDEN) bf16  current layer's output sequence
    proj_buf : VMEM (seq*TB, HIDDEN) f32   hoisted input->hidden projection (+ bias)
    num_sub  : number of independent batch sub-tiles interleaved per time step
    """
    seq, tb, hid = x_ref.shape
    half = tb // num_sub

    for l in range(NUM_LAYERS):                       # static unroll: 9 layers
        w_ih = w_ih_ref[l]                            # (H, H) bf16, static index
        w_hh = w_hh_ref[l]                            # (H, H) bf16
        b = b_ref[l]                                  # (1, H) f32

        # (1) Hoisted whole-sequence input->hidden projection: one large-M bf16
        #     matmul per layer instead of `seq` tiny matmuls on the serial path.
        if l == 0:
            layer_in = x_ref[...].reshape(seq * tb, hid)   # bf16, contiguous merge
        else:
            layer_in = seq_buf[...]                        # bf16
        proj_buf[...] = (jnp.dot(layer_in, w_ih, preferred_element_type=jnp.float32)
                         + b)

        # (2) Serial recurrence: num_sub independent sub-recurrences per step so
        #     tanh/add of one half hides under the other half's MXU matmul.
        def step(offs, hs, w_hh=w_hh):
            new_hs = []
            for s in range(num_sub):
                z = (proj_buf[pl.ds(offs[s], half), :]
                     + jnp.dot(hs[s], w_hh, preferred_element_type=jnp.float32))
                new_hs.append(jnp.tanh(z).astype(jnp.bfloat16))
            for s in range(num_sub):
                seq_buf[pl.ds(offs[s], half), :] = new_hs[s]
            return tuple(new_hs)

        hs0 = tuple(jnp.zeros((half, hid), jnp.bfloat16) for _ in range(num_sub))
        if seq <= UNROLL_SEQ:
            hs = hs0
            for t in range(seq):                       # fully static unroll
                hs = step(tuple(t * tb + s * half for s in range(num_sub)), hs)
        else:
            def body(t, hs):
                offs = tuple(pl.multiple_of(t * tb + s * half, half)
                             for s in range(num_sub))
                return step(offs, hs)
            lax.fori_loop(0, seq, body, hs0, unroll=8)

    # fc(out[:, -1, :]) on the final hidden state, lane-dense padded output block.
    last_h = seq_buf[pl.ds((seq - 1) * tb, tb), :]     # bf16 (TB, H)
    out_ref[...] = (jnp.dot(last_h, w_fc_ref[...], preferred_element_type=jnp.float32)
                    + b_fc_ref[...])


def rnn_classifier_forward(x, params):
    """x: (batch, seq, INPUT_SIZE) float32, batch-first like PyTorch."""
    w_ih, w_hh, b, w_fc, b_fc = params
    batch, seq, in_size = x.shape

    tb, num_tiles, phys = _select_tiling(batch, seq)
    batch_pad = tb * num_tiles
    # Sub-tile interleave only while each half stays <= 128 rows (vreg budget);
    # tb is a multiple of 32 so the bf16 half-tile stores stay (16,128)-aligned.
    num_sub = 2 if tb <= 256 else 1

    # Glue: zero-pad features 35 -> HIDDEN, zero-pad batch, go time-major, bf16.
    x_pad = (jnp.zeros((batch_pad, seq, HIDDEN), jnp.float32)
             .at[:batch, :, :in_size].set(x)
             .astype(jnp.bfloat16))
    x_tm = jnp.transpose(x_pad, (1, 0, 2))            # (seq, batch_pad, HIDDEN)

    kernel = functools.partial(rnn_classifier_kernel, num_sub=num_sub)

    out = pl.pallas_call(
        kernel,
        out_shape=jax.ShapeDtypeStruct((batch_pad, FC_PAD), jnp.float32),
        grid_spec=pltpu.PrefetchScalarGridSpec(
            num_scalar_prefetch=0,
            grid=(num_tiles,),
            in_specs=[
                pl.BlockSpec((seq, tb, HIDDEN), lambda i: (0, i, 0)),
                pl.BlockSpec((NUM_LAYERS, HIDDEN, HIDDEN), lambda i: (0, 0, 0)),
                pl.BlockSpec((NUM_LAYERS, HIDDEN, HIDDEN), lambda i: (0, 0, 0)),
                pl.BlockSpec((NUM_LAYERS, 1, HIDDEN), lambda i: (0, 0, 0)),
                pl.BlockSpec((HIDDEN, FC_PAD), lambda i: (0, 0)),
                pl.BlockSpec((1, FC_PAD), lambda i: (0, 0)),
            ],
            out_specs=pl.BlockSpec((tb, FC_PAD), lambda i: (i, 0)),
            scratch_shapes=[
                pltpu.VMEM((seq * tb, HIDDEN), jnp.bfloat16),   # seq_buf
                pltpu.VMEM((seq * tb, HIDDEN), jnp.float32),    # proj_buf
            ],
        ),
        compiler_params=pltpu.CompilerParams(
            dimension_semantics=("parallel",),
            vmem_limit_bytes=_vmem_limit_bytes(tb, seq, phys)),
    )(x_tm, w_ih, w_hh, b, w_fc, b_fc)

    return out[:batch, :NUM_CLASSES]


def init_params(key):
    """Deterministic synthetic init matching PyTorch nn.RNN / nn.Linear shapes.

    PyTorch shapes: W_ih_l0 (H, I), W_ih_l>0 (H, H), W_hh_l (H, H), b_* (H,),
                    fc.weight (C, H), fc.bias (C,).
    Stored pre-transposed, layer-0 input dim zero-padded to H, RNN + fc weights
    in bf16, fc weight/bias zero-padded to FC_PAD lanes.
    """
    ks = jax.random.split(key, 7)
    scale = 1.0 / np.sqrt(HIDDEN)
    u = lambda k, shape: jax.random.uniform(k, shape, jnp.float32, -scale, scale)

    w_ih = jnp.zeros((NUM_LAYERS, HIDDEN, HIDDEN), jnp.float32)
    w_ih = w_ih.at[0, :INPUT_SIZE, :].set(u(ks[0], (INPUT_SIZE, HIDDEN)))
    w_ih = w_ih.at[1:].set(u(ks[1], (NUM_LAYERS - 1, HIDDEN, HIDDEN)))
    w_ih = w_ih.astype(jnp.bfloat16)

    w_hh = u(ks[2], (NUM_LAYERS, HIDDEN, HIDDEN)).astype(jnp.bfloat16)
    b = u(ks[3], (NUM_LAYERS, 1, HIDDEN)) + u(ks[4], (NUM_LAYERS, 1, HIDDEN))

    w_fc = jnp.zeros((HIDDEN, FC_PAD), jnp.float32)
    w_fc = w_fc.at[:, :NUM_CLASSES].set(u(ks[5], (HIDDEN, NUM_CLASSES)))
    w_fc = w_fc.astype(jnp.bfloat16)
    b_fc = jnp.zeros((1, FC_PAD), jnp.float32)
    b_fc = b_fc.at[:, :NUM_CLASSES].set(u(ks[6], (1, NUM_CLASSES)))
    return w_ih, w_hh, b, w_fc, b_fc


def reference_forward(x, params):
    """Pure-JAX reference mirroring the kernel numerics (bf16 matmul operands,
    bf16-carried h, f32 accumulation / tanh)."""
    w_ih, w_hh, b, w_fc, b_fc = params
    batch, seq, in_size = x.shape
    h_seq = (jnp.zeros((batch, seq, HIDDEN), jnp.float32)
             .at[:, :, :in_size].set(x)
             .astype(jnp.bfloat16))
    h = jnp.zeros((batch, HIDDEN), jnp.bfloat16)
    for l in range(NUM_LAYERS):
        proj = (jnp.dot(h_seq.reshape(batch * seq, HIDDEN), w_ih[l],
                        preferred_element_type=jnp.float32)
                .reshape(batch, seq, HIDDEN) + b[l])
        h = jnp.zeros((batch, HIDDEN), jnp.bfloat16)
        outs = []
        for t in range(seq):
            h = jnp.tanh(proj[:, t, :]
                         + jnp.dot(h, w_hh[l], preferred_element_type=jnp.float32)
                         ).astype(jnp.bfloat16)
            outs.append(h)
        h_seq = jnp.stack(outs, axis=1)
    logits = jnp.dot(h, w_fc, preferred_element_type=jnp.float32) + b_fc
    return logits[:, :NUM_CLASSES]


if __name__ == "__main__":
    key = jax.random.PRNGKey(0)
    k_param, k_x = jax.random.split(key)

    batch, seq = 2, 8
    x = jax.random.normal(k_x, (batch, seq, INPUT_SIZE), jnp.float32)
    params = init_params(k_param)

    out = rnn_classifier_forward(x, params)
    out = jax.block_until_ready(out)
    assert out.shape == (batch, NUM_CLASSES)

    ref = jax.block_until_ready(reference_forward(x, params))
    # NOTE: bf16 MXU operands compounded over 9 layers x seq steps deviate from
    # PyTorch's f32 nn.RNN; the reference mirrors the kernel's numerics.
    np.testing.assert_allclose(np.asarray(out), np.asarray(ref), rtol=2e-2, atol=2e-2)

    print("KERNEL_OK")
</pallas_src>

<mosaic_0001>
module attributes {stable_mosaic.version = 11 : i64} {
  func.func @rnn_classifier_kernel(%arg0: i32, %arg1: memref<8x32x64xbf16, #tpu.memory_space<vmem>>, %arg2: memref<9x64x64xbf16, #tpu.memory_space<vmem>>, %arg3: memref<9x64x64xbf16, #tpu.memory_space<vmem>>, %arg4: memref<9x1x64xf32, #tpu.memory_space<vmem>>, %arg5: memref<64x128xbf16, #tpu.memory_space<vmem>>, %arg6: memref<1x128xf32, #tpu.memory_space<vmem>>, %arg7: memref<32x128xf32, #tpu.memory_space<vmem>>, %arg8: memref<256x64xbf16, #tpu.memory_space<vmem>>, %arg9: memref<256x64xf32, #tpu.memory_space<vmem>>) attributes {dimension_semantics = [#tpu.dimension_semantics<parallel>], iteration_bounds = array<i64: 1>, scalar_prefetch = 0 : i64, scratch_operands = 2 : i64, tpu.core_type = #tpu.core_type<tc>, window_params = [{transform_indices = @transform_0, window_bounds = array<i64: 8, 32, 64>}, {pipeline_mode = #tpu.pipeline_mode<synchronous>, transform_indices = @transform_1, window_bounds = array<i64: 9, 64, 64>}, {pipeline_mode = #tpu.pipeline_mode<synchronous>, transform_indices = @transform_2, window_bounds = array<i64: 9, 64, 64>}, {pipeline_mode = #tpu.pipeline_mode<synchronous>, transform_indices = @transform_3, window_bounds = array<i64: 9, 1, 64>}, {pipeline_mode = #tpu.pipeline_mode<synchronous>, transform_indices = @transform_4, window_bounds = array<i64: 64, 128>}, {pipeline_mode = #tpu.pipeline_mode<synchronous>, transform_indices = @transform_5, window_bounds = array<i64: 1, 128>}, {transform_indices = @transform_6, window_bounds = array<i64: 32, 128>}]} {
    %c0 = arith.constant 0 : index
    %c0_0 = arith.constant 0 : index
    %c0_1 = arith.constant 0 : index
    %0 = vector.load %arg2[%c0, %c0_0, %c0_1] : memref<9x64x64xbf16, #tpu.memory_space<vmem>>, vector<1x64x64xbf16>
    %1 = vector.shape_cast %0 : vector<1x64x64xbf16> to vector<64x64xbf16>
    %c0_2 = arith.constant 0 : index
    %c0_3 = arith.constant 0 : index
    %c0_4 = arith.constant 0 : index
    %2 = vector.load %arg3[%c0_2, %c0_3, %c0_4] : memref<9x64x64xbf16, #tpu.memory_space<vmem>>, vector<1x64x64xbf16>
    %3 = vector.shape_cast %2 : vector<1x64x64xbf16> to vector<64x64xbf16>
    %c0_5 = arith.constant 0 : index
    %c0_6 = arith.constant 0 : index
    %c0_7 = arith.constant 0 : index
    %4 = vector.load %arg4[%c0_5, %c0_6, %c0_7] : memref<9x1x64xf32, #tpu.memory_space<vmem>>, vector<1x1x64xf32>
    %5 = vector.shape_cast %4 : vector<1x1x64xf32> to vector<1x64xf32>
    %c0_8 = arith.constant 0 : index
    %c0_9 = arith.constant 0 : index
    %c0_10 = arith.constant 0 : index
    %6 = vector.load %arg1[%c0_8, %c0_9, %c0_10] : memref<8x32x64xbf16, #tpu.memory_space<vmem>>, vector<8x32x64xbf16>
    %7 = vector.shape_cast %6 : vector<8x32x64xbf16> to vector<256x64xbf16>
    %cst = arith.constant dense<0.000000e+00> : vector<256x64xf32>
    %8 = tpu.matmul %7, %1, %cst {dimension_numbers = #tpu.dot_dimension_numbers<[1], [0], [0], [1], [0, 0, 1, 1], [], []>} : vector<256x64xbf16>, vector<64x64xbf16>, vector<256x64xf32> -> vector<256x64xf32>
    %9 = vector.broadcast %5 : vector<1x64xf32> to vector<256x64xf32>
    %10 = arith.addf %8, %9 : vector<256x64xf32>
    %c0_11 = arith.constant 0 : index
    %c0_12 = arith.constant 0 : index
    %11 = vector.load %arg9[%c0_11, %c0_12] : memref<256x64xf32, #tpu.memory_space<vmem>>, vector<256x64xf32>
    tpu.vector_store %arg9[%c0_11, %c0_12], %10 {strides = array<i32>} : memref<256x64xf32, #tpu.memory_space<vmem>>, vector<256x64xf32>,
    %cst_13 = arith.constant 0.000000e+00 : bf16
    %12 = vector.broadcast %cst_13 : bf16 to vector<16x64xbf16>
    %cst_14 = arith.constant 0.000000e+00 : bf16
    %13 = vector.broadcast %cst_14 : bf16 to vector<16x64xbf16>
    %c0_15 = arith.constant 0 : index
    %c0_16 = arith.constant 0 : index
    %14 = vector.load %arg9[%c0_15, %c0_16] : memref<256x64xf32, #tpu.memory_space<vmem>>, vector<16x64xf32>
    %cst_17 = arith.constant dense<0.000000e+00> : vector<16x64xf32>
    %15 = tpu.matmul %12, %3, %cst_17 {dimension_numbers = #tpu.dot_dimension_numbers<[1], [0], [0], [1], [0, 0, 1, 1], [], []>} : vector<16x64xbf16>, vector<64x64xbf16>, vector<16x64xf32> -> vector<16x64xf32>
    %16 = arith.addf %14, %15 : vector<16x64xf32>
    %17 = math.tanh %16 : vector<16x64xf32>
    %18 = arith.truncf %17 : vector<16x64xf32> to vector<16x64xbf16>
    %c16 = arith.constant 16 : index
    %c0_18 = arith.constant 0 : index
    %19 = vector.load %arg9[%c16, %c0_18] : memref<256x64xf32, #tpu.memory_space<vmem>>, vector<16x64xf32>
    %cst_19 = arith.constant dense<0.000000e+00> : vector<16x64xf32>
    %20 = tpu.matmul %13, %3, %cst_19 {dimension_numbers = #tpu.dot_dimension_numbers<[1], [0], [0], [1], [0, 0, 1, 1], [], []>} : vector<16x64xbf16>, vector<64x64xbf16>, vector<16x64xf32> -> vector<16x64xf32>
    %21 = arith.addf %19, %20 : vector<16x64xf32>
    %22 = math.tanh %21 : vector<16x64xf32>
    %23 = arith.truncf %22 : vector<16x64xf32> to vector<16x64xbf16>
    %c0_20 = arith.constant 0 : index
    %c0_21 = arith.constant 0 : index
    %24 = vector.load %arg8[%c0_20, %c0_21] : memref<256x64xbf16, #tpu.memory_space<vmem>>, vector<16x64xbf16>
    tpu.vector_store %arg8[%c0_20, %c0_21], %18 {strides = array<i32>} : memref<256x64xbf16, #tpu.memory_space<vmem>>, vector<16x64xbf16>,
    %c16_22 = arith.constant 16 : index
    %c0_23 = arith.constant 0 : index
    %25 = vector.load %arg8[%c16_22, %c0_23] : memref<256x64xbf16, #tpu.memory_space<vmem>>, vector<16x64xbf16>
    tpu.vector_store %arg8[%c16_22, %c0_23], %23 {strides = array<i32>} : memref<256x64xbf16, #tpu.memory_space<vmem>>, vector<16x64xbf16>,
    %c32 = arith.constant 32 : index
    %c0_24 = arith.constant 0 : index
    %26 = vector.load %arg9[%c32, %c0_24] : memref<256x64xf32, #tpu.memory_space<vmem>>, vector<16x64xf32>
    %cst_25 = arith.constant dense<0.000000e+00> : vector<16x64xf32>
    %27 = tpu.matmul %18, %3, %cst_25 {dimension_numbers = #tpu.dot_dimension_numbers<[1], [0], [0], [1], [0, 0, 1, 1], [], []>} : vector<16x64xbf16>, vector<64x64xbf16>, vector<16x64xf32> -> vector<16x64xf32>
    %28 = arith.addf %26, %27 : vector<16x64xf32>
    %29 = math.tanh %28 : vector<16x64xf32>
    %30 = arith.truncf %29 : vector<16x64xf32> to vector<16x64xbf16>
    %c48 = arith.constant 48 : index
    %c0_26 = arith.constant 0 : index
    %31 = vector.load %arg9[%c48, %c0_26] : memref<256x64xf32, #tpu.memory_space<vmem>>, vector<16x64xf32>
    %cst_27 = arith.constant dense<0.000000e+00> : vector<16x64xf32>
    %32 = tpu.matmul %23, %3, %cst_27 {dimension_numbers = #tpu.dot_dimension_numbers<[1], [0], [0], [1], [0, 0, 1, 1], [], []>} : vector<16x64xbf16>, vector<64x64xbf16>, vector<16x64xf32> -> vector<16x64xf32>
    %33 = arith.addf %31, %32 : vector<16x64xf32>
    %34 = math.tanh %33 : vector<16x64xf32>
    %35 = arith.truncf %34 : vector<16x64xf32> to vector<16x64xbf16>
    %c32_28 = arith.constant 32 : index
    %c0_29 = arith.constant 0 : index
    %36 = vector.load %arg8[%c32_28, %c0_29] : memref<256x64xbf16, #tpu.memory_space<vmem>>, vector<16x64xbf16>
    tpu.vector_store %arg8[%c32_28, %c0_29], %30 {strides = array<i32>} : memref<256x64xbf16, #tpu.memory_space<vmem>>, vector<16x64xbf16>,
    %c48_30 = arith.constant 48 : index
    %c0_31 = arith.constant 0 : index
    %37 = vector.load %arg8[%c48_30, %c0_31] : memref<256x64xbf16, #tpu.memory_space<vmem>>, vector<16x64xbf16>
    tpu.vector_store %arg8[%c48_30, %c0_31], %35 {strides = array<i32>} : memref<256x64xbf16, #tpu.memory_space<vmem>>, vector<16x64xbf16>,
    %c64 = arith.constant 64 : index
    %c0_32 = arith.constant 0 : index
    %38 = vector.load %arg9[%c64, %c0_32] : memref<256x64xf32, #tpu.memory_space<vmem>>, vector<16x64xf32>
    %cst_33 = arith.constant dense<0.000000e+00> : vector<16x64xf32>
    %39 = tpu.matmul %30, %3, %cst_33 {dimension_numbers = #tpu.dot_dimension_numbers<[1], [0], [0], [1], [0, 0, 1, 1], [], []>} : vector<16x64xbf16>, vector<64x64xbf16>, vector<16x64xf32> -> vector<16x64xf32>
    %40 = arith.addf %38, %39 : vector<16x64xf32>
    %41 = math.tanh %40 : vector<16x64xf32>
    %42 = arith.truncf %41 : vector<16x64xf32> to vector<16x64xbf16>
    %c80 = arith.constant 80 : index
    %c0_34 = arith.constant 0 : index
    %43 = vector.load %arg9[%c80, %c0_34] : memref<256x64xf32, #tpu.memory_space<vmem>>, vector<16x64xf32>
    %cst_35 = arith.constant dense<0.000000e+00> : vector<16x64xf32>
    %44 = tpu.matmul %35, %3, %cst_35 {dimension_numbers = #tpu.dot_dimension_numbers<[1], [0], [0], [1], [0, 0, 1, 1], [], []>} : vector<16x64xbf16>, vector<64x64xbf16>, vector<16x64xf32> -> vector<16x64xf32>
    %45 = arith.addf %43, %44 : vector<16x64xf32>
    %46 = math.tanh %45 : vector<16x64xf32>
    %47 = arith.truncf %46 : vector<16x64xf32> to vector<16x64xbf16>
    %c64_36 = arith.constant 64 : index
    %c0_37 = arith.constant 0 : index
    %48 = vector.load %arg8[%c64_36, %c0_37] : memref<256x64xbf16, #tpu.memory_space<vmem>>, vector<16x64xbf16>
    tpu.vector_store %arg8[%c64_36, %c0_37], %42 {strides = array<i32>} : memref<256x64xbf16, #tpu.memory_space<vmem>>, vector<16x64xbf16>,
    %c80_38 = arith.constant 80 : index
    %c0_39 = arith.constant 0 : index
    %49 = vector.load %arg8[%c80_38, %c0_39] : memref<256x64xbf16, #tpu.memory_space<vmem>>, vector<16x64xbf16>
    tpu.vector_store %arg8[%c80_38, %c0_39], %47 {strides = array<i32>} : memref<256x64xbf16, #tpu.memory_space<vmem>>, vector<16x64xbf16>,
    %c96 = arith.constant 96 : index
    %c0_40 = arith.constant 0 : index
    %50 = vector.load %arg9[%c96, %c0_40] : memref<256x64xf32, #tpu.memory_space<vmem>>, vector<16x64xf32>
    %cst_41 = arith.constant dense<0.000000e+00> : vector<16x64xf32>
    %51 = tpu.matmul %42, %3, %cst_41 {dimension_numbers = #tpu.dot_dimension_numbers<[1], [0], [0], [1], [0, 0, 1, 1], [], []>} : vector<16x64xbf16>, vector<64x64xbf16>, vector<16x64xf32> -> vector<16x64xf32>
    %52 = arith.addf %50, %51 : vector<16x64xf32>
    %53 = math.tanh %52 : vector<16x64xf32>
    %54 = arith.truncf %53 : vector<16x64xf32> to vector<16x64xbf16>
    %c112 = arith.constant 112 : index
    %c0_42 = arith.constant 0 : index
    %55 = vector.load %arg9[%c112, %c0_42] : memref<256x64xf32, #tpu.memory_space<vmem>>, vector<16x64xf32>
    %cst_43 = arith.constant dense<0.000000e+00> : vector<16x64xf32>
    %56 = tpu.matmul %47, %3, %cst_43 {dimension_numbers = #tpu.dot_dimension_numbers<[1], [0], [0], [1], [0, 0, 1, 1], [], []>} : vector<16x64xbf16>, vector<64x64xbf16>, vector<16x64xf32> -> vector<16x64xf32>
    %57 = arith.addf %55, %56 : vector<16x64xf32>
    %58 = math.tanh %57 : vector<16x64xf32>
    %59 = arith.truncf %58 : vector<16x64xf32> to vector<16x64xbf16>
    %c96_44 = arith.constant 96 : index
    %c0_45 = arith.constant 0 : index
    %60 = vector.load %arg8[%c96_44, %c0_45] : memref<256x64xbf16, #tpu.memory_space<vmem>>, vector<16x64xbf16>
    tpu.vector_store %arg8[%c96_44, %c0_45], %54 {strides = array<i32>} : memref<256x64xbf16, #tpu.memory_space<vmem>>, vector<16x64xbf16>,
    %c112_46 = arith.constant 112 : index
    %c0_47 = arith.constant 0 : index
    %61 = vector.load %arg8[%c112_46, %c0_47] : memref<256x64xbf16, #tpu.memory_space<vmem>>, vector<16x64xbf16>
    tpu.vector_store %arg8[%c112_46, %c0_47], %59 {strides = array<i32>} : memref<256x64xbf16, #tpu.memory_space<vmem>>, vector<16x64xbf16>,
    %c128 = arith.constant 128 : index
    %c0_48 = arith.constant 0 : index
    %62 = vector.load %arg9[%c128, %c0_48] : memref<256x64xf32, #tpu.memory_space<vmem>>, vector<16x64xf32>
    %cst_49 = arith.constant dense<0.000000e+00> : vector<16x64xf32>
    %63 = tpu.matmul %54, %3, %cst_49 {dimension_numbers = #tpu.dot_dimension_numbers<[1], [0], [0], [1], [0, 0, 1, 1], [], []>} : vector<16x64xbf16>, vector<64x64xbf16>, vector<16x64xf32> -> vector<16x64xf32>
    %64 = arith.addf %62, %63 : vector<16x64xf32>
    %65 = math.tanh %64 : vector<16x64xf32>
    %66 = arith.truncf %65 : vector<16x64xf32> to vector<16x64xbf16>
    %c144 = arith.constant 144 : index
    %c0_50 = arith.constant 0 : index
    %67 = vector.load %arg9[%c144, %c0_50] : memref<256x64xf32, #tpu.memory_space<vmem>>, vector<16x64xf32>
    %cst_51 = arith.constant dense<0.000000e+00> : vector<16x64xf32>
    %68 = tpu.matmul %59, %3, %cst_51 {dimension_numbers = #tpu.dot_dimension_numbers<[1], [0], [0], [1], [0, 0, 1, 1], [], []>} : vector<16x64xbf16>, vector<64x64xbf16>, vector<16x64xf32> -> vector<16x64xf32>
    %69 = arith.addf %67, %68 : vector<16x64xf32>
    %70 = math.tanh %69 : vector<16x64xf32>
    %71 = arith.truncf %70 : vector<16x64xf32> to vector<16x64xbf16>
    %c128_52 = arith.constant 128 : index
    %c0_53 = arith.constant 0 : index
    %72 = vector.load %arg8[%c128_52, %c0_53] : memref<256x64xbf16, #tpu.memory_space<vmem>>, vector<16x64xbf16>
    tpu.vector_store %arg8[%c128_52, %c0_53], %66 {strides = array<i32>} : memref<256x64xbf16, #tpu.memory_space<vmem>>, vector<16x64xbf16>,
    %c144_54 = arith.constant 144 : index
    %c0_55 = arith.constant 0 : index
    %73 = vector.load %arg8[%c144_54, %c0_55] : memref<256x64xbf16, #tpu.memory_space<vmem>>, vector<16x64xbf16>
    tpu.vector_store %arg8[%c144_54, %c0_55], %71 {strides = array<i32>} : memref<256x64xbf16, #tpu.memory_space<vmem>>, vector<16x64xbf16>,
    %c160 = arith.constant 160 : index
    %c0_56 = arith.constant 0 : index
    %74 = vector.load %arg9[%c160, %c0_56] : memref<256x64xf32, #tpu.memory_space<vmem>>, vector<16x64xf32>
    %cst_57 = arith.constant dense<0.000000e+00> : vector<16x64xf32>
    %75 = tpu.matmul %66, %3, %cst_57 {dimension_numbers = #tpu.dot_dimension_numbers<[1], [0], [0], [1], [0, 0, 1, 1], [], []>} : vector<16x64xbf16>, vector<64x64xbf16>, vector<16x64xf32> -> vector<16x64xf32>
    %76 = arith.addf %74, %75 : vector<16x64xf32>
    %77 = math.tanh %76 : vector<16x64xf32>
    %78 = arith.truncf %77 : vector<16x64xf32> to vector<16x64xbf16>
    %c176 = arith.constant 176 : index
    %c0_58 = arith.constant 0 : index
    %79 = vector.load %arg9[%c176, %c0_58] : memref<256x64xf32, #tpu.memory_space<vmem>>, vector<16x64xf32>
    %cst_59 = arith.constant dense<0.000000e+00> : vector<16x64xf32>
    %80 = tpu.matmul %71, %3, %cst_59 {dimension_numbers = #tpu.dot_dimension_numbers<[1], [0], [0], [1], [0, 0, 1, 1], [], []>} : vector<16x64xbf16>, vector<64x64xbf16>, vector<16x64xf32> -> vector<16x64xf32>
    %81 = arith.addf %79, %80 : vector<16x64xf32>
    %82 = math.tanh %81 : vector<16x64xf32>
    %83 = arith.truncf %82 : vector<16x64xf32> to vector<16x64xbf16>
    %c160_60 = arith.constant 160 : index
    %c0_61 = arith.constant 0 : index
    %84 = vector.load %arg8[%c160_60, %c0_61] : memref<256x64xbf16, #tpu.memory_space<vmem>>, vector<16x64xbf16>
    tpu.vector_store %arg8[%c160_60, %c0_61], %78 {strides = array<i32>} : memref<256x64xbf16, #tpu.memory_space<vmem>>, vector<16x64xbf16>,
    %c176_62 = arith.constant 176 : index
    %c0_63 = arith.constant 0 : index
    %85 = vector.load %arg8[%c176_62, %c0_63] : memref<256x64xbf16, #tpu.memory_space<vmem>>, vector<16x64xbf16>
    tpu.vector_store %arg8[%c176_62, %c0_63], %83 {strides = array<i32>} : memref<256x64xbf16, #tpu.memory_space<vmem>>, vector<16x64xbf16>,
    %c192 = arith.constant 192 : index
    %c0_64 = arith.constant 0 : index
    %86 = vector.load %arg9[%c192, %c0_64] : memref<256x64xf32, #tpu.memory_space<vmem>>, vector<16x64xf32>
    %cst_65 = arith.constant dense<0.000000e+00> : vector<16x64xf32>
    %87 = tpu.matmul %78, %3, %cst_65 {dimension_numbers = #tpu.dot_dimension_numbers<[1], [0], [0], [1], [0, 0, 1, 1], [], []>} : vector<16x64xbf16>, vector<64x64xbf16>, vector<16x64xf32> -> vector<16x64xf32>
    %88 = arith.addf %86, %87 : vector<16x64xf32>
    %89 = math.tanh %88 : vector<16x64xf32>
    %90 = arith.truncf %89 : vector<16x64xf32> to vector<16x64xbf16>
    %c208 = arith.constant 208 : index
    %c0_66 = arith.constant 0 : index
    %91 = vector.load %arg9[%c208, %c0_66] : memref<256x64xf32, #tpu.memory_space<vmem>>, vector<16x64xf32>
    %cst_67 = arith.constant dense<0.000000e+00> : vector<16x64xf32>
    %92 = tpu.matmul %83, %3, %cst_67 {dimension_numbers = #tpu.dot_dimension_numbers<[1], [0], [0], [1], [0, 0, 1, 1], [], []>} : vector<16x64xbf16>, vector<64x64xbf16>, vector<16x64xf32> -> vector<16x64xf32>
    %93 = arith.addf %91, %92 : vector<16x64xf32>
    %94 = math.tanh %93 : vector<16x64xf32>
    %95 = arith.truncf %94 : vector<16x64xf32> to vector<16x64xbf16>
    %c192_68 = arith.constant 192 : index
    %c0_69 = arith.constant 0 : index
    %96 = vector.load %arg8[%c192_68, %c0_69] : memref<256x64xbf16, #tpu.memory_space<vmem>>, vector<16x64xbf16>
    tpu.vector_store %arg8[%c192_68, %c0_69], %90 {strides = array<i32>} : memref<256x64xbf16, #tpu.memory_space<vmem>>, vector<16x64xbf16>,
    %c208_70 = arith.constant 208 : index
    %c0_71 = arith.constant 0 : index
    %97 = vector.load %arg8[%c208_70, %c0_71] : memref<256x64xbf16, #tpu.memory_space<vmem>>, vector<16x64xbf16>
    tpu.vector_store %arg8[%c208_70, %c0_71], %95 {strides = array<i32>} : memref<256x64xbf16, #tpu.memory_space<vmem>>, vector<16x64xbf16>,
    %c224 = arith.constant 224 : index
    %c0_72 = arith.constant 0 : index
    %98 = vector.load %arg9[%c224, %c0_72] : memref<256x64xf32, #tpu.memory_space<vmem>>, vector<16x64xf32>
    %cst_73 = arith.constant dense<0.000000e+00> : vector<16x64xf32>
    %99 = tpu.matmul %90, %3, %cst_73 {dimension_numbers = #tpu.dot_dimension_numbers<[1], [0], [0], [1], [0, 0, 1, 1], [], []>} : vector<16x64xbf16>, vector<64x64xbf16>, vector<16x64xf32> -> vector<16x64xf32>
    %100 = arith.addf %98, %99 : vector<16x64xf32>
    %101 = math.tanh %100 : vector<16x64xf32>
    %102 = arith.truncf %101 : vector<16x64xf32> to vector<16x64xbf16>
    %c240 = arith.constant 240 : index
    %c0_74 = arith.constant 0 : index
    %103 = vector.load %arg9[%c240, %c0_74] : memref<256x64xf32, #tpu.memory_space<vmem>>, vector<16x64xf32>
    %cst_75 = arith.constant dense<0.000000e+00> : vector<16x64xf32>
    %104 = tpu.matmul %95, %3, %cst_75 {dimension_numbers = #tpu.dot_dimension_numbers<[1], [0], [0], [1], [0, 0, 1, 1], [], []>} : vector<16x64xbf16>, vector<64x64xbf16>, vector<16x64xf32> -> vector<16x64xf32>
    %105 = arith.addf %103, %104 : vector<16x64xf32>
    %106 = math.tanh %105 : vector<16x64xf32>
    %107 = arith.truncf %106 : vector<16x64xf32> to vector<16x64xbf16>
    %c224_76 = arith.constant 224 : index
    %c0_77 = arith.constant 0 : index
    %108 = vector.load %arg8[%c224_76, %c0_77] : memref<256x64xbf16, #tpu.memory_space<vmem>>, vector<16x64xbf16>
    tpu.vector_store %arg8[%c224_76, %c0_77], %102 {strides = array<i32>} : memref<256x64xbf16, #tpu.memory_space<vmem>>, vector<16x64xbf16>,
    %c240_78 = arith.constant 240 : index
    %c0_79 = arith.constant 0 : index
    %109 = vector.load %arg8[%c240_78, %c0_79] : memref<256x64xbf16, #tpu.memory_space<vmem>>, vector<16x64xbf16>
    tpu.vector_store %arg8[%c240_78, %c0_79], %107 {strides = array<i32>} : memref<256x64xbf16, #tpu.memory_space<vmem>>, vector<16x64xbf16>,
    %c1 = arith.constant 1 : index
    %c0_80 = arith.constant 0 : index
    %c0_81 = arith.constant 0 : index
    %110 = vector.load %arg2[%c1, %c0_80, %c0_81] : memref<9x64x64xbf16, #tpu.memory_space<vmem>>, vector<1x64x64xbf16>
    %111 = vector.shape_cast %110 : vector<1x64x64xbf16> to vector<64x64xbf16>
    %c1_82 = arith.constant 1 : index
    %c0_83 = arith.constant 0 : index
    %c0_84 = arith.constant 0 : index
    %112 = vector.load %arg3[%c1_82, %c0_83, %c0_84] : memref<9x64x64xbf16, #tpu.memory_space<vmem>>, vector<1x64x64xbf16>
    %113 = vector.shape_cast %112 : vector<1x64x64xbf16> to vector<64x64xbf16>
    %c1_85 = arith.constant 1 : index
    %c0_86 = arith.constant 0 : index
    %c0_87 = arith.constant 0 : index
    %114 = vector.load %arg4[%c1_85, %c0_86, %c0_87] : memref<9x1x64xf32, #tpu.memory_space<vmem>>, vector<1x1x64xf32>
    %115 = vector.shape_cast %114 : vector<1x1x64xf32> to vector<1x64xf32>
    %c0_88 = arith.constant 0 : index
    %c0_89 = arith.constant 0 : index
    %116 = vector.load %arg8[%c0_88, %c0_89] : memref<256x64xbf16, #tpu.memory_space<vmem>>, vector<256x64xbf16>
    %cst_90 = arith.constant dense<0.000000e+00> : vector<256x64xf32>
    %117 = tpu.matmul %116, %111, %cst_90 {dimension_numbers = #tpu.dot_dimension_numbers<[1], [0], [0], [1], [0, 0, 1, 1], [], []>} : vector<256x64xbf16>, vector<64x64xbf16>, vector<256x64xf32> -> vector<256x64xf32>
    %118 = vector.broadcast %115 : vector<1x64xf32> to vector<256x64xf32>
    %119 = arith.addf %117, %118 : vector<256x64xf32>
    %c0_91 = arith.constant 0 : index
    %c0_92 = arith.constant 0 : index
    %120 = vector.load %arg9[%c0_91, %c0_92] : memref<256x64xf32, #tpu.memory_space<vmem>>, vector<256x64xf32>
    tpu.vector_store %arg9[%c0_91, %c0_92], %119 {strides = array<i32>} : memref<256x64xf32, #tpu.memory_space<vmem>>, vector<256x64xf32>,
    %cst_93 = arith.constant 0.000000e+00 : bf16
    %121 = vector.broadcast %cst_93 : bf16 to vector<16x64xbf16>
    %cst_94 = arith.constant 0.000000e+00 : bf16
    %122 = vector.broadcast %cst_94 : bf16 to vector<16x64xbf16>
    %c0_95 = arith.constant 0 : index
    %c0_96 = arith.constant 0 : index
    %123 = vector.load %arg9[%c0_95, %c0_96] : memref<256x64xf32, #tpu.memory_space<vmem>>, vector<16x64xf32>
    %cst_97 = arith.constant dense<0.000000e+00> : vector<16x64xf32>
    %124 = tpu.matmul %121, %113, %cst_97 {dimension_numbers = #tpu.dot_dimension_numbers<[1], [0], [0], [1], [0, 0, 1, 1], [], []>} : vector<16x64xbf16>, vector<64x64xbf16>, vector<16x64xf32> -> vector<16x64xf32>
    %125 = arith.addf %123, %124 : vector<16x64xf32>
    %126 = math.tanh %125 : vector<16x64xf32>
    %127 = arith.truncf %126 : vector<16x64xf32> to vector<16x64xbf16>
    %c16_98 = arith.constant 16 : index
    %c0_99 = arith.constant 0 : index
    %128 = vector.load %arg9[%c16_98, %c0_99] : memref<256x64xf32, #tpu.memory_space<vmem>>, vector<16x64xf32>
    %cst_100 = arith.constant dense<0.000000e+00> : vector<16x64xf32>
    %129 = tpu.matmul %122, %113, %cst_100 {dimension_numbers = #tpu.dot_dimension_numbers<[1], [0], [0], [1], [0, 0, 1, 1], [], []>} : vector<16x64xbf16>, vector<64x64xbf16>, vector<16x64xf32> -> vector<16x64xf32>
    %130 = arith.addf %128, %129 : vector<16x64xf32>
    %131 = math.tanh %130 : vector<16x64xf32>
    %132 = arith.truncf %131 : vector<16x64xf32> to vector<16x64xbf16>
    %c0_101 = arith.constant 0 : index
    %c0_102 = arith.constant 0 : index
    %133 = vector.load %arg8[%c0_101, %c0_102] : memref<256x64xbf16, #tpu.memory_space<vmem>>, vector<16x64xbf16>
    tpu.vector_store %arg8[%c0_101, %c0_102], %127 {strides = array<i32>} : memref<256x64xbf16, #tpu.memory_space<vmem>>, vector<16x64xbf16>,
    %c16_103 = arith.constant 16 : index
    %c0_104 = arith.constant 0 : index
    %134 = vector.load %arg8[%c16_103, %c0_104] : memref<256x64xbf16, #tpu.memory_space<vmem>>, vector<16x64xbf16>
    tpu.vector_store %arg8[%c16_103, %c0_104], %132 {strides = array<i32>} : memref<256x64xbf16, #tpu.memory_space<vmem>>, vector<16x64xbf16>,
    %c32_105 = arith.constant 32 : index
    %c0_106 = arith.constant 0 : index
    %135 = vector.load %arg9[%c32_105, %c0_106] : memref<256x64xf32, #tpu.memory_space<vmem>>, vector<16x64xf32>
    %cst_107 = arith.constant dense<0.000000e+00> : vector<16x64xf32>
    %136 = tpu.matmul %127, %113, %cst_107 {dimension_numbers = #tpu.dot_dimension_numbers<[1], [0], [0], [1], [0, 0, 1, 1], [], []>} : vector<16x64xbf16>, vector<64x64xbf16>, vector<16x64xf32> -> vector<16x64xf32>
    %137 = arith.addf %135, %136 : vector<16x64xf32>
    %138 = math.tanh %137 : vector<16x64xf32>
    %139 = arith.truncf %138 : vector<16x64xf32> to vector<16x64xbf16>
    %c48_108 = arith.constant 48 : index
    %c0_109 = arith.constant 0 : index
    %140 = vector.load %arg9[%c48_108, %c0_109] : memref<256x64xf32, #tpu.memory_space<vmem>>, vector<16x64xf32>
    %cst_110 = arith.constant dense<0.000000e+00> : vector<16x64xf32>
    %141 = tpu.matmul %132, %113, %cst_110 {dimension_numbers = #tpu.dot_dimension_numbers<[1], [0], [0], [1], [0, 0, 1, 1], [], []>} : vector<16x64xbf16>, vector<64x64xbf16>, vector<16x64xf32> -> vector<16x64xf32>
    %142 = arith.addf %140, %141 : vector<16x64xf32>
    %143 = math.tanh %142 : vector<16x64xf32>
    %144 = arith.truncf %143 : vector<16x64xf32> to vector<16x64xbf16>
    %c32_111 = arith.constant 32 : index
    %c0_112 = arith.constant 0 : index
    %145 = vector.load %arg8[%c32_111, %c0_112] : memref<256x64xbf16, #tpu.memory_space<vmem>>, vector<16x64xbf16>
    tpu.vector_store %arg8[%c32_111, %c0_112], %139 {strides = array<i32>} : memref<256x64xbf16, #tpu.memory_space<vmem>>, vector<16x64xbf16>,
    %c48_113 = arith.constant 48 : index
    %c0_114 = arith.constant 0 : index
    %146 = vector.load %arg8[%c48_113, %c0_114] : memref<256x64xbf16, #tpu.memory_space<vmem>>, vector<16x64xbf16>
    tpu.vector_store %arg8[%c48_113, %c0_114], %144 {strides = array<i32>} : memref<256x64xbf16, #tpu.memory_space<vmem>>, vector<16x64xbf16>,
    %c64_115 = arith.constant 64 : index
    %c0_116 = arith.constant 0 : index
    %147 = vector.load %arg9[%c64_115, %c0_116] : memref<256x64xf32, #tpu.memory_space<vmem>>, vector<16x64xf32>
    %cst_117 = arith.constant dense<0.000000e+00> : vector<16x64xf32>
    %148 = tpu.matmul %139, %113, %cst_117 {dimension_numbers = #tpu.dot_dimension_numbers<[1], [0], [0], [1], [0, 0, 1, 1], [], []>} : vector<16x64xbf16>, vector<64x64xbf16>, vector<16x64xf32> -> vector<16x64xf32>
    %149 = arith.addf %147, %148 : vector<16x64xf32>
    %150 = math.tanh %149 : vector<16x64xf32>
    %151 = arith.truncf %150 : vector<16x64xf32> to vector<16x64xbf16>
    %c80_118 = arith.constant 80 : index
    %c0_119 = arith.constant 0 : index
    %152 = vector.load %arg9[%c80_118, %c0_119] : memref<256x64xf32, #tpu.memory_space<vmem>>, vector<16x64xf32>
    %cst_120 = arith.constant dense<0.000000e+00> : vector<16x64xf32>
    %153 = tpu.matmul %144, %113, %cst_120 {dimension_numbers = #tpu.dot_dimension_numbers<[1], [0], [0], [1], [0, 0, 1, 1], [], []>} : vector<16x64xbf16>, vector<64x64xbf16>, vector<16x64xf32> -> vector<16x64xf32>
    %154 = arith.addf %152, %153 : vector<16x64xf32>
    %155 = math.tanh %154 : vector<16x64xf32>
    %156 = arith.truncf %155 : vector<16x64xf32> to vector<16x64xbf16>
    %c64_121 = arith.constant 64 : index
    %c0_122 = arith.constant 0 : index
    %157 = vector.load %arg8[%c64_121, %c0_122] : memref<256x64xbf16, #tpu.memory_space<vmem>>, vector<16x64xbf16>
    tpu.vector_store %arg8[%c64_121, %c0_122], %151 {strides = array<i32>} : memref<256x64xbf16, #tpu.memory_space<vmem>>, vector<16x64xbf16>,
    %c80_123 = arith.constant 80 : index
    %c0_124 = arith.constant 0 : index
    %158 = vector.load %arg8[%c80_123, %c0_124] : memref<256x64xbf16, #tpu.memory_space<vmem>>, vector<16x64xbf16>
    tpu.vector_store %arg8[%c80_123, %c0_124], %156 {strides = array<i32>} : memref<256x64xbf16, #tpu.memory_space<vmem>>, vector<16x64xbf16>,
    %c96_125 = arith.constant 96 : index
    %c0_126 = arith.constant 0 : index
    %159 = vector.load %arg9[%c96_125, %c0_126] : memref<256x64xf32, #tpu.memory_space<vmem>>, vector<16x64xf32>
    %cst_127 = arith.constant dense<0.000000e+00> : vector<16x64xf32>
    %160 = tpu.matmul %151, %113, %cst_127 {dimension_numbers = #tpu.dot_dimension_numbers<[1], [0], [0], [1], [0, 0, 1, 1], [], []>} : vector<16x64xbf16>, vector<64x64xbf16>, vector<16x64xf32> -> vector<16x64xf32>
    %161 = arith.addf %159, %160 : vector<16x64xf32>
    %162 = math.tanh %161 : vector<16x64xf32>
    %163 = arith.truncf %162 : vector<16x64xf32> to vector<16x64xbf16>
    %c112_128 = arith.constant 112 : index
    %c0_129 = arith.constant 0 : index
    %164 = vector.load %arg9[%c112_128, %c0_129] : memref<256x64xf32, #tpu.memory_space<vmem>>, vector<16x64xf32>
    %cst_130 = arith.constant dense<0.000000e+00> : vector<16x64xf32>
    %165 = tpu.matmul %156, %113, %cst_130 {dimension_numbers = #tpu.dot_dimension_numbers<[1], [0], [0], [1], [0, 0, 1, 1], [], []>} : vector<16x64xbf16>, vector<64x64xbf16>, vector<16x64xf32> -> vector<16x64xf32>
    %166 = arith.addf %164, %165 : vector<16x64xf32>
    %167 = math.tanh %166 : vector<16x64xf32>
    %168 = arith.truncf %167 : vector<16x64xf32> to vector<16x64xbf16>
    %c96_131 = arith.constant 96 : index
    %c0_132 = arith.constant 0 : index
    %169 = vector.load %arg8[%c96_131, %c0_132] : memref<256x64xbf16, #tpu.memory_space<vmem>>, vector<16x64xbf16>
    tpu.vector_store %arg8[%c96_131, %c0_132], %163 {strides = array<i32>} : memref<256x64xbf16, #tpu.memory_space<vmem>>, vector<16x64xbf16>,
    %c112_133 = arith.constant 112 : index
    %c0_134 = arith.constant 0 : index
    %170 = vector.load %arg8[%c112_133, %c0_134] : memref<256x64xbf16, #tpu.memory_space<vmem>>, vector<16x64xbf16>
    tpu.vector_store %arg8[%c112_133, %c0_134], %168 {strides = array<i32>} : memref<256x64xbf16, #tpu.memory_space<vmem>>, vector<16x64xbf16>,
    %c128_135 = arith.constant 128 : index
    %c0_136 = arith.constant 0 : index
    %171 = vector.load %arg9[%c128_135, %c0_136] : memref<256x64xf32, #tpu.memory_space<vmem>>, vector<16x64xf32>
    %cst_137 = arith.constant dense<0.000000e+00> : vector<16x64xf32>
    %172 = tpu.matmul %163, %113, %cst_137 {dimension_numbers = #tpu.dot_dimension_numbers<[1], [0], [0], [1], [0, 0, 1, 1], [], []>} : vector<16x64xbf16>, vector<64x64xbf16>, vector<16x64xf32> -> vector<16x64xf32>
    %173 = arith.addf %171, %172 : vector<16x64xf32>
    %174 = math.tanh %173 : vector<16x64xf32>
    %175 = arith.truncf %174 : vector<16x64xf32> to vector<16x64xbf16>
    %c144_138 = arith.constant 144 : index
    %c0_139 = arith.constant 0 : index
    %176 = vector.load %arg9[%c144_138, %c0_139] : memref<256x64xf32, #tpu.memory_space<vmem>>, vector<16x64xf32>
    %cst_140 = arith.constant dense<0.000000e+00> : vector<16x64xf32>
    %177 = tpu.matmul %168, %113, %cst_140 {dimension_numbers = #tpu.dot_dimension_numbers<[1], [0], [0], [1], [0, 0, 1, 1], [], []>} : vector<16x64xbf16>, vector<64x64xbf16>, vector<16x64xf32> -> vector<16x64xf32>
    %178 = arith.addf %176, %177 : vector<16x64xf32>
    %179 = math.tanh %178 : vector<16x64xf32>
    %180 = arith.truncf %179 : vector<16x64xf32> to vector<16x64xbf16>
    %c128_141 = arith.constant 128 : index
    %c0_142 = arith.constant 0 : index
    %181 = vector.load %arg8[%c128_141, %c0_142] : memref<256x64xbf16, #tpu.memory_space<vmem>>, vector<16x64xbf16>
    tpu.vector_store %arg8[%c128_141, %c0_142], %175 {strides = array<i32>} : memref<256x64xbf16, #tpu.memory_space<vmem>>, vector<16x64xbf16>,
    %c144_143 = arith.constant 144 : index
    %c0_144 = arith.constant 0 : index
    %182 = vector.load %arg8[%c144_143, %c0_144] : memref<256x64xbf16, #tpu.memory_space<vmem>>, vector<16x64xbf16>
    tpu.vector_store %arg8[%c144_143, %c0_144], %180 {strides = array<i32>} : memref<256x64xbf16, #tpu.memory_space<vmem>>, vector<16x64xbf16>,
    %c160_145 = arith.constant 160 : index
    %c0_146 = arith.constant 0 : index
    %183 = vector.load %arg9[%c160_145, %c0_146] : memref<256x64xf32, #tpu.memory_space<vmem>>, vector<16x64xf32>
    %cst_147 = arith.constant dense<0.000000e+00> : vector<16x64xf32>
    %184 = tpu.matmul %175, %113, %cst_147 {dimension_numbers = #tpu.dot_dimension_numbers<[1], [0], [0], [1], [0, 0, 1, 1], [], []>} : vector<16x64xbf16>, vector<64x64xbf16>, vector<16x64xf32> -> vector<16x64xf32>
    %185 = arith.addf %183, %184 : vector<16x64xf32>
    %186 = math.tanh %185 : vector<16x64xf32>
    %187 = arith.truncf %186 : vector<16x64xf32> to vector<16x64xbf16>
    %c176_148 = arith.constant 176 : index
    %c0_149 = arith.constant 0 : index
    %188 = vector.load %arg9[%c176_148, %c0_149] : memref<256x64xf32, #tpu.memory_space<vmem>>, vector<16x64xf32>
    %cst_150 = arith.constant dense<0.000000e+00> : vector<16x64xf32>
    %189 = tpu.matmul %180, %113, %cst_150 {dimension_numbers = #tpu.dot_dimension_numbers<[1], [0], [0], [1], [0, 0, 1, 1], [], []>} : vector<16x64xbf16>, vector<64x64xbf16>, vector<16x64xf32> -> vector<16x64xf32>
    %190 = arith.addf %188, %189 : vector<16x64xf32>
    %191 = math.tanh %190 : vector<16x64xf32>
    %192 = arith.truncf %191 : vector<16x64xf32> to vector<16x64xbf16>
    %c160_151 = arith.constant 160 : index
    %c0_152 = arith.constant 0 : index
    %193 = vector.load %arg8[%c160_151, %c0_152] : memref<256x64xbf16, #tpu.memory_space<vmem>>, vector<16x64xbf16>
    tpu.vector_store %arg8[%c160_151, %c0_152], %187 {strides = array<i32>} : memref<256x64xbf16, #tpu.memory_space<vmem>>, vector<16x64xbf16>,
    %c176_153 = arith.constant 176 : index
    %c0_154 = arith.constant 0 : index
    %194 = vector.load %arg8[%c176_153, %c0_154] : memref<256x64xbf16, #tpu.memory_space<vmem>>, vector<16x64xbf16>
    tpu.vector_store %arg8[%c176_153, %c0_154], %192 {strides = array<i32>} : memref<256x64xbf16, #tpu.memory_space<vmem>>, vector<16x64xbf16>,
    %c192_155 = arith.constant 192 : index
    %c0_156 = arith.constant 0 : index
    %195 = vector.load %arg9[%c192_155, %c0_156] : memref<256x64xf32, #tpu.memory_space<vmem>>, vector<16x64xf32>
    %cst_157 = arith.constant dense<0.000000e+00> : vector<16x64xf32>
    %196 = tpu.matmul %187, %113, %cst_157 {dimension_numbers = #tpu.dot_dimension_numbers<[1], [0], [0], [1], [0, 0, 1, 1], [], []>} : vector<16x64xbf16>, vector<64x64xbf16>, vector<16x64xf32> -> vector<16x64xf32>
    %197 = arith.addf %195, %196 : vector<16x64xf32>
    %198 = math.tanh %197 : vector<16x64xf32>
    %199 = arith.truncf %198 : vector<16x64xf32> to vector<16x64xbf16>
    %c208_158 = arith.constant 208 : index
    %c0_159 = arith.constant 0 : index
    %200 = vector.load %arg9[%c208_158, %c0_159] : memref<256x64xf32, #tpu.memory_space<vmem>>, vector<16x64xf32>
    %cst_160 = arith.constant dense<0.000000e+00> : vector<16x64xf32>
    %201 = tpu.matmul %192, %113, %cst_160 {dimension_numbers = #tpu.dot_dimension_numbers<[1], [0], [0], [1], [0, 0, 1, 1], [], []>} : vector<16x64xbf16>, vector<64x64xbf16>, vector<16x64xf32> -> vector<16x64xf32>
    %202 = arith.addf %200, %201 : vector<16x64xf32>
    %203 = math.tanh %202 : vector<16x64xf32>
    %204 = arith.truncf %203 : vector<16x64xf32> to vector<16x64xbf16>
    %c192_161 = arith.constant 192 : index
    %c0_162 = arith.constant 0 : index
    %205 = vector.load %arg8[%c192_161, %c0_162] : memref<256x64xbf16, #tpu.memory_space<vmem>>, vector<16x64xbf16>
    tpu.vector_store %arg8[%c192_161, %c0_162], %199 {strides = array<i32>} : memref<256x64xbf16, #tpu.memory_space<vmem>>, vector<16x64xbf16>,
    %c208_163 = arith.constant 208 : index
    %c0_164 = arith.constant 0 : index
    %206 = vector.load %arg8[%c208_163, %c0_164] : memref<256x64xbf16, #tpu.memory_space<vmem>>, vector<16x64xbf16>
    tpu.vector_store %arg8[%c208_163, %c0_164], %204 {strides = array<i32>} : memref<256x64xbf16, #tpu.memory_space<vmem>>, vector<16x64xbf16>,
    %c224_165 = arith.constant 224 : index
    %c0_166 = arith.constant 0 : index
    %207 = vector.load %arg9[%c224_165, %c0_166] : memref<256x64xf32, #tpu.memory_space<vmem>>, vector<16x64xf32>
    %cst_167 = arith.constant dense<0.000000e+00> : vector<16x64xf32>
    %208 = tpu.matmul %199, %113, %cst_167 {dimension_numbers = #tpu.dot_dimension_numbers<[1], [0], [0], [1], [0, 0, 1, 1], [], []>} : vector<16x64xbf16>, vector<64x64xbf16>, vector<16x64xf32> -> vector<16x64xf32>
    %209 = arith.addf %207, %208 : vector<16x64xf32>
    %210 = math.tanh %209 : vector<16x64xf32>
    %211 = arith.truncf %210 : vector<16x64xf32> to vector<16x64xbf16>
    %c240_168 = arith.constant 240 : index
    %c0_169 = arith.constant 0 : index
    %212 = vector.load %arg9[%c240_168, %c0_169] : memref<256x64xf32, #tpu.memory_space<vmem>>, vector<16x64xf32>
    %cst_170 = arith.constant dense<0.000000e+00> : vector<16x64xf32>
    %213 = tpu.matmul %204, %113, %cst_170 {dimension_numbers = #tpu.dot_dimension_numbers<[1], [0], [0], [1], [0, 0, 1, 1], [], []>} : vector<16x64xbf16>, vector<64x64xbf16>, vector<16x64xf32> -> vector<16x64xf32>
    %214 = arith.addf %212, %213 : vector<16x64xf32>
    %215 = math.tanh %214 : vector<16x64xf32>
    %216 = arith.truncf %215 : vector<16x64xf32> to vector<16x64xbf16>
    %c224_171 = arith.constant 224 : index
    %c0_172 = arith.constant 0 : index
    %217 = vector.load %arg8[%c224_171, %c0_172] : memref<256x64xbf16, #tpu.memory_space<vmem>>, vector<16x64xbf16>
    tpu.vector_store %arg8[%c224_171, %c0_172], %211 {strides = array<i32>} : memref<256x64xbf16, #tpu.memory_space<vmem>>, vector<16x64xbf16>,
    %c240_173 = arith.constant 240 : index
    %c0_174 = arith.constant 0 : index
    %218 = vector.load %arg8[%c240_173, %c0_174] : memref<256x64xbf16, #tpu.memory_space<vmem>>, vector<16x64xbf16>
    tpu.vector_store %arg8[%c240_173, %c0_174], %216 {strides = array<i32>} : memref<256x64xbf16, #tpu.memory_space<vmem>>, vector<16x64xbf16>,
    %c2 = arith.constant 2 : index
    %c0_175 = arith.constant 0 : index
    %c0_176 = arith.constant 0 : index
    %219 = vector.load %arg2[%c2, %c0_175, %c0_176] : memref<9x64x64xbf16, #tpu.memory_space<vmem>>, vector<1x64x64xbf16>
    %220 = vector.shape_cast %219 : vector<1x64x64xbf16> to vector<64x64xbf16>
    %c2_177 = arith.constant 2 : index
    %c0_178 = arith.constant 0 : index
    %c0_179 = arith.constant 0 : index
    %221 = vector.load %arg3[%c2_177, %c0_178, %c0_179] : memref<9x64x64xbf16, #tpu.memory_space<vmem>>, vector<1x64x64xbf16>
    %222 = vector.shape_cast %221 : vector<1x64x64xbf16> to vector<64x64xbf16>
    %c2_180 = arith.constant 2 : index
    %c0_181 = arith.constant 0 : index
    %c0_182 = arith.constant 0 : index
    %223 = vector.load %arg4[%c2_180, %c0_181, %c0_182] : memref<9x1x64xf32, #tpu.memory_space<vmem>>, vector<1x1x64xf32>
    %224 = vector.shape_cast %223 : vector<1x1x64xf32> to vector<1x64xf32>
    %c0_183 = arith.constant 0 : index
    %c0_184 = arith.constant 0 : index
    %225 = vector.load %arg8[%c0_183, %c0_184] : memref<256x64xbf16, #tpu.memory_space<vmem>>, vector<256x64xbf16>
    %cst_185 = arith.constant dense<0.000000e+00> : vector<256x64xf32>
    %226 = tpu.matmul %225, %220, %cst_185 {dimension_numbers = #tpu.dot_dimension_numbers<[1], [0], [0], [1], [0, 0, 1, 1], [], []>} : vector<256x64xbf16>, vector<64x64xbf16>, vector<256x64xf32> -> vector<256x64xf32>
    %227 = vector.broadcast %224 : vector<1x64xf32> to vector<256x64xf32>
    %228 = arith.addf %226, %227 : vector<256x64xf32>
    %c0_186 = arith.constant 0 : index
    %c0_187 = arith.constant 0 : index
    %229 = vector.load %arg9[%c0_186, %c0_187] : memref<256x64xf32, #tpu.memory_space<vmem>>, vector<256x64xf32>
    tpu.vector_store %arg9[%c0_186, %c0_187], %228 {strides = array<i32>} : memref<256x64xf32, #tpu.memory_space<vmem>>, vector<256x64xf32>,
    %cst_188 = arith.constant 0.000000e+00 : bf16
    %230 = vector.broadcast %cst_188 : bf16 to vector<16x64xbf16>
    %cst_189 = arith.constant 0.000000e+00 : bf16
    %231 = vector.broadcast %cst_189 : bf16 to vector<16x64xbf16>
    %c0_190 = arith.constant 0 : index
    %c0_191 = arith.constant 0 : index
    %232 = vector.load %arg9[%c0_190, %c0_191] : memref<256x64xf32, #tpu.memory_space<vmem>>, vector<16x64xf32>
    %cst_192 = arith.constant dense<0.000000e+00> : vector<16x64xf32>
    %233 = tpu.matmul %230, %222, %cst_192 {dimension_numbers = #tpu.dot_dimension_numbers<[1], [0], [0], [1], [0, 0, 1, 1], [], []>} : vector<16x64xbf16>, vector<64x64xbf16>, vector<16x64xf32> -> vector<16x64xf32>
    %234 = arith.addf %232, %233 : vector<16x64xf32>
    %235 = math.tanh %234 : vector<16x64xf32>
    %236 = arith.truncf %235 : vector<16x64xf32> to vector<16x64xbf16>
    %c16_193 = arith.constant 16 : index
    %c0_194 = arith.constant 0 : index
    %237 = vector.load %arg9[%c16_193, %c0_194] : memref<256x64xf32, #tpu.memory_space<vmem>>, vector<16x64xf32>
    %cst_195 = arith.constant dense<0.000000e+00> : vector<16x64xf32>
    %238 = tpu.matmul %231, %222, %cst_195 {dimension_numbers = #tpu.dot_dimension_numbers<[1], [0], [0], [1], [0, 0, 1, 1], [], []>} : vector<16x64xbf16>, vector<64x64xbf16>, vector<16x64xf32> -> vector<16x64xf32>
    %239 = arith.addf %237, %238 : vector<16x64xf32>
    %240 = math.tanh %239 : vector<16x64xf32>
    %241 = arith.truncf %240 : vector<16x64xf32> to vector<16x64xbf16>
    %c0_196 = arith.constant 0 : index
    %c0_197 = arith.constant 0 : index
    %242 = vector.load %arg8[%c0_196, %c0_197] : memref<256x64xbf16, #tpu.memory_space<vmem>>, vector<16x64xbf16>
    tpu.vector_store %arg8[%c0_196, %c0_197], %236 {strides = array<i32>} : memref<256x64xbf16, #tpu.memory_space<vmem>>, vector<16x64xbf16>,
    %c16_198 = arith.constant 16 : index
    %c0_199 = arith.constant 0 : index
    %243 = vector.load %arg8[%c16_198, %c0_199] : memref<256x64xbf16, #tpu.memory_space<vmem>>, vector<16x64xbf16>
    tpu.vector_store %arg8[%c16_198, %c0_199], %241 {strides = array<i32>} : memref<256x64xbf16, #tpu.memory_space<vmem>>, vector<16x64xbf16>,
    %c32_200 = arith.constant 32 : index
    %c0_201 = arith.constant 0 : index
    %244 = vector.load %arg9[%c32_200, %c0_201] : memref<256x64xf32, #tpu.memory_space<vmem>>, vector<16x64xf32>
    %cst_202 = arith.constant dense<0.000000e+00> : vector<16x64xf32>
    %245 = tpu.matmul %236, %222, %cst_202 {dimension_numbers = #tpu.dot_dimension_numbers<[1], [0], [0], [1], [0, 0, 1, 1], [], []>} : vector<16x64xbf16>, vector<64x64xbf16>, vector<16x64xf32> -> vector<16x64xf32>
    %246 = arith.addf %244, %245 : vector<16x64xf32>
    %247 = math.tanh %246 : vector<16x64xf32>
    %248 = arith.truncf %247 : vector<16x64xf32> to vector<16x64xbf16>
    %c48_203 = arith.constant 48 : index
    %c0_204 = arith.constant 0 : index
    %249 = vector.load %arg9[%c48_203, %c0_204] : memref<256x64xf32, #tpu.memory_space<vmem>>, vector<16x64xf32>
    %cst_205 = arith.constant dense<0.000000e+00> : vector<16x64xf32>
    %250 = tpu.matmul %241, %222, %cst_205 {dimension_numbers = #tpu.dot_dimension_numbers<[1], [0], [0], [1], [0, 0, 1, 1], [], []>} : vector<16x64xbf16>, vector<64x64xbf16>, vector<16x64xf32> -> vector<16x64xf32>
    %251 = arith.addf %249, %250 : vector<16x64xf32>
    %252 = math.tanh %251 : vector<16x64xf32>
    %253 = arith.truncf %252 : vector<16x64xf32> to vector<16x64xbf16>
    %c32_206 = arith.constant 32 : index
    %c0_207 = arith.constant 0 : index
    %254 = vector.load %arg8[%c32_206, %c0_207] : memref<256x64xbf16, #tpu.memory_space<vmem>>, vector<16x64xbf16>
    tpu.vector_store %arg8[%c32_206, %c0_207], %248 {strides = array<i32>} : memref<256x64xbf16, #tpu.memory_space<vmem>>, vector<16x64xbf16>,
    %c48_208 = arith.constant 48 : index
    %c0_209 = arith.constant 0 : index
    %255 = vector.load %arg8[%c48_208, %c0_209] : memref<256x64xbf16, #tpu.memory_space<vmem>>, vector<16x64xbf16>
    tpu.vector_store %arg8[%c48_208, %c0_209], %253 {strides = array<i32>} : memref<256x64xbf16, #tpu.memory_space<vmem>>, vector<16x64xbf16>,
    %c64_210 = arith.constant 64 : index
    %c0_211 = arith.constant 0 : index
    %256 = vector.load %arg9[%c64_210, %c0_211] : memref<256x64xf32, #tpu.memory_space<vmem>>, vector<16x64xf32>
    %cst_212 = arith.constant dense<0.000000e+00> : vector<16x64xf32>
    %257 = tpu.matmul %248, %222, %cst_212 {dimension_numbers = #tpu.dot_dimension_numbers<[1], [0], [0], [1], [0, 0, 1, 1], [], []>} : vector<16x64xbf16>, vector<64x64xbf16>, vector<16x64xf32> -> vector<16x64xf32>
    %258 = arith.addf %256, %257 : vector<16x64xf32>
    %259 = math.tanh %258 : vector<16x64xf32>
    %260 = arith.truncf %259 : vector<16x64xf32> to vector<16x64xbf16>
    %c80_213 = arith.constant 80 : index
    %c0_214 = arith.constant 0 : index
    %261 = vector.load %arg9[%c80_213, %c0_214] : memref<256x64xf32, #tpu.memory_space<vmem>>, vector<16x64xf32>
    %cst_215 = arith.constant dense<0.000000e+00> : vector<16x64xf32>
    %262 = tpu.matmul %253, %222, %cst_215 {dimension_numbers = #tpu.dot_dimension_numbers<[1], [0], [0], [1], [0, 0, 1, 1], [], []>} : vector<16x64xbf16>, vector<64x64xbf16>, vector<16x64xf32> -> vector<16x64xf32>
    %263 = arith.addf %261, %262 : vector<16x64xf32>
    %264 = math.tanh %263 : vector<16x64xf32>
    %265 = arith.truncf %264 : vector<16x64xf32> to vector<16x64xbf16>
    %c64_216 = arith.constant 64 : index
    %c0_217 = arith.constant 0 : index
    %266 = vector.load %arg8[%c64_216, %c0_217] : memref<256x64xbf16, #tpu.memory_space<vmem>>, vector<16x64xbf16>
    tpu.vector_store %arg8[%c64_216, %c0_217], %260 {strides = array<i32>} : memref<256x64xbf16, #tpu.memory_space<vmem>>, vector<16x64xbf16>,
    %c80_218 = arith.constant 80 : index
    %c0_219 = arith.constant 0 : index
    %267 = vector.load %arg8[%c80_218, %c0_219] : memref<256x64xbf16, #tpu.memory_space<vmem>>, vector<16x64xbf16>
    tpu.vector_store %arg8[%c80_218, %c0_219], %265 {strides = array<i32>} : memref<256x64xbf16, #tpu.memory_space<vmem>>, vector<16x64xbf16>,
    %c96_220 = arith.constant 96 : index
    %c0_221 = arith.constant 0 : index
    %268 = vector.load %arg9[%c96_220, %c0_221] : memref<256x64xf32, #tpu.memory_space<vmem>>, vector<16x64xf32>
    %cst_222 = arith.constant dense<0.000000e+00> : vector<16x64xf32>
    %269 = tpu.matmul %260, %222, %cst_222 {dimension_numbers = #tpu.dot_dimension_numbers<[1], [0], [0], [1], [0, 0, 1, 1], [], []>} : vector<16x64xbf16>, vector<64x64xbf16>, vector<16x64xf32> -> vector<16x64xf32>
    %270 = arith.addf %268, %269 : vector<16x64xf32>
    %271 = math.tanh %270 : vector<16x64xf32>
    %272 = arith.truncf %271 : vector<16x64xf32> to vector<16x64xbf16>
    %c112_223 = arith.constant 112 : index
    %c0_224 = arith.constant 0 : index
    %273 = vector.load %arg9[%c112_223, %c0_224] : memref<256x64xf32, #tpu.memory_space<vmem>>, vector<16x64xf32>
    %cst_225 = arith.constant dense<0.000000e+00> : vector<16x64xf32>
    %274 = tpu.matmul %265, %222, %cst_225 {dimension_numbers = #tpu.dot_dimension_numbers<[1], [0], [0], [1], [0, 0, 1, 1], [], []>} : vector<16x64xbf16>, vector<64x64xbf16>, vector<16x64xf32> -> vector<16x64xf32>
    %275 = arith.addf %273, %274 : vector<16x64xf32>
    %276 = math.tanh %275 : vector<16x64xf32>
    %277 = arith.truncf %276 : vector<16x64xf32> to vector<16x64xbf16>
    %c96_226 = arith.constant 96 : index
    %c0_227 = arith.constant 0 : index
    %278 = vector.load %arg8[%c96_226, %c0_227] : memref<256x64xbf16, #tpu.memory_space<vmem>>, vector<16x64xbf16>
    tpu.vector_store %arg8[%c96_226, %c0_227], %272 {strides = array<i32>} : memref<256x64xbf16, #tpu.memory_space<vmem>>, vector<16x64xbf16>,
    %c112_228 = arith.constant 112 : index
    %c0_229 = arith.constant 0 : index
    %279 = vector.load %arg8[%c112_228, %c0_229] : memref<256x64xbf16, #tpu.memory_space<vmem>>, vector<16x64xbf16>
    tpu.vector_store %arg8[%c112_228, %c0_229], %277 {strides = array<i32>} : memref<256x64xbf16, #tpu.memory_space<vmem>>, vector<16x64xbf16>,
    %c128_230 = arith.constant 128 : index
    %c0_231 = arith.constant 0 : index
    %280 = vector.load %arg9[%c128_230, %c0_231] : memref<256x64xf32, #tpu.memory_space<vmem>>, vector<16x64xf32>
    %cst_232 = arith.constant dense<0.000000e+00> : vector<16x64xf32>
    %281 = tpu.matmul %272, %222, %cst_232 {dimension_numbers = #tpu.dot_dimension_numbers<[1], [0], [0], [1], [0, 0, 1, 1], [], []>} : vector<16x64xbf16>, vector<64x64xbf16>, vector<16x64xf32> -> vector<16x64xf32>
    %282 = arith.addf %280, %281 : vector<16x64xf32>
    %283 = math.tanh %282 : vector<16x64xf32>
    %284 = arith.truncf %283 : vector<16x64xf32> to vector<16x64xbf16>
    %c144_233 = arith.constant 144 : index
    %c0_234 = arith.constant 0 : index
    %285 = vector.load %arg9[%c144_233, %c0_234] : memref<256x64xf32, #tpu.memory_space<vmem>>, vector<16x64xf32>
    %cst_235 = arith.constant dense<0.000000e+00> : vector<16x64xf32>
    %286 = tpu.matmul %277, %222, %cst_235 {dimension_numbers = #tpu.dot_dimension_numbers<[1], [0], [0], [1], [0, 0, 1, 1], [], []>} : vector<16x64xbf16>, vector<64x64xbf16>, vector<16x64xf32> -> vector<16x64xf32>
    %287 = arith.addf %285, %286 : vector<16x64xf32>
    %288 = math.tanh %287 : vector<16x64xf32>
    %289 = arith.truncf %288 : vector<16x64xf32> to vector<16x64xbf16>
    %c128_236 = arith.constant 128 : index
    %c0_237 = arith.constant 0 : index
    %290 = vector.load %arg8[%c128_236, %c0_237] : memref<256x64xbf16, #tpu.memory_space<vmem>>, vector<16x64xbf16>
    tpu.vector_store %arg8[%c128_236, %c0_237], %284 {strides = array<i32>} : memref<256x64xbf16, #tpu.memory_space<vmem>>, vector<16x64xbf16>,
    %c144_238 = arith.constant 144 : index
    %c0_239 = arith.constant 0 : index
    %291 = vector.load %arg8[%c144_238, %c0_239] : memref<256x64xbf16, #tpu.memory_space<vmem>>, vector<16x64xbf16>
    tpu.vector_store %arg8[%c144_238, %c0_239], %289 {strides = array<i32>} : memref<256x64xbf16, #tpu.memory_space<vmem>>, vector<16x64xbf16>,
    %c160_240 = arith.constant 160 : index
    %c0_241 = arith.constant 0 : index
    %292 = vector.load %arg9[%c160_240, %c0_241] : memref<256x64xf32, #tpu.memory_space<vmem>>, vector<16x64xf32>
    %cst_242 = arith.constant dense<0.000000e+00> : vector<16x64xf32>
    %293 = tpu.matmul %284, %222, %cst_242 {dimension_numbers = #tpu.dot_dimension_numbers<[1], [0], [0], [1], [0, 0, 1, 1], [], []>} : vector<16x64xbf16>, vector<64x64xbf16>, vector<16x64xf32> -> vector<16x64xf32>
    %294 = arith.addf %292, %293 : vector<16x64xf32>
    %295 = math.tanh %294 : vector<16x64xf32>
    %296 = arith.truncf %295 : vector<16x64xf32> to vector<16x64xbf16>
    %c176_243 = arith.constant 176 : index
    %c0_244 = arith.constant 0 : index
    %297 = vector.load %arg9[%c176_243, %c0_244] : memref<256x64xf32, #tpu.memory_space<vmem>>, vector<16x64xf32>
    %cst_245 = arith.constant dense<0.000000e+00> : vector<16x64xf32>
    %298 = tpu.matmul %289, %222, %cst_245 {dimension_numbers = #tpu.dot_dimension_numbers<[1], [0], [0], [1], [0, 0, 1, 1], [], []>} : vector<16x64xbf16>, vector<64x64xbf16>, vector<16x64xf32> -> vector<16x64xf32>
    %299 = arith.addf %297, %298 : vector<16x64xf32>
    %300 = math.tanh %299 : vector<16x64xf32>
    %301 = arith.truncf %300 : vector<16x64xf32> to vector<16x64xbf16>
    %c160_246 = arith.constant 160 : index
    %c0_247 = arith.constant 0 : index
    %302 = vector.load %arg8[%c160_246, %c0_247] : memref<256x64xbf16, #tpu.memory_space<vmem>>, vector<16x64xbf16>
    tpu.vector_store %arg8[%c160_246, %c0_247], %296 {strides = array<i32>} : memref<256x64xbf16, #tpu.memory_space<vmem>>, vector<16x64xbf16>,
    %c176_248 = arith.constant 176 : index
    %c0_249 = arith.constant 0 : index
    %303 = vector.load %arg8[%c176_248, %c0_249] : memref<256x64xbf16, #tpu.memory_space<vmem>>, vector<16x64xbf16>
    tpu.vector_store %arg8[%c176_248, %c0_249], %301 {strides = array<i32>} : memref<256x64xbf16, #tpu.memory_space<vmem>>, vector<16x64xbf16>,
    %c192_250 = arith.constant 192 : index
    %c0_251 = arith.constant 0 : index
    %304 = vector.load %arg9[%c192_250, %c0_251] : memref<256x64xf32, #tpu.memory_space<vmem>>, vector<16x64xf32>
    %cst_252 = arith.constant dense<0.000000e+00> : vector<16x64xf32>
    %305 = tpu.matmul %296, %222, %cst_252 {dimension_numbers = #tpu.dot_dimension_numbers<[1], [0], [0], [1], [0, 0, 1, 1], [], []>} : vector<16x64xbf16>, vector<64x64xbf16>, vector<16x64xf32> -> vector<16x64xf32>
    %306 = arith.addf %304, %305 : vector<16x64xf32>
    %307 = math.tanh %306 : vector<16x64xf32>
    %308 = arith.truncf %307 : vector<16x64xf32> to vector<16x64xbf16>
    %c208_253 = arith.constant 208 : index
    %c0_254 = arith.constant 0 : index
    %309 = vector.load %arg9[%c208_253, %c0_254] : memref<256x64xf32, #tpu.memory_space<vmem>>, vector<16x64xf32>
    %cst_255 = arith.constant dense<0.000000e+00> : vector<16x64xf32>
    %310 = tpu.matmul %301, %222, %cst_255 {dimension_numbers = #tpu.dot_dimension_numbers<[1], [0], [0], [1], [0, 0, 1, 1], [], []>} : vector<16x64xbf16>, vector<64x64xbf16>, vector<16x64xf32> -> vector<16x64xf32>
    %311 = arith.addf %309, %310 : vector<16x64xf32>
    %312 = math.tanh %311 : vector<16x64xf32>
    %313 = arith.truncf %312 : vector<16x64xf32> to vector<16x64xbf16>
    %c192_256 = arith.constant 192 : index
    %c0_257 = arith.constant 0 : index
    %314 = vector.load %arg8[%c192_256, %c0_257] : memref<256x64xbf16, #tpu.memory_space<vmem>>, vector<16x64xbf16>
    tpu.vector_store %arg8[%c192_256, %c0_257], %308 {strides = array<i32>} : memref<256x64xbf16, #tpu.memory_space<vmem>>, vector<16x64xbf16>,
    %c208_258 = arith.constant 208 : index
    %c0_259 = arith.constant 0 : index
    %315 = vector.load %arg8[%c208_258, %c0_259] : memref<256x64xbf16, #tpu.memory_space<vmem>>, vector<16x64xbf16>
    tpu.vector_store %arg8[%c208_258, %c0_259], %313 {strides = array<i32>} : memref<256x64xbf16, #tpu.memory_space<vmem>>, vector<16x64xbf16>,
    %c224_260 = arith.constant 224 : index
    %c0_261 = arith.constant 0 : index
    %316 = vector.load %arg9[%c224_260, %c0_261] : memref<256x64xf32, #tpu.memory_space<vmem>>, vector<16x64xf32>
    %cst_262 = arith.constant dense<0.000000e+00> : vector<16x64xf32>
    %317 = tpu.matmul %308, %222, %cst_262 {dimension_numbers = #tpu.dot_dimension_numbers<[1], [0], [0], [1], [0, 0, 1, 1], [], []>} : vector<16x64xbf16>, vector<64x64xbf16>, vector<16x64xf32> -> vector<16x64xf32>
    %318 = arith.addf %316, %317 : vector<16x64xf32>
    %319 = math.tanh %318 : vector<16x64xf32>
    %320 = arith.truncf %319 : vector<16x64xf32> to vector<16x64xbf16>
    %c240_263 = arith.constant 240 : index
    %c0_264 = arith.constant 0 : index
    %321 = vector.load %arg9[%c240_263, %c0_264] : memref<256x64xf32, #tpu.memory_space<vmem>>, vector<16x64xf32>
    %cst_265 = arith.constant dense<0.000000e+00> : vector<16x64xf32>
    %322 = tpu.matmul %313, %222, %cst_265 {dimension_numbers = #tpu.dot_dimension_numbers<[1], [0], [0], [1], [0, 0, 1, 1], [], []>} : vector<16x64xbf16>, vector<64x64xbf16>, vector<16x64xf32> -> vector<16x64xf32>
    %323 = arith.addf %321, %322 : vector<16x64xf32>
    %324 = math.tanh %323 : vector<16x64xf32>
    %325 = arith.truncf %324 : vector<16x64xf32> to vector<16x64xbf16>
    %c224_266 = arith.constant 224 : index
    %c0_267 = arith.constant 0 : index
    %326 = vector.load %arg8[%c224_266, %c0_267] : memref<256x64xbf16, #tpu.memory_space<vmem>>, vector<16x64xbf16>
    tpu.vector_store %arg8[%c224_266, %c0_267], %320 {strides = array<i32>} : memref<256x64xbf16, #tpu.memory_space<vmem>>, vector<16x64xbf16>,
    %c240_268 = arith.constant 240 : index
    %c0_269 = arith.constant 0 : index
    %327 = vector.load %arg8[%c240_268, %c0_269] : memref<256x64xbf16, #tpu.memory_space<vmem>>, vector<16x64xbf16>
    tpu.vector_store %arg8[%c240_268, %c0_269], %325 {strides = array<i32>} : memref<256x64xbf16, #tpu.memory_space<vmem>>, vector<16x64xbf16>,
    %c3 = arith.constant 3 : index
    %c0_270 = arith.constant 0 : index
    %c0_271 = arith.constant 0 : index
    %328 = vector.load %arg2[%c3, %c0_270, %c0_271] : memref<9x64x64xbf16, #tpu.memory_space<vmem>>, vector<1x64x64xbf16>
    %329 = vector.shape_cast %328 : vector<1x64x64xbf16> to vector<64x64xbf16>
    %c3_272 = arith.constant 3 : index
    %c0_273 = arith.constant 0 : index
    %c0_274 = arith.constant 0 : index
    %330 = vector.load %arg3[%c3_272, %c0_273, %c0_274] : memref<9x64x64xbf16, #tpu.memory_space<vmem>>, vector<1x64x64xbf16>
    %331 = vector.shape_cast %330 : vector<1x64x64xbf16> to vector<64x64xbf16>
    %c3_275 = arith.constant 3 : index
    %c0_276 = arith.constant 0 : index
    %c0_277 = arith.constant 0 : index
    %332 = vector.load %arg4[%c3_275, %c0_276, %c0_277] : memref<9x1x64xf32, #tpu.memory_space<vmem>>, vector<1x1x64xf32>
    %333 = vector.shape_cast %332 : vector<1x1x64xf32> to vector<1x64xf32>
    %c0_278 = arith.constant 0 : index
    %c0_279 = arith.constant 0 : index
    %334 = vector.load %arg8[%c0_278, %c0_279] : memref<256x64xbf16, #tpu.memory_space<vmem>>, vector<256x64xbf16>
    %cst_280 = arith.constant dense<0.000000e+00> : vector<256x64xf32>
    %335 = tpu.matmul %334, %329, %cst_280 {dimension_numbers = #tpu.dot_dimension_numbers<[1], [0], [0], [1], [0, 0, 1, 1], [], []>} : vector<256x64xbf16>, vector<64x64xbf16>, vector<256x64xf32> -> vector<256x64xf32>
    %336 = vector.broadcast %333 : vector<1x64xf32> to vector<256x64xf32>
    %337 = arith.addf %335, %336 : vector<256x64xf32>
    %c0_281 = arith.constant 0 : index
    %c0_282 = arith.constant 0 : index
    %338 = vector.load %arg9[%c0_281, %c0_282] : memref<256x64xf32, #tpu.memory_space<vmem>>, vector<256x64xf32>
    tpu.vector_store %arg9[%c0_281, %c0_282], %337 {strides = array<i32>} : memref<256x64xf32, #tpu.memory_space<vmem>>, vector<256x64xf32>,
    %cst_283 = arith.constant 0.000000e+00 : bf16
    %339 = vector.broadcast %cst_283 : bf16 to vector<16x64xbf16>
    %cst_284 = arith.constant 0.000000e+00 : bf16
    %340 = vector.broadcast %cst_284 : bf16 to vector<16x64xbf16>
    %c0_285 = arith.constant 0 : index
    %c0_286 = arith.constant 0 : index
    %341 = vector.load %arg9[%c0_285, %c0_286] : memref<256x64xf32, #tpu.memory_space<vmem>>, vector<16x64xf32>
    %cst_287 = arith.constant dense<0.000000e+00> : vector<16x64xf32>
    %342 = tpu.matmul %339, %331, %cst_287 {dimension_numbers = #tpu.dot_dimension_numbers<[1], [0], [0], [1], [0, 0, 1, 1], [], []>} : vector<16x64xbf16>, vector<64x64xbf16>, vector<16x64xf32> -> vector<16x64xf32>
    %343 = arith.addf %341, %342 : vector<16x64xf32>
    %344 = math.tanh %343 : vector<16x64xf32>
    %345 = arith.truncf %344 : vector<16x64xf32> to vector<16x64xbf16>
    %c16_288 = arith.constant 16 : index
    %c0_289 = arith.constant 0 : index
    %346 = vector.load %arg9[%c16_288, %c0_289] : memref<256x64xf32, #tpu.memory_space<vmem>>, vector<16x64xf32>
    %cst_290 = arith.constant dense<0.000000e+00> : vector<16x64xf32>
    %347 = tpu.matmul %340, %331, %cst_290 {dimension_numbers = #tpu.dot_dimension_numbers<[1], [0], [0], [1], [0, 0, 1, 1], [], []>} : vector<16x64xbf16>, vector<64x64xbf16>, vector<16x64xf32> -> vector<16x64xf32>
    %348 = arith.addf %346, %347 : vector<16x64xf32>
    %349 = math.tanh %348 : vector<16x64xf32>
    %350 = arith.truncf %349 : vector<16x64xf32> to vector<16x64xbf16>
    %c0_291 = arith.constant 0 : index
    %c0_292 = arith.constant 0 : index
    %351 = vector.load %arg8[%c0_291, %c0_292] : memref<256x64xbf16, #tpu.memory_space<vmem>>, vector<16x64xbf16>
    tpu.vector_store %arg8[%c0_291, %c0_292], %345 {strides = array<i32>} : memref<256x64xbf16, #tpu.memory_space<vmem>>, vector<16x64xbf16>,
    %c16_293 = arith.constant 16 : index
    %c0_294 = arith.constant 0 : index
    %352 = vector.load %arg8[%c16_293, %c0_294] : memref<256x64xbf16, #tpu.memory_space<vmem>>, vector<16x64xbf16>
    tpu.vector_store %arg8[%c16_293, %c0_294], %350 {strides = array<i32>} : memref<256x64xbf16, #tpu.memory_space<vmem>>, vector<16x64xbf16>,
    %c32_295 = arith.constant 32 : index
    %c0_296 = arith.constant 0 : index
    %353 = vector.load %arg9[%c32_295, %c0_296] : memref<256x64xf32, #tpu.memory_space<vmem>>, vector<16x64xf32>
    %cst_297 = arith.constant dense<0.000000e+00> : vector<16x64xf32>
    %354 = tpu.matmul %345, %331, %cst_297 {dimension_numbers = #tpu.dot_dimension_numbers<[1], [0], [0], [1], [0, 0, 1, 1], [], []>} : vector<16x64xbf16>, vector<64x64xbf16>, vector<16x64xf32> -> vector<16x64xf32>
    %355 = arith.addf %353, %354 : vector<16x64xf32>
    %356 = math.tanh %355 : vector<16x64xf32>
    %357 = arith.truncf %356 : vector<16x64xf32> to vector<16x64xbf16>
    %c48_298 = arith.constant 48 : index
    %c0_299 = arith.constant 0 : index
    %358 = vector.load %arg9[%c48_298, %c0_299] : memref<256x64xf32, #tpu.memory_space<vmem>>, vector<16x64xf32>
    %cst_300 = arith.constant dense<0.000000e+00> : vector<16x64xf32>
    %359 = tpu.matmul %350, %331, %cst_300 {dimension_numbers = #tpu.dot_dimension_numbers<[1], [0], [0], [1], [0, 0, 1, 1], [], []>} : vector<16x64xbf16>, vector<64x64xbf16>, vector<16x64xf32> -> vector<16x64xf32>
    %360 = arith.addf %358, %359 : vector<16x64xf32>
    %361 = math.tanh %360 : vector<16x64xf32>
    %362 = arith.truncf %361 : vector<16x64xf32> to vector<16x64xbf16>
    %c32_301 = arith.constant 32 : index
    %c0_302 = arith.constant 0 : index
    %363 = vector.load %arg8[%c32_301, %c0_302] : memref<256x64xbf16, #tpu.memory_space<vmem>>, vector<16x64xbf16>
    tpu.vector_store %arg8[%c32_301, %c0_302], %357 {strides = array<i32>} : memref<256x64xbf16, #tpu.memory_space<vmem>>, vector<16x64xbf16>,
    %c48_303 = arith.constant 48 : index
    %c0_304 = arith.constant 0 : index
    %364 = vector.load %arg8[%c48_303, %c0_304] : memref<256x64xbf16, #tpu.memory_space<vmem>>, vector<16x64xbf16>
    tpu.vector_store %arg8[%c48_303, %c0_304], %362 {strides = array<i32>} : memref<256x64xbf16, #tpu.memory_space<vmem>>, vector<16x64xbf16>,
    %c64_305 = arith.constant 64 : index
    %c0_306 = arith.constant 0 : index
    %365 = vector.load %arg9[%c64_305, %c0_306] : memref<256x64xf32, #tpu.memory_space<vmem>>, vector<16x64xf32>
    %cst_307 = arith.constant dense<0.000000e+00> : vector<16x64xf32>
    %366 = tpu.matmul %357, %331, %cst_307 {dimension_numbers = #tpu.dot_dimension_numbers<[1], [0], [0], [1], [0, 0, 1, 1], [], []>} : vector<16x64xbf16>, vector<64x64xbf16>, vector<16x64xf32> -> vector<16x64xf32>
    %367 = arith.addf %365, %366 : vector<16x64xf32>
    %368 = math.tanh %367 : vector<16x64xf32>
    %369 = arith.truncf %368 : vector<16x64xf32> to vector<16x64xbf16>
    %c80_308 = arith.constant 80 : index
    %c0_309 = arith.constant 0 : index
    %370 = vector.load %arg9[%c80_308, %c0_309] : memref<256x64xf32, #tpu.memory_space<vmem>>, vector<16x64xf32>
    %cst_310 = arith.constant dense<0.000000e+00> : vector<16x64xf32>
    %371 = tpu.matmul %362, %331, %cst_310 {dimension_numbers = #tpu.dot_dimension_numbers<[1], [0], [0], [1], [0, 0, 1, 1], [], []>} : vector<16x64xbf16>, vector<64x64xbf16>, vector<16x64xf32> -> vector<16x64xf32>
    %372 = arith.addf %370, %371 : vector<16x64xf32>
    %373 = math.tanh %372 : vector<16x64xf32>
    %374 = arith.truncf %373 : vector<16x64xf32> to vector<16x64xbf16>
    %c64_311 = arith.constant 64 : index
    %c0_312 = arith.constant 0 : index
    %375 = vector.load %arg8[%c64_311, %c0_312] : memref<256x64xbf16, #tpu.memory_space<vmem>>, vector<16x64xbf16>
    tpu.vector_store %arg8[%c64_311, %c0_312], %369 {strides = array<i32>} : memref<256x64xbf16, #tpu.memory_space<vmem>>, vector<16x64xbf16>,
    %c80_313 = arith.constant 80 : index
    %c0_314 = arith.constant 0 : index
    %376 = vector.load %arg8[%c80_313, %c0_314] : memref<256x64xbf16, #tpu.memory_space<vmem>>, vector<16x64xbf16>
    tpu.vector_store %arg8[%c80_313, %c0_314], %374 {strides = array<i32>} : memref<256x64xbf16, #tpu.memory_space<vmem>>, vector<16x64xbf16>,
    %c96_315 = arith.constant 96 : index
    %c0_316 = arith.constant 0 : index
    %377 = vector.load %arg9[%c96_315, %c0_316] : memref<256x64xf32, #tpu.memory_space<vmem>>, vector<16x64xf32>
    %cst_317 = arith.constant dense<0.000000e+00> : vector<16x64xf32>
    %378 = tpu.matmul %369, %331, %cst_317 {dimension_numbers = #tpu.dot_dimension_numbers<[1], [0], [0], [1], [0, 0, 1, 1], [], []>} : vector<16x64xbf16>, vector<64x64xbf16>, vector<16x64xf32> -> vector<16x64xf32>
    %379 = arith.addf %377, %378 : vector<16x64xf32>
    %380 = math.tanh %379 : vector<16x64xf32>
    %381 = arith.truncf %380 : vector<16x64xf32> to vector<16x64xbf16>
    %c112_318 = arith.constant 112 : index
    %c0_319 = arith.constant 0 : index
    %382 = vector.load %arg9[%c112_318, %c0_319] : memref<256x64xf32, #tpu.memory_space<vmem>>, vector<16x64xf32>
    %cst_320 = arith.constant dense<0.000000e+00> : vector<16x64xf32>
    %383 = tpu.matmul %374, %331, %cst_320 {dimension_numbers = #tpu.dot_dimension_numbers<[1], [0], [0], [1], [0, 0, 1, 1], [], []>} : vector<16x64xbf16>, vector<64x64xbf16>, vector<16x64xf32> -> vector<16x64xf32>
    %384 = arith.addf %382, %383 : vector<16x64xf32>
    %385 = math.tanh %384 : vector<16x64xf32>
    %386 = arith.truncf %385 : vector<16x64xf32> to vector<16x64xbf16>
    %c96_321 = arith.constant 96 : index
    %c0_322 = arith.constant 0 : index
    %387 = vector.load %arg8[%c96_321, %c0_322] : memref<256x64xbf16, #tpu.memory_space<vmem>>, vector<16x64xbf16>
    tpu.vector_store %arg8[%c96_321, %c0_322], %381 {strides = array<i32>} : memref<256x64xbf16, #tpu.memory_space<vmem>>, vector<16x64xbf16>,
    %c112_323 = arith.constant 112 : index
    %c0_324 = arith.constant 0 : index
    %388 = vector.load %arg8[%c112_323, %c0_324] : memref<256x64xbf16, #tpu.memory_space<vmem>>, vector<16x64xbf16>
    tpu.vector_store %arg8[%c112_323, %c0_324], %386 {strides = array<i32>} : memref<256x64xbf16, #tpu.memory_space<vmem>>, vector<16x64xbf16>,
    %c128_325 = arith.constant 128 : index
    %c0_326 = arith.constant 0 : index
    %389 = vector.load %arg9[%c128_325, %c0_326] : memref<256x64xf32, #tpu.memory_space<vmem>>, vector<16x64xf32>
    %cst_327 = arith.constant dense<0.000000e+00> : vector<16x64xf32>
    %390 = tpu.matmul %381, %331, %cst_327 {dimension_numbers = #tpu.dot_dimension_numbers<[1], [0], [0], [1], [0, 0, 1, 1], [], []>} : vector<16x64xbf16>, vector<64x64xbf16>, vector<16x64xf32> -> vector<16x64xf32>
    %391 = arith.addf %389, %390 : vector<16x64xf32>
    %392 = math.tanh %391 : vector<16x64xf32>
    %393 = arith.truncf %392 : vector<16x64xf32> to vector<16x64xbf16>
    %c144_328 = arith.constant 144 : index
    %c0_329 = arith.constant 0 : index
    %394 = vector.load %arg9[%c144_328, %c0_329] : memref<256x64xf32, #tpu.memory_space<vmem>>, vector<16x64xf32>
    %cst_330 = arith.constant dense<0.000000e+00> : vector<16x64xf32>
    %395 = tpu.matmul %386, %331, %cst_330 {dimension_numbers = #tpu.dot_dimension_numbers<[1], [0], [0], [1], [0, 0, 1, 1], [], []>} : vector<16x64xbf16>, vector<64x64xbf16>, vector<16x64xf32> -> vector<16x64xf32>
    %396 = arith.addf %394, %395 : vector<16x64xf32>
    %397 = math.tanh %396 : vector<16x64xf32>
    %398 = arith.truncf %397 : vector<16x64xf32> to vector<16x64xbf16>
    %c128_331 = arith.constant 128 : index
    %c0_332 = arith.constant 0 : index
    %399 = vector.load %arg8[%c128_331, %c0_332] : memref<256x64xbf16, #tpu.memory_space<vmem>>, vector<16x64xbf16>
    tpu.vector_store %arg8[%c128_331, %c0_332], %393 {strides = array<i32>} : memref<256x64xbf16, #tpu.memory_space<vmem>>, vector<16x64xbf16>,
    %c144_333 = arith.constant 144 : index
    %c0_334 = arith.constant 0 : index
    %400 = vector.load %arg8[%c144_333, %c0_334] : memref<256x64xbf16, #tpu.memory_space<vmem>>, vector<16x64xbf16>
    tpu.vector_store %arg8[%c144_333, %c0_334], %398 {strides = array<i32>} : memref<256x64xbf16, #tpu.memory_space<vmem>>, vector<16x64xbf16>,
    %c160_335 = arith.constant 160 : index
    %c0_336 = arith.constant 0 : index
    %401 = vector.load %arg9[%c160_335, %c0_336] : memref<256x64xf32, #tpu.memory_space<vmem>>, vector<16x64xf32>
    %cst_337 = arith.constant dense<0.000000e+00> : vector<16x64xf32>
    %402 = tpu.matmul %393, %331, %cst_337 {dimension_numbers = #tpu.dot_dimension_numbers<[1], [0], [0], [1], [0, 0, 1, 1], [], []>} : vector<16x64xbf16>, vector<64x64xbf16>, vector<16x64xf32> -> vector<16x64xf32>
    %403 = arith.addf %401, %402 : vector<16x64xf32>
    %404 = math.tanh %403 : vector<16x64xf32>
    %405 = arith.truncf %404 : vector<16x64xf32> to vector<16x64xbf16>
    %c176_338 = arith.constant 176 : index
    %c0_339 = arith.constant 0 : index
    %406 = vector.load %arg9[%c176_338, %c0_339] : memref<256x64xf32, #tpu.memory_space<vmem>>, vector<16x64xf32>
    %cst_340 = arith.constant dense<0.000000e+00> : vector<16x64xf32>
    %407 = tpu.matmul %398, %331, %cst_340 {dimension_numbers = #tpu.dot_dimension_numbers<[1], [0], [0], [1], [0, 0, 1, 1], [], []>} : vector<16x64xbf16>, vector<64x64xbf16>, vector<16x64xf32> -> vector<16x64xf32>
    %408 = arith.addf %406, %407 : vector<16x64xf32>
    %409 = math.tanh %408 : vector<16x64xf32>
    %410 = arith.truncf %409 : vector<16x64xf32> to vector<16x64xbf16>
    %c160_341 = arith.constant 160 : index
    %c0_342 = arith.constant 0 : index
    %411 = vector.load %arg8[%c160_341, %c0_342] : memref<256x64xbf16, #tpu.memory_space<vmem>>, vector<16x64xbf16>
    tpu.vector_store %arg8[%c160_341, %c0_342], %405 {strides = array<i32>} : memref<256x64xbf16, #tpu.memory_space<vmem>>, vector<16x64xbf16>,
    %c176_343 = arith.constant 176 : index
    %c0_344 = arith.constant 0 : index
    %412 = vector.load %arg8[%c176_343, %c0_344] : memref<256x64xbf16, #tpu.memory_space<vmem>>, vector<16x64xbf16>
    tpu.vector_store %arg8[%c176_343, %c0_344], %410 {strides = array<i32>} : memref<256x64xbf16, #tpu.memory_space<vmem>>, vector<16x64xbf16>,
    %c192_345 = arith.constant 192 : index
    %c0_346 = arith.constant 0 : index
    %413 = vector.load %arg9[%c192_345, %c0_346] : memref<256x64xf32, #tpu.memory_space<vmem>>, vector<16x64xf32>
    %cst_347 = arith.constant dense<0.000000e+00> : vector<16x64xf32>
    %414 = tpu.matmul %405, %331, %cst_347 {dimension_numbers = #tpu.dot_dimension_numbers<[1], [0], [0], [1], [0, 0, 1, 1], [], []>} : vector<16x64xbf16>, vector<64x64xbf16>, vector<16x64xf32> -> vector<16x64xf32>
    %415 = arith.addf %413, %414 : vector<16x64xf32>
    %416 = math.tanh %415 : vector<16x64xf32>
    %417 = arith.truncf %416 : vector<16x64xf32> to vector<16x64xbf16>
    %c208_348 = arith.constant 208 : index
    %c0_349 = arith.constant 0 : index
    %418 = vector.load %arg9[%c208_348, %c0_349] : memref<256x64xf32, #tpu.memory_space<vmem>>, vector<16x64xf32>
    %cst_350 = arith.constant dense<0.000000e+00> : vector<16x64xf32>
    %419 = tpu.matmul %410, %331, %cst_350 {dimension_numbers = #tpu.dot_dimension_numbers<[1], [0], [0], [1], [0, 0, 1, 1], [], []>} : vector<16x64xbf16>, vector<64x64xbf16>, vector<16x64xf32> -> vector<16x64xf32>
    %420 = arith.addf %418, %419 : vector<16x64xf32>
    %421 = math.tanh %420 : vector<16x64xf32>
    %422 = arith.truncf %421 : vector<16x64xf32> to vector<16x64xbf16>
    %c192_351 = arith.constant 192 : index
    %c0_352 = arith.constant 0 : index
    %423 = vector.load %arg8[%c192_351, %c0_352] : memref<256x64xbf16, #tpu.memory_space<vmem>>, vector<16x64xbf16>
    tpu.vector_store %arg8[%c192_351, %c0_352], %417 {strides = array<i32>} : memref<256x64xbf16, #tpu.memory_space<vmem>>, vector<16x64xbf16>,
    %c208_353 = arith.constant 208 : index
    %c0_354 = arith.constant 0 : index
    %424 = vector.load %arg8[%c208_353, %c0_354] : memref<256x64xbf16, #tpu.memory_space<vmem>>, vector<16x64xbf16>
    tpu.vector_store %arg8[%c208_353, %c0_354], %422 {strides = array<i32>} : memref<256x64xbf16, #tpu.memory_space<vmem>>, vector<16x64xbf16>,
    %c224_355 = arith.constant 224 : index
    %c0_356 = arith.constant 0 : index
    %425 = vector.load %arg9[%c224_355, %c0_356] : memref<256x64xf32, #tpu.memory_space<vmem>>, vector<16x64xf32>
    %cst_357 = arith.constant dense<0.000000e+00> : vector<16x64xf32>
    %426 = tpu.matmul %417, %331, %cst_357 {dimension_numbers = #tpu.dot_dimension_numbers<[1], [0], [0], [1], [0, 0, 1, 1], [], []>} : vector<16x64xbf16>, vector<64x64xbf16>, vector<16x64xf32> -> vector<16x64xf32>
    %427 = arith.addf %425, %426 : vector<16x64xf32>
    %428 = math.tanh %427 : vector<16x64xf32>
    %429 = arith.truncf %428 : vector<16x64xf32> to vector<16x64xbf16>
    %c240_358 = arith.constant 240 : index
    %c0_359 = arith.constant 0 : index
    %430 = vector.load %arg9[%c240_358, %c0_359] : memref<256x64xf32, #tpu.memory_space<vmem>>, vector<16x64xf32>
    %cst_360 = arith.constant dense<0.000000e+00> : vector<16x64xf32>
    %431 = tpu.matmul %422, %331, %cst_360 {dimension_numbers = #tpu.dot_dimension_numbers<[1], [0], [0], [1], [0, 0, 1, 1], [], []>} : vector<16x64xbf16>, vector<64x64xbf16>, vector<16x64xf32> -> vector<16x64xf32>
    %432 = arith.addf %430, %431 : vector<16x64xf32>
    %433 = math.tanh %432 : vector<16x64xf32>
    %434 = arith.truncf %433 : vector<16x64xf32> to vector<16x64xbf16>
    %c224_361 = arith.constant 224 : index
    %c0_362 = arith.constant 0 : index
    %435 = vector.load %arg8[%c224_361, %c0_362] : memref<256x64xbf16, #tpu.memory_space<vmem>>, vector<16x64xbf16>
    tpu.vector_store %arg8[%c224_361, %c0_362], %429 {strides = array<i32>} : memref<256x64xbf16, #tpu.memory_space<vmem>>, vector<16x64xbf16>,
    %c240_363 = arith.constant 240 : index
    %c0_364 = arith.constant 0 : index
    %436 = vector.load %arg8[%c240_363, %c0_364] : memref<256x64xbf16, #tpu.memory_space<vmem>>, vector<16x64xbf16>
    tpu.vector_store %arg8[%c240_363, %c0_364], %434 {strides = array<i32>} : memref<256x64xbf16, #tpu.memory_space<vmem>>, vector<16x64xbf16>,
    %c4 = arith.constant 4 : index
    %c0_365 = arith.constant 0 : index
    %c0_366 = arith.constant 0 : index
    %437 = vector.load %arg2[%c4, %c0_365, %c0_366] : memref<9x64x64xbf16, #tpu.memory_space<vmem>>, vector<1x64x64xbf16>
    %438 = vector.shape_cast %437 : vector<1x64x64xbf16> to vector<64x64xbf16>
    %c4_367 = arith.constant 4 : index
    %c0_368 = arith.constant 0 : index
    %c0_369 = arith.constant 0 : index
    %439 = vector.load %arg3[%c4_367, %c0_368, %c0_369] : memref<9x64x64xbf16, #tpu.memory_space<vmem>>, vector<1x64x64xbf16>
    %440 = vector.shape_cast %439 : vector<1x64x64xbf16> to vector<64x64xbf16>
    %c4_370 = arith.constant 4 : index
    %c0_371 = arith.constant 0 : index
    %c0_372 = arith.constant 0 : index
    %441 = vector.load %arg4[%c4_370, %c0_371, %c0_372] : memref<9x1x64xf32, #tpu.memory_space<vmem>>, vector<1x1x64xf32>
    %442 = vector.shape_cast %441 : vector<1x1x64xf32> to vector<1x64xf32>
    %c0_373 = arith.constant 0 : index
    %c0_374 = arith.constant 0 : index
    %443 = vector.load %arg8[%c0_373, %c0_374] : memref<256x64xbf16, #tpu.memory_space<vmem>>, vector<256x64xbf16>
    %cst_375 = arith.constant dense<0.000000e+00> : vector<256x64xf32>
    %444 = tpu.matmul %443, %438, %cst_375 {dimension_numbers = #tpu.dot_dimension_numbers<[1], [0], [0], [1], [0, 0, 1, 1], [], []>} : vector<256x64xbf16>, vector<64x64xbf16>, vector<256x64xf32> -> vector<256x64xf32>
    %445 = vector.broadcast %442 : vector<1x64xf32> to vector<256x64xf32>
    %446 = arith.addf %444, %445 : vector<256x64xf32>
    %c0_376 = arith.constant 0 : index
    %c0_377 = arith.constant 0 : index
    %447 = vector.load %arg9[%c0_376, %c0_377] : memref<256x64xf32, #tpu.memory_space<vmem>>, vector<256x64xf32>
    tpu.vector_store %arg9[%c0_376, %c0_377], %446 {strides = array<i32>} : memref<256x64xf32, #tpu.memory_space<vmem>>, vector<256x64xf32>,
    %cst_378 = arith.constant 0.000000e+00 : bf16
    %448 = vector.broadcast %cst_378 : bf16 to vector<16x64xbf16>
    %cst_379 = arith.constant 0.000000e+00 : bf16
    %449 = vector.broadcast %cst_379 : bf16 to vector<16x64xbf16>
    %c0_380 = arith.constant 0 : index
    %c0_381 = arith.constant 0 : index
    %450 = vector.load %arg9[%c0_380, %c0_381] : memref<256x64xf32, #tpu.memory_space<vmem>>, vector<16x64xf32>
    %cst_382 = arith.constant dense<0.000000e+00> : vector<16x64xf32>
    %451 = tpu.matmul %448, %440, %cst_382 {dimension_numbers = #tpu.dot_dimension_numbers<[1], [0], [0], [1], [0, 0, 1, 1], [], []>} : vector<16x64xbf16>, vector<64x64xbf16>, vector<16x64xf32> -> vector<16x64xf32>
    %452 = arith.addf %450, %451 : vector<16x64xf32>
    %453 = math.tanh %452 : vector<16x64xf32>
    %454 = arith.truncf %453 : vector<16x64xf32> to vector<16x64xbf16>
    %c16_383 = arith.constant 16 : index
    %c0_384 = arith.constant 0 : index
    %455 = vector.load %arg9[%c16_383, %c0_384] : memref<256x64xf32, #tpu.memory_space<vmem>>, vector<16x64xf32>
    %cst_385 = arith.constant dense<0.000000e+00> : vector<16x64xf32>
    %456 = tpu.matmul %449, %440, %cst_385 {dimension_numbers = #tpu.dot_dimension_numbers<[1], [0], [0], [1], [0, 0, 1, 1], [], []>} : vector<16x64xbf16>, vector<64x64xbf16>, vector<16x64xf32> -> vector<16x64xf32>
    %457 = arith.addf %455, %456 : vector<16x64xf32>
    %458 = math.tanh %457 : vector<16x64xf32>
    %459 = arith.truncf %458 : vector<16x64xf32> to vector<16x64xbf16>
    %c0_386 = arith.constant 0 : index
    %c0_387 = arith.constant 0 : index
    %460 = vector.load %arg8[%c0_386, %c0_387] : memref<256x64xbf16, #tpu.memory_space<vmem>>, vector<16x64xbf16>
    tpu.vector_store %arg8[%c0_386, %c0_387], %454 {strides = array<i32>} : memref<256x64xbf16, #tpu.memory_space<vmem>>, vector<16x64xbf16>,
    %c16_388 = arith.constant 16 : index
    %c0_389 = arith.constant 0 : index
    %461 = vector.load %arg8[%c16_388, %c0_389] : memref<256x64xbf16, #tpu.memory_space<vmem>>, vector<16x64xbf16>
    tpu.vector_store %arg8[%c16_388, %c0_389], %459 {strides = array<i32>} : memref<256x64xbf16, #tpu.memory_space<vmem>>, vector<16x64xbf16>,
    %c32_390 = arith.constant 32 : index
    %c0_391 = arith.constant 0 : index
    %462 = vector.load %arg9[%c32_390, %c0_391] : memref<256x64xf32, #tpu.memory_space<vmem>>, vector<16x64xf32>
    %cst_392 = arith.constant dense<0.000000e+00> : vector<16x64xf32>
    %463 = tpu.matmul %454, %440, %cst_392 {dimension_numbers = #tpu.dot_dimension_numbers<[1], [0], [0], [1], [0, 0, 1, 1], [], []>} : vector<16x64xbf16>, vector<64x64xbf16>, vector<16x64xf32> -> vector<16x64xf32>
    %464 = arith.addf %462, %463 : vector<16x64xf32>
    %465 = math.tanh %464 : vector<16x64xf32>
    %466 = arith.truncf %465 : vector<16x64xf32> to vector<16x64xbf16>
    %c48_393 = arith.constant 48 : index
    %c0_394 = arith.constant 0 : index
    %467 = vector.load %arg9[%c48_393, %c0_394] : memref<256x64xf32, #tpu.memory_space<vmem>>, vector<16x64xf32>
    %cst_395 = arith.constant dense<0.000000e+00> : vector<16x64xf32>
    %468 = tpu.matmul %459, %440, %cst_395 {dimension_numbers = #tpu.dot_dimension_numbers<[1], [0], [0], [1], [0, 0, 1, 1], [], []>} : vector<16x64xbf16>, vector<64x64xbf16>, vector<16x64xf32> -> vector<16x64xf32>
    %469 = arith.addf %467, %468 : vector<16x64xf32>
    %470 = math.tanh %469 : vector<16x64xf32>
    %471 = arith.truncf %470 : vector<16x64xf32> to vector<16x64xbf16>
    %c32_396 = arith.constant 32 : index
    %c0_397 = arith.constant 0 : index
    %472 = vector.load %arg8[%c32_396, %c0_397] : memref<256x64xbf16, #tpu.memory_space<vmem>>, vector<16x64xbf16>
    tpu.vector_store %arg8[%c32_396, %c0_397], %466 {strides = array<i32>} : memref<256x64xbf16, #tpu.memory_space<vmem>>, vector<16x64xbf16>,
    %c48_398 = arith.constant 48 : index
    %c0_399 = arith.constant 0 : index
    %473 = vector.load %arg8[%c48_398, %c0_399] : memref<256x64xbf16, #tpu.memory_space<vmem>>, vector<16x64xbf16>
    tpu.vector_store %arg8[%c48_398, %c0_399], %471 {strides = array<i32>} : memref<256x64xbf16, #tpu.memory_space<vmem>>, vector<16x64xbf16>,
    %c64_400 = arith.constant 64 : index
    %c0_401 = arith.constant 0 : index
    %474 = vector.load %arg9[%c64_400, %c0_401] : memref<256x64xf32, #tpu.memory_space<vmem>>, vector<16x64xf32>
    %cst_402 = arith.constant dense<0.000000e+00> : vector<16x64xf32>
    %475 = tpu.matmul %466, %440, %cst_402 {dimension_numbers = #tpu.dot_dimension_numbers<[1], [0], [0], [1], [0, 0, 1, 1], [], []>} : vector<16x64xbf16>, vector<64x64xbf16>, vector<16x64xf32> -> vector<16x64xf32>
    %476 = arith.addf %474, %475 : vector<16x64xf32>
    %477 = math.tanh %476 : vector<16x64xf32>
    %478 = arith.truncf %477 : vector<16x64xf32> to vector<16x64xbf16>
    %c80_403 = arith.constant 80 : index
    %c0_404 = arith.constant 0 : index
    %479 = vector.load %arg9[%c80_403, %c0_404] : memref<256x64xf32, #tpu.memory_space<vmem>>, vector<16x64xf32>
    %cst_405 = arith.constant dense<0.000000e+00> : vector<16x64xf32>
    %480 = tpu.matmul %471, %440, %cst_405 {dimension_numbers = #tpu.dot_dimension_numbers<[1], [0], [0], [1], [0, 0, 1, 1], [], []>} : vector<16x64xbf16>, vector<64x64xbf16>, vector<16x64xf32> -> vector<16x64xf32>
    %481 = arith.addf %479, %480 : vector<16x64xf32>
    %482 = math.tanh %481 : vector<16x64xf32>
    %483 = arith.truncf %482 : vector<16x64xf32> to vector<16x64xbf16>
    %c64_406 = arith.constant 64 : index
    %c0_407 = arith.constant 0 : index
    %484 = vector.load %arg8[%c64_406, %c0_407] : memref<256x64xbf16, #tpu.memory_space<vmem>>, vector<16x64xbf16>
    tpu.vector_store %arg8[%c64_406, %c0_407], %478 {strides = array<i32>} : memref<256x64xbf16, #tpu.memory_space<vmem>>, vector<16x64xbf16>,
    %c80_408 = arith.constant 80 : index
    %c0_409 = arith.constant 0 : index
    %485 = vector.load %arg8[%c80_408, %c0_409] : memref<256x64xbf16, #tpu.memory_space<vmem>>, vector<16x64xbf16>
    tpu.vector_store %arg8[%c80_408, %c0_409], %483 {strides = array<i32>} : memref<256x64xbf16, #tpu.memory_space<vmem>>, vector<16x64xbf16>,
    %c96_410 = arith.constant 96 : index
    %c0_411 = arith.constant 0 : index
    %486 = vector.load %arg9[%c96_410, %c0_411] : memref<256x64xf32, #tpu.memory_space<vmem>>, vector<16x64xf32>
    %cst_412 = arith.constant dense<0.000000e+00> : vector<16x64xf32>
    %487 = tpu.matmul %478, %440, %cst_412 {dimension_numbers = #tpu.dot_dimension_numbers<[1], [0], [0], [1], [0, 0, 1, 1], [], []>} : vector<16x64xbf16>, vector<64x64xbf16>, vector<16x64xf32> -> vector<16x64xf32>
    %488 = arith.addf %486, %487 : vector<16x64xf32>
    %489 = math.tanh %488 : vector<16x64xf32>
    %490 = arith.truncf %489 : vector<16x64xf32> to vector<16x64xbf16>
    %c112_413 = arith.constant 112 : index
    %c0_414 = arith.constant 0 : index
    %491 = vector.load %arg9[%c112_413, %c0_414] : memref<256x64xf32, #tpu.memory_space<vmem>>, vector<16x64xf32>
    %cst_415 = arith.constant dense<0.000000e+00> : vector<16x64xf32>
    %492 = tpu.matmul %483, %440, %cst_415 {dimension_numbers = #tpu.dot_dimension_numbers<[1], [0], [0], [1], [0, 0, 1, 1], [], []>} : vector<16x64xbf16>, vector<64x64xbf16>, vector<16x64xf32> -> vector<16x64xf32>
    %493 = arith.addf %491, %492 : vector<16x64xf32>
    %494 = math.tanh %493 : vector<16x64xf32>
    %495 = arith.truncf %494 : vector<16x64xf32> to vector<16x64xbf16>
    %c96_416 = arith.constant 96 : index
    %c0_417 = arith.constant 0 : index
    %496 = vector.load %arg8[%c96_416, %c0_417] : memref<256x64xbf16, #tpu.memory_space<vmem>>, vector<16x64xbf16>
    tpu.vector_store %arg8[%c96_416, %c0_417], %490 {strides = array<i32>} : memref<256x64xbf16, #tpu.memory_space<vmem>>, vector<16x64xbf16>,
    %c112_418 = arith.constant 112 : index
    %c0_419 = arith.constant 0 : index
    %497 = vector.load %arg8[%c112_418, %c0_419] : memref<256x64xbf16, #tpu.memory_space<vmem>>, vector<16x64xbf16>
    tpu.vector_store %arg8[%c112_418, %c0_419], %495 {strides = array<i32>} : memref<256x64xbf16, #tpu.memory_space<vmem>>, vector<16x64xbf16>,
    %c128_420 = arith.constant 128 : index
    %c0_421 = arith.constant 0 : index
    %498 = vector.load %arg9[%c128_420, %c0_421] : memref<256x64xf32, #tpu.memory_space<vmem>>, vector<16x64xf32>
    %cst_422 = arith.constant dense<0.000000e+00> : vector<16x64xf32>
    %499 = tpu.matmul %490, %440, %cst_422 {dimension_numbers = #tpu.dot_dimension_numbers<[1], [0], [0], [1], [0, 0, 1, 1], [], []>} : vector<16x64xbf16>, vector<64x64xbf16>, vector<16x64xf32> -> vector<16x64xf32>
    %500 = arith.addf %498, %499 : vector<16x64xf32>
    %501 = math.tanh %500 : vector<16x64xf32>
    %502 = arith.truncf %501 : vector<16x64xf32> to vector<16x64xbf16>
    %c144_423 = arith.constant 144 : index
    %c0_424 = arith.constant 0 : index
    %503 = vector.load %arg9[%c144_423, %c0_424] : memref<256x64xf32, #tpu.memory_space<vmem>>, vector<16x64xf32>
    %cst_425 = arith.constant dense<0.000000e+00> : vector<16x64xf32>
    %504 = tpu.matmul %495, %440, %cst_425 {dimension_numbers = #tpu.dot_dimension_numbers<[1], [0], [0], [1], [0, 0, 1, 1], [], []>} : vector<16x64xbf16>, vector<64x64xbf16>, vector<16x64xf32> -> vector<16x64xf32>
    %505 = arith.addf %503, %504 : vector<16x64xf32>
    %506 = math.tanh %505 : vector<16x64xf32>
    %507 = arith.truncf %506 : vector<16x64xf32> to vector<16x64xbf16>
    %c128_426 = arith.constant 128 : index
    %c0_427 = arith.constant 0 : index
    %508 = vector.load %arg8[%c128_426, %c0_427] : memref<256x64xbf16, #tpu.memory_space<vmem>>, vector<16x64xbf16>
    tpu.vector_store %arg8[%c128_426, %c0_427], %502 {strides = array<i32>} : memref<256x64xbf16, #tpu.memory_space<vmem>>, vector<16x64xbf16>,
    %c144_428 = arith.constant 144 : index
    %c0_429 = arith.constant 0 : index
    %509 = vector.load %arg8[%c144_428, %c0_429] : memref<256x64xbf16, #tpu.memory_space<vmem>>, vector<16x64xbf16>
    tpu.vector_store %arg8[%c144_428, %c0_429], %507 {strides = array<i32>} : memref<256x64xbf16, #tpu.memory_space<vmem>>, vector<16x64xbf16>,
    %c160_430 = arith.constant 160 : index
    %c0_431 = arith.constant 0 : index
    %510 = vector.load %arg9[%c160_430, %c0_431] : memref<256x64xf32, #tpu.memory_space<vmem>>, vector<16x64xf32>
    %cst_432 = arith.constant dense<0.000000e+00> : vector<16x64xf32>
    %511 = tpu.matmul %502, %440, %cst_432 {dimension_numbers = #tpu.dot_dimension_numbers<[1], [0], [0], [1], [0, 0, 1, 1], [], []>} : vector<16x64xbf16>, vector<64x64xbf16>, vector<16x64xf32> -> vector<16x64xf32>
    %512 = arith.addf %510, %511 : vector<16x64xf32>
    %513 = math.tanh %512 : vector<16x64xf32>
    %514 = arith.truncf %513 : vector<16x64xf32> to vector<16x64xbf16>
    %c176_433 = arith.constant 176 : index
    %c0_434 = arith.constant 0 : index
    %515 = vector.load %arg9[%c176_433, %c0_434] : memref<256x64xf32, #tpu.memory_space<vmem>>, vector<16x64xf32>
    %cst_435 = arith.constant dense<0.000000e+00> : vector<16x64xf32>
    %516 = tpu.matmul %507, %440, %cst_435 {dimension_numbers = #tpu.dot_dimension_numbers<[1], [0], [0], [1], [0, 0, 1, 1], [], []>} : vector<16x64xbf16>, vector<64x64xbf16>, vector<16x64xf32> -> vector<16x64xf32>
    %517 = arith.addf %515, %516 : vector<16x64xf32>
    %518 = math.tanh %517 : vector<16x64xf32>
    %519 = arith.truncf %518 : vector<16x64xf32> to vector<16x64xbf16>
    %c160_436 = arith.constant 160 : index
    %c0_437 = arith.constant 0 : index
    %520 = vector.load %arg8[%c160_436, %c0_437] : memref<256x64xbf16, #tpu.memory_space<vmem>>, vector<16x64xbf16>
    tpu.vector_store %arg8[%c160_436, %c0_437], %514 {strides = array<i32>} : memref<256x64xbf16, #tpu.memory_space<vmem>>, vector<16x64xbf16>,
    %c176_438 = arith.constant 176 : index
    %c0_439 = arith.constant 0 : index
    %521 = vector.load %arg8[%c176_438, %c0_439] : memref<256x64xbf16, #tpu.memory_space<vmem>>, vector<16x64xbf16>
    tpu.vector_store %arg8[%c176_438, %c0_439], %519 {strides = array<i32>} : memref<256x64xbf16, #tpu.memory_space<vmem>>, vector<16x64xbf16>,
    %c192_440 = arith.constant 192 : index
    %c0_441 = arith.constant 0 : index
    %522 = vector.load %arg9[%c192_440, %c0_441] : memref<256x64xf32, #tpu.memory_space<vmem>>, vector<16x64xf32>
    %cst_442 = arith.constant dense<0.000000e+00> : vector<16x64xf32>
    %523 = tpu.matmul %514, %440, %cst_442 {dimension_numbers = #tpu.dot_dimension_numbers<[1], [0], [0], [1], [0, 0, 1, 1], [], []>} : vector<16x64xbf16>, vector<64x64xbf16>, vector<16x64xf32> -> vector<16x64xf32>
    %524 = arith.addf %522, %523 : vector<16x64xf32>
    %525 = math.tanh %524 : vector<16x64xf32>
    %526 = arith.truncf %525 : vector<16x64xf32> to vector<16x64xbf16>
    %c208_443 = arith.constant 208 : index
    %c0_444 = arith.constant 0 : index
    %527 = vector.load %arg9[%c208_443, %c0_444] : memref<256x64xf32, #tpu.memory_space<vmem>>, vector<16x64xf32>
    %cst_445 = arith.constant dense<0.000000e+00> : vector<16x64xf32>
    %528 = tpu.matmul %519, %440, %cst_445 {dimension_numbers = #tpu.dot_dimension_numbers<[1], [0], [0], [1], [0, 0, 1, 1], [], []>} : vector<16x64xbf16>, vector<64x64xbf16>, vector<16x64xf32> -> vector<16x64xf32>
    %529 = arith.addf %527, %528 : vector<16x64xf32>
    %530 = math.tanh %529 : vector<16x64xf32>
    %531 = arith.truncf %530 : vector<16x64xf32> to vector<16x64xbf16>
    %c192_446 = arith.constant 192 : index
    %c0_447 = arith.constant 0 : index
    %532 = vector.load %arg8[%c192_446, %c0_447] : memref<256x64xbf16, #tpu.memory_space<vmem>>, vector<16x64xbf16>
    tpu.vector_store %arg8[%c192_446, %c0_447], %526 {strides = array<i32>} : memref<256x64xbf16, #tpu.memory_space<vmem>>, vector<16x64xbf16>,
    %c208_448 = arith.constant 208 : index
    %c0_449 = arith.constant 0 : index
    %533 = vector.load %arg8[%c208_448, %c0_449] : memref<256x64xbf16, #tpu.memory_space<vmem>>, vector<16x64xbf16>
    tpu.vector_store %arg8[%c208_448, %c0_449], %531 {strides = array<i32>} : memref<256x64xbf16, #tpu.memory_space<vmem>>, vector<16x64xbf16>,
    %c224_450 = arith.constant 224 : index
    %c0_451 = arith.constant 0 : index
    %534 = vector.load %arg9[%c224_450, %c0_451] : memref<256x64xf32, #tpu.memory_space<vmem>>, vector<16x64xf32>
    %cst_452 = arith.constant dense<0.000000e+00> : vector<16x64xf32>
    %535 = tpu.matmul %526, %440, %cst_452 {dimension_numbers = #tpu.dot_dimension_numbers<[1], [0], [0], [1], [0, 0, 1, 1], [], []>} : vector<16x64xbf16>, vector<64x64xbf16>, vector<16x64xf32> -> vector<16x64xf32>
    %536 = arith.addf %534, %535 : vector<16x64xf32>
    %537 = math.tanh %536 : vector<16x64xf32>
    %538 = arith.truncf %537 : vector<16x64xf32> to vector<16x64xbf16>
    %c240_453 = arith.constant 240 : index
    %c0_454 = arith.constant 0 : index
    %539 = vector.load %arg9[%c240_453, %c0_454] : memref<256x64xf32, #tpu.memory_space<vmem>>, vector<16x64xf32>
    %cst_455 = arith.constant dense<0.000000e+00> : vector<16x64xf32>
    %540 = tpu.matmul %531, %440, %cst_455 {dimension_numbers = #tpu.dot_dimension_numbers<[1], [0], [0], [1], [0, 0, 1, 1], [], []>} : vector<16x64xbf16>, vector<64x64xbf16>, vector<16x64xf32> -> vector<16x64xf32>
    %541 = arith.addf %539, %540 : vector<16x64xf32>
    %542 = math.tanh %541 : vector<16x64xf32>
    %543 = arith.truncf %542 : vector<16x64xf32> to vector<16x64xbf16>
    %c224_456 = arith.constant 224 : index
    %c0_457 = arith.constant 0 : index
    %544 = vector.load %arg8[%c224_456, %c0_457] : memref<256x64xbf16, #tpu.memory_space<vmem>>, vector<16x64xbf16>
    tpu.vector_store %arg8[%c224_456, %c0_457], %538 {strides = array<i32>} : memref<256x64xbf16, #tpu.memory_space<vmem>>, vector<16x64xbf16>,
    %c240_458 = arith.constant 240 : index
    %c0_459 = arith.constant 0 : index
    %545 = vector.load %arg8[%c240_458, %c0_459] : memref<256x64xbf16, #tpu.memory_space<vmem>>, vector<16x64xbf16>
    tpu.vector_store %arg8[%c240_458, %c0_459], %543 {strides = array<i32>} : memref<256x64xbf16, #tpu.memory_space<vmem>>, vector<16x64xbf16>,
    %c5 = arith.constant 5 : index
    %c0_460 = arith.constant 0 : index
    %c0_461 = arith.constant 0 : index
    %546 = vector.load %arg2[%c5, %c0_460, %c0_461] : memref<9x64x64xbf16, #tpu.memory_space<vmem>>, vector<1x64x64xbf16>
    %547 = vector.shape_cast %546 : vector<1x64x64xbf16> to vector<64x64xbf16>
    %c5_462 = arith.constant 5 : index
    %c0_463 = arith.constant 0 : index
    %c0_464 = arith.constant 0 : index
    %548 = vector.load %arg3[%c5_462, %c0_463, %c0_464] : memref<9x64x64xbf16, #tpu.memory_space<vmem>>, vector<1x64x64xbf16>
    %549 = vector.shape_cast %548 : vector<1x64x64xbf16> to vector<64x64xbf16>
    %c5_465 = arith.constant 5 : index
    %c0_466 = arith.constant 0 : index
    %c0_467 = arith.constant 0 : index
    %550 = vector.load %arg4[%c5_465, %c0_466, %c0_467] : memref<9x1x64xf32, #tpu.memory_space<vmem>>, vector<1x1x64xf32>
    %551 = vector.shape_cast %550 : vector<1x1x64xf32> to vector<1x64xf32>
    %c0_468 = arith.constant 0 : index
    %c0_469 = arith.constant 0 : index
    %552 = vector.load %arg8[%c0_468, %c0_469] : memref<256x64xbf16, #tpu.memory_space<vmem>>, vector<256x64xbf16>
    %cst_470 = arith.constant dense<0.000000e+00> : vector<256x64xf32>
    %553 = tpu.matmul %552, %547, %cst_470 {dimension_numbers = #tpu.dot_dimension_numbers<[1], [0], [0], [1], [0, 0, 1, 1], [], []>} : vector<256x64xbf16>, vector<64x64xbf16>, vector<256x64xf32> -> vector<256x64xf32>
    %554 = vector.broadcast %551 : vector<1x64xf32> to vector<256x64xf32>
    %555 = arith.addf %553, %554 : vector<256x64xf32>
    %c0_471 = arith.constant 0 : index
    %c0_472 = arith.constant 0 : index
    %556 = vector.load %arg9[%c0_471, %c0_472] : memref<256x64xf32, #tpu.memory_space<vmem>>, vector<256x64xf32>
    tpu.vector_store %arg9[%c0_471, %c0_472], %555 {strides = array<i32>} : memref<256x64xf32, #tpu.memory_space<vmem>>, vector<256x64xf32>,
    %cst_473 = arith.constant 0.000000e+00 : bf16
    %557 = vector.broadcast %cst_473 : bf16 to vector<16x64xbf16>
    %cst_474 = arith.constant 0.000000e+00 : bf16
    %558 = vector.broadcast %cst_474 : bf16 to vector<16x64xbf16>
    %c0_475 = arith.constant 0 : index
    %c0_476 = arith.constant 0 : index
    %559 = vector.load %arg9[%c0_475, %c0_476] : memref<256x64xf32, #tpu.memory_space<vmem>>, vector<16x64xf32>
    %cst_477 = arith.constant dense<0.000000e+00> : vector<16x64xf32>
    %560 = tpu.matmul %557, %549, %cst_477 {dimension_numbers = #tpu.dot_dimension_numbers<[1], [0], [0], [1], [0, 0, 1, 1], [], []>} : vector<16x64xbf16>, vector<64x64xbf16>, vector<16x64xf32> -> vector<16x64xf32>
    %561 = arith.addf %559, %560 : vector<16x64xf32>
    %562 = math.tanh %561 : vector<16x64xf32>
    %563 = arith.truncf %562 : vector<16x64xf32> to vector<16x64xbf16>
    %c16_478 = arith.constant 16 : index
    %c0_479 = arith.constant 0 : index
    %564 = vector.load %arg9[%c16_478, %c0_479] : memref<256x64xf32, #tpu.memory_space<vmem>>, vector<16x64xf32>
    %cst_480 = arith.constant dense<0.000000e+00> : vector<16x64xf32>
    %565 = tpu.matmul %558, %549, %cst_480 {dimension_numbers = #tpu.dot_dimension_numbers<[1], [0], [0], [1], [0, 0, 1, 1], [], []>} : vector<16x64xbf16>, vector<64x64xbf16>, vector<16x64xf32> -> vector<16x64xf32>
    %566 = arith.addf %564, %565 : vector<16x64xf32>
    %567 = math.tanh %566 : vector<16x64xf32>
    %568 = arith.truncf %567 : vector<16x64xf32> to vector<16x64xbf16>
    %c0_481 = arith.constant 0 : index
    %c0_482 = arith.constant 0 : index
    %569 = vector.load %arg8[%c0_481, %c0_482] : memref<256x64xbf16, #tpu.memory_space<vmem>>, vector<16x64xbf16>
    tpu.vector_store %arg8[%c0_481, %c0_482], %563 {strides = array<i32>} : memref<256x64xbf16, #tpu.memory_space<vmem>>, vector<16x64xbf16>,
    %c16_483 = arith.constant 16 : index
    %c0_484 = arith.constant 0 : index
    %570 = vector.load %arg8[%c16_483, %c0_484] : memref<256x64xbf16, #tpu.memory_space<vmem>>, vector<16x64xbf16>
    tpu.vector_store %arg8[%c16_483, %c0_484], %568 {strides = array<i32>} : memref<256x64xbf16, #tpu.memory_space<vmem>>, vector<16x64xbf16>,
    %c32_485 = arith.constant 32 : index
    %c0_486 = arith.constant 0 : index
    %571 = vector.load %arg9[%c32_485, %c0_486] : memref<256x64xf32, #tpu.memory_space<vmem>>, vector<16x64xf32>
    %cst_487 = arith.constant dense<0.000000e+00> : vector<16x64xf32>
    %572 = tpu.matmul %563, %549, %cst_487 {dimension_numbers = #tpu.dot_dimension_numbers<[1], [0], [0], [1], [0, 0, 1, 1], [], []>} : vector<16x64xbf16>, vector<64x64xbf16>, vector<16x64xf32> -> vector<16x64xf32>
    %573 = arith.addf %571, %572 : vector<16x64xf32>
    %574 = math.tanh %573 : vector<16x64xf32>
    %575 = arith.truncf %574 : vector<16x64xf32> to vector<16x64xbf16>
    %c48_488 = arith.constant 48 : index
    %c0_489 = arith.constant 0 : index
    %576 = vector.load %arg9[%c48_488, %c0_489] : memref<256x64xf32, #tpu.memory_space<vmem>>, vector<16x64xf32>
    %cst_490 = arith.constant dense<0.000000e+00> : vector<16x64xf32>
    %577 = tpu.matmul %568, %549, %cst_490 {dimension_numbers = #tpu.dot_dimension_numbers<[1], [0], [0], [1], [0, 0, 1, 1], [], []>} : vector<16x64xbf16>, vector<64x64xbf16>, vector<16x64xf32> -> vector<16x64xf32>
    %578 = arith.addf %576, %577 : vector<16x64xf32>
    %579 = math.tanh %578 : vector<16x64xf32>
    %580 = arith.truncf %579 : vector<16x64xf32> to vector<16x64xbf16>
    %c32_491 = arith.constant 32 : index
    %c0_492 = arith.constant 0 : index
    %581 = vector.load %arg8[%c32_491, %c0_492] : memref<256x64xbf16, #tpu.memory_space<vmem>>, vector<16x64xbf16>
    tpu.vector_store %arg8[%c32_491, %c0_492], %575 {strides = array<i32>} : memref<256x64xbf16, #tpu.memory_space<vmem>>, vector<16x64xbf16>,
    %c48_493 = arith.constant 48 : index
    %c0_494 = arith.constant 0 : index
    %582 = vector.load %arg8[%c48_493, %c0_494] : memref<256x64xbf16, #tpu.memory_space<vmem>>, vector<16x64xbf16>
    tpu.vector_store %arg8[%c48_493, %c0_494], %580 {strides = array<i32>} : memref<256x64xbf16, #tpu.memory_space<vmem>>, vector<16x64xbf16>,
    %c64_495 = arith.constant 64 : index
    %c0_496 = arith.constant 0 : index
    %583 = vector.load %arg9[%c64_495, %c0_496] : memref<256x64xf32, #tpu.memory_space<vmem>>, vector<16x64xf32>
    %cst_497 = arith.constant dense<0.000000e+00> : vector<16x64xf32>
    %584 = tpu.matmul %575, %549, %cst_497 {dimension_numbers = #tpu.dot_dimension_numbers<[1], [0], [0], [1], [0, 0, 1, 1], [], []>} : vector<16x64xbf16>, vector<64x64xbf16>, vector<16x64xf32> -> vector<16x64xf32>
    %585 = arith.addf %583, %584 : vector<16x64xf32>
    %586 = math.tanh %585 : vector<16x64xf32>
    %587 = arith.truncf %586 : vector<16x64xf32> to vector<16x64xbf16>
    %c80_498 = arith.constant 80 : index
    %c0_499 = arith.constant 0 : index
    %588 = vector.load %arg9[%c80_498, %c0_499] : memref<256x64xf32, #tpu.memory_space<vmem>>, vector<16x64xf32>
    %cst_500 = arith.constant dense<0.000000e+00> : vector<16x64xf32>
    %589 = tpu.matmul %580, %549, %cst_500 {dimension_numbers = #tpu.dot_dimension_numbers<[1], [0], [0], [1], [0, 0, 1, 1], [], []>} : vector<16x64xbf16>, vector<64x64xbf16>, vector<16x64xf32> -> vector<16x64xf32>
    %590 = arith.addf %588, %589 : vector<16x64xf32>
    %591 = math.tanh %590 : vector<16x64xf32>
    %592 = arith.truncf %591 : vector<16x64xf32> to vector<16x64xbf16>
    %c64_501 = arith.constant 64 : index
    %c0_502 = arith.constant 0 : index
    %593 = vector.load %arg8[%c64_501, %c0_502] : memref<256x64xbf16, #tpu.memory_space<vmem>>, vector<16x64xbf16>
    tpu.vector_store %arg8[%c64_501, %c0_502], %587 {strides = array<i32>} : memref<256x64xbf16, #tpu.memory_space<vmem>>, vector<16x64xbf16>,
    %c80_503 = arith.constant 80 : index
    %c0_504 = arith.constant 0 : index
    %594 = vector.load %arg8[%c80_503, %c0_504] : memref<256x64xbf16, #tpu.memory_space<vmem>>, vector<16x64xbf16>
    tpu.vector_store %arg8[%c80_503, %c0_504], %592 {strides = array<i32>} : memref<256x64xbf16, #tpu.memory_space<vmem>>, vector<16x64xbf16>,
    %c96_505 = arith.constant 96 : index
    %c0_506 = arith.constant 0 : index
    %595 = vector.load %arg9[%c96_505, %c0_506] : memref<256x64xf32, #tpu.memory_space<vmem>>, vector<16x64xf32>
    %cst_507 = arith.constant dense<0.000000e+00> : vector<16x64xf32>
    %596 = tpu.matmul %587, %549, %cst_507 {dimension_numbers = #tpu.dot_dimension_numbers<[1], [0], [0], [1], [0, 0, 1, 1], [], []>} : vector<16x64xbf16>, vector<64x64xbf16>, vector<16x64xf32> -> vector<16x64xf32>
    %597 = arith.addf %595, %596 : vector<16x64xf32>
    %598 = math.tanh %597 : vector<16x64xf32>
    %599 = arith.truncf %598 : vector<16x64xf32> to vector<16x64xbf16>
    %c112_508 = arith.constant 112 : index
    %c0_509 = arith.constant 0 : index
    %600 = vector.load %arg9[%c112_508, %c0_509] : memref<256x64xf32, #tpu.memory_space<vmem>>, vector<16x64xf32>
    %cst_510 = arith.constant dense<0.000000e+00> : vector<16x64xf32>
    %601 = tpu.matmul %592, %549, %cst_510 {dimension_numbers = #tpu.dot_dimension_numbers<[1], [0], [0], [1], [0, 0, 1, 1], [], []>} : vector<16x64xbf16>, vector<64x64xbf16>, vector<16x64xf32> -> vector<16x64xf32>
    %602 = arith.addf %600, %601 : vector<16x64xf32>
    %603 = math.tanh %602 : vector<16x64xf32>
    %604 = arith.truncf %603 : vector<16x64xf32> to vector<16x64xbf16>
    %c96_511 = arith.constant 96 : index
    %c0_512 = arith.constant 0 : index
    %605 = vector.load %arg8[%c96_511, %c0_512] : memref<256x64xbf16, #tpu.memory_space<vmem>>, vector<16x64xbf16>
    tpu.vector_store %arg8[%c96_511, %c0_512], %599 {strides = array<i32>} : memref<256x64xbf16, #tpu.memory_space<vmem>>, vector<16x64xbf16>,
    %c112_513 = arith.constant 112 : index
    %c0_514 = arith.constant 0 : index
    %606 = vector.load %arg8[%c112_513, %c0_514] : memref<256x64xbf16, #tpu.memory_space<vmem>>, vector<16x64xbf16>
    tpu.vector_store %arg8[%c112_513, %c0_514], %604 {strides = array<i32>} : memref<256x64xbf16, #tpu.memory_space<vmem>>, vector<16x64xbf16>,
    %c128_515 = arith.constant 128 : index
    %c0_516 = arith.constant 0 : index
    %607 = vector.load %arg9[%c128_515, %c0_516] : memref<256x64xf32, #tpu.memory_space<vmem>>, vector<16x64xf32>
    %cst_517 = arith.constant dense<0.000000e+00> : vector<16x64xf32>
    %608 = tpu.matmul %599, %549, %cst_517 {dimension_numbers = #tpu.dot_dimension_numbers<[1], [0], [0], [1], [0, 0, 1, 1], [], []>} : vector<16x64xbf16>, vector<64x64xbf16>, vector<16x64xf32> -> vector<16x64xf32>
    %609 = arith.addf %607, %608 : vector<16x64xf32>
    %610 = math.tanh %609 : vector<16x64xf32>
    %611 = arith.truncf %610 : vector<16x64xf32> to vector<16x64xbf16>
    %c144_518 = arith.constant 144 : index
    %c0_519 = arith.constant 0 : index
    %612 = vector.load %arg9[%c144_518, %c0_519] : memref<256x64xf32, #tpu.memory_space<vmem>>, vector<16x64xf32>
    %cst_520 = arith.constant dense<0.000000e+00> : vector<16x64xf32>
    %613 = tpu.matmul %604, %549, %cst_520 {dimension_numbers = #tpu.dot_dimension_numbers<[1], [0], [0], [1], [0, 0, 1, 1], [], []>} : vector<16x64xbf16>, vector<64x64xbf16>, vector<16x64xf32> -> vector<16x64xf32>
    %614 = arith.addf %612, %613 : vector<16x64xf32>
    %615 = math.tanh %614 : vector<16x64xf32>
    %616 = arith.truncf %615 : vector<16x64xf32> to vector<16x64xbf16>
    %c128_521 = arith.constant 128 : index
    %c0_522 = arith.constant 0 : index
    %617 = vector.load %arg8[%c128_521, %c0_522] : memref<256x64xbf16, #tpu.memory_space<vmem>>, vector<16x64xbf16>
    tpu.vector_store %arg8[%c128_521, %c0_522], %611 {strides = array<i32>} : memref<256x64xbf16, #tpu.memory_space<vmem>>, vector<16x64xbf16>,
    %c144_523 = arith.constant 144 : index
    %c0_524 = arith.constant 0 : index
    %618 = vector.load %arg8[%c144_523, %c0_524] : memref<256x64xbf16, #tpu.memory_space<vmem>>, vector<16x64xbf16>
    tpu.vector_store %arg8[%c144_523, %c0_524], %616 {strides = array<i32>} : memref<256x64xbf16, #tpu.memory_space<vmem>>, vector<16x64xbf16>,
    %c160_525 = arith.constant 160 : index
    %c0_526 = arith.constant 0 : index
    %619 = vector.load %arg9[%c160_525, %c0_526] : memref<256x64xf32, #tpu.memory_space<vmem>>, vector<16x64xf32>
    %cst_527 = arith.constant dense<0.000000e+00> : vector<16x64xf32>
    %620 = tpu.matmul %611, %549, %cst_527 {dimension_numbers = #tpu.dot_dimension_numbers<[1], [0], [0], [1], [0, 0, 1, 1], [], []>} : vector<16x64xbf16>, vector<64x64xbf16>, vector<16x64xf32> -> vector<16x64xf32>
    %621 = arith.addf %619, %620 : vector<16x64xf32>
    %622 = math.tanh %621 : vector<16x64xf32>
    %623 = arith.truncf %622 : vector<16x64xf32> to vector<16x64xbf16>
    %c176_528 = arith.constant 176 : index
    %c0_529 = arith.constant 0 : index
    %624 = vector.load %arg9[%c176_528, %c0_529] : memref<256x64xf32, #tpu.memory_space<vmem>>, vector<16x64xf32>
    %cst_530 = arith.constant dense<0.000000e+00> : vector<16x64xf32>
    %625 = tpu.matmul %616, %549, %cst_530 {dimension_numbers = #tpu.dot_dimension_numbers<[1], [0], [0], [1], [0, 0, 1, 1], [], []>} : vector<16x64xbf16>, vector<64x64xbf16>, vector<16x64xf32> -> vector<16x64xf32>
    %626 = arith.addf %624, %625 : vector<16x64xf32>
    %627 = math.tanh %626 : vector<16x64xf32>
    %628 = arith.truncf %627 : vector<16x64xf32> to vector<16x64xbf16>
    %c160_531 = arith.constant 160 : index
    %c0_532 = arith.constant 0 : index
    %629 = vector.load %arg8[%c160_531, %c0_532] : memref<256x64xbf16, #tpu.memory_space<vmem>>, vector<16x64xbf16>
    tpu.vector_store %arg8[%c160_531, %c0_532], %623 {strides = array<i32>} : memref<256x64xbf16, #tpu.memory_space<vmem>>, vector<16x64xbf16>,
    %c176_533 = arith.constant 176 : index
    %c0_534 = arith.constant 0 : index
    %630 = vector.load %arg8[%c176_533, %c0_534] : memref<256x64xbf16, #tpu.memory_space<vmem>>, vector<16x64xbf16>
    tpu.vector_store %arg8[%c176_533, %c0_534], %628 {strides = array<i32>} : memref<256x64xbf16, #tpu.memory_space<vmem>>, vector<16x64xbf16>,
    %c192_535 = arith.constant 192 : index
    %c0_536 = arith.constant 0 : index
    %631 = vector.load %arg9[%c192_535, %c0_536] : memref<256x64xf32, #tpu.memory_space<vmem>>, vector<16x64xf32>
    %cst_537 = arith.constant dense<0.000000e+00> : vector<16x64xf32>
    %632 = tpu.matmul %623, %549, %cst_537 {dimension_numbers = #tpu.dot_dimension_numbers<[1], [0], [0], [1], [0, 0, 1, 1], [], []>} : vector<16x64xbf16>, vector<64x64xbf16>, vector<16x64xf32> -> vector<16x64xf32>
    %633 = arith.addf %631, %632 : vector<16x64xf32>
    %634 = math.tanh %633 : vector<16x64xf32>
    %635 = arith.truncf %634 : vector<16x64xf32> to vector<16x64xbf16>
    %c208_538 = arith.constant 208 : index
    %c0_539 = arith.constant 0 : index
    %636 = vector.load %arg9[%c208_538, %c0_539] : memref<256x64xf32, #tpu.memory_space<vmem>>, vector<16x64xf32>
    %cst_540 = arith.constant dense<0.000000e+00> : vector<16x64xf32>
    %637 = tpu.matmul %628, %549, %cst_540 {dimension_numbers = #tpu.dot_dimension_numbers<[1], [0], [0], [1], [0, 0, 1, 1], [], []>} : vector<16x64xbf16>, vector<64x64xbf16>, vector<16x64xf32> -> vector<16x64xf32>
    %638 = arith.addf %636, %637 : vector<16x64xf32>
    %639 = math.tanh %638 : vector<16x64xf32>
    %640 = arith.truncf %639 : vector<16x64xf32> to vector<16x64xbf16>
    %c192_541 = arith.constant 192 : index
    %c0_542 = arith.constant 0 : index
    %641 = vector.load %arg8[%c192_541, %c0_542] : memref<256x64xbf16, #tpu.memory_space<vmem>>, vector<16x64xbf16>
    tpu.vector_store %arg8[%c192_541, %c0_542], %635 {strides = array<i32>} : memref<256x64xbf16, #tpu.memory_space<vmem>>, vector<16x64xbf16>,
    %c208_543 = arith.constant 208 : index
    %c0_544 = arith.constant 0 : index
    %642 = vector.load %arg8[%c208_543, %c0_544] : memref<256x64xbf16, #tpu.memory_space<vmem>>, vector<16x64xbf16>
    tpu.vector_store %arg8[%c208_543, %c0_544], %640 {strides = array<i32>} : memref<256x64xbf16, #tpu.memory_space<vmem>>, vector<16x64xbf16>,
    %c224_545 = arith.constant 224 : index
    %c0_546 = arith.constant 0 : index
    %643 = vector.load %arg9[%c224_545, %c0_546] : memref<256x64xf32, #tpu.memory_space<vmem>>, vector<16x64xf32>
    %cst_547 = arith.constant dense<0.000000e+00> : vector<16x64xf32>
    %644 = tpu.matmul %635, %549, %cst_547 {dimension_numbers = #tpu.dot_dimension_numbers<[1], [0], [0], [1], [0, 0, 1, 1], [], []>} : vector<16x64xbf16>, vector<64x64xbf16>, vector<16x64xf32> -> vector<16x64xf32>
    %645 = arith.addf %643, %644 : vector<16x64xf32>
    %646 = math.tanh %645 : vector<16x64xf32>
    %647 = arith.truncf %646 : vector<16x64xf32> to vector<16x64xbf16>
    %c240_548 = arith.constant 240 : index
    %c0_549 = arith.constant 0 : index
    %648 = vector.load %arg9[%c240_548, %c0_549] : memref<256x64xf32, #tpu.memory_space<vmem>>, vector<16x64xf32>
    %cst_550 = arith.constant dense<0.000000e+00> : vector<16x64xf32>
    %649 = tpu.matmul %640, %549, %cst_550 {dimension_numbers = #tpu.dot_dimension_numbers<[1], [0], [0], [1], [0, 0, 1, 1], [], []>} : vector<16x64xbf16>, vector<64x64xbf16>, vector<16x64xf32> -> vector<16x64xf32>
    %650 = arith.addf %648, %649 : vector<16x64xf32>
    %651 = math.tanh %650 : vector<16x64xf32>
    %652 = arith.truncf %651 : vector<16x64xf32> to vector<16x64xbf16>
    %c224_551 = arith.constant 224 : index
    %c0_552 = arith.constant 0 : index
    %653 = vector.load %arg8[%c224_551, %c0_552] : memref<256x64xbf16, #tpu.memory_space<vmem>>, vector<16x64xbf16>
    tpu.vector_store %arg8[%c224_551, %c0_552], %647 {strides = array<i32>} : memref<256x64xbf16, #tpu.memory_space<vmem>>, vector<16x64xbf16>,
    %c240_553 = arith.constant 240 : index
    %c0_554 = arith.constant 0 : index
    %654 = vector.load %arg8[%c240_553, %c0_554] : memref<256x64xbf16, #tpu.memory_space<vmem>>, vector<16x64xbf16>
    tpu.vector_store %arg8[%c240_553, %c0_554], %652 {strides = array<i32>} : memref<256x64xbf16, #tpu.memory_space<vmem>>, vector<16x64xbf16>,
    %c6 = arith.constant 6 : index
    %c0_555 = arith.constant 0 : index
    %c0_556 = arith.constant 0 : index
    %655 = vector.load %arg2[%c6, %c0_555, %c0_556] : memref<9x64x64xbf16, #tpu.memory_space<vmem>>, vector<1x64x64xbf16>
    %656 = vector.shape_cast %655 : vector<1x64x64xbf16> to vector<64x64xbf16>
    %c6_557 = arith.constant 6 : index
    %c0_558 = arith.constant 0 : index
    %c0_559 = arith.constant 0 : index
    %657 = vector.load %arg3[%c6_557, %c0_558, %c0_559] : memref<9x64x64xbf16, #tpu.memory_space<vmem>>, vector<1x64x64xbf16>
    %658 = vector.shape_cast %657 : vector<1x64x64xbf16> to vector<64x64xbf16>
    %c6_560 = arith.constant 6 : index
    %c0_561 = arith.constant 0 : index
    %c0_562 = arith.constant 0 : index
    %659 = vector.load %arg4[%c6_560, %c0_561, %c0_562] : memref<9x1x64xf32, #tpu.memory_space<vmem>>, vector<1x1x64xf32>
    %660 = vector.shape_cast %659 : vector<1x1x64xf32> to vector<1x64xf32>
    %c0_563 = arith.constant 0 : index
    %c0_564 = arith.constant 0 : index
    %661 = vector.load %arg8[%c0_563, %c0_564] : memref<256x64xbf16, #tpu.memory_space<vmem>>, vector<256x64xbf16>
    %cst_565 = arith.constant dense<0.000000e+00> : vector<256x64xf32>
    %662 = tpu.matmul %661, %656, %cst_565 {dimension_numbers = #tpu.dot_dimension_numbers<[1], [0], [0], [1], [0, 0, 1, 1], [], []>} : vector<256x64xbf16>, vector<64x64xbf16>, vector<256x64xf32> -> vector<256x64xf32>
    %663 = vector.broadcast %660 : vector<1x64xf32> to vector<256x64xf32>
    %664 = arith.addf %662, %663 : vector<256x64xf32>
    %c0_566 = arith.constant 0 : index
    %c0_567 = arith.constant 0 : index
    %665 = vector.load %arg9[%c0_566, %c0_567] : memref<256x64xf32, #tpu.memory_space<vmem>>, vector<256x64xf32>
    tpu.vector_store %arg9[%c0_566, %c0_567], %664 {strides = array<i32>} : memref<256x64xf32, #tpu.memory_space<vmem>>, vector<256x64xf32>,
    %cst_568 = arith.constant 0.000000e+00 : bf16
    %666 = vector.broadcast %cst_568 : bf16 to vector<16x64xbf16>
    %cst_569 = arith.constant 0.000000e+00 : bf16
    %667 = vector.broadcast %cst_569 : bf16 to vector<16x64xbf16>
    %c0_570 = arith.constant 0 : index
    %c0_571 = arith.constant 0 : index
    %668 = vector.load %arg9[%c0_570, %c0_571] : memref<256x64xf32, #tpu.memory_space<vmem>>, vector<16x64xf32>
    %cst_572 = arith.constant dense<0.000000e+00> : vector<16x64xf32>
    %669 = tpu.matmul %666, %658, %cst_572 {dimension_numbers = #tpu.dot_dimension_numbers<[1], [0], [0], [1], [0, 0, 1, 1], [], []>} : vector<16x64xbf16>, vector<64x64xbf16>, vector<16x64xf32> -> vector<16x64xf32>
    %670 = arith.addf %668, %669 : vector<16x64xf32>
    %671 = math.tanh %670 : vector<16x64xf32>
    %672 = arith.truncf %671 : vector<16x64xf32> to vector<16x64xbf16>
    %c16_573 = arith.constant 16 : index
    %c0_574 = arith.constant 0 : index
    %673 = vector.load %arg9[%c16_573, %c0_574] : memref<256x64xf32, #tpu.memory_space<vmem>>, vector<16x64xf32>
    %cst_575 = arith.constant dense<0.000000e+00> : vector<16x64xf32>
    %674 = tpu.matmul %667, %658, %cst_575 {dimension_numbers = #tpu.dot_dimension_numbers<[1], [0], [0], [1], [0, 0, 1, 1], [], []>} : vector<16x64xbf16>, vector<64x64xbf16>, vector<16x64xf32> -> vector<16x64xf32>
    %675 = arith.addf %673, %674 : vector<16x64xf32>
    %676 = math.tanh %675 : vector<16x64xf32>
    %677 = arith.truncf %676 : vector<16x64xf32> to vector<16x64xbf16>
    %c0_576 = arith.constant 0 : index
    %c0_577 = arith.constant 0 : index
    %678 = vector.load %arg8[%c0_576, %c0_577] : memref<256x64xbf16, #tpu.memory_space<vmem>>, vector<16x64xbf16>
    tpu.vector_store %arg8[%c0_576, %c0_577], %672 {strides = array<i32>} : memref<256x64xbf16, #tpu.memory_space<vmem>>, vector<16x64xbf16>,
    %c16_578 = arith.constant 16 : index
    %c0_579 = arith.constant 0 : index
    %679 = vector.load %arg8[%c16_578, %c0_579] : memref<256x64xbf16, #tpu.memory_space<vmem>>, vector<16x64xbf16>
    tpu.vector_store %arg8[%c16_578, %c0_579], %677 {strides = array<i32>} : memref<256x64xbf16, #tpu.memory_space<vmem>>, vector<16x64xbf16>,
    %c32_580 = arith.constant 32 : index
    %c0_581 = arith.constant 0 : index
    %680 = vector.load %arg9[%c32_580, %c0_581] : memref<256x64xf32, #tpu.memory_space<vmem>>, vector<16x64xf32>
    %cst_582 = arith.constant dense<0.000000e+00> : vector<16x64xf32>
    %681 = tpu.matmul %672, %658, %cst_582 {dimension_numbers = #tpu.dot_dimension_numbers<[1], [0], [0], [1], [0, 0, 1, 1], [], []>} : vector<16x64xbf16>, vector<64x64xbf16>, vector<16x64xf32> -> vector<16x64xf32>
    %682 = arith.addf %680, %681 : vector<16x64xf32>
    %683 = math.tanh %682 : vector<16x64xf32>
    %684 = arith.truncf %683 : vector<16x64xf32> to vector<16x64xbf16>
    %c48_583 = arith.constant 48 : index
    %c0_584 = arith.constant 0 : index
    %685 = vector.load %arg9[%c48_583, %c0_584] : memref<256x64xf32, #tpu.memory_space<vmem>>, vector<16x64xf32>
    %cst_585 = arith.constant dense<0.000000e+00> : vector<16x64xf32>
    %686 = tpu.matmul %677, %658, %cst_585 {dimension_numbers = #tpu.dot_dimension_numbers<[1], [0], [0], [1], [0, 0, 1, 1], [], []>} : vector<16x64xbf16>, vector<64x64xbf16>, vector<16x64xf32> -> vector<16x64xf32>
    %687 = arith.addf %685, %686 : vector<16x64xf32>
    %688 = math.tanh %687 : vector<16x64xf32>
    %689 = arith.truncf %688 : vector<16x64xf32> to vector<16x64xbf16>
    %c32_586 = arith.constant 32 : index
    %c0_587 = arith.constant 0 : index
    %690 = vector.load %arg8[%c32_586, %c0_587] : memref<256x64xbf16, #tpu.memory_space<vmem>>, vector<16x64xbf16>
    tpu.vector_store %arg8[%c32_586, %c0_587], %684 {strides = array<i32>} : memref<256x64xbf16, #tpu.memory_space<vmem>>, vector<16x64xbf16>,
    %c48_588 = arith.constant 48 : index
    %c0_589 = arith.constant 0 : index
    %691 = vector.load %arg8[%c48_588, %c0_589] : memref<256x64xbf16, #tpu.memory_space<vmem>>, vector<16x64xbf16>
    tpu.vector_store %arg8[%c48_588, %c0_589], %689 {strides = array<i32>} : memref<256x64xbf16, #tpu.memory_space<vmem>>, vector<16x64xbf16>,
    %c64_590 = arith.constant 64 : index
    %c0_591 = arith.constant 0 : index
    %692 = vector.load %arg9[%c64_590, %c0_591] : memref<256x64xf32, #tpu.memory_space<vmem>>, vector<16x64xf32>
    %cst_592 = arith.constant dense<0.000000e+00> : vector<16x64xf32>
    %693 = tpu.matmul %684, %658, %cst_592 {dimension_numbers = #tpu.dot_dimension_numbers<[1], [0], [0], [1], [0, 0, 1, 1], [], []>} : vector<16x64xbf16>, vector<64x64xbf16>, vector<16x64xf32> -> vector<16x64xf32>
    %694 = arith.addf %692, %693 : vector<16x64xf32>
    %695 = math.tanh %694 : vector<16x64xf32>
    %696 = arith.truncf %695 : vector<16x64xf32> to vector<16x64xbf16>
    %c80_593 = arith.constant 80 : index
    %c0_594 = arith.constant 0 : index
    %697 = vector.load %arg9[%c80_593, %c0_594] : memref<256x64xf32, #tpu.memory_space<vmem>>, vector<16x64xf32>
    %cst_595 = arith.constant dense<0.000000e+00> : vector<16x64xf32>
    %698 = tpu.matmul %689, %658, %cst_595 {dimension_numbers = #tpu.dot_dimension_numbers<[1], [0], [0], [1], [0, 0, 1, 1], [], []>} : vector<16x64xbf16>, vector<64x64xbf16>, vector<16x64xf32> -> vector<16x64xf32>
    %699 = arith.addf %697, %698 : vector<16x64xf32>
    %700 = math.tanh %699 : vector<16x64xf32>
    %701 = arith.truncf %700 : vector<16x64xf32> to vector<16x64xbf16>
    %c64_596 = arith.constant 64 : index
    %c0_597 = arith.constant 0 : index
    %702 = vector.load %arg8[%c64_596, %c0_597] : memref<256x64xbf16, #tpu.memory_space<vmem>>, vector<16x64xbf16>
    tpu.vector_store %arg8[%c64_596, %c0_597], %696 {strides = array<i32>} : memref<256x64xbf16, #tpu.memory_space<vmem>>, vector<16x64xbf16>,
    %c80_598 = arith.constant 80 : index
    %c0_599 = arith.constant 0 : index
    %703 = vector.load %arg8[%c80_598, %c0_599] : memref<256x64xbf16, #tpu.memory_space<vmem>>, vector<16x64xbf16>
    tpu.vector_store %arg8[%c80_598, %c0_599], %701 {strides = array<i32>} : memref<256x64xbf16, #tpu.memory_space<vmem>>, vector<16x64xbf16>,
    %c96_600 = arith.constant 96 : index
    %c0_601 = arith.constant 0 : index
    %704 = vector.load %arg9[%c96_600, %c0_601] : memref<256x64xf32, #tpu.memory_space<vmem>>, vector<16x64xf32>
    %cst_602 = arith.constant dense<0.000000e+00> : vector<16x64xf32>
    %705 = tpu.matmul %696, %658, %cst_602 {dimension_numbers = #tpu.dot_dimension_numbers<[1], [0], [0], [1], [0, 0, 1, 1], [], []>} : vector<16x64xbf16>, vector<64x64xbf16>, vector<16x64xf32> -> vector<16x64xf32>
    %706 = arith.addf %704, %705 : vector<16x64xf32>
    %707 = math.tanh %706 : vector<16x64xf32>
    %708 = arith.truncf %707 : vector<16x64xf32> to vector<16x64xbf16>
    %c112_603 = arith.constant 112 : index
    %c0_604 = arith.constant 0 : index
    %709 = vector.load %arg9[%c112_603, %c0_604] : memref<256x64xf32, #tpu.memory_space<vmem>>, vector<16x64xf32>
    %cst_605 = arith.constant dense<0.000000e+00> : vector<16x64xf32>
    %710 = tpu.matmul %701, %658, %cst_605 {dimension_numbers = #tpu.dot_dimension_numbers<[1], [0], [0], [1], [0, 0, 1, 1], [], []>} : vector<16x64xbf16>, vector<64x64xbf16>, vector<16x64xf32> -> vector<16x64xf32>
    %711 = arith.addf %709, %710 : vector<16x64xf32>
    %712 = math.tanh %711 : vector<16x64xf32>
    %713 = arith.truncf %712 : vector<16x64xf32> to vector<16x64xbf16>
    %c96_606 = arith.constant 96 : index
    %c0_607 = arith.constant 0 : index
    %714 = vector.load %arg8[%c96_606, %c0_607] : memref<256x64xbf16, #tpu.memory_space<vmem>>, vector<16x64xbf16>
    tpu.vector_store %arg8[%c96_606, %c0_607], %708 {strides = array<i32>} : memref<256x64xbf16, #tpu.memory_space<vmem>>, vector<16x64xbf16>,
    %c112_608 = arith.constant 112 : index
    %c0_609 = arith.constant 0 : index
    %715 = vector.load %arg8[%c112_608, %c0_609] : memref<256x64xbf16, #tpu.memory_space<vmem>>, vector<16x64xbf16>
    tpu.vector_store %arg8[%c112_608, %c0_609], %713 {strides = array<i32>} : memref<256x64xbf16, #tpu.memory_space<vmem>>, vector<16x64xbf16>,
    %c128_610 = arith.constant 128 : index
    %c0_611 = arith.constant 0 : index
    %716 = vector.load %arg9[%c128_610, %c0_611] : memref<256x64xf32, #tpu.memory_space<vmem>>, vector<16x64xf32>
    %cst_612 = arith.constant dense<0.000000e+00> : vector<16x64xf32>
    %717 = tpu.matmul %708, %658, %cst_612 {dimension_numbers = #tpu.dot_dimension_numbers<[1], [0], [0], [1], [0, 0, 1, 1], [], []>} : vector<16x64xbf16>, vector<64x64xbf16>, vector<16x64xf32> -> vector<16x64xf32>
    %718 = arith.addf %716, %717 : vector<16x64xf32>
    %719 = math.tanh %718 : vector<16x64xf32>
    %720 = arith.truncf %719 : vector<16x64xf32> to vector<16x64xbf16>
    %c144_613 = arith.constant 144 : index
    %c0_614 = arith.constant 0 : index
    %721 = vector.load %arg9[%c144_613, %c0_614] : memref<256x64xf32, #tpu.memory_space<vmem>>, vector<16x64xf32>
    %cst_615 = arith.constant dense<0.000000e+00> : vector<16x64xf32>
    %722 = tpu.matmul %713, %658, %cst_615 {dimension_numbers = #tpu.dot_dimension_numbers<[1], [0], [0], [1], [0, 0, 1, 1], [], []>} : vector<16x64xbf16>, vector<64x64xbf16>, vector<16x64xf32> -> vector<16x64xf32>
    %723 = arith.addf %721, %722 : vector<16x64xf32>
    %724 = math.tanh %723 : vector<16x64xf32>
    %725 = arith.truncf %724 : vector<16x64xf32> to vector<16x64xbf16>
    %c128_616 = arith.constant 128 : index
    %c0_617 = arith.constant 0 : index
    %726 = vector.load %arg8[%c128_616, %c0_617] : memref<256x64xbf16, #tpu.memory_space<vmem>>, vector<16x64xbf16>
    tpu.vector_store %arg8[%c128_616, %c0_617], %720 {strides = array<i32>} : memref<256x64xbf16, #tpu.memory_space<vmem>>, vector<16x64xbf16>,
    %c144_618 = arith.constant 144 : index
    %c0_619 = arith.constant 0 : index
    %727 = vector.load %arg8[%c144_618, %c0_619] : memref<256x64xbf16, #tpu.memory_space<vmem>>, vector<16x64xbf16>
    tpu.vector_store %arg8[%c144_618, %c0_619], %725 {strides = array<i32>} : memref<256x64xbf16, #tpu.memory_space<vmem>>, vector<16x64xbf16>,
    %c160_620 = arith.constant 160 : index
    %c0_621 = arith.constant 0 : index
    %728 = vector.load %arg9[%c160_620, %c0_621] : memref<256x64xf32, #tpu.memory_space<vmem>>, vector<16x64xf32>
    %cst_622 = arith.constant dense<0.000000e+00> : vector<16x64xf32>
    %729 = tpu.matmul %720, %658, %cst_622 {dimension_numbers = #tpu.dot_dimension_numbers<[1], [0], [0], [1], [0, 0, 1, 1], [], []>} : vector<16x64xbf16>, vector<64x64xbf16>, vector<16x64xf32> -> vector<16x64xf32>
    %730 = arith.addf %728, %729 : vector<16x64xf32>
    %731 = math.tanh %730 : vector<16x64xf32>
    %732 = arith.truncf %731 : vector<16x64xf32> to vector<16x64xbf16>
    %c176_623 = arith.constant 176 : index
    %c0_624 = arith.constant 0 : index
    %733 = vector.load %arg9[%c176_623, %c0_624] : memref<256x64xf32, #tpu.memory_space<vmem>>, vector<16x64xf32>
    %cst_625 = arith.constant dense<0.000000e+00> : vector<16x64xf32>
    %734 = tpu.matmul %725, %658, %cst_625 {dimension_numbers = #tpu.dot_dimension_numbers<[1], [0], [0], [1], [0, 0, 1, 1], [], []>} : vector<16x64xbf16>, vector<64x64xbf16>, vector<16x64xf32> -> vector<16x64xf32>
    %735 = arith.addf %733, %734 : vector<16x64xf32>
    %736 = math.tanh %735 : vector<16x64xf32>
    %737 = arith.truncf %736 : vector<16x64xf32> to vector<16x64xbf16>
    %c160_626 = arith.constant 160 : index
    %c0_627 = arith.constant 0 : index
    %738 = vector.load %arg8[%c160_626, %c0_627] : memref<256x64xbf16, #tpu.memory_space<vmem>>, vector<16x64xbf16>
    tpu.vector_store %arg8[%c160_626, %c0_627], %732 {strides = array<i32>} : memref<256x64xbf16, #tpu.memory_space<vmem>>, vector<16x64xbf16>,
    %c176_628 = arith.constant 176 : index
    %c0_629 = arith.constant 0 : index
    %739 = vector.load %arg8[%c176_628, %c0_629] : memref<256x64xbf16, #tpu.memory_space<vmem>>, vector<16x64xbf16>
    tpu.vector_store %arg8[%c176_628, %c0_629], %737 {strides = array<i32>} : memref<256x64xbf16, #tpu.memory_space<vmem>>, vector<16x64xbf16>,
    %c192_630 = arith.constant 192 : index
    %c0_631 = arith.constant 0 : index
    %740 = vector.load %arg9[%c192_630, %c0_631] : memref<256x64xf32, #tpu.memory_space<vmem>>, vector<16x64xf32>
    %cst_632 = arith.constant dense<0.000000e+00> : vector<16x64xf32>
    %741 = tpu.matmul %732, %658, %cst_632 {dimension_numbers = #tpu.dot_dimension_numbers<[1], [0], [0], [1], [0, 0, 1, 1], [], []>} : vector<16x64xbf16>, vector<64x64xbf16>, vector<16x64xf32> -> vector<16x64xf32>
    %742 = arith.addf %740, %741 : vector<16x64xf32>
    %743 = math.tanh %742 : vector<16x64xf32>
    %744 = arith.truncf %743 : vector<16x64xf32> to vector<16x64xbf16>
    %c208_633 = arith.constant 208 : index
    %c0_634 = arith.constant 0 : index
    %745 = vector.load %arg9[%c208_633, %c0_634] : memref<256x64xf32, #tpu.memory_space<vmem>>, vector<16x64xf32>
    %cst_635 = arith.constant dense<0.000000e+00> : vector<16x64xf32>
    %746 = tpu.matmul %737, %658, %cst_635 {dimension_numbers = #tpu.dot_dimension_numbers<[1], [0], [0], [1], [0, 0, 1, 1], [], []>} : vector<16x64xbf16>, vector<64x64xbf16>, vector<16x64xf32> -> vector<16x64xf32>
    %747 = arith.addf %745, %746 : vector<16x64xf32>
    %748 = math.tanh %747 : vector<16x64xf32>
    %749 = arith.truncf %748 : vector<16x64xf32> to vector<16x64xbf16>
    %c192_636 = arith.constant 192 : index
    %c0_637 = arith.constant 0 : index
    %750 = vector.load %arg8[%c192_636, %c0_637] : memref<256x64xbf16, #tpu.memory_space<vmem>>, vector<16x64xbf16>
    tpu.vector_store %arg8[%c192_636, %c0_637], %744 {strides = array<i32>} : memref<256x64xbf16, #tpu.memory_space<vmem>>, vector<16x64xbf16>,
    %c208_638 = arith.constant 208 : index
    %c0_639 = arith.constant 0 : index
    %751 = vector.load %arg8[%c208_638, %c0_639] : memref<256x64xbf16, #tpu.memory_space<vmem>>, vector<16x64xbf16>
    tpu.vector_store %arg8[%c208_638, %c0_639], %749 {strides = array<i32>} : memref<256x64xbf16, #tpu.memory_space<vmem>>, vector<16x64xbf16>,
    %c224_640 = arith.constant 224 : index
    %c0_641 = arith.constant 0 : index
    %752 = vector.load %arg9[%c224_640, %c0_641] : memref<256x64xf32, #tpu.memory_space<vmem>>, vector<16x64xf32>
    %cst_642 = arith.constant dense<0.000000e+00> : vector<16x64xf32>
    %753 = tpu.matmul %744, %658, %cst_642 {dimension_numbers = #tpu.dot_dimension_numbers<[1], [0], [0], [1], [0, 0, 1, 1], [], []>} : vector<16x64xbf16>, vector<64x64xbf16>, vector<16x64xf32> -> vector<16x64xf32>
    %754 = arith.addf %752, %753 : vector<16x64xf32>
    %755 = math.tanh %754 : vector<16x64xf32>
    %756 = arith.truncf %755 : vector<16x64xf32> to vector<16x64xbf16>
    %c240_643 = arith.constant 240 : index
    %c0_644 = arith.constant 0 : index
    %757 = vector.load %arg9[%c240_643, %c0_644] : memref<256x64xf32, #tpu.memory_space<vmem>>, vector<16x64xf32>
    %cst_645 = arith.constant dense<0.000000e+00> : vector<16x64xf32>
    %758 = tpu.matmul %749, %658, %cst_645 {dimension_numbers = #tpu.dot_dimension_numbers<[1], [0], [0], [1], [0, 0, 1, 1], [], []>} : vector<16x64xbf16>, vector<64x64xbf16>, vector<16x64xf32> -> vector<16x64xf32>
    %759 = arith.addf %757, %758 : vector<16x64xf32>
    %760 = math.tanh %759 : vector<16x64xf32>
    %761 = arith.truncf %760 : vector<16x64xf32> to vector<16x64xbf16>
    %c224_646 = arith.constant 224 : index
    %c0_647 = arith.constant 0 : index
    %762 = vector.load %arg8[%c224_646, %c0_647] : memref<256x64xbf16, #tpu.memory_space<vmem>>, vector<16x64xbf16>
    tpu.vector_store %arg8[%c224_646, %c0_647], %756 {strides = array<i32>} : memref<256x64xbf16, #tpu.memory_space<vmem>>, vector<16x64xbf16>,
    %c240_648 = arith.constant 240 : index
    %c0_649 = arith.constant 0 : index
    %763 = vector.load %arg8[%c240_648, %c0_649] : memref<256x64xbf16, #tpu.memory_space<vmem>>, vector<16x64xbf16>
    tpu.vector_store %arg8[%c240_648, %c0_649], %761 {strides = array<i32>} : memref<256x64xbf16, #tpu.memory_space<vmem>>, vector<16x64xbf16>,
    %c7 = arith.constant 7 : index
    %c0_650 = arith.constant 0 : index
    %c0_651 = arith.constant 0 : index
    %764 = vector.load %arg2[%c7, %c0_650, %c0_651] : memref<9x64x64xbf16, #tpu.memory_space<vmem>>, vector<1x64x64xbf16>
    %765 = vector.shape_cast %764 : vector<1x64x64xbf16> to vector<64x64xbf16>
    %c7_652 = arith.constant 7 : index
    %c0_653 = arith.constant 0 : index
    %c0_654 = arith.constant 0 : index
    %766 = vector.load %arg3[%c7_652, %c0_653, %c0_654] : memref<9x64x64xbf16, #tpu.memory_space<vmem>>, vector<1x64x64xbf16>
    %767 = vector.shape_cast %766 : vector<1x64x64xbf16> to vector<64x64xbf16>
    %c7_655 = arith.constant 7 : index
    %c0_656 = arith.constant 0 : index
    %c0_657 = arith.constant 0 : index
    %768 = vector.load %arg4[%c7_655, %c0_656, %c0_657] : memref<9x1x64xf32, #tpu.memory_space<vmem>>, vector<1x1x64xf32>
    %769 = vector.shape_cast %768 : vector<1x1x64xf32> to vector<1x64xf32>
    %c0_658 = arith.constant 0 : index
    %c0_659 = arith.constant 0 : index
    %770 = vector.load %arg8[%c0_658, %c0_659] : memref<256x64xbf16, #tpu.memory_space<vmem>>, vector<256x64xbf16>
    %cst_660 = arith.constant dense<0.000000e+00> : vector<256x64xf32>
    %771 = tpu.matmul %770, %765, %cst_660 {dimension_numbers = #tpu.dot_dimension_numbers<[1], [0], [0], [1], [0, 0, 1, 1], [], []>} : vector<256x64xbf16>, vector<64x64xbf16>, vector<256x64xf32> -> vector<256x64xf32>
    %772 = vector.broadcast %769 : vector<1x64xf32> to vector<256x64xf32>
    %773 = arith.addf %771, %772 : vector<256x64xf32>
    %c0_661 = arith.constant 0 : index
    %c0_662 = arith.constant 0 : index
    %774 = vector.load %arg9[%c0_661, %c0_662] : memref<256x64xf32, #tpu.memory_space<vmem>>, vector<256x64xf32>
    tpu.vector_store %arg9[%c0_661, %c0_662], %773 {strides = array<i32>} : memref<256x64xf32, #tpu.memory_space<vmem>>, vector<256x64xf32>,
    %cst_663 = arith.constant 0.000000e+00 : bf16
    %775 = vector.broadcast %cst_663 : bf16 to vector<16x64xbf16>
    %cst_664 = arith.constant 0.000000e+00 : bf16
    %776 = vector.broadcast %cst_664 : bf16 to vector<16x64xbf16>
    %c0_665 = arith.constant 0 : index
    %c0_666 = arith.constant 0 : index
    %777 = vector.load %arg9[%c0_665, %c0_666] : memref<256x64xf32, #tpu.memory_space<vmem>>, vector<16x64xf32>
    %cst_667 = arith.constant dense<0.000000e+00> : vector<16x64xf32>
    %778 = tpu.matmul %775, %767, %cst_667 {dimension_numbers = #tpu.dot_dimension_numbers<[1], [0], [0], [1], [0, 0, 1, 1], [], []>} : vector<16x64xbf16>, vector<64x64xbf16>, vector<16x64xf32> -> vector<16x64xf32>
    %779 = arith.addf %777, %778 : vector<16x64xf32>
    %780 = math.tanh %779 : vector<16x64xf32>
    %781 = arith.truncf %780 : vector<16x64xf32> to vector<16x64xbf16>
    %c16_668 = arith.constant 16 : index
    %c0_669 = arith.constant 0 : index
    %782 = vector.load %arg9[%c16_668, %c0_669] : memref<256x64xf32, #tpu.memory_space<vmem>>, vector<16x64xf32>
    %cst_670 = arith.constant dense<0.000000e+00> : vector<16x64xf32>
    %783 = tpu.matmul %776, %767, %cst_670 {dimension_numbers = #tpu.dot_dimension_numbers<[1], [0], [0], [1], [0, 0, 1, 1], [], []>} : vector<16x64xbf16>, vector<64x64xbf16>, vector<16x64xf32> -> vector<16x64xf32>
    %784 = arith.addf %782, %783 : vector<16x64xf32>
    %785 = math.tanh %784 : vector<16x64xf32>
    %786 = arith.truncf %785 : vector<16x64xf32> to vector<16x64xbf16>
    %c0_671 = arith.constant 0 : index
    %c0_672 = arith.constant 0 : index
    %787 = vector.load %arg8[%c0_671, %c0_672] : memref<256x64xbf16, #tpu.memory_space<vmem>>, vector<16x64xbf16>
    tpu.vector_store %arg8[%c0_671, %c0_672], %781 {strides = array<i32>} : memref<256x64xbf16, #tpu.memory_space<vmem>>, vector<16x64xbf16>,
    %c16_673 = arith.constant 16 : index
    %c0_674 = arith.constant 0 : index
    %788 = vector.load %arg8[%c16_673, %c0_674] : memref<256x64xbf16, #tpu.memory_space<vmem>>, vector<16x64xbf16>
    tpu.vector_store %arg8[%c16_673, %c0_674], %786 {strides = array<i32>} : memref<256x64xbf16, #tpu.memory_space<vmem>>, vector<16x64xbf16>,
    %c32_675 = arith.constant 32 : index
    %c0_676 = arith.constant 0 : index
    %789 = vector.load %arg9[%c32_675, %c0_676] : memref<256x64xf32, #tpu.memory_space<vmem>>, vector<16x64xf32>
    %cst_677 = arith.constant dense<0.000000e+00> : vector<16x64xf32>
    %790 = tpu.matmul %781, %767, %cst_677 {dimension_numbers = #tpu.dot_dimension_numbers<[1], [0], [0], [1], [0, 0, 1, 1], [], []>} : vector<16x64xbf16>, vector<64x64xbf16>, vector<16x64xf32> -> vector<16x64xf32>
    %791 = arith.addf %789, %790 : vector<16x64xf32>
    %792 = math.tanh %791 : vector<16x64xf32>
    %793 = arith.truncf %792 : vector<16x64xf32> to vector<16x64xbf16>
    %c48_678 = arith.constant 48 : index
    %c0_679 = arith.constant 0 : index
    %794 = vector.load %arg9[%c48_678, %c0_679] : memref<256x64xf32, #tpu.memory_space<vmem>>, vector<16x64xf32>
    %cst_680 = arith.constant dense<0.000000e+00> : vector<16x64xf32>
    %795 = tpu.matmul %786, %767, %cst_680 {dimension_numbers = #tpu.dot_dimension_numbers<[1], [0], [0], [1], [0, 0, 1, 1], [], []>} : vector<16x64xbf16>, vector<64x64xbf16>, vector<16x64xf32> -> vector<16x64xf32>
    %796 = arith.addf %794, %795 : vector<16x64xf32>
    %797 = math.tanh %796 : vector<16x64xf32>
    %798 = arith.truncf %797 : vector<16x64xf32> to vector<16x64xbf16>
    %c32_681 = arith.constant 32 : index
    %c0_682 = arith.constant 0 : index
    %799 = vector.load %arg8[%c32_681, %c0_682] : memref<256x64xbf16, #tpu.memory_space<vmem>>, vector<16x64xbf16>
    tpu.vector_store %arg8[%c32_681, %c0_682], %793 {strides = array<i32>} : memref<256x64xbf16, #tpu.memory_space<vmem>>, vector<16x64xbf16>,
    %c48_683 = arith.constant 48 : index
    %c0_684 = arith.constant 0 : index
    %800 = vector.load %arg8[%c48_683, %c0_684] : memref<256x64xbf16, #tpu.memory_space<vmem>>, vector<16x64xbf16>
    tpu.vector_store %arg8[%c48_683, %c0_684], %798 {strides = array<i32>} : memref<256x64xbf16, #tpu.memory_space<vmem>>, vector<16x64xbf16>,
    %c64_685 = arith.constant 64 : index
    %c0_686 = arith.constant 0 : index
    %801 = vector.load %arg9[%c64_685, %c0_686] : memref<256x64xf32, #tpu.memory_space<vmem>>, vector<16x64xf32>
    %cst_687 = arith.constant dense<0.000000e+00> : vector<16x64xf32>
    %802 = tpu.matmul %793, %767, %cst_687 {dimension_numbers = #tpu.dot_dimension_numbers<[1], [0], [0], [1], [0, 0, 1, 1], [], []>} : vector<16x64xbf16>, vector<64x64xbf16>, vector<16x64xf32> -> vector<16x64xf32>
    %803 = arith.addf %801, %802 : vector<16x64xf32>
    %804 = math.tanh %803 : vector<16x64xf32>
    %805 = arith.truncf %804 : vector<16x64xf32> to vector<16x64xbf16>
    %c80_688 = arith.constant 80 : index
    %c0_689 = arith.constant 0 : index
    %806 = vector.load %arg9[%c80_688, %c0_689] : memref<256x64xf32, #tpu.memory_space<vmem>>, vector<16x64xf32>
    %cst_690 = arith.constant dense<0.000000e+00> : vector<16x64xf32>
    %807 = tpu.matmul %798, %767, %cst_690 {dimension_numbers = #tpu.dot_dimension_numbers<[1], [0], [0], [1], [0, 0, 1, 1], [], []>} : vector<16x64xbf16>, vector<64x64xbf16>, vector<16x64xf32> -> vector<16x64xf32>
    %808 = arith.addf %806, %807 : vector<16x64xf32>
    %809 = math.tanh %808 : vector<16x64xf32>
    %810 = arith.truncf %809 : vector<16x64xf32> to vector<16x64xbf16>
    %c64_691 = arith.constant 64 : index
    %c0_692 = arith.constant 0 : index
    %811 = vector.load %arg8[%c64_691, %c0_692] : memref<256x64xbf16, #tpu.memory_space<vmem>>, vector<16x64xbf16>
    tpu.vector_store %arg8[%c64_691, %c0_692], %805 {strides = array<i32>} : memref<256x64xbf16, #tpu.memory_space<vmem>>, vector<16x64xbf16>,
    %c80_693 = arith.constant 80 : index
    %c0_694 = arith.constant 0 : index
    %812 = vector.load %arg8[%c80_693, %c0_694] : memref<256x64xbf16, #tpu.memory_space<vmem>>, vector<16x64xbf16>
    tpu.vector_store %arg8[%c80_693, %c0_694], %810 {strides = array<i32>} : memref<256x64xbf16, #tpu.memory_space<vmem>>, vector<16x64xbf16>,
    %c96_695 = arith.constant 96 : index
    %c0_696 = arith.constant 0 : index
    %813 = vector.load %arg9[%c96_695, %c0_696] : memref<256x64xf32, #tpu.memory_space<vmem>>, vector<16x64xf32>
    %cst_697 = arith.constant dense<0.000000e+00> : vector<16x64xf32>
    %814 = tpu.matmul %805, %767, %cst_697 {dimension_numbers = #tpu.dot_dimension_numbers<[1], [0], [0], [1], [0, 0, 1, 1], [], []>} : vector<16x64xbf16>, vector<64x64xbf16>, vector<16x64xf32> -> vector<16x64xf32>
    %815 = arith.addf %813, %814 : vector<16x64xf32>
    %816 = math.tanh %815 : vector<16x64xf32>
    %817 = arith.truncf %816 : vector<16x64xf32> to vector<16x64xbf16>
    %c112_698 = arith.constant 112 : index
    %c0_699 = arith.constant 0 : index
    %818 = vector.load %arg9[%c112_698, %c0_699] : memref<256x64xf32, #tpu.memory_space<vmem>>, vector<16x64xf32>
    %cst_700 = arith.constant dense<0.000000e+00> : vector<16x64xf32>
    %819 = tpu.matmul %810, %767, %cst_700 {dimension_numbers = #tpu.dot_dimension_numbers<[1], [0], [0], [1], [0, 0, 1, 1], [], []>} : vector<16x64xbf16>, vector<64x64xbf16>, vector<16x64xf32> -> vector<16x64xf32>
    %820 = arith.addf %818, %819 : vector<16x64xf32>
    %821 = math.tanh %820 : vector<16x64xf32>
    %822 = arith.truncf %821 : vector<16x64xf32> to vector<16x64xbf16>
    %c96_701 = arith.constant 96 : index
    %c0_702 = arith.constant 0 : index
    %823 = vector.load %arg8[%c96_701, %c0_702] : memref<256x64xbf16, #tpu.memory_space<vmem>>, vector<16x64xbf16>
    tpu.vector_store %arg8[%c96_701, %c0_702], %817 {strides = array<i32>} : memref<256x64xbf16, #tpu.memory_space<vmem>>, vector<16x64xbf16>,
    %c112_703 = arith.constant 112 : index
    %c0_704 = arith.constant 0 : index
    %824 = vector.load %arg8[%c112_703, %c0_704] : memref<256x64xbf16, #tpu.memory_space<vmem>>, vector<16x64xbf16>
    tpu.vector_store %arg8[%c112_703, %c0_704], %822 {strides = array<i32>} : memref<256x64xbf16, #tpu.memory_space<vmem>>, vector<16x64xbf16>,
    %c128_705 = arith.constant 128 : index
    %c0_706 = arith.constant 0 : index
    %825 = vector.load %arg9[%c128_705, %c0_706] : memref<256x64xf32, #tpu.memory_space<vmem>>, vector<16x64xf32>
    %cst_707 = arith.constant dense<0.000000e+00> : vector<16x64xf32>
    %826 = tpu.matmul %817, %767, %cst_707 {dimension_numbers = #tpu.dot_dimension_numbers<[1], [0], [0], [1], [0, 0, 1, 1], [], []>} : vector<16x64xbf16>, vector<64x64xbf16>, vector<16x64xf32> -> vector<16x64xf32>
    %827 = arith.addf %825, %826 : vector<16x64xf32>
    %828 = math.tanh %827 : vector<16x64xf32>
    %829 = arith.truncf %828 : vector<16x64xf32> to vector<16x64xbf16>
    %c144_708 = arith.constant 144 : index
    %c0_709 = arith.constant 0 : index
    %830 = vector.load %arg9[%c144_708, %c0_709] : memref<256x64xf32, #tpu.memory_space<vmem>>, vector<16x64xf32>
    %cst_710 = arith.constant dense<0.000000e+00> : vector<16x64xf32>
    %831 = tpu.matmul %822, %767, %cst_710 {dimension_numbers = #tpu.dot_dimension_numbers<[1], [0], [0], [1], [0, 0, 1, 1], [], []>} : vector<16x64xbf16>, vector<64x64xbf16>, vector<16x64xf32> -> vector<16x64xf32>
    %832 = arith.addf %830, %831 : vector<16x64xf32>
    %833 = math.tanh %832 : vector<16x64xf32>
    %834 = arith.truncf %833 : vector<16x64xf32> to vector<16x64xbf16>
    %c128_711 = arith.constant 128 : index
    %c0_712 = arith.constant 0 : index
    %835 = vector.load %arg8[%c128_711, %c0_712] : memref<256x64xbf16, #tpu.memory_space<vmem>>, vector<16x64xbf16>
    tpu.vector_store %arg8[%c128_711, %c0_712], %829 {strides = array<i32>} : memref<256x64xbf16, #tpu.memory_space<vmem>>, vector<16x64xbf16>,
    %c144_713 = arith.constant 144 : index
    %c0_714 = arith.constant 0 : index
    %836 = vector.load %arg8[%c144_713, %c0_714] : memref<256x64xbf16, #tpu.memory_space<vmem>>, vector<16x64xbf16>
    tpu.vector_store %arg8[%c144_713, %c0_714], %834 {strides = array<i32>} : memref<256x64xbf16, #tpu.memory_space<vmem>>, vector<16x64xbf16>,
    %c160_715 = arith.constant 160 : index
    %c0_716 = arith.constant 0 : index
    %837 = vector.load %arg9[%c160_715, %c0_716] : memref<256x64xf32, #tpu.memory_space<vmem>>, vector<16x64xf32>
    %cst_717 = arith.constant dense<0.000000e+00> : vector<16x64xf32>
    %838 = tpu.matmul %829, %767, %cst_717 {dimension_numbers = #tpu.dot_dimension_numbers<[1], [0], [0], [1], [0, 0, 1, 1], [], []>} : vector<16x64xbf16>, vector<64x64xbf16>, vector<16x64xf32> -> vector<16x64xf32>
    %839 = arith.addf %837, %838 : vector<16x64xf32>
    %840 = math.tanh %839 : vector<16x64xf32>
    %841 = arith.truncf %840 : vector<16x64xf32> to vector<16x64xbf16>
    %c176_718 = arith.constant 176 : index
    %c0_719 = arith.constant 0 : index
    %842 = vector.load %arg9[%c176_718, %c0_719] : memref<256x64xf32, #tpu.memory_space<vmem>>, vector<16x64xf32>
    %cst_720 = arith.constant dense<0.000000e+00> : vector<16x64xf32>
    %843 = tpu.matmul %834, %767, %cst_720 {dimension_numbers = #tpu.dot_dimension_numbers<[1], [0], [0], [1], [0, 0, 1, 1], [], []>} : vector<16x64xbf16>, vector<64x64xbf16>, vector<16x64xf32> -> vector<16x64xf32>
    %844 = arith.addf %842, %843 : vector<16x64xf32>
    %845 = math.tanh %844 : vector<16x64xf32>
    %846 = arith.truncf %845 : vector<16x64xf32> to vector<16x64xbf16>
    %c160_721 = arith.constant 160 : index
    %c0_722 = arith.constant 0 : index
    %847 = vector.load %arg8[%c160_721, %c0_722] : memref<256x64xbf16, #tpu.memory_space<vmem>>, vector<16x64xbf16>
    tpu.vector_store %arg8[%c160_721, %c0_722], %841 {strides = array<i32>} : memref<256x64xbf16, #tpu.memory_space<vmem>>, vector<16x64xbf16>,
    %c176_723 = arith.constant 176 : index
    %c0_724 = arith.constant 0 : index
    %848 = vector.load %arg8[%c176_723, %c0_724] : memref<256x64xbf16, #tpu.memory_space<vmem>>, vector<16x64xbf16>
    tpu.vector_store %arg8[%c176_723, %c0_724], %846 {strides = array<i32>} : memref<256x64xbf16, #tpu.memory_space<vmem>>, vector<16x64xbf16>,
    %c192_725 = arith.constant 192 : index
    %c0_726 = arith.constant 0 : index
    %849 = vector.load %arg9[%c192_725, %c0_726] : memref<256x64xf32, #tpu.memory_space<vmem>>, vector<16x64xf32>
    %cst_727 = arith.constant dense<0.000000e+00> : vector<16x64xf32>
    %850 = tpu.matmul %841, %767, %cst_727 {dimension_numbers = #tpu.dot_dimension_numbers<[1], [0], [0], [1], [0, 0, 1, 1], [], []>} : vector<16x64xbf16>, vector<64x64xbf16>, vector<16x64xf32> -> vector<16x64xf32>
    %851 = arith.addf %849, %850 : vector<16x64xf32>
    %852 = math.tanh %851 : vector<16x64xf32>
    %853 = arith.truncf %852 : vector<16x64xf32> to vector<16x64xbf16>
    %c208_728 = arith.constant 208 : index
    %c0_729 = arith.constant 0 : index
    %854 = vector.load %arg9[%c208_728, %c0_729] : memref<256x64xf32, #tpu.memory_space<vmem>>, vector<16x64xf32>
    %cst_730 = arith.constant dense<0.000000e+00> : vector<16x64xf32>
    %855 = tpu.matmul %846, %767, %cst_730 {dimension_numbers = #tpu.dot_dimension_numbers<[1], [0], [0], [1], [0, 0, 1, 1], [], []>} : vector<16x64xbf16>, vector<64x64xbf16>, vector<16x64xf32> -> vector<16x64xf32>
    %856 = arith.addf %854, %855 : vector<16x64xf32>
    %857 = math.tanh %856 : vector<16x64xf32>
    %858 = arith.truncf %857 : vector<16x64xf32> to vector<16x64xbf16>
    %c192_731 = arith.constant 192 : index
    %c0_732 = arith.constant 0 : index
    %859 = vector.load %arg8[%c192_731, %c0_732] : memref<256x64xbf16, #tpu.memory_space<vmem>>, vector<16x64xbf16>
    tpu.vector_store %arg8[%c192_731, %c0_732], %853 {strides = array<i32>} : memref<256x64xbf16, #tpu.memory_space<vmem>>, vector<16x64xbf16>,
    %c208_733 = arith.constant 208 : index
    %c0_734 = arith.constant 0 : index
    %860 = vector.load %arg8[%c208_733, %c0_734] : memref<256x64xbf16, #tpu.memory_space<vmem>>, vector<16x64xbf16>
    tpu.vector_store %arg8[%c208_733, %c0_734], %858 {strides = array<i32>} : memref<256x64xbf16, #tpu.memory_space<vmem>>, vector<16x64xbf16>,
    %c224_735 = arith.constant 224 : index
    %c0_736 = arith.constant 0 : index
    %861 = vector.load %arg9[%c224_735, %c0_736] : memref<256x64xf32, #tpu.memory_space<vmem>>, vector<16x64xf32>
    %cst_737 = arith.constant dense<0.000000e+00> : vector<16x64xf32>
    %862 = tpu.matmul %853, %767, %cst_737 {dimension_numbers = #tpu.dot_dimension_numbers<[1], [0], [0], [1], [0, 0, 1, 1], [], []>} : vector<16x64xbf16>, vector<64x64xbf16>, vector<16x64xf32> -> vector<16x64xf32>
    %863 = arith.addf %861, %862 : vector<16x64xf32>
    %864 = math.tanh %863 : vector<16x64xf32>
    %865 = arith.truncf %864 : vector<16x64xf32> to vector<16x64xbf16>
    %c240_738 = arith.constant 240 : index
    %c0_739 = arith.constant 0 : index
    %866 = vector.load %arg9[%c240_738, %c0_739] : memref<256x64xf32, #tpu.memory_space<vmem>>, vector<16x64xf32>
    %cst_740 = arith.constant dense<0.000000e+00> : vector<16x64xf32>
    %867 = tpu.matmul %858, %767, %cst_740 {dimension_numbers = #tpu.dot_dimension_numbers<[1], [0], [0], [1], [0, 0, 1, 1], [], []>} : vector<16x64xbf16>, vector<64x64xbf16>, vector<16x64xf32> -> vector<16x64xf32>
    %868 = arith.addf %866, %867 : vector<16x64xf32>
    %869 = math.tanh %868 : vector<16x64xf32>
    %870 = arith.truncf %869 : vector<16x64xf32> to vector<16x64xbf16>
    %c224_741 = arith.constant 224 : index
    %c0_742 = arith.constant 0 : index
    %871 = vector.load %arg8[%c224_741, %c0_742] : memref<256x64xbf16, #tpu.memory_space<vmem>>, vector<16x64xbf16>
    tpu.vector_store %arg8[%c224_741, %c0_742], %865 {strides = array<i32>} : memref<256x64xbf16, #tpu.memory_space<vmem>>, vector<16x64xbf16>,
    %c240_743 = arith.constant 240 : index
    %c0_744 = arith.constant 0 : index
    %872 = vector.load %arg8[%c240_743, %c0_744] : memref<256x64xbf16, #tpu.memory_space<vmem>>, vector<16x64xbf16>
    tpu.vector_store %arg8[%c240_743, %c0_744], %870 {strides = array<i32>} : memref<256x64xbf16, #tpu.memory_space<vmem>>, vector<16x64xbf16>,
    %c8 = arith.constant 8 : index
    %c0_745 = arith.constant 0 : index
    %c0_746 = arith.constant 0 : index
    %873 = vector.load %arg2[%c8, %c0_745, %c0_746] : memref<9x64x64xbf16, #tpu.memory_space<vmem>>, vector<1x64x64xbf16>
    %874 = vector.shape_cast %873 : vector<1x64x64xbf16> to vector<64x64xbf16>
    %c8_747 = arith.constant 8 : index
    %c0_748 = arith.constant 0 : index
    %c0_749 = arith.constant 0 : index
    %875 = vector.load %arg3[%c8_747, %c0_748, %c0_749] : memref<9x64x64xbf16, #tpu.memory_space<vmem>>, vector<1x64x64xbf16>
    %876 = vector.shape_cast %875 : vector<1x64x64xbf16> to vector<64x64xbf16>
    %c8_750 = arith.constant 8 : index
    %c0_751 = arith.constant 0 : index
    %c0_752 = arith.constant 0 : index
    %877 = vector.load %arg4[%c8_750, %c0_751, %c0_752] : memref<9x1x64xf32, #tpu.memory_space<vmem>>, vector<1x1x64xf32>
    %878 = vector.shape_cast %877 : vector<1x1x64xf32> to vector<1x64xf32>
    %c0_753 = arith.constant 0 : index
    %c0_754 = arith.constant 0 : index
    %879 = vector.load %arg8[%c0_753, %c0_754] : memref<256x64xbf16, #tpu.memory_space<vmem>>, vector<256x64xbf16>
    %cst_755 = arith.constant dense<0.000000e+00> : vector<256x64xf32>
    %880 = tpu.matmul %879, %874, %cst_755 {dimension_numbers = #tpu.dot_dimension_numbers<[1], [0], [0], [1], [0, 0, 1, 1], [], []>} : vector<256x64xbf16>, vector<64x64xbf16>, vector<256x64xf32> -> vector<256x64xf32>
    %881 = vector.broadcast %878 : vector<1x64xf32> to vector<256x64xf32>
    %882 = arith.addf %880, %881 : vector<256x64xf32>
    %c0_756 = arith.constant 0 : index
    %c0_757 = arith.constant 0 : index
    %883 = vector.load %arg9[%c0_756, %c0_757] : memref<256x64xf32, #tpu.memory_space<vmem>>, vector<256x64xf32>
    tpu.vector_store %arg9[%c0_756, %c0_757], %882 {strides = array<i32>} : memref<256x64xf32, #tpu.memory_space<vmem>>, vector<256x64xf32>,
    %cst_758 = arith.constant 0.000000e+00 : bf16
    %884 = vector.broadcast %cst_758 : bf16 to vector<16x64xbf16>
    %cst_759 = arith.constant 0.000000e+00 : bf16
    %885 = vector.broadcast %cst_759 : bf16 to vector<16x64xbf16>
    %c0_760 = arith.constant 0 : index
    %c0_761 = arith.constant 0 : index
    %886 = vector.load %arg9[%c0_760, %c0_761] : memref<256x64xf32, #tpu.memory_space<vmem>>, vector<16x64xf32>
    %cst_762 = arith.constant dense<0.000000e+00> : vector<16x64xf32>
    %887 = tpu.matmul %884, %876, %cst_762 {dimension_numbers = #tpu.dot_dimension_numbers<[1], [0], [0], [1], [0, 0, 1, 1], [], []>} : vector<16x64xbf16>, vector<64x64xbf16>, vector<16x64xf32> -> vector<16x64xf32>
    %888 = arith.addf %886, %887 : vector<16x64xf32>
    %889 = math.tanh %888 : vector<16x64xf32>
    %890 = arith.truncf %889 : vector<16x64xf32> to vector<16x64xbf16>
    %c16_763 = arith.constant 16 : index
    %c0_764 = arith.constant 0 : index
    %891 = vector.load %arg9[%c16_763, %c0_764] : memref<256x64xf32, #tpu.memory_space<vmem>>, vector<16x64xf32>
    %cst_765 = arith.constant dense<0.000000e+00> : vector<16x64xf32>
    %892 = tpu.matmul %885, %876, %cst_765 {dimension_numbers = #tpu.dot_dimension_numbers<[1], [0], [0], [1], [0, 0, 1, 1], [], []>} : vector<16x64xbf16>, vector<64x64xbf16>, vector<16x64xf32> -> vector<16x64xf32>
    %893 = arith.addf %891, %892 : vector<16x64xf32>
    %894 = math.tanh %893 : vector<16x64xf32>
    %895 = arith.truncf %894 : vector<16x64xf32> to vector<16x64xbf16>
    %c0_766 = arith.constant 0 : index
    %c0_767 = arith.constant 0 : index
    %896 = vector.load %arg8[%c0_766, %c0_767] : memref<256x64xbf16, #tpu.memory_space<vmem>>, vector<16x64xbf16>
    tpu.vector_store %arg8[%c0_766, %c0_767], %890 {strides = array<i32>} : memref<256x64xbf16, #tpu.memory_space<vmem>>, vector<16x64xbf16>,
    %c16_768 = arith.constant 16 : index
    %c0_769 = arith.constant 0 : index
    %897 = vector.load %arg8[%c16_768, %c0_769] : memref<256x64xbf16, #tpu.memory_space<vmem>>, vector<16x64xbf16>
    tpu.vector_store %arg8[%c16_768, %c0_769], %895 {strides = array<i32>} : memref<256x64xbf16, #tpu.memory_space<vmem>>, vector<16x64xbf16>,
    %c32_770 = arith.constant 32 : index
    %c0_771 = arith.constant 0 : index
    %898 = vector.load %arg9[%c32_770, %c0_771] : memref<256x64xf32, #tpu.memory_space<vmem>>, vector<16x64xf32>
    %cst_772 = arith.constant dense<0.000000e+00> : vector<16x64xf32>
    %899 = tpu.matmul %890, %876, %cst_772 {dimension_numbers = #tpu.dot_dimension_numbers<[1], [0], [0], [1], [0, 0, 1, 1], [], []>} : vector<16x64xbf16>, vector<64x64xbf16>, vector<16x64xf32> -> vector<16x64xf32>
    %900 = arith.addf %898, %899 : vector<16x64xf32>
    %901 = math.tanh %900 : vector<16x64xf32>
    %902 = arith.truncf %901 : vector<16x64xf32> to vector<16x64xbf16>
    %c48_773 = arith.constant 48 : index
    %c0_774 = arith.constant 0 : index
    %903 = vector.load %arg9[%c48_773, %c0_774] : memref<256x64xf32, #tpu.memory_space<vmem>>, vector<16x64xf32>
    %cst_775 = arith.constant dense<0.000000e+00> : vector<16x64xf32>
    %904 = tpu.matmul %895, %876, %cst_775 {dimension_numbers = #tpu.dot_dimension_numbers<[1], [0], [0], [1], [0, 0, 1, 1], [], []>} : vector<16x64xbf16>, vector<64x64xbf16>, vector<16x64xf32> -> vector<16x64xf32>
    %905 = arith.addf %903, %904 : vector<16x64xf32>
    %906 = math.tanh %905 : vector<16x64xf32>
    %907 = arith.truncf %906 : vector<16x64xf32> to vector<16x64xbf16>
    %c32_776 = arith.constant 32 : index
    %c0_777 = arith.constant 0 : index
    %908 = vector.load %arg8[%c32_776, %c0_777] : memref<256x64xbf16, #tpu.memory_space<vmem>>, vector<16x64xbf16>
    tpu.vector_store %arg8[%c32_776, %c0_777], %902 {strides = array<i32>} : memref<256x64xbf16, #tpu.memory_space<vmem>>, vector<16x64xbf16>,
    %c48_778 = arith.constant 48 : index
    %c0_779 = arith.constant 0 : index
    %909 = vector.load %arg8[%c48_778, %c0_779] : memref<256x64xbf16, #tpu.memory_space<vmem>>, vector<16x64xbf16>
    tpu.vector_store %arg8[%c48_778, %c0_779], %907 {strides = array<i32>} : memref<256x64xbf16, #tpu.memory_space<vmem>>, vector<16x64xbf16>,
    %c64_780 = arith.constant 64 : index
    %c0_781 = arith.constant 0 : index
    %910 = vector.load %arg9[%c64_780, %c0_781] : memref<256x64xf32, #tpu.memory_space<vmem>>, vector<16x64xf32>
    %cst_782 = arith.constant dense<0.000000e+00> : vector<16x64xf32>
    %911 = tpu.matmul %902, %876, %cst_782 {dimension_numbers = #tpu.dot_dimension_numbers<[1], [0], [0], [1], [0, 0, 1, 1], [], []>} : vector<16x64xbf16>, vector<64x64xbf16>, vector<16x64xf32> -> vector<16x64xf32>
    %912 = arith.addf %910, %911 : vector<16x64xf32>
    %913 = math.tanh %912 : vector<16x64xf32>
    %914 = arith.truncf %913 : vector<16x64xf32> to vector<16x64xbf16>
    %c80_783 = arith.constant 80 : index
    %c0_784 = arith.constant 0 : index
    %915 = vector.load %arg9[%c80_783, %c0_784] : memref<256x64xf32, #tpu.memory_space<vmem>>, vector<16x64xf32>
    %cst_785 = arith.constant dense<0.000000e+00> : vector<16x64xf32>
    %916 = tpu.matmul %907, %876, %cst_785 {dimension_numbers = #tpu.dot_dimension_numbers<[1], [0], [0], [1], [0, 0, 1, 1], [], []>} : vector<16x64xbf16>, vector<64x64xbf16>, vector<16x64xf32> -> vector<16x64xf32>
    %917 = arith.addf %915, %916 : vector<16x64xf32>
    %918 = math.tanh %917 : vector<16x64xf32>
    %919 = arith.truncf %918 : vector<16x64xf32> to vector<16x64xbf16>
    %c64_786 = arith.constant 64 : index
    %c0_787 = arith.constant 0 : index
    %920 = vector.load %arg8[%c64_786, %c0_787] : memref<256x64xbf16, #tpu.memory_space<vmem>>, vector<16x64xbf16>
    tpu.vector_store %arg8[%c64_786, %c0_787], %914 {strides = array<i32>} : memref<256x64xbf16, #tpu.memory_space<vmem>>, vector<16x64xbf16>,
    %c80_788 = arith.constant 80 : index
    %c0_789 = arith.constant 0 : index
    %921 = vector.load %arg8[%c80_788, %c0_789] : memref<256x64xbf16, #tpu.memory_space<vmem>>, vector<16x64xbf16>
    tpu.vector_store %arg8[%c80_788, %c0_789], %919 {strides = array<i32>} : memref<256x64xbf16, #tpu.memory_space<vmem>>, vector<16x64xbf16>,
    %c96_790 = arith.constant 96 : index
    %c0_791 = arith.constant 0 : index
    %922 = vector.load %arg9[%c96_790, %c0_791] : memref<256x64xf32, #tpu.memory_space<vmem>>, vector<16x64xf32>
    %cst_792 = arith.constant dense<0.000000e+00> : vector<16x64xf32>
    %923 = tpu.matmul %914, %876, %cst_792 {dimension_numbers = #tpu.dot_dimension_numbers<[1], [0], [0], [1], [0, 0, 1, 1], [], []>} : vector<16x64xbf16>, vector<64x64xbf16>, vector<16x64xf32> -> vector<16x64xf32>
    %924 = arith.addf %922, %923 : vector<16x64xf32>
    %925 = math.tanh %924 : vector<16x64xf32>
    %926 = arith.truncf %925 : vector<16x64xf32> to vector<16x64xbf16>
    %c112_793 = arith.constant 112 : index
    %c0_794 = arith.constant 0 : index
    %927 = vector.load %arg9[%c112_793, %c0_794] : memref<256x64xf32, #tpu.memory_space<vmem>>, vector<16x64xf32>
    %cst_795 = arith.constant dense<0.000000e+00> : vector<16x64xf32>
    %928 = tpu.matmul %919, %876, %cst_795 {dimension_numbers = #tpu.dot_dimension_numbers<[1], [0], [0], [1], [0, 0, 1, 1], [], []>} : vector<16x64xbf16>, vector<64x64xbf16>, vector<16x64xf32> -> vector<16x64xf32>
    %929 = arith.addf %927, %928 : vector<16x64xf32>
    %930 = math.tanh %929 : vector<16x64xf32>
    %931 = arith.truncf %930 : vector<16x64xf32> to vector<16x64xbf16>
    %c96_796 = arith.constant 96 : index
    %c0_797 = arith.constant 0 : index
    %932 = vector.load %arg8[%c96_796, %c0_797] : memref<256x64xbf16, #tpu.memory_space<vmem>>, vector<16x64xbf16>
    tpu.vector_store %arg8[%c96_796, %c0_797], %926 {strides = array<i32>} : memref<256x64xbf16, #tpu.memory_space<vmem>>, vector<16x64xbf16>,
    %c112_798 = arith.constant 112 : index
    %c0_799 = arith.constant 0 : index
    %933 = vector.load %arg8[%c112_798, %c0_799] : memref<256x64xbf16, #tpu.memory_space<vmem>>, vector<16x64xbf16>
    tpu.vector_store %arg8[%c112_798, %c0_799], %931 {strides = array<i32>} : memref<256x64xbf16, #tpu.memory_space<vmem>>, vector<16x64xbf16>,
    %c128_800 = arith.constant 128 : index
    %c0_801 = arith.constant 0 : index
    %934 = vector.load %arg9[%c128_800, %c0_801] : memref<256x64xf32, #tpu.memory_space<vmem>>, vector<16x64xf32>
    %cst_802 = arith.constant dense<0.000000e+00> : vector<16x64xf32>
    %935 = tpu.matmul %926, %876, %cst_802 {dimension_numbers = #tpu.dot_dimension_numbers<[1], [0], [0], [1], [0, 0, 1, 1], [], []>} : vector<16x64xbf16>, vector<64x64xbf16>, vector<16x64xf32> -> vector<16x64xf32>
    %936 = arith.addf %934, %935 : vector<16x64xf32>
    %937 = math.tanh %936 : vector<16x64xf32>
    %938 = arith.truncf %937 : vector<16x64xf32> to vector<16x64xbf16>
    %c144_803 = arith.constant 144 : index
    %c0_804 = arith.constant 0 : index
    %939 = vector.load %arg9[%c144_803, %c0_804] : memref<256x64xf32, #tpu.memory_space<vmem>>, vector<16x64xf32>
    %cst_805 = arith.constant dense<0.000000e+00> : vector<16x64xf32>
    %940 = tpu.matmul %931, %876, %cst_805 {dimension_numbers = #tpu.dot_dimension_numbers<[1], [0], [0], [1], [0, 0, 1, 1], [], []>} : vector<16x64xbf16>, vector<64x64xbf16>, vector<16x64xf32> -> vector<16x64xf32>
    %941 = arith.addf %939, %940 : vector<16x64xf32>
    %942 = math.tanh %941 : vector<16x64xf32>
    %943 = arith.truncf %942 : vector<16x64xf32> to vector<16x64xbf16>
    %c128_806 = arith.constant 128 : index
    %c0_807 = arith.constant 0 : index
    %944 = vector.load %arg8[%c128_806, %c0_807] : memref<256x64xbf16, #tpu.memory_space<vmem>>, vector<16x64xbf16>
    tpu.vector_store %arg8[%c128_806, %c0_807], %938 {strides = array<i32>} : memref<256x64xbf16, #tpu.memory_space<vmem>>, vector<16x64xbf16>,
    %c144_808 = arith.constant 144 : index
    %c0_809 = arith.constant 0 : index
    %945 = vector.load %arg8[%c144_808, %c0_809] : memref<256x64xbf16, #tpu.memory_space<vmem>>, vector<16x64xbf16>
    tpu.vector_store %arg8[%c144_808, %c0_809], %943 {strides = array<i32>} : memref<256x64xbf16, #tpu.memory_space<vmem>>, vector<16x64xbf16>,
    %c160_810 = arith.constant 160 : index
    %c0_811 = arith.constant 0 : index
    %946 = vector.load %arg9[%c160_810, %c0_811] : memref<256x64xf32, #tpu.memory_space<vmem>>, vector<16x64xf32>
    %cst_812 = arith.constant dense<0.000000e+00> : vector<16x64xf32>
    %947 = tpu.matmul %938, %876, %cst_812 {dimension_numbers = #tpu.dot_dimension_numbers<[1], [0], [0], [1], [0, 0, 1, 1], [], []>} : vector<16x64xbf16>, vector<64x64xbf16>, vector<16x64xf32> -> vector<16x64xf32>
    %948 = arith.addf %946, %947 : vector<16x64xf32>
    %949 = math.tanh %948 : vector<16x64xf32>
    %950 = arith.truncf %949 : vector<16x64xf32> to vector<16x64xbf16>
    %c176_813 = arith.constant 176 : index
    %c0_814 = arith.constant 0 : index
    %951 = vector.load %arg9[%c176_813, %c0_814] : memref<256x64xf32, #tpu.memory_space<vmem>>, vector<16x64xf32>
    %cst_815 = arith.constant dense<0.000000e+00> : vector<16x64xf32>
    %952 = tpu.matmul %943, %876, %cst_815 {dimension_numbers = #tpu.dot_dimension_numbers<[1], [0], [0], [1], [0, 0, 1, 1], [], []>} : vector<16x64xbf16>, vector<64x64xbf16>, vector<16x64xf32> -> vector<16x64xf32>
    %953 = arith.addf %951, %952 : vector<16x64xf32>
    %954 = math.tanh %953 : vector<16x64xf32>
    %955 = arith.truncf %954 : vector<16x64xf32> to vector<16x64xbf16>
    %c160_816 = arith.constant 160 : index
    %c0_817 = arith.constant 0 : index
    %956 = vector.load %arg8[%c160_816, %c0_817] : memref<256x64xbf16, #tpu.memory_space<vmem>>, vector<16x64xbf16>
    tpu.vector_store %arg8[%c160_816, %c0_817], %950 {strides = array<i32>} : memref<256x64xbf16, #tpu.memory_space<vmem>>, vector<16x64xbf16>,
    %c176_818 = arith.constant 176 : index
    %c0_819 = arith.constant 0 : index
    %957 = vector.load %arg8[%c176_818, %c0_819] : memref<256x64xbf16, #tpu.memory_space<vmem>>, vector<16x64xbf16>
    tpu.vector_store %arg8[%c176_818, %c0_819], %955 {strides = array<i32>} : memref<256x64xbf16, #tpu.memory_space<vmem>>, vector<16x64xbf16>,
    %c192_820 = arith.constant 192 : index
    %c0_821 = arith.constant 0 : index
    %958 = vector.load %arg9[%c192_820, %c0_821] : memref<256x64xf32, #tpu.memory_space<vmem>>, vector<16x64xf32>
    %cst_822 = arith.constant dense<0.000000e+00> : vector<16x64xf32>
    %959 = tpu.matmul %950, %876, %cst_822 {dimension_numbers = #tpu.dot_dimension_numbers<[1], [0], [0], [1], [0, 0, 1, 1], [], []>} : vector<16x64xbf16>, vector<64x64xbf16>, vector<16x64xf32> -> vector<16x64xf32>
    %960 = arith.addf %958, %959 : vector<16x64xf32>
    %961 = math.tanh %960 : vector<16x64xf32>
    %962 = arith.truncf %961 : vector<16x64xf32> to vector<16x64xbf16>
    %c208_823 = arith.constant 208 : index
    %c0_824 = arith.constant 0 : index
    %963 = vector.load %arg9[%c208_823, %c0_824] : memref<256x64xf32, #tpu.memory_space<vmem>>, vector<16x64xf32>
    %cst_825 = arith.constant dense<0.000000e+00> : vector<16x64xf32>
    %964 = tpu.matmul %955, %876, %cst_825 {dimension_numbers = #tpu.dot_dimension_numbers<[1], [0], [0], [1], [0, 0, 1, 1], [], []>} : vector<16x64xbf16>, vector<64x64xbf16>, vector<16x64xf32> -> vector<16x64xf32>
    %965 = arith.addf %963, %964 : vector<16x64xf32>
    %966 = math.tanh %965 : vector<16x64xf32>
    %967 = arith.truncf %966 : vector<16x64xf32> to vector<16x64xbf16>
    %c192_826 = arith.constant 192 : index
    %c0_827 = arith.constant 0 : index
    %968 = vector.load %arg8[%c192_826, %c0_827] : memref<256x64xbf16, #tpu.memory_space<vmem>>, vector<16x64xbf16>
    tpu.vector_store %arg8[%c192_826, %c0_827], %962 {strides = array<i32>} : memref<256x64xbf16, #tpu.memory_space<vmem>>, vector<16x64xbf16>,
    %c208_828 = arith.constant 208 : index
    %c0_829 = arith.constant 0 : index
    %969 = vector.load %arg8[%c208_828, %c0_829] : memref<256x64xbf16, #tpu.memory_space<vmem>>, vector<16x64xbf16>
    tpu.vector_store %arg8[%c208_828, %c0_829], %967 {strides = array<i32>} : memref<256x64xbf16, #tpu.memory_space<vmem>>, vector<16x64xbf16>,
    %c224_830 = arith.constant 224 : index
    %c0_831 = arith.constant 0 : index
    %970 = vector.load %arg9[%c224_830, %c0_831] : memref<256x64xf32, #tpu.memory_space<vmem>>, vector<16x64xf32>
    %cst_832 = arith.constant dense<0.000000e+00> : vector<16x64xf32>
    %971 = tpu.matmul %962, %876, %cst_832 {dimension_numbers = #tpu.dot_dimension_numbers<[1], [0], [0], [1], [0, 0, 1, 1], [], []>} : vector<16x64xbf16>, vector<64x64xbf16>, vector<16x64xf32> -> vector<16x64xf32>
    %972 = arith.addf %970, %971 : vector<16x64xf32>
    %973 = math.tanh %972 : vector<16x64xf32>
    %974 = arith.truncf %973 : vector<16x64xf32> to vector<16x64xbf16>
    %c240_833 = arith.constant 240 : index
    %c0_834 = arith.constant 0 : index
    %975 = vector.load %arg9[%c240_833, %c0_834] : memref<256x64xf32, #tpu.memory_space<vmem>>, vector<16x64xf32>
    %cst_835 = arith.constant dense<0.000000e+00> : vector<16x64xf32>
    %976 = tpu.matmul %967, %876, %cst_835 {dimension_numbers = #tpu.dot_dimension_numbers<[1], [0], [0], [1], [0, 0, 1, 1], [], []>} : vector<16x64xbf16>, vector<64x64xbf16>, vector<16x64xf32> -> vector<16x64xf32>
    %977 = arith.addf %975, %976 : vector<16x64xf32>
    %978 = math.tanh %977 : vector<16x64xf32>
    %979 = arith.truncf %978 : vector<16x64xf32> to vector<16x64xbf16>
    %c224_836 = arith.constant 224 : index
    %c0_837 = arith.constant 0 : index
    %980 = vector.load %arg8[%c224_836, %c0_837] : memref<256x64xbf16, #tpu.memory_space<vmem>>, vector<16x64xbf16>
    tpu.vector_store %arg8[%c224_836, %c0_837], %974 {strides = array<i32>} : memref<256x64xbf16, #tpu.memory_space<vmem>>, vector<16x64xbf16>,
    %c240_838 = arith.constant 240 : index
    %c0_839 = arith.constant 0 : index
    %981 = vector.load %arg8[%c240_838, %c0_839] : memref<256x64xbf16, #tpu.memory_space<vmem>>, vector<16x64xbf16>
    tpu.vector_store %arg8[%c240_838, %c0_839], %979 {strides = array<i32>} : memref<256x64xbf16, #tpu.memory_space<vmem>>, vector<16x64xbf16>,
    %c224_840 = arith.constant 224 : index
    %c0_841 = arith.constant 0 : index
    %982 = vector.load %arg8[%c224_840, %c0_841] : memref<256x64xbf16, #tpu.memory_space<vmem>>, vector<32x64xbf16>
    %c0_842 = arith.constant 0 : index
    %c0_843 = arith.constant 0 : index
    %983 = vector.load %arg5[%c0_842, %c0_843] : memref<64x128xbf16, #tpu.memory_space<vmem>>, vector<64x128xbf16>
    %cst_844 = arith.constant dense<0.000000e+00> : vector<32x128xf32>
    %984 = tpu.matmul %982, %983, %cst_844 {dimension_numbers = #tpu.dot_dimension_numbers<[1], [0], [0], [1], [0, 0, 1, 1], [], []>} : vector<32x64xbf16>, vector<64x128xbf16>, vector<32x128xf32> -> vector<32x128xf32>
    %c0_845 = arith.constant 0 : index
    %c0_846 = arith.constant 0 : index
    %985 = vector.load %arg6[%c0_845, %c0_846] : memref<1x128xf32, #tpu.memory_space<vmem>>, vector<1x128xf32>
    %986 = vector.broadcast %985 : vector<1x128xf32> to vector<32x128xf32>
    %987 = arith.addf %984, %986 : vector<32x128xf32>
    %c0_847 = arith.constant 0 : index
    %c0_848 = arith.constant 0 : index
    %988 = vector.load %arg7[%c0_847, %c0_848] : memref<32x128xf32, #tpu.memory_space<vmem>>, vector<32x128xf32>
    tpu.vector_store %arg7[%c0_847, %c0_848], %987 {strides = array<i32>} : memref<32x128xf32, #tpu.memory_space<vmem>>, vector<32x128xf32>,
    return
  }
  func.func @transform_0(%arg0: i32) -> (i32, i32, i32) {
    %c0_i32 = arith.constant 0 : i32
    %c0_i32_0 = arith.constant 0 : i32
    %c0_i32_1 = arith.constant 0 : i32
    return %c0_i32, %arg0, %c0_i32_0 : i32, i32, i32
  }
  func.func @transform_1(%arg0: i32) -> (i32, i32, i32) {
    %c0_i32 = arith.constant 0 : i32
    %c0_i32_0 = arith.constant 0 : i32
    %c0_i32_1 = arith.constant 0 : i32
    %c0_i32_2 = arith.constant 0 : i32
    return %c0_i32, %c0_i32_0, %c0_i32_1 : i32, i32, i32
  }
  func.func @transform_2(%arg0: i32) -> (i32, i32, i32) {
    %c0_i32 = arith.constant 0 : i32
    %c0_i32_0 = arith.constant 0 : i32
    %c0_i32_1 = arith.constant 0 : i32
    %c0_i32_2 = arith.constant 0 : i32
    return %c0_i32, %c0_i32_0, %c0_i32_1 : i32, i32, i32
  }
  func.func @transform_3(%arg0: i32) -> (i32, i32, i32) {
    %c0_i32 = arith.constant 0 : i32
    %c0_i32_0 = arith.constant 0 : i32
    %c0_i32_1 = arith.constant 0 : i32
    %c0_i32_2 = arith.constant 0 : i32
    return %c0_i32, %c0_i32_0, %c0_i32_1 : i32, i32, i32
  }
  func.func @transform_4(%arg0: i32) -> (i32, i32) {
    %c0_i32 = arith.constant 0 : i32
    %c0_i32_0 = arith.constant 0 : i32
    %c0_i32_1 = arith.constant 0 : i32
    return %c0_i32, %c0_i32_0 : i32, i32
  }
  func.func @transform_5(%arg0: i32) -> (i32, i32) {
    %c0_i32 = arith.constant 0 : i32
    %c0_i32_0 = arith.constant 0 : i32
    %c0_i32_1 = arith.constant 0 : i32
    return %c0_i32, %c0_i32_0 : i32, i32
  }
  func.func @transform_6(%arg0: i32) -> (i32, i32) {
    %c0_i32 = arith.constant 0 : i32
    %c0_i32_0 = arith.constant 0 : i32
    return %arg0, %c0_i32 : i32, i32
  }
}

</mosaic_0001>

<llo_original>
// kernel: tpu_custom_call.1
$region0: #{tpu_custom_call.1}
  #allocation0 [shape = 'u32[]', space=smem, size = 0x4, offset = 0x4, fixed_abs, tag = 'smem constant byte address 0x4 - core index']
  #allocation1 [shape = 'u32[72,128]{1,0:T(1,128)}', space=vmem, size = 0x9000, scoped, tag = 'internal scratch']
  #allocation2 [shape = 'bf16[256,64]{1,0:T(8,128)(2,1)}', space=vmem, size = 0x10000, scoped, tag = 'scratch operand']
  #allocation3 [shape = 'f32[256,64]{1,0:T(8,128)}', space=vmem, size = 0x20000, scoped, tag = 'scratch operand']
  %s0 = inlined_call_operand.hbm [shape: bf16[8,32,64], index: 0, kind: input, shape index: {}]
  %s1 = inlined_call_operand.hbm [shape: bf16[9,64,64], index: 1, kind: input, shape index: {}]
  %s2 = inlined_call_operand.hbm [shape: bf16[9,64,64], index: 2, kind: input, shape index: {}]
  %s3 = inlined_call_operand.hbm [shape: f32[9,1,64], index: 3, kind: input, shape index: {}]
  %s4 = inlined_call_operand.hbm [shape: bf16[64,128], index: 4, kind: input, shape index: {}]
  %s5 = inlined_call_operand.vmem [shape: f32[1,128], index: 5, kind: input, shape index: {}]
  %s6 = inlined_call_operand.hbm [shape: f32[32,128], index: 6, kind: output, shape index: {}]
  %s7 = sld [smem:[#allocation0]]
  $region54: #{tpu_custom_call.1} parent=0
    _
  %s9 = ssub.s32 1, %s7
  %s10 = scalar_select 0, %s9, %s7
  $region1: #{tpu_custom_call.1} parent=0
    #allocation4 [shape = 'u8[65536]{0}', space=vmem, size = 0x10000, scoped, tag = 'input window, operand 0, single buffered']
    #allocation5 [shape = 's32[1]{0}', space=sflag, size = 0x4, scoped, tag = 'scoped memory for tpu_custom_call.1']
    #allocation6 [shape = 's32[1]{0}', space=sflag, size = 0x4, scoped, tag = 'scoped memory for tpu_custom_call.1']
    #allocation7 [shape = 'u8[147456]{0}', space=vmem, size = 0x24000, scoped, tag = 'input window, operand 1, single buffered']
    #allocation8 [shape = 's32[1]{0}', space=sflag, size = 0x4, scoped, tag = 'scoped memory for tpu_custom_call.1']
    #allocation9 [shape = 'u8[147456]{0}', space=vmem, size = 0x24000, scoped, tag = 'input window, operand 2, single buffered']
    #allocation10 [shape = 'u8[4608]{0}', space=vmem, size = 0x1400, scoped, tag = 'input window, operand 3, single buffered']
    #allocation11 [shape = 's32[1]{0}', space=sflag, size = 0x4, scoped, tag = 'scoped memory for tpu_custom_call.1']
    #allocation12 [shape = 'u8[16384]{0}', space=vmem, size = 0x4000, scoped, tag = 'input window, operand 4, single buffered']
    #allocation13 [shape = 'u8[16384]{0}', space=vmem, size = 0x4000, scoped, tag = 'output window, operand 0, single buffered']
    %11 = vsyncpa [#allocation5], 0
    %12 = vsyncpa [#allocation8], 0
    %13 = vsyncpa [#allocation11], 0
    %14 = vsyncpa [#allocation6], 0
    // Predicated region
    $region2: #{tpu_custom_call.1} parent=1 // pred_check
      _
    $region3: #{tpu_custom_call.1} parent=1 // pred_check_branch
      %16 = sbr.rel (0) target = $region5
    $region4: #{tpu_custom_call.1} parent=1 // pred_region
      %18 = vsyncadd [#allocation5], 0
      %s19 = sshll.u32 %s0, 4
      %s20 = int_to_ptr.hbm [resolvable:$true] %s19
      %s21 = sshll.u32 [#allocation4], 4
      %s22 = int_to_ptr.vmem [resolvable:$true] %s21
      %27 = dma.hbm_to_vmem [thread:$0]  %s20, 2048, %s22, [#allocation5], 64, 64, 4
    $region5: #{tpu_custom_call.1} parent=1 // pred_fallthru
      _
    // Predicated region
    $region6: #{tpu_custom_call.1} parent=1 // pred_check
      _
    $region7: #{tpu_custom_call.1} parent=1 // pred_check_branch
      %29 = sbr.rel (0) target = $region9
    $region8: #{tpu_custom_call.1} parent=1 // pred_region
      %31 = vsyncadd [#allocation8], 0
      %s32 = sshll.u32 %s1, 4
      %s33 = int_to_ptr.hbm [resolvable:$true] %s32
      %s34 = sshll.u32 [#allocation7], 4
      %s35 = int_to_ptr.vmem [resolvable:$true] %s34
      %40 = dma.hbm_to_vmem [thread:$0]  %s33, 4608, %s35, [#allocation8], 64, 64, 4
    $region9: #{tpu_custom_call.1} parent=1 // pred_fallthru
      _
    // Predicated region
    $region10: #{tpu_custom_call.1} parent=1 // pred_check
      _
    $region11: #{tpu_custom_call.1} parent=1 // pred_check_branch
      %42 = sbr.rel (0) target = $region13
    $region12: #{tpu_custom_call.1} parent=1 // pred_region
      %44 = vsyncadd [#allocation8], 0
      %s45 = sshll.u32 %s2, 4
      %s46 = int_to_ptr.hbm [resolvable:$true] %s45
      %s47 = sshll.u32 [#allocation9], 4
      %s48 = int_to_ptr.vmem [resolvable:$true] %s47
      %53 = dma.hbm_to_vmem [thread:$0]  %s46, 4608, %s48, [#allocation8], 64, 64, 4
    $region13: #{tpu_custom_call.1} parent=1 // pred_fallthru
      _
    // Predicated region
    $region14: #{tpu_custom_call.1} parent=1 // pred_check
      _
    $region15: #{tpu_custom_call.1} parent=1 // pred_check_branch
      %55 = sbr.rel (0) target = $region17
    $region16: #{tpu_custom_call.1} parent=1 // pred_region
      %57 = vsyncadd [#allocation11], 0
      %s58 = sshll.u32 %s3, 4
      %s59 = int_to_ptr.hbm [resolvable:$true] %s58
      %s60 = sshll.u32 [#allocation10], 4
      %s61 = int_to_ptr.vmem [resolvable:$true] %s60
      %66 = dma.hbm_to_vmem [thread:$0]  %s59, 144, %s61, [#allocation11], 16, 16, 1
    $region17: #{tpu_custom_call.1} parent=1 // pred_fallthru
      _
    // Predicated region
    $region18: #{tpu_custom_call.1} parent=1 // pred_check
      _
    $region19: #{tpu_custom_call.1} parent=1 // pred_check_branch
      %68 = sbr.rel (0) target = $region21
    $region20: #{tpu_custom_call.1} parent=1 // pred_region
      %70 = vsyncadd [#allocation11], 0
      %s71 = sshll.u32 %s4, 4
      %s72 = int_to_ptr.hbm [resolvable:$true] %s71
      %s73 = sshll.u32 [#allocation12], 4
      %s74 = int_to_ptr.vmem [resolvable:$true] %s73
      %79 = dma.hbm_to_vmem [thread:$0]  %s72, 512, %s74, [#allocation11], 64, 64, 4
    $region21: #{tpu_custom_call.1} parent=1 // pred_fallthru
      _
    // Predicated region
    $region22: #{tpu_custom_call.1} parent=1 // pred_check
      _
    $region23: #{tpu_custom_call.1} parent=1 // pred_check_branch
      %81 = sbr.rel (0) target = $region25
    $region24: #{tpu_custom_call.1} parent=1 // pred_region
      _
    $region25: #{tpu_custom_call.1} parent=1 // pred_fallthru
      _
    // Predicated region
    $region26: #{tpu_custom_call.1} parent=1 // pred_check
      _
    $region27: #{tpu_custom_call.1} parent=1 // pred_check_branch
      %83 = sbr.rel (0) target = $region29
    $region28: #{tpu_custom_call.1} parent=1 // pred_region
      %85 = dma.done [#allocation5], 2048
    $region29: #{tpu_custom_call.1} parent=1 // pred_fallthru
      _
    // Predicated region
    $region30: #{tpu_custom_call.1} parent=1 // pred_check
      _
    $region31: #{tpu_custom_call.1} parent=1 // pred_check_branch
      %87 = sbr.rel (0) target = $region33
    $region32: #{tpu_custom_call.1} parent=1 // pred_region
      %89 = dma.done [#allocation8], 4608
    $region33: #{tpu_custom_call.1} parent=1 // pred_fallthru
      _
    // Predicated region
    $region34: #{tpu_custom_call.1} parent=1 // pred_check
      _
    $region35: #{tpu_custom_call.1} parent=1 // pred_check_branch
      %91 = sbr.rel (0) target = $region37
    $region36: #{tpu_custom_call.1} parent=1 // pred_region
      %93 = dma.done [#allocation8], 4608
    $region37: #{tpu_custom_call.1} parent=1 // pred_fallthru
      _
    // Predicated region
    $region38: #{tpu_custom_call.1} parent=1 // pred_check
      _
    $region39: #{tpu_custom_call.1} parent=1 // pred_check_branch
      %95 = sbr.rel (0) target = $region41
    $region40: #{tpu_custom_call.1} parent=1 // pred_region
      %97 = dma.done [#allocation11], 144
    $region41: #{tpu_custom_call.1} parent=1 // pred_fallthru
      _
    // Predicated region
    $region42: #{tpu_custom_call.1} parent=1 // pred_check
      _
    $region43: #{tpu_custom_call.1} parent=1 // pred_check_branch
      %99 = sbr.rel (0) target = $region45
    $region44: #{tpu_custom_call.1} parent=1 // pred_region
      %101 = dma.done [#allocation11], 512
    $region45: #{tpu_custom_call.1} parent=1 // pred_fallthru
      _
    %v103 = vld [vmem:[#allocation7] sm:$0xf]
    %v104 = vld [vmem:[#allocation7 + $0x4] sm:$0xf]
    %v105 = vld [vmem:[#allocation7 + $0x8] sm:$0xf]
    %v106 = vld [vmem:[#allocation7 + $0xc] sm:$0xf]
    %v107 = vld [vmem:[#allocation7 + $0x10] sm:$0xf]
    %v108 = vld [vmem:[#allocation7 + $0x14] sm:$0xf]
    %v109 = vld [vmem:[#allocation7 + $0x18] sm:$0xf]
    %v110 = vld [vmem:[#allocation7 + $0x1c] sm:$0xf]
    %v111 = vld [vmem:[#allocation9] sm:$0xf]
    %v112 = vld [vmem:[#allocation9 + $0x4] sm:$0xf]
    %v113 = vld [vmem:[#allocation9 + $0x8] sm:$0xf]
    %v114 = vld [vmem:[#allocation9 + $0xc] sm:$0xf]
    %v115 = vld [vmem:[#allocation9 + $0x10] sm:$0xf]
    %v116 = vld [vmem:[#allocation9 + $0x14] sm:$0xf]
    %v117 = vld [vmem:[#allocation9 + $0x18] sm:$0xf]
    %v118 = vld [vmem:[#allocation9 + $0x1c] sm:$0xf]
    %v119 = vld [vmem:[#allocation10] sm:$0x1]
    %v120 = vld [vmem:[#allocation4] sm:$0xf]
    %v121 = vld [vmem:[#allocation4 + $0x4] sm:$0xf]
    %v122 = vld [vmem:[#allocation4 + $0x8] sm:$0xf]
    %v123 = vld [vmem:[#allocation4 + $0xc] sm:$0xf]
    %v124 = vld [vmem:[#allocation4 + $0x10] sm:$0xf]
    %v125 = vld [vmem:[#allocation4 + $0x14] sm:$0xf]
    %v126 = vld [vmem:[#allocation4 + $0x18] sm:$0xf]
    %v127 = vld [vmem:[#allocation4 + $0x1c] sm:$0xf]
    %v128 = vld [vmem:[#allocation4 + $0x20] sm:$0xf]
    %v129 = vld [vmem:[#allocation4 + $0x24] sm:$0xf]
    %v130 = vld [vmem:[#allocation4 + $0x28] sm:$0xf]
    %v131 = vld [vmem:[#allocation4 + $0x2c] sm:$0xf]
    %v132 = vld [vmem:[#allocation4 + $0x30] sm:$0xf]
    %v133 = vld [vmem:[#allocation4 + $0x34] sm:$0xf]
    %v134 = vld [vmem:[#allocation4 + $0x38] sm:$0xf]
    %v135 = vld [vmem:[#allocation4 + $0x3c] sm:$0xf]
    %v136 = vld [vmem:[#allocation4 + $0x40] sm:$0xf]
    %v137 = vld [vmem:[#allocation4 + $0x44] sm:$0xf]
    %v138 = vld [vmem:[#allocation4 + $0x48] sm:$0xf]
    %v139 = vld [vmem:[#allocation4 + $0x4c] sm:$0xf]
    %v140 = vld [vmem:[#allocation4 + $0x50] sm:$0xf]
    %v141 = vld [vmem:[#allocation4 + $0x54] sm:$0xf]
    %v142 = vld [vmem:[#allocation4 + $0x58] sm:$0xf]
    %v143 = vld [vmem:[#allocation4 + $0x5c] sm:$0xf]
    %v144 = vld [vmem:[#allocation4 + $0x60] sm:$0xf]
    %v145 = vld [vmem:[#allocation4 + $0x64] sm:$0xf]
    %v146 = vld [vmem:[#allocation4 + $0x68] sm:$0xf]
    %v147 = vld [vmem:[#allocation4 + $0x6c] sm:$0xf]
    %v148 = vld [vmem:[#allocation4 + $0x70] sm:$0xf]
    %v149 = vld [vmem:[#allocation4 + $0x74] sm:$0xf]
    %v150 = vld [vmem:[#allocation4 + $0x78] sm:$0xf]
    %v151 = vld [vmem:[#allocation4 + $0x7c] sm:$0xf]
    %v153 = vperm.slane %v119, 0
    %v187 = vunpack.c.l.b16 %v120
    %v188 = vunpack.c.l.b16 %v121
    %v189 = vunpack.c.l.b16 %v122
    %v190 = vunpack.c.l.b16 %v123
    %v191 = vunpack.c.l.b16 %v124
    %v192 = vunpack.c.l.b16 %v125
    %v193 = vunpack.c.l.b16 %v126
    %v194 = vunpack.c.l.b16 %v127
    %v195 = vunpack.c.l.b16 %v128
    %v196 = vunpack.c.l.b16 %v129
    %v197 = vunpack.c.l.b16 %v130
    %v198 = vunpack.c.l.b16 %v131
    %v199 = vunpack.c.l.b16 %v132
    %v200 = vunpack.c.l.b16 %v133
    %v201 = vunpack.c.l.b16 %v134
    %v202 = vunpack.c.l.b16 %v135
    %v203 = vunpack.c.l.b16 %v136
    %v204 = vunpack.c.l.b16 %v137
    %v205 = vunpack.c.l.b16 %v138
    %v206 = vunpack.c.l.b16 %v139
    %v207 = vunpack.c.l.b16 %v140
    %v208 = vunpack.c.l.b16 %v141
    %v209 = vunpack.c.l.b16 %v142
    %v210 = vunpack.c.l.b16 %v143
    %v211 = vunpack.c.l.b16 %v144
    %v212 = vunpack.c.l.b16 %v145
    %v213 = vunpack.c.l.b16 %v146
    %v214 = vunpack.c.l.b16 %v147
    %v215 = vunpack.c.l.b16 %v148
    %v216 = vunpack.c.l.b16 %v149
    %v217 = vunpack.c.l.b16 %v150
    %v218 = vunpack.c.l.b16 %v151
    %v219 = vpack.c.b16 %v188, %v187
    %v220 = vpack.c.b16 %v190, %v189
    %v221 = vpack.c.b16 %v192, %v191
    %v222 = vpack.c.b16 %v194, %v193
    %v223 = vpack.c.b16 %v196, %v195
    %v224 = vpack.c.b16 %v198, %v197
    %v225 = vpack.c.b16 %v200, %v199
    %v226 = vpack.c.b16 %v202, %v201
    %v227 = vpack.c.b16 %v204, %v203
    %v228 = vpack.c.b16 %v206, %v205
    %v229 = vpack.c.b16 %v208, %v207
    %v230 = vpack.c.b16 %v210, %v209
    %v231 = vpack.c.b16 %v212, %v211
    %v232 = vpack.c.b16 %v214, %v213
    %v233 = vpack.c.b16 %v216, %v215
    %v234 = vpack.c.b16 %v218, %v217
    %v243 = vunpack.c.l.b16 %v103
    %v244 = vunpack.c.l.b16 %v104
    %v245 = vunpack.c.l.b16 %v105
    %v246 = vunpack.c.l.b16 %v106
    %v247 = vunpack.c.l.b16 %v107
    %v248 = vunpack.c.l.b16 %v108
    %v249 = vunpack.c.l.b16 %v109
    %v250 = vunpack.c.l.b16 %v110
    %v251 = vpack.c.b16 %v244, %v243
    %v252 = vpack.c.b16 %v246, %v245
    %v253 = vpack.c.b16 %v248, %v247
    %v254 = vpack.c.b16 %v250, %v249
    %vm259 = vcmask 523264
    %v261 = vsel %vm259, %v219, 0
    %v264 = vsel %vm259, %v220, 0
    %v267 = vsel %vm259, %v221, 0
    %v270 = vsel %vm259, %v222, 0
    %v273 = vsel %vm259, %v223, 0
    %v276 = vsel %vm259, %v224, 0
    %v279 = vsel %vm259, %v225, 0
    %v282 = vsel %vm259, %v226, 0
    %v285 = vsel %vm259, %v227, 0
    %v288 = vsel %vm259, %v228, 0
    %v291 = vsel %vm259, %v229, 0
    %v294 = vsel %vm259, %v230, 0
    %v297 = vsel %vm259, %v231, 0
    %v300 = vsel %vm259, %v232, 0
    %v303 = vsel %vm259, %v233, 0
    %v306 = vsel %vm259, %v234, 0
    %308 = vmatpush.bf16.msra.mxu0 0
    %309 = vmatpush.bf16.msra.mxu0 0
    %310 = vmatpush.bf16.msra.mxu0 0
    %311 = vmatpush.bf16.msra.mxu0 0
    %312 = vmatpush.bf16.msra.mxu0 %v254
    %313 = vmatpush.bf16.msra.mxu0 %v253
    %314 = vmatpush.bf16.msra.mxu0 %v252
    %315 = vmatpush.bf16.msra.mxu0 %v251
    %316 = vmatmul.bf16.gmra.mxu0 %v261
    %v317 = vpop.f32.mrf.mxu0
    %v318 = vadd.f32 %v153, %v317
    %v319 = vpop.f32.mrf.mxu0
    %v320 = vadd.f32 %v153, %v319
    %321 = vmatmul.bf16.gmra.mxu0 %v264
    %v322 = vpop.f32.mrf.mxu0
    %v323 = vadd.f32 %v153, %v322
    %v324 = vpop.f32.mrf.mxu0
    %v325 = vadd.f32 %v153, %v324
    %326 = vmatmul.bf16.gmra.mxu0 %v267
    %v327 = vpop.f32.mrf.mxu0
    %v328 = vadd.f32 %v153, %v327
    %v329 = vpop.f32.mrf.mxu0
    %v330 = vadd.f32 %v153, %v329
    %331 = vmatmul.bf16.gmra.mxu0 %v270
    %v332 = vpop.f32.mrf.mxu0
    %v333 = vadd.f32 %v153, %v332
    %v334 = vpop.f32.mrf.mxu0
    %v335 = vadd.f32 %v153, %v334
    %336 = vmatmul.bf16.gmra.mxu0 %v273
    %v337 = vpop.f32.mrf.mxu0
    %v338 = vadd.f32 %v153, %v337
    %v339 = vpop.f32.mrf.mxu0
    %v340 = vadd.f32 %v153, %v339
    %341 = vmatmul.bf16.gmra.mxu0 %v276
    %v342 = vpop.f32.mrf.mxu0
    %v343 = vadd.f32 %v153, %v342
    %v344 = vpop.f32.mrf.mxu0
    %v345 = vadd.f32 %v153, %v344
    %346 = vmatmul.bf16.gmra.mxu0 %v279
    %v347 = vpop.f32.mrf.mxu0
    %v348 = vadd.f32 %v153, %v347
    %v349 = vpop.f32.mrf.mxu0
    %v350 = vadd.f32 %v153, %v349
    %351 = vmatmul.bf16.gmra.mxu0 %v282
    %v352 = vpop.f32.mrf.mxu0
    %v353 = vadd.f32 %v153, %v352
    %v354 = vpop.f32.mrf.mxu0
    %v355 = vadd.f32 %v153, %v354
    %356 = vmatmul.bf16.gmra.mxu0 %v285
    %v357 = vpop.f32.mrf.mxu0
    %v358 = vadd.f32 %v153, %v357
    %v359 = vpop.f32.mrf.mxu0
    %v360 = vadd.f32 %v153, %v359
    %361 = vmatmul.bf16.gmra.mxu0 %v288
    %v362 = vpop.f32.mrf.mxu0
    %v363 = vadd.f32 %v153, %v362
    %v364 = vpop.f32.mrf.mxu0
    %v365 = vadd.f32 %v153, %v364
    %366 = vmatmul.bf16.gmra.mxu0 %v291
    %v367 = vpop.f32.mrf.mxu0
    %v368 = vadd.f32 %v153, %v367
    %v369 = vpop.f32.mrf.mxu0
    %v370 = vadd.f32 %v153, %v369
    %371 = vmatmul.bf16.gmra.mxu0 %v294
    %v372 = vpop.f32.mrf.mxu0
    %v373 = vadd.f32 %v153, %v372
    %v374 = vpop.f32.mrf.mxu0
    %v375 = vadd.f32 %v153, %v374
    %376 = vmatmul.bf16.gmra.mxu0 %v297
    %v377 = vpop.f32.mrf.mxu0
    %v378 = vadd.f32 %v153, %v377
    %v379 = vpop.f32.mrf.mxu0
    %v380 = vadd.f32 %v153, %v379
    %381 = vmatmul.bf16.gmra.mxu0 %v300
    %v382 = vpop.f32.mrf.mxu0
    %v383 = vadd.f32 %v153, %v382
    %v384 = vpop.f32.mrf.mxu0
    %v385 = vadd.f32 %v153, %v384
    %386 = vmatmul.bf16.gmra.mxu0 %v303
    %v387 = vpop.f32.mrf.mxu0
    %v388 = vadd.f32 %v153, %v387
    %v389 = vpop.f32.mrf.mxu0
    %v390 = vadd.f32 %v153, %v389
    %391 = vmatmul.bf16.gmra.mxu0 %v306
    %v392 = vpop.f32.mrf.mxu0
    %v393 = vadd.f32 %v153, %v392
    %v394 = vpop.f32.mrf.mxu0
    %v395 = vadd.f32 %v153, %v394
    %396 = vdwg.mxu0
    %397 = vst.msk [vmem:[#allocation3] sm:$0xff] %vm259, %v318
    %398 = vst.msk [vmem:[#allocation3 + $0x8] sm:$0xff] %vm259, %v320
    %399 = vst.msk [vmem:[#allocation3 + $0x10] sm:$0xff] %vm259, %v323
    %400 = vst.msk [vmem:[#allocation3 + $0x18] sm:$0xff] %vm259, %v325
    %401 = vst.msk [vmem:[#allocation3 + $0x20] sm:$0xff] %vm259, %v328
    %402 = vst.msk [vmem:[#allocation3 + $0x28] sm:$0xff] %vm259, %v330
    %403 = vst.msk [vmem:[#allocation3 + $0x30] sm:$0xff] %vm259, %v333
    %404 = vst.msk [vmem:[#allocation3 + $0x38] sm:$0xff] %vm259, %v335
    %405 = vst.msk [vmem:[#allocation3 + $0x40] sm:$0xff] %vm259, %v338
    %406 = vst.msk [vmem:[#allocation3 + $0x48] sm:$0xff] %vm259, %v340
    %407 = vst.msk [vmem:[#allocation3 + $0x50] sm:$0xff] %vm259, %v343
    %408 = vst.msk [vmem:[#allocation3 + $0x58] sm:$0xff] %vm259, %v345
    %409 = vst.msk [vmem:[#allocation3 + $0x60] sm:$0xff] %vm259, %v348
    %410 = vst.msk [vmem:[#allocation3 + $0x68] sm:$0xff] %vm259, %v350
    %411 = vst.msk [vmem:[#allocation3 + $0x70] sm:$0xff] %vm259, %v353
    %412 = vst.msk [vmem:[#allocation3 + $0x78] sm:$0xff] %vm259, %v355
    %413 = vst.msk [vmem:[#allocation3 + $0x80] sm:$0xff] %vm259, %v358
    %414 = vst.msk [vmem:[#allocation3 + $0x88] sm:$0xff] %vm259, %v360
    %415 = vst.msk [vmem:[#allocation3 + $0x90] sm:$0xff] %vm259, %v363
    %416 = vst.msk [vmem:[#allocation3 + $0x98] sm:$0xff] %vm259, %v365
    %417 = vst.msk [vmem:[#allocation3 + $0xa0] sm:$0xff] %vm259, %v368
    %418 = vst.msk [vmem:[#allocation3 + $0xa8] sm:$0xff] %vm259, %v370
    %419 = vst.msk [vmem:[#allocation3 + $0xb0] sm:$0xff] %vm259, %v373
    %420 = vst.msk [vmem:[#allocation3 + $0xb8] sm:$0xff] %vm259, %v375
    %421 = vst.msk [vmem:[#allocation3 + $0xc0] sm:$0xff] %vm259, %v378
    %422 = vst.msk [vmem:[#allocation3 + $0xc8] sm:$0xff] %vm259, %v380
    %423 = vst.msk [vmem:[#allocation3 + $0xd0] sm:$0xff] %vm259, %v383
    %424 = vst.msk [vmem:[#allocation3 + $0xd8] sm:$0xff] %vm259, %v385
    %425 = vst.msk [vmem:[#allocation3 + $0xe0] sm:$0xff] %vm259, %v388
    %426 = vst.msk [vmem:[#allocation3 + $0xe8] sm:$0xff] %vm259, %v390
    %427 = vst.msk [vmem:[#allocation3 + $0xf0] sm:$0xff] %vm259, %v393
    %428 = vst.msk [vmem:[#allocation3 + $0xf8] sm:$0xff] %vm259, %v395
    %v429 = vld [vmem:[#allocation3] sm:$0xff]
    %v430 = vld [vmem:[#allocation3 + $0x8] sm:$0xff]
    %v439 = vunpack.c.l.b16 %v111
    %v440 = vunpack.c.l.b16 %v112
    %v441 = vunpack.c.l.b16 %v113
    %v442 = vunpack.c.l.b16 %v114
    %v443 = vunpack.c.l.b16 %v115
    %v444 = vunpack.c.l.b16 %v116
    %v445 = vunpack.c.l.b16 %v117
    %v446 = vunpack.c.l.b16 %v118
    %v447 = vpack.c.b16 %v440, %v439
    %v448 = vpack.c.b16 %v442, %v441
    %v449 = vpack.c.b16 %v444, %v443
    %v450 = vpack.c.b16 %v446, %v445
    %v456 = vsel %vm259, 0, 0
    %458 = vmatpush.bf16.msra.mxu0 0
    %459 = vmatpush.bf16.msra.mxu0 0
    %460 = vmatpush.bf16.msra.mxu0 0
    %461 = vmatpush.bf16.msra.mxu0 0
    %462 = vmatpush.bf16.msra.mxu0 %v450
    %463 = vmatpush.bf16.msra.mxu0 %v449
    %464 = vmatpush.bf16.msra.mxu0 %v448
    %465 = vmatpush.bf16.msra.mxu0 %v447
    %466 = vmatmul.bf16.gmra.mxu0 %v456
    %v467 = vpop.f32.mrf.mxu0
    %v468 = vadd.f32 0.0, %v467
    %v469 = vpop.f32.mrf.mxu0
    %v470 = vadd.f32 0.0, %v469
    %471 = vdwg.mxu0
    %v472 = vadd.f32 %v429, %v468
    %v473 = vadd.f32 %v430, %v470
    %v474 = vtanh.pop %v472
    %v475 = vtanh.pop %v473
    %v476 = vpack.c.bf16 %v474, %v474
    %v477 = vpack.c.bf16 %v475, %v475
    %v478 = vld [vmem:[#allocation3 + $0x10] sm:$0xff]
    %v479 = vld [vmem:[#allocation3 + $0x18] sm:$0xff]
    %v480 = vadd.f32 %v478, %v468
    %v481 = vadd.f32 %v479, %v470
    %v482 = vtanh.pop %v480
    %v483 = vtanh.pop %v481
    %v484 = vpack.c.bf16 %v482, %v482
    %v485 = vpack.c.bf16 %v483, %v483
    %vm486 = vcmask 519168
    %487 = vst.msk [vmem:[#allocation2] sm:$0xf] %vm486, %v476
    %488 = vst.msk [vmem:[#allocation2 + $0x4] sm:$0xf] %vm486, %v477
    %489 = vst.msk [vmem:[#allocation2 + $0x8] sm:$0xf] %vm486, %v484
    %490 = vst.msk [vmem:[#allocation2 + $0xc] sm:$0xf] %vm486, %v485
    %v491 = vld [vmem:[#allocation3 + $0x20] sm:$0xff]
    %v492 = vld [vmem:[#allocation3 + $0x28] sm:$0xff]
    %v495 = vunpack.c.l.b16 %v476
    %v496 = vunpack.c.l.b16 %v477
    %v497 = vpack.c.b16 %v496, %v495
    %v499 = vsel %vm259, %v497, 0
    %501 = vmatpush.bf16.msra.mxu0 0
    %502 = vmatpush.bf16.msra.mxu0 0
    %503 = vmatpush.bf16.msra.mxu0 0
    %504 = vmatpush.bf16.msra.mxu0 0
    %505 = vmatpush.bf16.msra.mxu0 %v450
    %506 = vmatpush.bf16.msra.mxu0 %v449
    %507 = vmatpush.bf16.msra.mxu0 %v448
    %508 = vmatpush.bf16.msra.mxu0 %v447
    %509 = vmatmul.bf16.gmra.mxu0 %v499
    %v510 = vpop.f32.mrf.mxu0
    %v511 = vadd.f32 0.0, %v510
    %v512 = vpop.f32.mrf.mxu0
    %v513 = vadd.f32 0.0, %v512
    %514 = vdwg.mxu0
    %v515 = vadd.f32 %v491, %v511
    %v516 = vadd.f32 %v492, %v513
    %v517 = vtanh.pop %v515
    %v518 = vtanh.pop %v516
    %v519 = vpack.c.bf16 %v517, %v517
    %v520 = vpack.c.bf16 %v518, %v518
    %v521 = vld [vmem:[#allocation3 + $0x30] sm:$0xff]
    %v522 = vld [vmem:[#allocation3 + $0x38] sm:$0xff]
    %v525 = vunpack.c.l.b16 %v484
    %v526 = vunpack.c.l.b16 %v485
    %v527 = vpack.c.b16 %v526, %v525
    %v529 = vsel %vm259, %v527, 0
    %531 = vmatpush.bf16.msra.mxu0 0
    %532 = vmatpush.bf16.msra.mxu0 0
    %533 = vmatpush.bf16.msra.mxu0 0
    %534 = vmatpush.bf16.msra.mxu0 0
    %535 = vmatpush.bf16.msra.mxu0 %v450
    %536 = vmatpush.bf16.msra.mxu0 %v449
    %537 = vmatpush.bf16.msra.mxu0 %v448
    %538 = vmatpush.bf16.msra.mxu0 %v447
    %539 = vmatmul.bf16.gmra.mxu0 %v529
    %v540 = vpop.f32.mrf.mxu0
    %v541 = vadd.f32 0.0, %v540
    %v542 = vpop.f32.mrf.mxu0
    %v543 = vadd.f32 0.0, %v542
    %544 = vdwg.mxu0
    %v545 = vadd.f32 %v521, %v541
    %v546 = vadd.f32 %v522, %v543
    %v547 = vtanh.pop %v545
    %v548 = vtanh.pop %v546
    %v549 = vpack.c.bf16 %v547, %v547
    %v550 = vpack.c.bf16 %v548, %v548
    %551 = vst.msk [vmem:[#allocation2 + $0x10] sm:$0xf] %vm486, %v519
    %552 = vst.msk [vmem:[#allocation2 + $0x14] sm:$0xf] %vm486, %v520
    %553 = vst.msk [vmem:[#allocation2 + $0x18] sm:$0xf] %vm486, %v549
    %554 = vst.msk [vmem:[#allocation2 + $0x1c] sm:$0xf] %vm486, %v550
    %v555 = vld [vmem:[#allocation3 + $0x40] sm:$0xff]
    %v556 = vld [vmem:[#allocation3 + $0x48] sm:$0xff]
    %v559 = vunpack.c.l.b16 %v519
    %v560 = vunpack.c.l.b16 %v520
    %v561 = vpack.c.b16 %v560, %v559
    %v563 = vsel %vm259, %v561, 0
    %565 = vmatpush.bf16.msra.mxu0 0
    %566 = vmatpush.bf16.msra.mxu0 0
    %567 = vmatpush.bf16.msra.mxu0 0
    %568 = vmatpush.bf16.msra.mxu0 0
    %569 = vmatpush.bf16.msra.mxu0 %v450
    %570 = vmatpush.bf16.msra.mxu0 %v449
    %571 = vmatpush.bf16.msra.mxu0 %v448
    %572 = vmatpush.bf16.msra.mxu0 %v447
    %573 = vmatmul.bf16.gmra.mxu0 %v563
    %v574 = vpop.f32.mrf.mxu0
    %v575 = vadd.f32 0.0, %v574
    %v576 = vpop.f32.mrf.mxu0
    %v577 = vadd.f32 0.0, %v576
    %578 = vdwg.mxu0
    %v579 = vadd.f32 %v555, %v575
    %v580 = vadd.f32 %v556, %v577
    %v581 = vtanh.pop %v579
    %v582 = vtanh.pop %v580
    %v583 = vpack.c.bf16 %v581, %v581
    %v584 = vpack.c.bf16 %v582, %v582
    %v585 = vld [vmem:[#allocation3 + $0x50] sm:$0xff]
    %v586 = vld [vmem:[#allocation3 + $0x58] sm:$0xff]
    %v589 = vunpack.c.l.b16 %v549
    %v590 = vunpack.c.l.b16 %v550
    %v591 = vpack.c.b16 %v590, %v589
    %v593 = vsel %vm259, %v591, 0
    %595 = vmatpush.bf16.msra.mxu0 0
    %596 = vmatpush.bf16.msra.mxu0 0
    %597 = vmatpush.bf16.msra.mxu0 0
    %598 = vmatpush.bf16.msra.mxu0 0
    %599 = vmatpush.bf16.msra.mxu0 %v450
    %600 = vmatpush.bf16.msra.mxu0 %v449
    %601 = vmatpush.bf16.msra.mxu0 %v448
    %602 = vmatpush.bf16.msra.mxu0 %v447
    %603 = vmatmul.bf16.gmra.mxu0 %v593
    %v604 = vpop.f32.mrf.mxu0
    %v605 = vadd.f32 0.0, %v604
    %v606 = vpop.f32.mrf.mxu0
    %v607 = vadd.f32 0.0, %v606
    %608 = vdwg.mxu0
    %v609 = vadd.f32 %v585, %v605
    %v610 = vadd.f32 %v586, %v607
    %v611 = vtanh.pop %v609
    %v612 = vtanh.pop %v610
    %v613 = vpack.c.bf16 %v611, %v611
    %v614 = vpack.c.bf16 %v612, %v612
    %615 = vst.msk [vmem:[#allocation2 + $0x20] sm:$0xf] %vm486, %v583
    %616 = vst.msk [vmem:[#allocation2 + $0x24] sm:$0xf] %vm486, %v584
    %617 = vst.msk [vmem:[#allocation2 + $0x28] sm:$0xf] %vm486, %v613
    %618 = vst.msk [vmem:[#allocation2 + $0x2c] sm:$0xf] %vm486, %v614
    %v619 = vld [vmem:[#allocation3 + $0x60] sm:$0xff]
    %v620 = vld [vmem:[#allocation3 + $0x68] sm:$0xff]
    %v623 = vunpack.c.l.b16 %v583
    %v624 = vunpack.c.l.b16 %v584
    %v625 = vpack.c.b16 %v624, %v623
    %v627 = vsel %vm259, %v625, 0
    %629 = vmatpush.bf16.msra.mxu0 0
    %630 = vmatpush.bf16.msra.mxu0 0
    %631 = vmatpush.bf16.msra.mxu0 0
    %632 = vmatpush.bf16.msra.mxu0 0
    %633 = vmatpush.bf16.msra.mxu0 %v450
    %634 = vmatpush.bf16.msra.mxu0 %v449
    %635 = vmatpush.bf16.msra.mxu0 %v448
    %636 = vmatpush.bf16.msra.mxu0 %v447
    %637 = vmatmul.bf16.gmra.mxu0 %v627
    %v638 = vpop.f32.mrf.mxu0
    %v639 = vadd.f32 0.0, %v638
    %v640 = vpop.f32.mrf.mxu0
    %v641 = vadd.f32 0.0, %v640
    %642 = vdwg.mxu0
    %v643 = vadd.f32 %v619, %v639
    %v644 = vadd.f32 %v620, %v641
    %v645 = vtanh.pop %v643
    %v646 = vtanh.pop %v644
    %v647 = vpack.c.bf16 %v645, %v645
    %v648 = vpack.c.bf16 %v646, %v646
    %v649 = vld [vmem:[#allocation3 + $0x70] sm:$0xff]
    %v650 = vld [vmem:[#allocation3 + $0x78] sm:$0xff]
    %v653 = vunpack.c.l.b16 %v613
    %v654 = vunpack.c.l.b16 %v614
    %v655 = vpack.c.b16 %v654, %v653
    %v657 = vsel %vm259, %v655, 0
    %659 = vmatpush.bf16.msra.mxu0 0
    %660 = vmatpush.bf16.msra.mxu0 0
    %661 = vmatpush.bf16.msra.mxu0 0
    %662 = vmatpush.bf16.msra.mxu0 0
    %663 = vmatpush.bf16.msra.mxu0 %v450
    %664 = vmatpush.bf16.msra.mxu0 %v449
    %665 = vmatpush.bf16.msra.mxu0 %v448
    %666 = vmatpush.bf16.msra.mxu0 %v447
    %667 = vmatmul.bf16.gmra.mxu0 %v657
    %v668 = vpop.f32.mrf.mxu0
    %v669 = vadd.f32 0.0, %v668
    %v670 = vpop.f32.mrf.mxu0
    %v671 = vadd.f32 0.0, %v670
    %672 = vdwg.mxu0
    %v673 = vadd.f32 %v649, %v669
    %v674 = vadd.f32 %v650, %v671
    %v675 = vtanh.pop %v673
    %v676 = vtanh.pop %v674
    %v677 = vpack.c.bf16 %v675, %v675
    %v678 = vpack.c.bf16 %v676, %v676
    %679 = vst.msk [vmem:[#allocation2 + $0x30] sm:$0xf] %vm486, %v647
    %680 = vst.msk [vmem:[#allocation2 + $0x34] sm:$0xf] %vm486, %v648
    %681 = vst.msk [vmem:[#allocation2 + $0x38] sm:$0xf] %vm486, %v677
    %682 = vst.msk [vmem:[#allocation2 + $0x3c] sm:$0xf] %vm486, %v678
    %v683 = vld [vmem:[#allocation3 + $0x80] sm:$0xff]
    %v684 = vld [vmem:[#allocation3 + $0x88] sm:$0xff]
    %v687 = vunpack.c.l.b16 %v647
    %v688 = vunpack.c.l.b16 %v648
    %v689 = vpack.c.b16 %v688, %v687
    %v691 = vsel %vm259, %v689, 0
    %693 = vmatpush.bf16.msra.mxu0 0
    %694 = vmatpush.bf16.msra.mxu0 0
    %695 = vmatpush.bf16.msra.mxu0 0
    %696 = vmatpush.bf16.msra.mxu0 0
    %697 = vmatpush.bf16.msra.mxu0 %v450
    %698 = vmatpush.bf16.msra.mxu0 %v449
    %699 = vmatpush.bf16.msra.mxu0 %v448
    %700 = vmatpush.bf16.msra.mxu0 %v447
    %701 = vmatmul.bf16.gmra.mxu0 %v691
    %v702 = vpop.f32.mrf.mxu0
    %v703 = vadd.f32 0.0, %v702
    %v704 = vpop.f32.mrf.mxu0
    %v705 = vadd.f32 0.0, %v704
    %706 = vdwg.mxu0
    %v707 = vadd.f32 %v683, %v703
    %v708 = vadd.f32 %v684, %v705
    %v709 = vtanh.pop %v707
    %v710 = vtanh.pop %v708
    %v711 = vpack.c.bf16 %v709, %v709
    %v712 = vpack.c.bf16 %v710, %v710
    %v713 = vld [vmem:[#allocation3 + $0x90] sm:$0xff]
    %v714 = vld [vmem:[#allocation3 + $0x98] sm:$0xff]
    %v717 = vunpack.c.l.b16 %v677
    %v718 = vunpack.c.l.b16 %v678
    %v719 = vpack.c.b16 %v718, %v717
    %v721 = vsel %vm259, %v719, 0
    %723 = vmatpush.bf16.msra.mxu0 0
    %724 = vmatpush.bf16.msra.mxu0 0
    %725 = vmatpush.bf16.msra.mxu0 0
    %726 = vmatpush.bf16.msra.mxu0 0
    %727 = vmatpush.bf16.msra.mxu0 %v450
    %728 = vmatpush.bf16.msra.mxu0 %v449
    %729 = vmatpush.bf16.msra.mxu0 %v448
    %730 = vmatpush.bf16.msra.mxu0 %v447
    %731 = vmatmul.bf16.gmra.mxu0 %v721
    %v732 = vpop.f32.mrf.mxu0
    %v733 = vadd.f32 0.0, %v732
    %v734 = vpop.f32.mrf.mxu0
    %v735 = vadd.f32 0.0, %v734
    %736 = vdwg.mxu0
    %v737 = vadd.f32 %v713, %v733
    %v738 = vadd.f32 %v714, %v735
    %v739 = vtanh.pop %v737
    %v740 = vtanh.pop %v738
    %v741 = vpack.c.bf16 %v739, %v739
    %v742 = vpack.c.bf16 %v740, %v740
    %743 = vst.msk [vmem:[#allocation2 + $0x40] sm:$0xf] %vm486, %v711
    %744 = vst.msk [vmem:[#allocation2 + $0x44] sm:$0xf] %vm486, %v712
    %745 = vst.msk [vmem:[#allocation2 + $0x48] sm:$0xf] %vm486, %v741
    %746 = vst.msk [vmem:[#allocation2 + $0x4c] sm:$0xf] %vm486, %v742
    %v747 = vld [vmem:[#allocation3 + $0xa0] sm:$0xff]
    %v748 = vld [vmem:[#allocation3 + $0xa8] sm:$0xff]
    %v751 = vunpack.c.l.b16 %v711
    %v752 = vunpack.c.l.b16 %v712
    %v753 = vpack.c.b16 %v752, %v751
    %v755 = vsel %vm259, %v753, 0
    %757 = vmatpush.bf16.msra.mxu0 0
    %758 = vmatpush.bf16.msra.mxu0 0
    %759 = vmatpush.bf16.msra.mxu0 0
    %760 = vmatpush.bf16.msra.mxu0 0
    %761 = vmatpush.bf16.msra.mxu0 %v450
    %762 = vmatpush.bf16.msra.mxu0 %v449
    %763 = vmatpush.bf16.msra.mxu0 %v448
    %764 = vmatpush.bf16.msra.mxu0 %v447
    %765 = vmatmul.bf16.gmra.mxu0 %v755
    %v766 = vpop.f32.mrf.mxu0
    %v767 = vadd.f32 0.0, %v766
    %v768 = vpop.f32.mrf.mxu0
    %v769 = vadd.f32 0.0, %v768
    %770 = vdwg.mxu0
    %v771 = vadd.f32 %v747, %v767
    %v772 = vadd.f32 %v748, %v769
    %v773 = vtanh.pop %v771
    %v774 = vtanh.pop %v772
    %v775 = vpack.c.bf16 %v773, %v773
    %v776 = vpack.c.bf16 %v774, %v774
    %v777 = vld [vmem:[#allocation3 + $0xb0] sm:$0xff]
    %v778 = vld [vmem:[#allocation3 + $0xb8] sm:$0xff]
    %v781 = vunpack.c.l.b16 %v741
    %v782 = vunpack.c.l.b16 %v742
    %v783 = vpack.c.b16 %v782, %v781
    %v785 = vsel %vm259, %v783, 0
    %787 = vmatpush.bf16.msra.mxu0 0
    %788 = vmatpush.bf16.msra.mxu0 0
    %789 = vmatpush.bf16.msra.mxu0 0
    %790 = vmatpush.bf16.msra.mxu0 0
    %791 = vmatpush.bf16.msra.mxu0 %v450
    %792 = vmatpush.bf16.msra.mxu0 %v449
    %793 = vmatpush.bf16.msra.mxu0 %v448
    %794 = vmatpush.bf16.msra.mxu0 %v447
    %795 = vmatmul.bf16.gmra.mxu0 %v785
    %v796 = vpop.f32.mrf.mxu0
    %v797 = vadd.f32 0.0, %v796
    %v798 = vpop.f32.mrf.mxu0
    %v799 = vadd.f32 0.0, %v798
    %800 = vdwg.mxu0
    %v801 = vadd.f32 %v777, %v797
    %v802 = vadd.f32 %v778, %v799
    %v803 = vtanh.pop %v801
    %v804 = vtanh.pop %v802
    %v805 = vpack.c.bf16 %v803, %v803
    %v806 = vpack.c.bf16 %v804, %v804
    %807 = vst.msk [vmem:[#allocation2 + $0x50] sm:$0xf] %vm486, %v775
    %808 = vst.msk [vmem:[#allocation2 + $0x54] sm:$0xf] %vm486, %v776
    %809 = vst.msk [vmem:[#allocation2 + $0x58] sm:$0xf] %vm486, %v805
    %810 = vst.msk [vmem:[#allocation2 + $0x5c] sm:$0xf] %vm486, %v806
    %v811 = vld [vmem:[#allocation3 + $0xc0] sm:$0xff]
    %v812 = vld [vmem:[#allocation3 + $0xc8] sm:$0xff]
    %v815 = vunpack.c.l.b16 %v775
    %v816 = vunpack.c.l.b16 %v776
    %v817 = vpack.c.b16 %v816, %v815
    %v819 = vsel %vm259, %v817, 0
    %821 = vmatpush.bf16.msra.mxu0 0
    %822 = vmatpush.bf16.msra.mxu0 0
    %823 = vmatpush.bf16.msra.mxu0 0
    %824 = vmatpush.bf16.msra.mxu0 0
    %825 = vmatpush.bf16.msra.mxu0 %v450
    %826 = vmatpush.bf16.msra.mxu0 %v449
    %827 = vmatpush.bf16.msra.mxu0 %v448
    %828 = vmatpush.bf16.msra.mxu0 %v447
    %829 = vmatmul.bf16.gmra.mxu0 %v819
    %v830 = vpop.f32.mrf.mxu0
    %v831 = vadd.f32 0.0, %v830
    %v832 = vpop.f32.mrf.mxu0
    %v833 = vadd.f32 0.0, %v832
    %834 = vdwg.mxu0
    %v835 = vadd.f32 %v811, %v831
    %v836 = vadd.f32 %v812, %v833
    %v837 = vtanh.pop %v835
    %v838 = vtanh.pop %v836
    %v839 = vpack.c.bf16 %v837, %v837
    %v840 = vpack.c.bf16 %v838, %v838
    %v841 = vld [vmem:[#allocation3 + $0xd0] sm:$0xff]
    %v842 = vld [vmem:[#allocation3 + $0xd8] sm:$0xff]
    %v845 = vunpack.c.l.b16 %v805
    %v846 = vunpack.c.l.b16 %v806
    %v847 = vpack.c.b16 %v846, %v845
    %v849 = vsel %vm259, %v847, 0
    %851 = vmatpush.bf16.msra.mxu0 0
    %852 = vmatpush.bf16.msra.mxu0 0
    %853 = vmatpush.bf16.msra.mxu0 0
    %854 = vmatpush.bf16.msra.mxu0 0
    %855 = vmatpush.bf16.msra.mxu0 %v450
    %856 = vmatpush.bf16.msra.mxu0 %v449
    %857 = vmatpush.bf16.msra.mxu0 %v448
    %858 = vmatpush.bf16.msra.mxu0 %v447
    %859 = vmatmul.bf16.gmra.mxu0 %v849
    %v860 = vpop.f32.mrf.mxu0
    %v861 = vadd.f32 0.0, %v860
    %v862 = vpop.f32.mrf.mxu0
    %v863 = vadd.f32 0.0, %v862
    %864 = vdwg.mxu0
    %v865 = vadd.f32 %v841, %v861
    %v866 = vadd.f32 %v842, %v863
    %v867 = vtanh.pop %v865
    %v868 = vtanh.pop %v866
    %v869 = vpack.c.bf16 %v867, %v867
    %v870 = vpack.c.bf16 %v868, %v868
    %871 = vst.msk [vmem:[#allocation2 + $0x60] sm:$0xf] %vm486, %v839
    %872 = vst.msk [vmem:[#allocation2 + $0x64] sm:$0xf] %vm486, %v840
    %873 = vst.msk [vmem:[#allocation2 + $0x68] sm:$0xf] %vm486, %v869
    %874 = vst.msk [vmem:[#allocation2 + $0x6c] sm:$0xf] %vm486, %v870
    %v875 = vld [vmem:[#allocation3 + $0xe0] sm:$0xff]
    %v876 = vld [vmem:[#allocation3 + $0xe8] sm:$0xff]
    %v879 = vunpack.c.l.b16 %v839
    %v880 = vunpack.c.l.b16 %v840
    %v881 = vpack.c.b16 %v880, %v879
    %v883 = vsel %vm259, %v881, 0
    %885 = vmatpush.bf16.msra.mxu0 0
    %886 = vmatpush.bf16.msra.mxu0 0
    %887 = vmatpush.bf16.msra.mxu0 0
    %888 = vmatpush.bf16.msra.mxu0 0
    %889 = vmatpush.bf16.msra.mxu0 %v450
    %890 = vmatpush.bf16.msra.mxu0 %v449
    %891 = vmatpush.bf16.msra.mxu0 %v448
    %892 = vmatpush.bf16.msra.mxu0 %v447
    %893 = vmatmul.bf16.gmra.mxu0 %v883
    %v894 = vpop.f32.mrf.mxu0
    %v895 = vadd.f32 0.0, %v894
    %v896 = vpop.f32.mrf.mxu0
    %v897 = vadd.f32 0.0, %v896
    %898 = vdwg.mxu0
    %v899 = vadd.f32 %v875, %v895
    %v900 = vadd.f32 %v876, %v897
    %v901 = vtanh.pop %v899
    %v902 = vtanh.pop %v900
    %v903 = vpack.c.bf16 %v901, %v901
    %v904 = vpack.c.bf16 %v902, %v902
    %v905 = vld [vmem:[#allocation3 + $0xf0] sm:$0xff]
    %v906 = vld [vmem:[#allocation3 + $0xf8] sm:$0xff]
    %v909 = vunpack.c.l.b16 %v869
    %v910 = vunpack.c.l.b16 %v870
    %v911 = vpack.c.b16 %v910, %v909
    %v913 = vsel %vm259, %v911, 0
    %915 = vmatpush.bf16.msra.mxu0 0
    %916 = vmatpush.bf16.msra.mxu0 0
    %917 = vmatpush.bf16.msra.mxu0 0
    %918 = vmatpush.bf16.msra.mxu0 0
    %919 = vmatpush.bf16.msra.mxu0 %v450
    %920 = vmatpush.bf16.msra.mxu0 %v449
    %921 = vmatpush.bf16.msra.mxu0 %v448
    %922 = vmatpush.bf16.msra.mxu0 %v447
    %923 = vmatmul.bf16.gmra.mxu0 %v913
    %v924 = vpop.f32.mrf.mxu0
    %v925 = vadd.f32 0.0, %v924
    %v926 = vpop.f32.mrf.mxu0
    %v927 = vadd.f32 0.0, %v926
    %928 = vdwg.mxu0
    %v929 = vadd.f32 %v905, %v925
    %v930 = vadd.f32 %v906, %v927
    %v931 = vtanh.pop %v929
    %v932 = vtanh.pop %v930
    %v933 = vpack.c.bf16 %v931, %v931
    %v934 = vpack.c.bf16 %v932, %v932
    %935 = vst.msk [vmem:[#allocation2 + $0x70] sm:$0xf] %vm486, %v903
    %936 = vst.msk [vmem:[#allocation2 + $0x74] sm:$0xf] %vm486, %v904
    %937 = vst.msk [vmem:[#allocation2 + $0x78] sm:$0xf] %vm486, %v933
    %938 = vst.msk [vmem:[#allocation2 + $0x7c] sm:$0xf] %vm486, %v934
    %s939 = scalar_lea.vmem [#allocation7], 32
    %v940 = vld [vmem:[%s939] sm:$0xf]
    %v941 = vld [vmem:[%s939 + $0x4] sm:$0xf]
    %v942 = vld [vmem:[%s939 + $0x8] sm:$0xf]
    %v943 = vld [vmem:[%s939 + $0xc] sm:$0xf]
    %v944 = vld [vmem:[%s939 + $0x10] sm:$0xf]
    %v945 = vld [vmem:[%s939 + $0x14] sm:$0xf]
    %v946 = vld [vmem:[%s939 + $0x18] sm:$0xf]
    %v947 = vld [vmem:[%s939 + $0x1c] sm:$0xf]
    %s948 = scalar_lea.vmem [#allocation9], 32
    %v949 = vld [vmem:[%s948] sm:$0xf]
    %v950 = vld [vmem:[%s948 + $0x4] sm:$0xf]
    %v951 = vld [vmem:[%s948 + $0x8] sm:$0xf]
    %v952 = vld [vmem:[%s948 + $0xc] sm:$0xf]
    %v953 = vld [vmem:[%s948 + $0x10] sm:$0xf]
    %v954 = vld [vmem:[%s948 + $0x14] sm:$0xf]
    %v955 = vld [vmem:[%s948 + $0x18] sm:$0xf]
    %v956 = vld [vmem:[%s948 + $0x1c] sm:$0xf]
    %s957 = scalar_lea.vmem [#allocation10], 1
    %v958 = vld [vmem:[%s957] sm:$0x1]
    %v959 = vld [vmem:[#allocation2] sm:$0xf]
    %v960 = vld [vmem:[#allocation2 + $0x4] sm:$0xf]
    %v961 = vld [vmem:[#allocation2 + $0x8] sm:$0xf]
    %v962 = vld [vmem:[#allocation2 + $0xc] sm:$0xf]
    %v963 = vld [vmem:[#allocation2 + $0x10] sm:$0xf]
    %v964 = vld [vmem:[#allocation2 + $0x14] sm:$0xf]
    %v965 = vld [vmem:[#allocation2 + $0x18] sm:$0xf]
    %v966 = vld [vmem:[#allocation2 + $0x1c] sm:$0xf]
    %v967 = vld [vmem:[#allocation2 + $0x20] sm:$0xf]
    %v968 = vld [vmem:[#allocation2 + $0x24] sm:$0xf]
    %v969 = vld [vmem:[#allocation2 + $0x28] sm:$0xf]
    %v970 = vld [vmem:[#allocation2 + $0x2c] sm:$0xf]
    %v971 = vld [vmem:[#allocation2 + $0x30] sm:$0xf]
    %v972 = vld [vmem:[#allocation2 + $0x34] sm:$0xf]
    %v973 = vld [vmem:[#allocation2 + $0x38] sm:$0xf]
    %v974 = vld [vmem:[#allocation2 + $0x3c] sm:$0xf]
    %v975 = vld [vmem:[#allocation2 + $0x40] sm:$0xf]
    %v976 = vld [vmem:[#allocation2 + $0x44] sm:$0xf]
    %v977 = vld [vmem:[#allocation2 + $0x48] sm:$0xf]
    %v978 = vld [vmem:[#allocation2 + $0x4c] sm:$0xf]
    %v979 = vld [vmem:[#allocation2 + $0x50] sm:$0xf]
    %v980 = vld [vmem:[#allocation2 + $0x54] sm:$0xf]
    %v981 = vld [vmem:[#allocation2 + $0x58] sm:$0xf]
    %v982 = vld [vmem:[#allocation2 + $0x5c] sm:$0xf]
    %v983 = vld [vmem:[#allocation2 + $0x60] sm:$0xf]
    %v984 = vld [vmem:[#allocation2 + $0x64] sm:$0xf]
    %v985 = vld [vmem:[#allocation2 + $0x68] sm:$0xf]
    %v986 = vld [vmem:[#allocation2 + $0x6c] sm:$0xf]
    %v987 = vld [vmem:[#allocation2 + $0x70] sm:$0xf]
    %v988 = vld [vmem:[#allocation2 + $0x74] sm:$0xf]
    %v989 = vld [vmem:[#allocation2 + $0x78] sm:$0xf]
    %v990 = vld [vmem:[#allocation2 + $0x7c] sm:$0xf]
    %v992 = vperm.slane %v958, 0
    %v1026 = vunpack.c.l.b16 %v959
    %v1027 = vunpack.c.l.b16 %v960
    %v1028 = vunpack.c.l.b16 %v961
    %v1029 = vunpack.c.l.b16 %v962
    %v1030 = vunpack.c.l.b16 %v963
    %v1031 = vunpack.c.l.b16 %v964
    %v1032 = vunpack.c.l.b16 %v965
    %v1033 = vunpack.c.l.b16 %v966
    %v1034 = vunpack.c.l.b16 %v967
    %v1035 = vunpack.c.l.b16 %v968
    %v1036 = vunpack.c.l.b16 %v969
    %v1037 = vunpack.c.l.b16 %v970
    %v1038 = vunpack.c.l.b16 %v971
    %v1039 = vunpack.c.l.b16 %v972
    %v1040 = vunpack.c.l.b16 %v973
    %v1041 = vunpack.c.l.b16 %v974
    %v1042 = vunpack.c.l.b16 %v975
    %v1043 = vunpack.c.l.b16 %v976
    %v1044 = vunpack.c.l.b16 %v977
    %v1045 = vunpack.c.l.b16 %v978
    %v1046 = vunpack.c.l.b16 %v979
    %v1047 = vunpack.c.l.b16 %v980
    %v1048 = vunpack.c.l.b16 %v981
    %v1049 = vunpack.c.l.b16 %v982
    %v1050 = vunpack.c.l.b16 %v983
    %v1051 = vunpack.c.l.b16 %v984
    %v1052 = vunpack.c.l.b16 %v985
    %v1053 = vunpack.c.l.b16 %v986
    %v1054 = vunpack.c.l.b16 %v987
    %v1055 = vunpack.c.l.b16 %v988
    %v1056 = vunpack.c.l.b16 %v989
    %v1057 = vunpack.c.l.b16 %v990
    %v1058 = vpack.c.b16 %v1027, %v1026
    %v1059 = vpack.c.b16 %v1029, %v1028
    %v1060 = vpack.c.b16 %v1031, %v1030
    %v1061 = vpack.c.b16 %v1033, %v1032
    %v1062 = vpack.c.b16 %v1035, %v1034
    %v1063 = vpack.c.b16 %v1037, %v1036
    %v1064 = vpack.c.b16 %v1039, %v1038
    %v1065 = vpack.c.b16 %v1041, %v1040
    %v1066 = vpack.c.b16 %v1043, %v1042
    %v1067 = vpack.c.b16 %v1045, %v1044
    %v1068 = vpack.c.b16 %v1047, %v1046
    %v1069 = vpack.c.b16 %v1049, %v1048
    %v1070 = vpack.c.b16 %v1051, %v1050
    %v1071 = vpack.c.b16 %v1053, %v1052
    %v1072 = vpack.c.b16 %v1055, %v1054
    %v1073 = vpack.c.b16 %v1057, %v1056
    %v1082 = vunpack.c.l.b16 %v940
    %v1083 = vunpack.c.l.b16 %v941
    %v1084 = vunpack.c.l.b16 %v942
    %v1085 = vunpack.c.l.b16 %v943
    %v1086 = vunpack.c.l.b16 %v944
    %v1087 = vunpack.c.l.b16 %v945
    %v1088 = vunpack.c.l.b16 %v946
    %v1089 = vunpack.c.l.b16 %v947
    %v1090 = vpack.c.b16 %v1083, %v1082
    %v1091 = vpack.c.b16 %v1085, %v1084
    %v1092 = vpack.c.b16 %v1087, %v1086
    %v1093 = vpack.c.b16 %v1089, %v1088
    %v1099 = vsel %vm259, %v1058, 0
    %v1102 = vsel %vm259, %v1059, 0
    %v1105 = vsel %vm259, %v1060, 0
    %v1108 = vsel %vm259, %v1061, 0
    %v1111 = vsel %vm259, %v1062, 0
    %v1114 = vsel %vm259, %v1063, 0
    %v1117 = vsel %vm259, %v1064, 0
    %v1120 = vsel %vm259, %v1065, 0
    %v1123 = vsel %vm259, %v1066, 0
    %v1126 = vsel %vm259, %v1067, 0
    %v1129 = vsel %vm259, %v1068, 0
    %v1132 = vsel %vm259, %v1069, 0
    %v1135 = vsel %vm259, %v1070, 0
    %v1138 = vsel %vm259, %v1071, 0
    %v1141 = vsel %vm259, %v1072, 0
    %v1144 = vsel %vm259, %v1073, 0
    %1146 = vmatpush.bf16.msra.mxu0 0
    %1147 = vmatpush.bf16.msra.mxu0 0
    %1148 = vmatpush.bf16.msra.mxu0 0
    %1149 = vmatpush.bf16.msra.mxu0 0
    %1150 = vmatpush.bf16.msra.mxu0 %v1093
    %1151 = vmatpush.bf16.msra.mxu0 %v1092
    %1152 = vmatpush.bf16.msra.mxu0 %v1091
    %1153 = vmatpush.bf16.msra.mxu0 %v1090
    %1154 = vmatmul.bf16.gmra.mxu0 %v1099
    %v1155 = vpop.f32.mrf.mxu0
    %v1156 = vadd.f32 %v992, %v1155
    %v1157 = vpop.f32.mrf.mxu0
    %v1158 = vadd.f32 %v992, %v1157
    %1159 = vmatmul.bf16.gmra.mxu0 %v1102
    %v1160 = vpop.f32.mrf.mxu0
    %v1161 = vadd.f32 %v992, %v1160
    %v1162 = vpop.f32.mrf.mxu0
    %v1163 = vadd.f32 %v992, %v1162
    %1164 = vmatmul.bf16.gmra.mxu0 %v1105
    %v1165 = vpop.f32.mrf.mxu0
    %v1166 = vadd.f32 %v992, %v1165
    %v1167 = vpop.f32.mrf.mxu0
    %v1168 = vadd.f32 %v992, %v1167
    %1169 = vmatmul.bf16.gmra.mxu0 %v1108
    %v1170 = vpop.f32.mrf.mxu0
    %v1171 = vadd.f32 %v992, %v1170
    %v1172 = vpop.f32.mrf.mxu0
    %v1173 = vadd.f32 %v992, %v1172
    %1174 = vmatmul.bf16.gmra.mxu0 %v1111
    %v1175 = vpop.f32.mrf.mxu0
    %v1176 = vadd.f32 %v992, %v1175
    %v1177 = vpop.f32.mrf.mxu0
    %v1178 = vadd.f32 %v992, %v1177
    %1179 = vmatmul.bf16.gmra.mxu0 %v1114
    %v1180 = vpop.f32.mrf.mxu0
    %v1181 = vadd.f32 %v992, %v1180
    %v1182 = vpop.f32.mrf.mxu0
    %v1183 = vadd.f32 %v992, %v1182
    %1184 = vmatmul.bf16.gmra.mxu0 %v1117
    %v1185 = vpop.f32.mrf.mxu0
    %v1186 = vadd.f32 %v992, %v1185
    %v1187 = vpop.f32.mrf.mxu0
    %v1188 = vadd.f32 %v992, %v1187
    %1189 = vmatmul.bf16.gmra.mxu0 %v1120
    %v1190 = vpop.f32.mrf.mxu0
    %v1191 = vadd.f32 %v992, %v1190
    %v1192 = vpop.f32.mrf.mxu0
    %v1193 = vadd.f32 %v992, %v1192
    %1194 = vmatmul.bf16.gmra.mxu0 %v1123
    %v1195 = vpop.f32.mrf.mxu0
    %v1196 = vadd.f32 %v992, %v1195
    %v1197 = vpop.f32.mrf.mxu0
    %v1198 = vadd.f32 %v992, %v1197
    %1199 = vmatmul.bf16.gmra.mxu0 %v1126
    %v1200 = vpop.f32.mrf.mxu0
    %v1201 = vadd.f32 %v992, %v1200
    %v1202 = vpop.f32.mrf.mxu0
    %v1203 = vadd.f32 %v992, %v1202
    %1204 = vmatmul.bf16.gmra.mxu0 %v1129
    %v1205 = vpop.f32.mrf.mxu0
    %v1206 = vadd.f32 %v992, %v1205
    %v1207 = vpop.f32.mrf.mxu0
    %v1208 = vadd.f32 %v992, %v1207
    %1209 = vmatmul.bf16.gmra.mxu0 %v1132
    %v1210 = vpop.f32.mrf.mxu0
    %v1211 = vadd.f32 %v992, %v1210
    %v1212 = vpop.f32.mrf.mxu0
    %v1213 = vadd.f32 %v992, %v1212
    %1214 = vmatmul.bf16.gmra.mxu0 %v1135
    %v1215 = vpop.f32.mrf.mxu0
    %v1216 = vadd.f32 %v992, %v1215
    %v1217 = vpop.f32.mrf.mxu0
    %v1218 = vadd.f32 %v992, %v1217
    %1219 = vmatmul.bf16.gmra.mxu0 %v1138
    %v1220 = vpop.f32.mrf.mxu0
    %v1221 = vadd.f32 %v992, %v1220
    %v1222 = vpop.f32.mrf.mxu0
    %v1223 = vadd.f32 %v992, %v1222
    %1224 = vmatmul.bf16.gmra.mxu0 %v1141
    %v1225 = vpop.f32.mrf.mxu0
    %v1226 = vadd.f32 %v992, %v1225
    %v1227 = vpop.f32.mrf.mxu0
    %v1228 = vadd.f32 %v992, %v1227
    %1229 = vmatmul.bf16.gmra.mxu0 %v1144
    %v1230 = vpop.f32.mrf.mxu0
    %v1231 = vadd.f32 %v992, %v1230
    %v1232 = vpop.f32.mrf.mxu0
    %v1233 = vadd.f32 %v992, %v1232
    %1234 = vdwg.mxu0
    %1235 = vst.msk [vmem:[#allocation3] sm:$0xff] %vm259, %v1156
    %1236 = vst.msk [vmem:[#allocation3 + $0x8] sm:$0xff] %vm259, %v1158
    %1237 = vst.msk [vmem:[#allocation3 + $0x10] sm:$0xff] %vm259, %v1161
    %1238 = vst.msk [vmem:[#allocation3 + $0x18] sm:$0xff] %vm259, %v1163
    %1239 = vst.msk [vmem:[#allocation3 + $0x20] sm:$0xff] %vm259, %v1166
    %1240 = vst.msk [vmem:[#allocation3 + $0x28] sm:$0xff] %vm259, %v1168
    %1241 = vst.msk [vmem:[#allocation3 + $0x30] sm:$0xff] %vm259, %v1171
    %1242 = vst.msk [vmem:[#allocation3 + $0x38] sm:$0xff] %vm259, %v1173
    %1243 = vst.msk [vmem:[#allocation3 + $0x40] sm:$0xff] %vm259, %v1176
    %1244 = vst.msk [vmem:[#allocation3 + $0x48] sm:$0xff] %vm259, %v1178
    %1245 = vst.msk [vmem:[#allocation3 + $0x50] sm:$0xff] %vm259, %v1181
    %1246 = vst.msk [vmem:[#allocation3 + $0x58] sm:$0xff] %vm259, %v1183
    %1247 = vst.msk [vmem:[#allocation3 + $0x60] sm:$0xff] %vm259, %v1186
    %1248 = vst.msk [vmem:[#allocation3 + $0x68] sm:$0xff] %vm259, %v1188
    %1249 = vst.msk [vmem:[#allocation3 + $0x70] sm:$0xff] %vm259, %v1191
    %1250 = vst.msk [vmem:[#allocation3 + $0x78] sm:$0xff] %vm259, %v1193
    %1251 = vst.msk [vmem:[#allocation3 + $0x80] sm:$0xff] %vm259, %v1196
    %1252 = vst.msk [vmem:[#allocation3 + $0x88] sm:$0xff] %vm259, %v1198
    %1253 = vst.msk [vmem:[#allocation3 + $0x90] sm:$0xff] %vm259, %v1201
    %1254 = vst.msk [vmem:[#allocation3 + $0x98] sm:$0xff] %vm259, %v1203
    %1255 = vst.msk [vmem:[#allocation3 + $0xa0] sm:$0xff] %vm259, %v1206
    %1256 = vst.msk [vmem:[#allocation3 + $0xa8] sm:$0xff] %vm259, %v1208
    %1257 = vst.msk [vmem:[#allocation3 + $0xb0] sm:$0xff] %vm259, %v1211
    %1258 = vst.msk [vmem:[#allocation3 + $0xb8] sm:$0xff] %vm259, %v1213
    %1259 = vst.msk [vmem:[#allocation3 + $0xc0] sm:$0xff] %vm259, %v1216
    %1260 = vst.msk [vmem:[#allocation3 + $0xc8] sm:$0xff] %vm259, %v1218
    %1261 = vst.msk [vmem:[#allocation3 + $0xd0] sm:$0xff] %vm259, %v1221
    %1262 = vst.msk [vmem:[#allocation3 + $0xd8] sm:$0xff] %vm259, %v1223
    %1263 = vst.msk [vmem:[#allocation3 + $0xe0] sm:$0xff] %vm259, %v1226
    %1264 = vst.msk [vmem:[#allocation3 + $0xe8] sm:$0xff] %vm259, %v1228
    %1265 = vst.msk [vmem:[#allocation3 + $0xf0] sm:$0xff] %vm259, %v1231
    %1266 = vst.msk [vmem:[#allocation3 + $0xf8] sm:$0xff] %vm259, %v1233
    %v1267 = vld [vmem:[#allocation3] sm:$0xff]
    %v1268 = vld [vmem:[#allocation3 + $0x8] sm:$0xff]
    %v1277 = vunpack.c.l.b16 %v949
    %v1278 = vunpack.c.l.b16 %v950
    %v1279 = vunpack.c.l.b16 %v951
    %v1280 = vunpack.c.l.b16 %v952
    %v1281 = vunpack.c.l.b16 %v953
    %v1282 = vunpack.c.l.b16 %v954
    %v1283 = vunpack.c.l.b16 %v955
    %v1284 = vunpack.c.l.b16 %v956
    %v1285 = vpack.c.b16 %v1278, %v1277
    %v1286 = vpack.c.b16 %v1280, %v1279
    %v1287 = vpack.c.b16 %v1282, %v1281
    %v1288 = vpack.c.b16 %v1284, %v1283
    %1293 = vmatpush.bf16.msra.mxu0 0
    %1294 = vmatpush.bf16.msra.mxu0 0
    %1295 = vmatpush.bf16.msra.mxu0 0
    %1296 = vmatpush.bf16.msra.mxu0 0
    %1297 = vmatpush.bf16.msra.mxu0 %v1288
    %1298 = vmatpush.bf16.msra.mxu0 %v1287
    %1299 = vmatpush.bf16.msra.mxu0 %v1286
    %1300 = vmatpush.bf16.msra.mxu0 %v1285
    %1301 = vmatmul.bf16.gmra.mxu0 %v456
    %v1302 = vpop.f32.mrf.mxu0
    %v1303 = vadd.f32 0.0, %v1302
    %v1304 = vpop.f32.mrf.mxu0
    %v1305 = vadd.f32 0.0, %v1304
    %1306 = vdwg.mxu0
    %v1307 = vadd.f32 %v1267, %v1303
    %v1308 = vadd.f32 %v1268, %v1305
    %v1309 = vtanh.pop %v1307
    %v1310 = vtanh.pop %v1308
    %v1311 = vpack.c.bf16 %v1309, %v1309
    %v1312 = vpack.c.bf16 %v1310, %v1310
    %v1313 = vld [vmem:[#allocation3 + $0x10] sm:$0xff]
    %v1314 = vld [vmem:[#allocation3 + $0x18] sm:$0xff]
    %v1315 = vadd.f32 %v1313, %v1303
    %v1316 = vadd.f32 %v1314, %v1305
    %v1317 = vtanh.pop %v1315
    %v1318 = vtanh.pop %v1316
    %v1319 = vpack.c.bf16 %v1317, %v1317
    %v1320 = vpack.c.bf16 %v1318, %v1318
    %1321 = vst.msk [vmem:[#allocation2] sm:$0xf] %vm486, %v1311
    %1322 = vst.msk [vmem:[#allocation2 + $0x4] sm:$0xf] %vm486, %v1312
    %1323 = vst.msk [vmem:[#allocation2 + $0x8] sm:$0xf] %vm486, %v1319
    %1324 = vst.msk [vmem:[#allocation2 + $0xc] sm:$0xf] %vm486, %v1320
    %v1325 = vld [vmem:[#allocation3 + $0x20] sm:$0xff]
    %v1326 = vld [vmem:[#allocation3 + $0x28] sm:$0xff]
    %v1329 = vunpack.c.l.b16 %v1311
    %v1330 = vunpack.c.l.b16 %v1312
    %v1331 = vpack.c.b16 %v1330, %v1329
    %v1333 = vsel %vm259, %v1331, 0
    %1335 = vmatpush.bf16.msra.mxu0 0
    %1336 = vmatpush.bf16.msra.mxu0 0
    %1337 = vmatpush.bf16.msra.mxu0 0
    %1338 = vmatpush.bf16.msra.mxu0 0
    %1339 = vmatpush.bf16.msra.mxu0 %v1288
    %1340 = vmatpush.bf16.msra.mxu0 %v1287
    %1341 = vmatpush.bf16.msra.mxu0 %v1286
    %1342 = vmatpush.bf16.msra.mxu0 %v1285
    %1343 = vmatmul.bf16.gmra.mxu0 %v1333
    %v1344 = vpop.f32.mrf.mxu0
    %v1345 = vadd.f32 0.0, %v1344
    %v1346 = vpop.f32.mrf.mxu0
    %v1347 = vadd.f32 0.0, %v1346
    %1348 = vdwg.mxu0
    %v1349 = vadd.f32 %v1325, %v1345
    %v1350 = vadd.f32 %v1326, %v1347
    %v1351 = vtanh.pop %v1349
    %v1352 = vtanh.pop %v1350
    %v1353 = vpack.c.bf16 %v1351, %v1351
    %v1354 = vpack.c.bf16 %v1352, %v1352
    %v1355 = vld [vmem:[#allocation3 + $0x30] sm:$0xff]
    %v1356 = vld [vmem:[#allocation3 + $0x38] sm:$0xff]
    %v1359 = vunpack.c.l.b16 %v1319
    %v1360 = vunpack.c.l.b16 %v1320
    %v1361 = vpack.c.b16 %v1360, %v1359
    %v1363 = vsel %vm259, %v1361, 0
    %1365 = vmatpush.bf16.msra.mxu0 0
    %1366 = vmatpush.bf16.msra.mxu0 0
    %1367 = vmatpush.bf16.msra.mxu0 0
    %1368 = vmatpush.bf16.msra.mxu0 0
    %1369 = vmatpush.bf16.msra.mxu0 %v1288
    %1370 = vmatpush.bf16.msra.mxu0 %v1287
    %1371 = vmatpush.bf16.msra.mxu0 %v1286
    %1372 = vmatpush.bf16.msra.mxu0 %v1285
    %1373 = vmatmul.bf16.gmra.mxu0 %v1363
    %v1374 = vpop.f32.mrf.mxu0
    %v1375 = vadd.f32 0.0, %v1374
    %v1376 = vpop.f32.mrf.mxu0
    %v1377 = vadd.f32 0.0, %v1376
    %1378 = vdwg.mxu0
    %v1379 = vadd.f32 %v1355, %v1375
    %v1380 = vadd.f32 %v1356, %v1377
    %v1381 = vtanh.pop %v1379
    %v1382 = vtanh.pop %v1380
    %v1383 = vpack.c.bf16 %v1381, %v1381
    %v1384 = vpack.c.bf16 %v1382, %v1382
    %1385 = vst.msk [vmem:[#allocation2 + $0x10] sm:$0xf] %vm486, %v1353
    %1386 = vst.msk [vmem:[#allocation2 + $0x14] sm:$0xf] %vm486, %v1354
    %1387 = vst.msk [vmem:[#allocation2 + $0x18] sm:$0xf] %vm486, %v1383
    %1388 = vst.msk [vmem:[#allocation2 + $0x1c] sm:$0xf] %vm486, %v1384
    %v1389 = vld [vmem:[#allocation3 + $0x40] sm:$0xff]
    %v1390 = vld [vmem:[#allocation3 + $0x48] sm:$0xff]
    %v1393 = vunpack.c.l.b16 %v1353
    %v1394 = vunpack.c.l.b16 %v1354
    %v1395 = vpack.c.b16 %v1394, %v1393
    %v1397 = vsel %vm259, %v1395, 0
    %1399 = vmatpush.bf16.msra.mxu0 0
    %1400 = vmatpush.bf16.msra.mxu0 0
    %1401 = vmatpush.bf16.msra.mxu0 0
    %1402 = vmatpush.bf16.msra.mxu0 0
    %1403 = vmatpush.bf16.msra.mxu0 %v1288
    %1404 = vmatpush.bf16.msra.mxu0 %v1287
    %1405 = vmatpush.bf16.msra.mxu0 %v1286
    %1406 = vmatpush.bf16.msra.mxu0 %v1285
    %1407 = vmatmul.bf16.gmra.mxu0 %v1397
    %v1408 = vpop.f32.mrf.mxu0
    %v1409 = vadd.f32 0.0, %v1408
    %v1410 = vpop.f32.mrf.mxu0
    %v1411 = vadd.f32 0.0, %v1410
    %1412 = vdwg.mxu0
    %v1413 = vadd.f32 %v1389, %v1409
    %v1414 = vadd.f32 %v1390, %v1411
    %v1415 = vtanh.pop %v1413
    %v1416 = vtanh.pop %v1414
    %v1417 = vpack.c.bf16 %v1415, %v1415
    %v1418 = vpack.c.bf16 %v1416, %v1416
    %v1419 = vld [vmem:[#allocation3 + $0x50] sm:$0xff]
    %v1420 = vld [vmem:[#allocation3 + $0x58] sm:$0xff]
    %v1423 = vunpack.c.l.b16 %v1383
    %v1424 = vunpack.c.l.b16 %v1384
    %v1425 = vpack.c.b16 %v1424, %v1423
    %v1427 = vsel %vm259, %v1425, 0
    %1429 = vmatpush.bf16.msra.mxu0 0
    %1430 = vmatpush.bf16.msra.mxu0 0
    %1431 = vmatpush.bf16.msra.mxu0 0
    %1432 = vmatpush.bf16.msra.mxu0 0
    %1433 = vmatpush.bf16.msra.mxu0 %v1288
    %1434 = vmatpush.bf16.msra.mxu0 %v1287
    %1435 = vmatpush.bf16.msra.mxu0 %v1286
    %1436 = vmatpush.bf16.msra.mxu0 %v1285
    %1437 = vmatmul.bf16.gmra.mxu0 %v1427
    %v1438 = vpop.f32.mrf.mxu0
    %v1439 = vadd.f32 0.0, %v1438
    %v1440 = vpop.f32.mrf.mxu0
    %v1441 = vadd.f32 0.0, %v1440
    %1442 = vdwg.mxu0
    %v1443 = vadd.f32 %v1419, %v1439
    %v1444 = vadd.f32 %v1420, %v1441
    %v1445 = vtanh.pop %v1443
    %v1446 = vtanh.pop %v1444
    %v1447 = vpack.c.bf16 %v1445, %v1445
    %v1448 = vpack.c.bf16 %v1446, %v1446
    %1449 = vst.msk [vmem:[#allocation2 + $0x20] sm:$0xf] %vm486, %v1417
    %1450 = vst.msk [vmem:[#allocation2 + $0x24] sm:$0xf] %vm486, %v1418
    %1451 = vst.msk [vmem:[#allocation2 + $0x28] sm:$0xf] %vm486, %v1447
    %1452 = vst.msk [vmem:[#allocation2 + $0x2c] sm:$0xf] %vm486, %v1448
    %v1453 = vld [vmem:[#allocation3 + $0x60] sm:$0xff]
    %v1454 = vld [vmem:[#allocation3 + $0x68] sm:$0xff]
    %v1457 = vunpack.c.l.b16 %v1417
    %v1458 = vunpack.c.l.b16 %v1418
    %v1459 = vpack.c.b16 %v1458, %v1457
    %v1461 = vsel %vm259, %v1459, 0
    %1463 = vmatpush.bf16.msra.mxu0 0
    %1464 = vmatpush.bf16.msra.mxu0 0
    %1465 = vmatpush.bf16.msra.mxu0 0
    %1466 = vmatpush.bf16.msra.mxu0 0
    %1467 = vmatpush.bf16.msra.mxu0 %v1288
    %1468 = vmatpush.bf16.msra.mxu0 %v1287
    %1469 = vmatpush.bf16.msra.mxu0 %v1286
    %1470 = vmatpush.bf16.msra.mxu0 %v1285
    %1471 = vmatmul.bf16.gmra.mxu0 %v1461
    %v1472 = vpop.f32.mrf.mxu0
    %v1473 = vadd.f32 0.0, %v1472
    %v1474 = vpop.f32.mrf.mxu0
    %v1475 = vadd.f32 0.0, %v1474
    %1476 = vdwg.mxu0
    %v1477 = vadd.f32 %v1453, %v1473
    %v1478 = vadd.f32 %v1454, %v1475
    %v1479 = vtanh.pop %v1477
    %v1480 = vtanh.pop %v1478
    %v1481 = vpack.c.bf16 %v1479, %v1479
    %v1482 = vpack.c.bf16 %v1480, %v1480
    %v1483 = vld [vmem:[#allocation3 + $0x70] sm:$0xff]
    %v1484 = vld [vmem:[#allocation3 + $0x78] sm:$0xff]
    %v1487 = vunpack.c.l.b16 %v1447
    %v1488 = vunpack.c.l.b16 %v1448
    %v1489 = vpack.c.b16 %v1488, %v1487
    %v1491 = vsel %vm259, %v1489, 0
    %1493 = vmatpush.bf16.msra.mxu0 0
    %1494 = vmatpush.bf16.msra.mxu0 0
    %1495 = vmatpush.bf16.msra.mxu0 0
    %1496 = vmatpush.bf16.msra.mxu0 0
    %1497 = vmatpush.bf16.msra.mxu0 %v1288
    %1498 = vmatpush.bf16.msra.mxu0 %v1287
    %1499 = vmatpush.bf16.msra.mxu0 %v1286
    %1500 = vmatpush.bf16.msra.mxu0 %v1285
    %1501 = vmatmul.bf16.gmra.mxu0 %v1491
    %v1502 = vpop.f32.mrf.mxu0
    %v1503 = vadd.f32 0.0, %v1502
    %v1504 = vpop.f32.mrf.mxu0
    %v1505 = vadd.f32 0.0, %v1504
    %1506 = vdwg.mxu0
    %v1507 = vadd.f32 %v1483, %v1503
    %v1508 = vadd.f32 %v1484, %v1505
    %v1509 = vtanh.pop %v1507
    %v1510 = vtanh.pop %v1508
    %v1511 = vpack.c.bf16 %v1509, %v1509
    %v1512 = vpack.c.bf16 %v1510, %v1510
    %1513 = vst.msk [vmem:[#allocation2 + $0x30] sm:$0xf] %vm486, %v1481
    %1514 = vst.msk [vmem:[#allocation2 + $0x34] sm:$0xf] %vm486, %v1482
    %1515 = vst.msk [vmem:[#allocation2 + $0x38] sm:$0xf] %vm486, %v1511
    %1516 = vst.msk [vmem:[#allocation2 + $0x3c] sm:$0xf] %vm486, %v1512
    %v1517 = vld [vmem:[#allocation3 + $0x80] sm:$0xff]
    %v1518 = vld [vmem:[#allocation3 + $0x88] sm:$0xff]
    %v1521 = vunpack.c.l.b16 %v1481
    %v1522 = vunpack.c.l.b16 %v1482
    %v1523 = vpack.c.b16 %v1522, %v1521
    %v1525 = vsel %vm259, %v1523, 0
    %1527 = vmatpush.bf16.msra.mxu0 0
    %1528 = vmatpush.bf16.msra.mxu0 0
    %1529 = vmatpush.bf16.msra.mxu0 0
    %1530 = vmatpush.bf16.msra.mxu0 0
    %1531 = vmatpush.bf16.msra.mxu0 %v1288
    %1532 = vmatpush.bf16.msra.mxu0 %v1287
    %1533 = vmatpush.bf16.msra.mxu0 %v1286
    %1534 = vmatpush.bf16.msra.mxu0 %v1285
    %1535 = vmatmul.bf16.gmra.mxu0 %v1525
    %v1536 = vpop.f32.mrf.mxu0
    %v1537 = vadd.f32 0.0, %v1536
    %v1538 = vpop.f32.mrf.mxu0
    %v1539 = vadd.f32 0.0, %v1538
    %1540 = vdwg.mxu0
    %v1541 = vadd.f32 %v1517, %v1537
    %v1542 = vadd.f32 %v1518, %v1539
    %v1543 = vtanh.pop %v1541
    %v1544 = vtanh.pop %v1542
    %v1545 = vpack.c.bf16 %v1543, %v1543
    %v1546 = vpack.c.bf16 %v1544, %v1544
    %v1547 = vld [vmem:[#allocation3 + $0x90] sm:$0xff]
    %v1548 = vld [vmem:[#allocation3 + $0x98] sm:$0xff]
    %v1551 = vunpack.c.l.b16 %v1511
    %v1552 = vunpack.c.l.b16 %v1512
    %v1553 = vpack.c.b16 %v1552, %v1551
    %v1555 = vsel %vm259, %v1553, 0
    %1557 = vmatpush.bf16.msra.mxu0 0
    %1558 = vmatpush.bf16.msra.mxu0 0
    %1559 = vmatpush.bf16.msra.mxu0 0
    %1560 = vmatpush.bf16.msra.mxu0 0
    %1561 = vmatpush.bf16.msra.mxu0 %v1288
    %1562 = vmatpush.bf16.msra.mxu0 %v1287
    %1563 = vmatpush.bf16.msra.mxu0 %v1286
    %1564 = vmatpush.bf16.msra.mxu0 %v1285
    %1565 = vmatmul.bf16.gmra.mxu0 %v1555
    %v1566 = vpop.f32.mrf.mxu0
    %v1567 = vadd.f32 0.0, %v1566
    %v1568 = vpop.f32.mrf.mxu0
    %v1569 = vadd.f32 0.0, %v1568
    %1570 = vdwg.mxu0
    %v1571 = vadd.f32 %v1547, %v1567
    %v1572 = vadd.f32 %v1548, %v1569
    %v1573 = vtanh.pop %v1571
    %v1574 = vtanh.pop %v1572
    %v1575 = vpack.c.bf16 %v1573, %v1573
    %v1576 = vpack.c.bf16 %v1574, %v1574
    %1577 = vst.msk [vmem:[#allocation2 + $0x40] sm:$0xf] %vm486, %v1545
    %1578 = vst.msk [vmem:[#allocation2 + $0x44] sm:$0xf] %vm486, %v1546
    %1579 = vst.msk [vmem:[#allocation2 + $0x48] sm:$0xf] %vm486, %v1575
    %1580 = vst.msk [vmem:[#allocation2 + $0x4c] sm:$0xf] %vm486, %v1576
    %v1581 = vld [vmem:[#allocation3 + $0xa0] sm:$0xff]
    %v1582 = vld [vmem:[#allocation3 + $0xa8] sm:$0xff]
    %v1585 = vunpack.c.l.b16 %v1545
    %v1586 = vunpack.c.l.b16 %v1546
    %v1587 = vpack.c.b16 %v1586, %v1585
    %v1589 = vsel %vm259, %v1587, 0
    %1591 = vmatpush.bf16.msra.mxu0 0
    %1592 = vmatpush.bf16.msra.mxu0 0
    %1593 = vmatpush.bf16.msra.mxu0 0
    %1594 = vmatpush.bf16.msra.mxu0 0
    %1595 = vmatpush.bf16.msra.mxu0 %v1288
    %1596 = vmatpush.bf16.msra.mxu0 %v1287
    %1597 = vmatpush.bf16.msra.mxu0 %v1286
    %1598 = vmatpush.bf16.msra.mxu0 %v1285
    %1599 = vmatmul.bf16.gmra.mxu0 %v1589
    %v1600 = vpop.f32.mrf.mxu0
    %v1601 = vadd.f32 0.0, %v1600
    %v1602 = vpop.f32.mrf.mxu0
    %v1603 = vadd.f32 0.0, %v1602
    %1604 = vdwg.mxu0
    %v1605 = vadd.f32 %v1581, %v1601
    %v1606 = vadd.f32 %v1582, %v1603
    %v1607 = vtanh.pop %v1605
    %v1608 = vtanh.pop %v1606
    %v1609 = vpack.c.bf16 %v1607, %v1607
    %v1610 = vpack.c.bf16 %v1608, %v1608
    %v1611 = vld [vmem:[#allocation3 + $0xb0] sm:$0xff]
    %v1612 = vld [vmem:[#allocation3 + $0xb8] sm:$0xff]
    %v1615 = vunpack.c.l.b16 %v1575
    %v1616 = vunpack.c.l.b16 %v1576
    %v1617 = vpack.c.b16 %v1616, %v1615
    %v1619 = vsel %vm259, %v1617, 0
    %1621 = vmatpush.bf16.msra.mxu0 0
    %1622 = vmatpush.bf16.msra.mxu0 0
    %1623 = vmatpush.bf16.msra.mxu0 0
    %1624 = vmatpush.bf16.msra.mxu0 0
    %1625 = vmatpush.bf16.msra.mxu0 %v1288
    %1626 = vmatpush.bf16.msra.mxu0 %v1287
    %1627 = vmatpush.bf16.msra.mxu0 %v1286
    %1628 = vmatpush.bf16.msra.mxu0 %v1285
    %1629 = vmatmul.bf16.gmra.mxu0 %v1619
    %v1630 = vpop.f32.mrf.mxu0
    %v1631 = vadd.f32 0.0, %v1630
    %v1632 = vpop.f32.mrf.mxu0
    %v1633 = vadd.f32 0.0, %v1632
    %1634 = vdwg.mxu0
    %v1635 = vadd.f32 %v1611, %v1631
    %v1636 = vadd.f32 %v1612, %v1633
    %v1637 = vtanh.pop %v1635
    %v1638 = vtanh.pop %v1636
    %v1639 = vpack.c.bf16 %v1637, %v1637
    %v1640 = vpack.c.bf16 %v1638, %v1638
    %1641 = vst.msk [vmem:[#allocation2 + $0x50] sm:$0xf] %vm486, %v1609
    %1642 = vst.msk [vmem:[#allocation2 + $0x54] sm:$0xf] %vm486, %v1610
    %1643 = vst.msk [vmem:[#allocation2 + $0x58] sm:$0xf] %vm486, %v1639
    %1644 = vst.msk [vmem:[#allocation2 + $0x5c] sm:$0xf] %vm486, %v1640
    %v1645 = vld [vmem:[#allocation3 + $0xc0] sm:$0xff]
    %v1646 = vld [vmem:[#allocation3 + $0xc8] sm:$0xff]
    %v1649 = vunpack.c.l.b16 %v1609
    %v1650 = vunpack.c.l.b16 %v1610
    %v1651 = vpack.c.b16 %v1650, %v1649
    %v1653 = vsel %vm259, %v1651, 0
    %1655 = vmatpush.bf16.msra.mxu0 0
    %1656 = vmatpush.bf16.msra.mxu0 0
    %1657 = vmatpush.bf16.msra.mxu0 0
    %1658 = vmatpush.bf16.msra.mxu0 0
    %1659 = vmatpush.bf16.msra.mxu0 %v1288
    %1660 = vmatpush.bf16.msra.mxu0 %v1287
    %1661 = vmatpush.bf16.msra.mxu0 %v1286
    %1662 = vmatpush.bf16.msra.mxu0 %v1285
    %1663 = vmatmul.bf16.gmra.mxu0 %v1653
    %v1664 = vpop.f32.mrf.mxu0
    %v1665 = vadd.f32 0.0, %v1664
    %v1666 = vpop.f32.mrf.mxu0
    %v1667 = vadd.f32 0.0, %v1666
    %1668 = vdwg.mxu0
    %v1669 = vadd.f32 %v1645, %v1665
    %v1670 = vadd.f32 %v1646, %v1667
    %v1671 = vtanh.pop %v1669
    %v1672 = vtanh.pop %v1670
    %v1673 = vpack.c.bf16 %v1671, %v1671
    %v1674 = vpack.c.bf16 %v1672, %v1672
    %v1675 = vld [vmem:[#allocation3 + $0xd0] sm:$0xff]
    %v1676 = vld [vmem:[#allocation3 + $0xd8] sm:$0xff]
    %v1679 = vunpack.c.l.b16 %v1639
    %v1680 = vunpack.c.l.b16 %v1640
    %v1681 = vpack.c.b16 %v1680, %v1679
    %v1683 = vsel %vm259, %v1681, 0
    %1685 = vmatpush.bf16.msra.mxu0 0
    %1686 = vmatpush.bf16.msra.mxu0 0
    %1687 = vmatpush.bf16.msra.mxu0 0
    %1688 = vmatpush.bf16.msra.mxu0 0
    %1689 = vmatpush.bf16.msra.mxu0 %v1288
    %1690 = vmatpush.bf16.msra.mxu0 %v1287
    %1691 = vmatpush.bf16.msra.mxu0 %v1286
    %1692 = vmatpush.bf16.msra.mxu0 %v1285
    %1693 = vmatmul.bf16.gmra.mxu0 %v1683
    %v1694 = vpop.f32.mrf.mxu0
    %v1695 = vadd.f32 0.0, %v1694
    %v1696 = vpop.f32.mrf.mxu0
    %v1697 = vadd.f32 0.0, %v1696
    %1698 = vdwg.mxu0
    %v1699 = vadd.f32 %v1675, %v1695
    %v1700 = vadd.f32 %v1676, %v1697
    %v1701 = vtanh.pop %v1699
    %v1702 = vtanh.pop %v1700
    %v1703 = vpack.c.bf16 %v1701, %v1701
    %v1704 = vpack.c.bf16 %v1702, %v1702
    %1705 = vst.msk [vmem:[#allocation2 + $0x60] sm:$0xf] %vm486, %v1673
    %1706 = vst.msk [vmem:[#allocation2 + $0x64] sm:$0xf] %vm486, %v1674
    %1707 = vst.msk [vmem:[#allocation2 + $0x68] sm:$0xf] %vm486, %v1703
    %1708 = vst.msk [vmem:[#allocation2 + $0x6c] sm:$0xf] %vm486, %v1704
    %v1709 = vld [vmem:[#allocation3 + $0xe0] sm:$0xff]
    %v1710 = vld [vmem:[#allocation3 + $0xe8] sm:$0xff]
    %v1713 = vunpack.c.l.b16 %v1673
    %v1714 = vunpack.c.l.b16 %v1674
    %v1715 = vpack.c.b16 %v1714, %v1713
    %v1717 = vsel %vm259, %v1715, 0
    %1719 = vmatpush.bf16.msra.mxu0 0
    %1720 = vmatpush.bf16.msra.mxu0 0
    %1721 = vmatpush.bf16.msra.mxu0 0
    %1722 = vmatpush.bf16.msra.mxu0 0
    %1723 = vmatpush.bf16.msra.mxu0 %v1288
    %1724 = vmatpush.bf16.msra.mxu0 %v1287
    %1725 = vmatpush.bf16.msra.mxu0 %v1286
    %1726 = vmatpush.bf16.msra.mxu0 %v1285
    %1727 = vmatmul.bf16.gmra.mxu0 %v1717
    %v1728 = vpop.f32.mrf.mxu0
    %v1729 = vadd.f32 0.0, %v1728
    %v1730 = vpop.f32.mrf.mxu0
    %v1731 = vadd.f32 0.0, %v1730
    %1732 = vdwg.mxu0
    %v1733 = vadd.f32 %v1709, %v1729
    %v1734 = vadd.f32 %v1710, %v1731
    %v1735 = vtanh.pop %v1733
    %v1736 = vtanh.pop %v1734
    %v1737 = vpack.c.bf16 %v1735, %v1735
    %v1738 = vpack.c.bf16 %v1736, %v1736
    %v1739 = vld [vmem:[#allocation3 + $0xf0] sm:$0xff]
    %v1740 = vld [vmem:[#allocation3 + $0xf8] sm:$0xff]
    %v1743 = vunpack.c.l.b16 %v1703
    %v1744 = vunpack.c.l.b16 %v1704
    %v1745 = vpack.c.b16 %v1744, %v1743
    %v1747 = vsel %vm259, %v1745, 0
    %1749 = vmatpush.bf16.msra.mxu0 0
    %1750 = vmatpush.bf16.msra.mxu0 0
    %1751 = vmatpush.bf16.msra.mxu0 0
    %1752 = vmatpush.bf16.msra.mxu0 0
    %1753 = vmatpush.bf16.msra.mxu0 %v1288
    %1754 = vmatpush.bf16.msra.mxu0 %v1287
    %1755 = vmatpush.bf16.msra.mxu0 %v1286
    %1756 = vmatpush.bf16.msra.mxu0 %v1285
    %1757 = vmatmul.bf16.gmra.mxu0 %v1747
    %v1758 = vpop.f32.mrf.mxu0
    %v1759 = vadd.f32 0.0, %v1758
    %v1760 = vpop.f32.mrf.mxu0
    %v1761 = vadd.f32 0.0, %v1760
    %1762 = vdwg.mxu0
    %v1763 = vadd.f32 %v1739, %v1759
    %v1764 = vadd.f32 %v1740, %v1761
    %v1765 = vtanh.pop %v1763
    %v1766 = vtanh.pop %v1764
    %v1767 = vpack.c.bf16 %v1765, %v1765
    %v1768 = vpack.c.bf16 %v1766, %v1766
    %1769 = vst.msk [vmem:[#allocation2 + $0x70] sm:$0xf] %vm486, %v1737
    %1770 = vst.msk [vmem:[#allocation2 + $0x74] sm:$0xf] %vm486, %v1738
    %1771 = vst.msk [vmem:[#allocation2 + $0x78] sm:$0xf] %vm486, %v1767
    %1772 = vst.msk [vmem:[#allocation2 + $0x7c] sm:$0xf] %vm486, %v1768
    %s1773 = scalar_lea.vmem [#allocation7], 64
    %v1774 = vld [vmem:[%s1773] sm:$0xf]
    %v1775 = vld [vmem:[%s1773 + $0x4] sm:$0xf]
    %v1776 = vld [vmem:[%s1773 + $0x8] sm:$0xf]
    %v1777 = vld [vmem:[%s1773 + $0xc] sm:$0xf]
    %v1778 = vld [vmem:[%s1773 + $0x10] sm:$0xf]
    %v1779 = vld [vmem:[%s1773 + $0x14] sm:$0xf]
    %v1780 = vld [vmem:[%s1773 + $0x18] sm:$0xf]
    %v1781 = vld [vmem:[%s1773 + $0x1c] sm:$0xf]
    %s1782 = scalar_lea.vmem [#allocation9], 64
    %v1783 = vld [vmem:[%s1782] sm:$0xf]
    %v1784 = vld [vmem:[%s1782 + $0x4] sm:$0xf]
    %v1785 = vld [vmem:[%s1782 + $0x8] sm:$0xf]
    %v1786 = vld [vmem:[%s1782 + $0xc] sm:$0xf]
    %v1787 = vld [vmem:[%s1782 + $0x10] sm:$0xf]
    %v1788 = vld [vmem:[%s1782 + $0x14] sm:$0xf]
    %v1789 = vld [vmem:[%s1782 + $0x18] sm:$0xf]
    %v1790 = vld [vmem:[%s1782 + $0x1c] sm:$0xf]
    %s1791 = scalar_lea.vmem [#allocation10], 2
    %v1792 = vld [vmem:[%s1791] sm:$0x1]
    %v1793 = vld [vmem:[#allocation2] sm:$0xf]
    %v1794 = vld [vmem:[#allocation2 + $0x4] sm:$0xf]
    %v1795 = vld [vmem:[#allocation2 + $0x8] sm:$0xf]
    %v1796 = vld [vmem:[#allocation2 + $0xc] sm:$0xf]
    %v1797 = vld [vmem:[#allocation2 + $0x10] sm:$0xf]
    %v1798 = vld [vmem:[#allocation2 + $0x14] sm:$0xf]
    %v1799 = vld [vmem:[#allocation2 + $0x18] sm:$0xf]
    %v1800 = vld [vmem:[#allocation2 + $0x1c] sm:$0xf]
    %v1801 = vld [vmem:[#allocation2 + $0x20] sm:$0xf]
    %v1802 = vld [vmem:[#allocation2 + $0x24] sm:$0xf]
    %v1803 = vld [vmem:[#allocation2 + $0x28] sm:$0xf]
    %v1804 = vld [vmem:[#allocation2 + $0x2c] sm:$0xf]
    %v1805 = vld [vmem:[#allocation2 + $0x30] sm:$0xf]
    %v1806 = vld [vmem:[#allocation2 + $0x34] sm:$0xf]
    %v1807 = vld [vmem:[#allocation2 + $0x38] sm:$0xf]
    %v1808 = vld [vmem:[#allocation2 + $0x3c] sm:$0xf]
    %v1809 = vld [vmem:[#allocation2 + $0x40] sm:$0xf]
    %v1810 = vld [vmem:[#allocation2 + $0x44] sm:$0xf]
    %v1811 = vld [vmem:[#allocation2 + $0x48] sm:$0xf]
    %v1812 = vld [vmem:[#allocation2 + $0x4c] sm:$0xf]
    %v1813 = vld [vmem:[#allocation2 + $0x50] sm:$0xf]
    %v1814 = vld [vmem:[#allocation2 + $0x54] sm:$0xf]
    %v1815 = vld [vmem:[#allocation2 + $0x58] sm:$0xf]
    %v1816 = vld [vmem:[#allocation2 + $0x5c] sm:$0xf]
    %v1817 = vld [vmem:[#allocation2 + $0x60] sm:$0xf]
    %v1818 = vld [vmem:[#allocation2 + $0x64] sm:$0xf]
    %v1819 = vld [vmem:[#allocation2 + $0x68] sm:$0xf]
    %v1820 = vld [vmem:[#allocation2 + $0x6c] sm:$0xf]
    %v1821 = vld [vmem:[#allocation2 + $0x70] sm:$0xf]
    %v1822 = vld [vmem:[#allocation2 + $0x74] sm:$0xf]
    %v1823 = vld [vmem:[#allocation2 + $0x78] sm:$0xf]
    %v1824 = vld [vmem:[#allocation2 + $0x7c] sm:$0xf]
    %v1826 = vperm.slane %v1792, 0
    %v1860 = vunpack.c.l.b16 %v1793
    %v1861 = vunpack.c.l.b16 %v1794
    %v1862 = vunpack.c.l.b16 %v1795
    %v1863 = vunpack.c.l.b16 %v1796
    %v1864 = vunpack.c.l.b16 %v1797
    %v1865 = vunpack.c.l.b16 %v1798
    %v1866 = vunpack.c.l.b16 %v1799
    %v1867 = vunpack.c.l.b16 %v1800
    %v1868 = vunpack.c.l.b16 %v1801
    %v1869 = vunpack.c.l.b16 %v1802
    %v1870 = vunpack.c.l.b16 %v1803
    %v1871 = vunpack.c.l.b16 %v1804
    %v1872 = vunpack.c.l.b16 %v1805
    %v1873 = vunpack.c.l.b16 %v1806
    %v1874 = vunpack.c.l.b16 %v1807
    %v1875 = vunpack.c.l.b16 %v1808
    %v1876 = vunpack.c.l.b16 %v1809
    %v1877 = vunpack.c.l.b16 %v1810
    %v1878 = vunpack.c.l.b16 %v1811
    %v1879 = vunpack.c.l.b16 %v1812
    %v1880 = vunpack.c.l.b16 %v1813
    %v1881 = vunpack.c.l.b16 %v1814
    %v1882 = vunpack.c.l.b16 %v1815
    %v1883 = vunpack.c.l.b16 %v1816
    %v1884 = vunpack.c.l.b16 %v1817
    %v1885 = vunpack.c.l.b16 %v1818
    %v1886 = vunpack.c.l.b16 %v1819
    %v1887 = vunpack.c.l.b16 %v1820
    %v1888 = vunpack.c.l.b16 %v1821
    %v1889 = vunpack.c.l.b16 %v1822
    %v1890 = vunpack.c.l.b16 %v1823
    %v1891 = vunpack.c.l.b16 %v1824
    %v1892 = vpack.c.b16 %v1861, %v1860
    %v1893 = vpack.c.b16 %v1863, %v1862
    %v1894 = vpack.c.b16 %v1865, %v1864
    %v1895 = vpack.c.b16 %v1867, %v1866
    %v1896 = vpack.c.b16 %v1869, %v1868
    %v1897 = vpack.c.b16 %v1871, %v1870
    %v1898 = vpack.c.b16 %v1873, %v1872
    %v1899 = vpack.c.b16 %v1875, %v1874
    %v1900 = vpack.c.b16 %v1877, %v1876
    %v1901 = vpack.c.b16 %v1879, %v1878
    %v1902 = vpack.c.b16 %v1881, %v1880
    %v1903 = vpack.c.b16 %v1883, %v1882
    %v1904 = vpack.c.b16 %v1885, %v1884
    %v1905 = vpack.c.b16 %v1887, %v1886
    %v1906 = vpack.c.b16 %v1889, %v1888
    %v1907 = vpack.c.b16 %v1891, %v1890
    %v1916 = vunpack.c.l.b16 %v1774
    %v1917 = vunpack.c.l.b16 %v1775
    %v1918 = vunpack.c.l.b16 %v1776
    %v1919 = vunpack.c.l.b16 %v1777
    %v1920 = vunpack.c.l.b16 %v1778
    %v1921 = vunpack.c.l.b16 %v1779
    %v1922 = vunpack.c.l.b16 %v1780
    %v1923 = vunpack.c.l.b16 %v1781
    %v1924 = vpack.c.b16 %v1917, %v1916
    %v1925 = vpack.c.b16 %v1919, %v1918
    %v1926 = vpack.c.b16 %v1921, %v1920
    %v1927 = vpack.c.b16 %v1923, %v1922
    %v1933 = vsel %vm259, %v1892, 0
    %v1936 = vsel %vm259, %v1893, 0
    %v1939 = vsel %vm259, %v1894, 0
    %v1942 = vsel %vm259, %v1895, 0
    %v1945 = vsel %vm259, %v1896, 0
    %v1948 = vsel %vm259, %v1897, 0
    %v1951 = vsel %vm259, %v1898, 0
    %v1954 = vsel %vm259, %v1899, 0
    %v1957 = vsel %vm259, %v1900, 0
    %v1960 = vsel %vm259, %v1901, 0
    %v1963 = vsel %vm259, %v1902, 0
    %v1966 = vsel %vm259, %v1903, 0
    %v1969 = vsel %vm259, %v1904, 0
    %v1972 = vsel %vm259, %v1905, 0
    %v1975 = vsel %vm259, %v1906, 0
    %v1978 = vsel %vm259, %v1907, 0
    %1980 = vmatpush.bf16.msra.mxu0 0
    %1981 = vmatpush.bf16.msra.mxu0 0
    %1982 = vmatpush.bf16.msra.mxu0 0
    %1983 = vmatpush.bf16.msra.mxu0 0
    %1984 = vmatpush.bf16.msra.mxu0 %v1927
    %1985 = vmatpush.bf16.msra.mxu0 %v1926
    %1986 = vmatpush.bf16.msra.mxu0 %v1925
    %1987 = vmatpush.bf16.msra.mxu0 %v1924
    %1988 = vmatmul.bf16.gmra.mxu0 %v1933
    %v1989 = vpop.f32.mrf.mxu0
    %v1990 = vadd.f32 %v1826, %v1989
    %v1991 = vpop.f32.mrf.mxu0
    %v1992 = vadd.f32 %v1826, %v1991
    %1993 = vmatmul.bf16.gmra.mxu0 %v1936
    %v1994 = vpop.f32.mrf.mxu0
    %v1995 = vadd.f32 %v1826, %v1994
    %v1996 = vpop.f32.mrf.mxu0
    %v1997 = vadd.f32 %v1826, %v1996
    %1998 = vmatmul.bf16.gmra.mxu0 %v1939
    %v1999 = vpop.f32.mrf.mxu0
    %v2000 = vadd.f32 %v1826, %v1999
    %v2001 = vpop.f32.mrf.mxu0
    %v2002 = vadd.f32 %v1826, %v2001
    %2003 = vmatmul.bf16.gmra.mxu0 %v1942
    %v2004 = vpop.f32.mrf.mxu0
    %v2005 = vadd.f32 %v1826, %v2004
    %v2006 = vpop.f32.mrf.mxu0
    %v2007 = vadd.f32 %v1826, %v2006
    %2008 = vmatmul.bf16.gmra.mxu0 %v1945
    %v2009 = vpop.f32.mrf.mxu0
    %v2010 = vadd.f32 %v1826, %v2009
    %v2011 = vpop.f32.mrf.mxu0
    %v2012 = vadd.f32 %v1826, %v2011
    %2013 = vmatmul.bf16.gmra.mxu0 %v1948
    %v2014 = vpop.f32.mrf.mxu0
    %v2015 = vadd.f32 %v1826, %v2014
    %v2016 = vpop.f32.mrf.mxu0
    %v2017 = vadd.f32 %v1826, %v2016
    %2018 = vmatmul.bf16.gmra.mxu0 %v1951
    %v2019 = vpop.f32.mrf.mxu0
    %v2020 = vadd.f32 %v1826, %v2019
    %v2021 = vpop.f32.mrf.mxu0
    %v2022 = vadd.f32 %v1826, %v2021
    %2023 = vmatmul.bf16.gmra.mxu0 %v1954
    %v2024 = vpop.f32.mrf.mxu0
    %v2025 = vadd.f32 %v1826, %v2024
    %v2026 = vpop.f32.mrf.mxu0
    %v2027 = vadd.f32 %v1826, %v2026
    %2028 = vmatmul.bf16.gmra.mxu0 %v1957
    %v2029 = vpop.f32.mrf.mxu0
    %v2030 = vadd.f32 %v1826, %v2029
    %v2031 = vpop.f32.mrf.mxu0
    %v2032 = vadd.f32 %v1826, %v2031
    %2033 = vmatmul.bf16.gmra.mxu0 %v1960
    %v2034 = vpop.f32.mrf.mxu0
    %v2035 = vadd.f32 %v1826, %v2034
    %v2036 = vpop.f32.mrf.mxu0
    %v2037 = vadd.f32 %v1826, %v2036
    %2038 = vmatmul.bf16.gmra.mxu0 %v1963
    %v2039 = vpop.f32.mrf.mxu0
    %v2040 = vadd.f32 %v1826, %v2039
    %v2041 = vpop.f32.mrf.mxu0
    %v2042 = vadd.f32 %v1826, %v2041
    %2043 = vmatmul.bf16.gmra.mxu0 %v1966
    %v2044 = vpop.f32.mrf.mxu0
    %v2045 = vadd.f32 %v1826, %v2044
    %v2046 = vpop.f32.mrf.mxu0
    %v2047 = vadd.f32 %v1826, %v2046
    %2048 = vmatmul.bf16.gmra.mxu0 %v1969
    %v2049 = vpop.f32.mrf.mxu0
    %v2050 = vadd.f32 %v1826, %v2049
    %v2051 = vpop.f32.mrf.mxu0
    %v2052 = vadd.f32 %v1826, %v2051
    %2053 = vmatmul.bf16.gmra.mxu0 %v1972
    %v2054 = vpop.f32.mrf.mxu0
    %v2055 = vadd.f32 %v1826, %v2054
    %v2056 = vpop.f32.mrf.mxu0
    %v2057 = vadd.f32 %v1826, %v2056
    %2058 = vmatmul.bf16.gmra.mxu0 %v1975
    %v2059 = vpop.f32.mrf.mxu0
    %v2060 = vadd.f32 %v1826, %v2059
    %v2061 = vpop.f32.mrf.mxu0
    %v2062 = vadd.f32 %v1826, %v2061
    %2063 = vmatmul.bf16.gmra.mxu0 %v1978
    %v2064 = vpop.f32.mrf.mxu0
    %v2065 = vadd.f32 %v1826, %v2064
    %v2066 = vpop.f32.mrf.mxu0
    %v2067 = vadd.f32 %v1826, %v2066
    %2068 = vdwg.mxu0
    %2069 = vst.msk [vmem:[#allocation3] sm:$0xff] %vm259, %v1990
    %2070 = vst.msk [vmem:[#allocation3 + $0x8] sm:$0xff] %vm259, %v1992
    %2071 = vst.msk [vmem:[#allocation3 + $0x10] sm:$0xff] %vm259, %v1995
    %2072 = vst.msk [vmem:[#allocation3 + $0x18] sm:$0xff] %vm259, %v1997
    %2073 = vst.msk [vmem:[#allocation3 + $0x20] sm:$0xff] %vm259, %v2000
    %2074 = vst.msk [vmem:[#allocation3 + $0x28] sm:$0xff] %vm259, %v2002
    %2075 = vst.msk [vmem:[#allocation3 + $0x30] sm:$0xff] %vm259, %v2005
    %2076 = vst.msk [vmem:[#allocation3 + $0x38] sm:$0xff] %vm259, %v2007
    %2077 = vst.msk [vmem:[#allocation3 + $0x40] sm:$0xff] %vm259, %v2010
    %2078 = vst.msk [vmem:[#allocation3 + $0x48] sm:$0xff] %vm259, %v2012
    %2079 = vst.msk [vmem:[#allocation3 + $0x50] sm:$0xff] %vm259, %v2015
    %2080 = vst.msk [vmem:[#allocation3 + $0x58] sm:$0xff] %vm259, %v2017
    %2081 = vst.msk [vmem:[#allocation3 + $0x60] sm:$0xff] %vm259, %v2020
    %2082 = vst.msk [vmem:[#allocation3 + $0x68] sm:$0xff] %vm259, %v2022
    %2083 = vst.msk [vmem:[#allocation3 + $0x70] sm:$0xff] %vm259, %v2025
    %2084 = vst.msk [vmem:[#allocation3 + $0x78] sm:$0xff] %vm259, %v2027
    %2085 = vst.msk [vmem:[#allocation3 + $0x80] sm:$0xff] %vm259, %v2030
    %2086 = vst.msk [vmem:[#allocation3 + $0x88] sm:$0xff] %vm259, %v2032
    %2087 = vst.msk [vmem:[#allocation3 + $0x90] sm:$0xff] %vm259, %v2035
    %2088 = vst.msk [vmem:[#allocation3 + $0x98] sm:$0xff] %vm259, %v2037
    %2089 = vst.msk [vmem:[#allocation3 + $0xa0] sm:$0xff] %vm259, %v2040
    %2090 = vst.msk [vmem:[#allocation3 + $0xa8] sm:$0xff] %vm259, %v2042
    %2091 = vst.msk [vmem:[#allocation3 + $0xb0] sm:$0xff] %vm259, %v2045
    %2092 = vst.msk [vmem:[#allocation3 + $0xb8] sm:$0xff] %vm259, %v2047
    %2093 = vst.msk [vmem:[#allocation3 + $0xc0] sm:$0xff] %vm259, %v2050
    %2094 = vst.msk [vmem:[#allocation3 + $0xc8] sm:$0xff] %vm259, %v2052
    %2095 = vst.msk [vmem:[#allocation3 + $0xd0] sm:$0xff] %vm259, %v2055
    %2096 = vst.msk [vmem:[#allocation3 + $0xd8] sm:$0xff] %vm259, %v2057
    %2097 = vst.msk [vmem:[#allocation3 + $0xe0] sm:$0xff] %vm259, %v2060
    %2098 = vst.msk [vmem:[#allocation3 + $0xe8] sm:$0xff] %vm259, %v2062
    %2099 = vst.msk [vmem:[#allocation3 + $0xf0] sm:$0xff] %vm259, %v2065
    %2100 = vst.msk [vmem:[#allocation3 + $0xf8] sm:$0xff] %vm259, %v2067
    %v2101 = vld [vmem:[#allocation3] sm:$0xff]
    %v2102 = vld [vmem:[#allocation3 + $0x8] sm:$0xff]
    %v2111 = vunpack.c.l.b16 %v1783
    %v2112 = vunpack.c.l.b16 %v1784
    %v2113 = vunpack.c.l.b16 %v1785
    %v2114 = vunpack.c.l.b16 %v1786
    %v2115 = vunpack.c.l.b16 %v1787
    %v2116 = vunpack.c.l.b16 %v1788
    %v2117 = vunpack.c.l.b16 %v1789
    %v2118 = vunpack.c.l.b16 %v1790
    %v2119 = vpack.c.b16 %v2112, %v2111
    %v2120 = vpack.c.b16 %v2114, %v2113
    %v2121 = vpack.c.b16 %v2116, %v2115
    %v2122 = vpack.c.b16 %v2118, %v2117
    %2127 = vmatpush.bf16.msra.mxu0 0
    %2128 = vmatpush.bf16.msra.mxu0 0
    %2129 = vmatpush.bf16.msra.mxu0 0
    %2130 = vmatpush.bf16.msra.mxu0 0
    %2131 = vmatpush.bf16.msra.mxu0 %v2122
    %2132 = vmatpush.bf16.msra.mxu0 %v2121
    %2133 = vmatpush.bf16.msra.mxu0 %v2120
    %2134 = vmatpush.bf16.msra.mxu0 %v2119
    %2135 = vmatmul.bf16.gmra.mxu0 %v456
    %v2136 = vpop.f32.mrf.mxu0
    %v2137 = vadd.f32 0.0, %v2136
    %v2138 = vpop.f32.mrf.mxu0
    %v2139 = vadd.f32 0.0, %v2138
    %2140 = vdwg.mxu0
    %v2141 = vadd.f32 %v2101, %v2137
    %v2142 = vadd.f32 %v2102, %v2139
    %v2143 = vtanh.pop %v2141
    %v2144 = vtanh.pop %v2142
    %v2145 = vpack.c.bf16 %v2143, %v2143
    %v2146 = vpack.c.bf16 %v2144, %v2144
    %v2147 = vld [vmem:[#allocation3 + $0x10] sm:$0xff]
    %v2148 = vld [vmem:[#allocation3 + $0x18] sm:$0xff]
    %v2149 = vadd.f32 %v2147, %v2137
    %v2150 = vadd.f32 %v2148, %v2139
    %v2151 = vtanh.pop %v2149
    %v2152 = vtanh.pop %v2150
    %v2153 = vpack.c.bf16 %v2151, %v2151
    %v2154 = vpack.c.bf16 %v2152, %v2152
    %2155 = vst.msk [vmem:[#allocation2] sm:$0xf] %vm486, %v2145
    %2156 = vst.msk [vmem:[#allocation2 + $0x4] sm:$0xf] %vm486, %v2146
    %2157 = vst.msk [vmem:[#allocation2 + $0x8] sm:$0xf] %vm486, %v2153
    %2158 = vst.msk [vmem:[#allocation2 + $0xc] sm:$0xf] %vm486, %v2154
    %v2159 = vld [vmem:[#allocation3 + $0x20] sm:$0xff]
    %v2160 = vld [vmem:[#allocation3 + $0x28] sm:$0xff]
    %v2163 = vunpack.c.l.b16 %v2145
    %v2164 = vunpack.c.l.b16 %v2146
    %v2165 = vpack.c.b16 %v2164, %v2163
    %v2167 = vsel %vm259, %v2165, 0
    %2169 = vmatpush.bf16.msra.mxu0 0
    %2170 = vmatpush.bf16.msra.mxu0 0
    %2171 = vmatpush.bf16.msra.mxu0 0
    %2172 = vmatpush.bf16.msra.mxu0 0
    %2173 = vmatpush.bf16.msra.mxu0 %v2122
    %2174 = vmatpush.bf16.msra.mxu0 %v2121
    %2175 = vmatpush.bf16.msra.mxu0 %v2120
    %2176 = vmatpush.bf16.msra.mxu0 %v2119
    %2177 = vmatmul.bf16.gmra.mxu0 %v2167
    %v2178 = vpop.f32.mrf.mxu0
    %v2179 = vadd.f32 0.0, %v2178
    %v2180 = vpop.f32.mrf.mxu0
    %v2181 = vadd.f32 0.0, %v2180
    %2182 = vdwg.mxu0
    %v2183 = vadd.f32 %v2159, %v2179
    %v2184 = vadd.f32 %v2160, %v2181
    %v2185 = vtanh.pop %v2183
    %v2186 = vtanh.pop %v2184
    %v2187 = vpack.c.bf16 %v2185, %v2185
    %v2188 = vpack.c.bf16 %v2186, %v2186
    %v2189 = vld [vmem:[#allocation3 + $0x30] sm:$0xff]
    %v2190 = vld [vmem:[#allocation3 + $0x38] sm:$0xff]
    %v2193 = vunpack.c.l.b16 %v2153
    %v2194 = vunpack.c.l.b16 %v2154
    %v2195 = vpack.c.b16 %v2194, %v2193
    %v2197 = vsel %vm259, %v2195, 0
    %2199 = vmatpush.bf16.msra.mxu0 0
    %2200 = vmatpush.bf16.msra.mxu0 0
    %2201 = vmatpush.bf16.msra.mxu0 0
    %2202 = vmatpush.bf16.msra.mxu0 0
    %2203 = vmatpush.bf16.msra.mxu0 %v2122
    %2204 = vmatpush.bf16.msra.mxu0 %v2121
    %2205 = vmatpush.bf16.msra.mxu0 %v2120
    %2206 = vmatpush.bf16.msra.mxu0 %v2119
    %2207 = vmatmul.bf16.gmra.mxu0 %v2197
    %v2208 = vpop.f32.mrf.mxu0
    %v2209 = vadd.f32 0.0, %v2208
    %v2210 = vpop.f32.mrf.mxu0
    %v2211 = vadd.f32 0.0, %v2210
    %2212 = vdwg.mxu0
    %v2213 = vadd.f32 %v2189, %v2209
    %v2214 = vadd.f32 %v2190, %v2211
    %v2215 = vtanh.pop %v2213
    %v2216 = vtanh.pop %v2214
    %v2217 = vpack.c.bf16 %v2215, %v2215
    %v2218 = vpack.c.bf16 %v2216, %v2216
    %2219 = vst.msk [vmem:[#allocation2 + $0x10] sm:$0xf] %vm486, %v2187
    %2220 = vst.msk [vmem:[#allocation2 + $0x14] sm:$0xf] %vm486, %v2188
    %2221 = vst.msk [vmem:[#allocation2 + $0x18] sm:$0xf] %vm486, %v2217
    %2222 = vst.msk [vmem:[#allocation2 + $0x1c] sm:$0xf] %vm486, %v2218
    %v2223 = vld [vmem:[#allocation3 + $0x40] sm:$0xff]
    %v2224 = vld [vmem:[#allocation3 + $0x48] sm:$0xff]
    %v2227 = vunpack.c.l.b16 %v2187
    %v2228 = vunpack.c.l.b16 %v2188
    %v2229 = vpack.c.b16 %v2228, %v2227
    %v2231 = vsel %vm259, %v2229, 0
    %2233 = vmatpush.bf16.msra.mxu0 0
    %2234 = vmatpush.bf16.msra.mxu0 0
    %2235 = vmatpush.bf16.msra.mxu0 0
    %2236 = vmatpush.bf16.msra.mxu0 0
    %2237 = vmatpush.bf16.msra.mxu0 %v2122
    %2238 = vmatpush.bf16.msra.mxu0 %v2121
    %2239 = vmatpush.bf16.msra.mxu0 %v2120
    %2240 = vmatpush.bf16.msra.mxu0 %v2119
    %2241 = vmatmul.bf16.gmra.mxu0 %v2231
    %v2242 = vpop.f32.mrf.mxu0
    %v2243 = vadd.f32 0.0, %v2242
    %v2244 = vpop.f32.mrf.mxu0
    %v2245 = vadd.f32 0.0, %v2244
    %2246 = vdwg.mxu0
    %v2247 = vadd.f32 %v2223, %v2243
    %v2248 = vadd.f32 %v2224, %v2245
    %v2249 = vtanh.pop %v2247
    %v2250 = vtanh.pop %v2248
    %v2251 = vpack.c.bf16 %v2249, %v2249
    %v2252 = vpack.c.bf16 %v2250, %v2250
    %v2253 = vld [vmem:[#allocation3 + $0x50] sm:$0xff]
    %v2254 = vld [vmem:[#allocation3 + $0x58] sm:$0xff]
    %v2257 = vunpack.c.l.b16 %v2217
    %v2258 = vunpack.c.l.b16 %v2218
    %v2259 = vpack.c.b16 %v2258, %v2257
    %v2261 = vsel %vm259, %v2259, 0
    %2263 = vmatpush.bf16.msra.mxu0 0
    %2264 = vmatpush.bf16.msra.mxu0 0
    %2265 = vmatpush.bf16.msra.mxu0 0
    %2266 = vmatpush.bf16.msra.mxu0 0
    %2267 = vmatpush.bf16.msra.mxu0 %v2122
    %2268 = vmatpush.bf16.msra.mxu0 %v2121
    %2269 = vmatpush.bf16.msra.mxu0 %v2120
    %2270 = vmatpush.bf16.msra.mxu0 %v2119
    %2271 = vmatmul.bf16.gmra.mxu0 %v2261
    %v2272 = vpop.f32.mrf.mxu0
    %v2273 = vadd.f32 0.0, %v2272
    %v2274 = vpop.f32.mrf.mxu0
    %v2275 = vadd.f32 0.0, %v2274
    %2276 = vdwg.mxu0
    %v2277 = vadd.f32 %v2253, %v2273
    %v2278 = vadd.f32 %v2254, %v2275
    %v2279 = vtanh.pop %v2277
    %v2280 = vtanh.pop %v2278
    %v2281 = vpack.c.bf16 %v2279, %v2279
    %v2282 = vpack.c.bf16 %v2280, %v2280
    %2283 = vst.msk [vmem:[#allocation2 + $0x20] sm:$0xf] %vm486, %v2251
    %2284 = vst.msk [vmem:[#allocation2 + $0x24] sm:$0xf] %vm486, %v2252
    %2285 = vst.msk [vmem:[#allocation2 + $0x28] sm:$0xf] %vm486, %v2281
    %2286 = vst.msk [vmem:[#allocation2 + $0x2c] sm:$0xf] %vm486, %v2282
    %v2287 = vld [vmem:[#allocation3 + $0x60] sm:$0xff]
    %v2288 = vld [vmem:[#allocation3 + $0x68] sm:$0xff]
    %v2291 = vunpack.c.l.b16 %v2251
    %v2292 = vunpack.c.l.b16 %v2252
    %v2293 = vpack.c.b16 %v2292, %v2291
    %v2295 = vsel %vm259, %v2293, 0
    %2297 = vmatpush.bf16.msra.mxu0 0
    %2298 = vmatpush.bf16.msra.mxu0 0
    %2299 = vmatpush.bf16.msra.mxu0 0
    %2300 = vmatpush.bf16.msra.mxu0 0
    %2301 = vmatpush.bf16.msra.mxu0 %v2122
    %2302 = vmatpush.bf16.msra.mxu0 %v2121
    %2303 = vmatpush.bf16.msra.mxu0 %v2120
    %2304 = vmatpush.bf16.msra.mxu0 %v2119
    %2305 = vmatmul.bf16.gmra.mxu0 %v2295
    %v2306 = vpop.f32.mrf.mxu0
    %v2307 = vadd.f32 0.0, %v2306
    %v2308 = vpop.f32.mrf.mxu0
    %v2309 = vadd.f32 0.0, %v2308
    %2310 = vdwg.mxu0
    %v2311 = vadd.f32 %v2287, %v2307
    %v2312 = vadd.f32 %v2288, %v2309
    %v2313 = vtanh.pop %v2311
    %v2314 = vtanh.pop %v2312
    %v2315 = vpack.c.bf16 %v2313, %v2313
    %v2316 = vpack.c.bf16 %v2314, %v2314
    %v2317 = vld [vmem:[#allocation3 + $0x70] sm:$0xff]
    %v2318 = vld [vmem:[#allocation3 + $0x78] sm:$0xff]
    %v2321 = vunpack.c.l.b16 %v2281
    %v2322 = vunpack.c.l.b16 %v2282
    %v2323 = vpack.c.b16 %v2322, %v2321
    %v2325 = vsel %vm259, %v2323, 0
    %2327 = vmatpush.bf16.msra.mxu0 0
    %2328 = vmatpush.bf16.msra.mxu0 0
    %2329 = vmatpush.bf16.msra.mxu0 0
    %2330 = vmatpush.bf16.msra.mxu0 0
    %2331 = vmatpush.bf16.msra.mxu0 %v2122
    %2332 = vmatpush.bf16.msra.mxu0 %v2121
    %2333 = vmatpush.bf16.msra.mxu0 %v2120
    %2334 = vmatpush.bf16.msra.mxu0 %v2119
    %2335 = vmatmul.bf16.gmra.mxu0 %v2325
    %v2336 = vpop.f32.mrf.mxu0
    %v2337 = vadd.f32 0.0, %v2336
    %v2338 = vpop.f32.mrf.mxu0
    %v2339 = vadd.f32 0.0, %v2338
    %2340 = vdwg.mxu0
    %v2341 = vadd.f32 %v2317, %v2337
    %v2342 = vadd.f32 %v2318, %v2339
    %v2343 = vtanh.pop %v2341
    %v2344 = vtanh.pop %v2342
    %v2345 = vpack.c.bf16 %v2343, %v2343
    %v2346 = vpack.c.bf16 %v2344, %v2344
    %2347 = vst.msk [vmem:[#allocation2 + $0x30] sm:$0xf] %vm486, %v2315
    %2348 = vst.msk [vmem:[#allocation2 + $0x34] sm:$0xf] %vm486, %v2316
    %2349 = vst.msk [vmem:[#allocation2 + $0x38] sm:$0xf] %vm486, %v2345
    %2350 = vst.msk [vmem:[#allocation2 + $0x3c] sm:$0xf] %vm486, %v2346
    %v2351 = vld [vmem:[#allocation3 + $0x80] sm:$0xff]
    %v2352 = vld [vmem:[#allocation3 + $0x88] sm:$0xff]
    %v2355 = vunpack.c.l.b16 %v2315
    %v2356 = vunpack.c.l.b16 %v2316
    %v2357 = vpack.c.b16 %v2356, %v2355
    %v2359 = vsel %vm259, %v2357, 0
    %2361 = vmatpush.bf16.msra.mxu0 0
    %2362 = vmatpush.bf16.msra.mxu0 0
    %2363 = vmatpush.bf16.msra.mxu0 0
    %2364 = vmatpush.bf16.msra.mxu0 0
    %2365 = vmatpush.bf16.msra.mxu0 %v2122
    %2366 = vmatpush.bf16.msra.mxu0 %v2121
    %2367 = vmatpush.bf16.msra.mxu0 %v2120
    %2368 = vmatpush.bf16.msra.mxu0 %v2119
    %2369 = vmatmul.bf16.gmra.mxu0 %v2359
    %v2370 = vpop.f32.mrf.mxu0
    %v2371 = vadd.f32 0.0, %v2370
    %v2372 = vpop.f32.mrf.mxu0
    %v2373 = vadd.f32 0.0, %v2372
    %2374 = vdwg.mxu0
    %v2375 = vadd.f32 %v2351, %v2371
    %v2376 = vadd.f32 %v2352, %v2373
    %v2377 = vtanh.pop %v2375
    %v2378 = vtanh.pop %v2376
    %v2379 = vpack.c.bf16 %v2377, %v2377
    %v2380 = vpack.c.bf16 %v2378, %v2378
    %v2381 = vld [vmem:[#allocation3 + $0x90] sm:$0xff]
    %v2382 = vld [vmem:[#allocation3 + $0x98] sm:$0xff]
    %v2385 = vunpack.c.l.b16 %v2345
    %v2386 = vunpack.c.l.b16 %v2346
    %v2387 = vpack.c.b16 %v2386, %v2385
    %v2389 = vsel %vm259, %v2387, 0
    %2391 = vmatpush.bf16.msra.mxu0 0
    %2392 = vmatpush.bf16.msra.mxu0 0
    %2393 = vmatpush.bf16.msra.mxu0 0
    %2394 = vmatpush.bf16.msra.mxu0 0
    %2395 = vmatpush.bf16.msra.mxu0 %v2122
    %2396 = vmatpush.bf16.msra.mxu0 %v2121
    %2397 = vmatpush.bf16.msra.mxu0 %v2120
    %2398 = vmatpush.bf16.msra.mxu0 %v2119
    %2399 = vmatmul.bf16.gmra.mxu0 %v2389
    %v2400 = vpop.f32.mrf.mxu0
    %v2401 = vadd.f32 0.0, %v2400
    %v2402 = vpop.f32.mrf.mxu0
    %v2403 = vadd.f32 0.0, %v2402
    %2404 = vdwg.mxu0
    %v2405 = vadd.f32 %v2381, %v2401
    %v2406 = vadd.f32 %v2382, %v2403
    %v2407 = vtanh.pop %v2405
    %v2408 = vtanh.pop %v2406
    %v2409 = vpack.c.bf16 %v2407, %v2407
    %v2410 = vpack.c.bf16 %v2408, %v2408
    %2411 = vst.msk [vmem:[#allocation2 + $0x40] sm:$0xf] %vm486, %v2379
    %2412 = vst.msk [vmem:[#allocation2 + $0x44] sm:$0xf] %vm486, %v2380
    %2413 = vst.msk [vmem:[#allocation2 + $0x48] sm:$0xf] %vm486, %v2409
    %2414 = vst.msk [vmem:[#allocation2 + $0x4c] sm:$0xf] %vm486, %v2410
    %v2415 = vld [vmem:[#allocation3 + $0xa0] sm:$0xff]
    %v2416 = vld [vmem:[#allocation3 + $0xa8] sm:$0xff]
    %v2419 = vunpack.c.l.b16 %v2379
    %v2420 = vunpack.c.l.b16 %v2380
    %v2421 = vpack.c.b16 %v2420, %v2419
    %v2423 = vsel %vm259, %v2421, 0
    %2425 = vmatpush.bf16.msra.mxu0 0
    %2426 = vmatpush.bf16.msra.mxu0 0
    %2427 = vmatpush.bf16.msra.mxu0 0
    %2428 = vmatpush.bf16.msra.mxu0 0
    %2429 = vmatpush.bf16.msra.mxu0 %v2122
    %2430 = vmatpush.bf16.msra.mxu0 %v2121
    %2431 = vmatpush.bf16.msra.mxu0 %v2120
    %2432 = vmatpush.bf16.msra.mxu0 %v2119
    %2433 = vmatmul.bf16.gmra.mxu0 %v2423
    %v2434 = vpop.f32.mrf.mxu0
    %v2435 = vadd.f32 0.0, %v2434
    %v2436 = vpop.f32.mrf.mxu0
    %v2437 = vadd.f32 0.0, %v2436
    %2438 = vdwg.mxu0
    %v2439 = vadd.f32 %v2415, %v2435
    %v2440 = vadd.f32 %v2416, %v2437
    %v2441 = vtanh.pop %v2439
    %v2442 = vtanh.pop %v2440
    %v2443 = vpack.c.bf16 %v2441, %v2441
    %v2444 = vpack.c.bf16 %v2442, %v2442
    %v2445 = vld [vmem:[#allocation3 + $0xb0] sm:$0xff]
    %v2446 = vld [vmem:[#allocation3 + $0xb8] sm:$0xff]
    %v2449 = vunpack.c.l.b16 %v2409
    %v2450 = vunpack.c.l.b16 %v2410
    %v2451 = vpack.c.b16 %v2450, %v2449
    %v2453 = vsel %vm259, %v2451, 0
    %2455 = vmatpush.bf16.msra.mxu0 0
    %2456 = vmatpush.bf16.msra.mxu0 0
    %2457 = vmatpush.bf16.msra.mxu0 0
    %2458 = vmatpush.bf16.msra.mxu0 0
    %2459 = vmatpush.bf16.msra.mxu0 %v2122
    %2460 = vmatpush.bf16.msra.mxu0 %v2121
    %2461 = vmatpush.bf16.msra.mxu0 %v2120
    %2462 = vmatpush.bf16.msra.mxu0 %v2119
    %2463 = vmatmul.bf16.gmra.mxu0 %v2453
    %v2464 = vpop.f32.mrf.mxu0
    %v2465 = vadd.f32 0.0, %v2464
    %v2466 = vpop.f32.mrf.mxu0
    %v2467 = vadd.f32 0.0, %v2466
    %2468 = vdwg.mxu0
    %v2469 = vadd.f32 %v2445, %v2465
    %v2470 = vadd.f32 %v2446, %v2467
    %v2471 = vtanh.pop %v2469
    %v2472 = vtanh.pop %v2470
    %v2473 = vpack.c.bf16 %v2471, %v2471
    %v2474 = vpack.c.bf16 %v2472, %v2472
    %2475 = vst.msk [vmem:[#allocation2 + $0x50] sm:$0xf] %vm486, %v2443
    %2476 = vst.msk [vmem:[#allocation2 + $0x54] sm:$0xf] %vm486, %v2444
    %2477 = vst.msk [vmem:[#allocation2 + $0x58] sm:$0xf] %vm486, %v2473
    %2478 = vst.msk [vmem:[#allocation2 + $0x5c] sm:$0xf] %vm486, %v2474
    %v2479 = vld [vmem:[#allocation3 + $0xc0] sm:$0xff]
    %v2480 = vld [vmem:[#allocation3 + $0xc8] sm:$0xff]
    %v2483 = vunpack.c.l.b16 %v2443
    %v2484 = vunpack.c.l.b16 %v2444
    %v2485 = vpack.c.b16 %v2484, %v2483
    %v2487 = vsel %vm259, %v2485, 0
    %2489 = vmatpush.bf16.msra.mxu0 0
    %2490 = vmatpush.bf16.msra.mxu0 0
    %2491 = vmatpush.bf16.msra.mxu0 0
    %2492 = vmatpush.bf16.msra.mxu0 0
    %2493 = vmatpush.bf16.msra.mxu0 %v2122
    %2494 = vmatpush.bf16.msra.mxu0 %v2121
    %2495 = vmatpush.bf16.msra.mxu0 %v2120
    %2496 = vmatpush.bf16.msra.mxu0 %v2119
    %2497 = vmatmul.bf16.gmra.mxu0 %v2487
    %v2498 = vpop.f32.mrf.mxu0
    %v2499 = vadd.f32 0.0, %v2498
    %v2500 = vpop.f32.mrf.mxu0
    %v2501 = vadd.f32 0.0, %v2500
    %2502 = vdwg.mxu0
    %v2503 = vadd.f32 %v2479, %v2499
    %v2504 = vadd.f32 %v2480, %v2501
    %v2505 = vtanh.pop %v2503
    %v2506 = vtanh.pop %v2504
    %v2507 = vpack.c.bf16 %v2505, %v2505
    %v2508 = vpack.c.bf16 %v2506, %v2506
    %v2509 = vld [vmem:[#allocation3 + $0xd0] sm:$0xff]
    %v2510 = vld [vmem:[#allocation3 + $0xd8] sm:$0xff]
    %v2513 = vunpack.c.l.b16 %v2473
    %v2514 = vunpack.c.l.b16 %v2474
    %v2515 = vpack.c.b16 %v2514, %v2513
    %v2517 = vsel %vm259, %v2515, 0
    %2519 = vmatpush.bf16.msra.mxu0 0
    %2520 = vmatpush.bf16.msra.mxu0 0
    %2521 = vmatpush.bf16.msra.mxu0 0
    %2522 = vmatpush.bf16.msra.mxu0 0
    %2523 = vmatpush.bf16.msra.mxu0 %v2122
    %2524 = vmatpush.bf16.msra.mxu0 %v2121
    %2525 = vmatpush.bf16.msra.mxu0 %v2120
    %2526 = vmatpush.bf16.msra.mxu0 %v2119
    %2527 = vmatmul.bf16.gmra.mxu0 %v2517
    %v2528 = vpop.f32.mrf.mxu0
    %v2529 = vadd.f32 0.0, %v2528
    %v2530 = vpop.f32.mrf.mxu0
    %v2531 = vadd.f32 0.0, %v2530
    %2532 = vdwg.mxu0
    %v2533 = vadd.f32 %v2509, %v2529
    %v2534 = vadd.f32 %v2510, %v2531
    %v2535 = vtanh.pop %v2533
    %v2536 = vtanh.pop %v2534
    %v2537 = vpack.c.bf16 %v2535, %v2535
    %v2538 = vpack.c.bf16 %v2536, %v2536
    %2539 = vst.msk [vmem:[#allocation2 + $0x60] sm:$0xf] %vm486, %v2507
    %2540 = vst.msk [vmem:[#allocation2 + $0x64] sm:$0xf] %vm486, %v2508
    %2541 = vst.msk [vmem:[#allocation2 + $0x68] sm:$0xf] %vm486, %v2537
    %2542 = vst.msk [vmem:[#allocation2 + $0x6c] sm:$0xf] %vm486, %v2538
    %v2543 = vld [vmem:[#allocation3 + $0xe0] sm:$0xff]
    %v2544 = vld [vmem:[#allocation3 + $0xe8] sm:$0xff]
    %v2547 = vunpack.c.l.b16 %v2507
    %v2548 = vunpack.c.l.b16 %v2508
    %v2549 = vpack.c.b16 %v2548, %v2547
    %v2551 = vsel %vm259, %v2549, 0
    %2553 = vmatpush.bf16.msra.mxu0 0
    %2554 = vmatpush.bf16.msra.mxu0 0
    %2555 = vmatpush.bf16.msra.mxu0 0
    %2556 = vmatpush.bf16.msra.mxu0 0
    %2557 = vmatpush.bf16.msra.mxu0 %v2122
    %2558 = vmatpush.bf16.msra.mxu0 %v2121
    %2559 = vmatpush.bf16.msra.mxu0 %v2120
    %2560 = vmatpush.bf16.msra.mxu0 %v2119
    %2561 = vmatmul.bf16.gmra.mxu0 %v2551
    %v2562 = vpop.f32.mrf.mxu0
    %v2563 = vadd.f32 0.0, %v2562
    %v2564 = vpop.f32.mrf.mxu0
    %v2565 = vadd.f32 0.0, %v2564
    %2566 = vdwg.mxu0
    %v2567 = vadd.f32 %v2543, %v2563
    %v2568 = vadd.f32 %v2544, %v2565
    %v2569 = vtanh.pop %v2567
    %v2570 = vtanh.pop %v2568
    %v2571 = vpack.c.bf16 %v2569, %v2569
    %v2572 = vpack.c.bf16 %v2570, %v2570
    %v2573 = vld [vmem:[#allocation3 + $0xf0] sm:$0xff]
    %v2574 = vld [vmem:[#allocation3 + $0xf8] sm:$0xff]
    %v2577 = vunpack.c.l.b16 %v2537
    %v2578 = vunpack.c.l.b16 %v2538
    %v2579 = vpack.c.b16 %v2578, %v2577
    %v2581 = vsel %vm259, %v2579, 0
    %2583 = vmatpush.bf16.msra.mxu0 0
    %2584 = vmatpush.bf16.msra.mxu0 0
    %2585 = vmatpush.bf16.msra.mxu0 0
    %2586 = vmatpush.bf16.msra.mxu0 0
    %2587 = vmatpush.bf16.msra.mxu0 %v2122
    %2588 = vmatpush.bf16.msra.mxu0 %v2121
    %2589 = vmatpush.bf16.msra.mxu0 %v2120
    %2590 = vmatpush.bf16.msra.mxu0 %v2119
    %2591 = vmatmul.bf16.gmra.mxu0 %v2581
    %v2592 = vpop.f32.mrf.mxu0
    %v2593 = vadd.f32 0.0, %v2592
    %v2594 = vpop.f32.mrf.mxu0
    %v2595 = vadd.f32 0.0, %v2594
    %2596 = vdwg.mxu0
    %v2597 = vadd.f32 %v2573, %v2593
    %v2598 = vadd.f32 %v2574, %v2595
    %v2599 = vtanh.pop %v2597
    %v2600 = vtanh.pop %v2598
    %v2601 = vpack.c.bf16 %v2599, %v2599
    %v2602 = vpack.c.bf16 %v2600, %v2600
    %2603 = vst.msk [vmem:[#allocation2 + $0x70] sm:$0xf] %vm486, %v2571
    %2604 = vst.msk [vmem:[#allocation2 + $0x74] sm:$0xf] %vm486, %v2572
    %2605 = vst.msk [vmem:[#allocation2 + $0x78] sm:$0xf] %vm486, %v2601
    %2606 = vst.msk [vmem:[#allocation2 + $0x7c] sm:$0xf] %vm486, %v2602
    %s2607 = scalar_lea.vmem [#allocation7], 96
    %v2608 = vld [vmem:[%s2607] sm:$0xf]
    %v2609 = vld [vmem:[%s2607 + $0x4] sm:$0xf]
    %v2610 = vld [vmem:[%s2607 + $0x8] sm:$0xf]
    %v2611 = vld [vmem:[%s2607 + $0xc] sm:$0xf]
    %v2612 = vld [vmem:[%s2607 + $0x10] sm:$0xf]
    %v2613 = vld [vmem:[%s2607 + $0x14] sm:$0xf]
    %v2614 = vld [vmem:[%s2607 + $0x18] sm:$0xf]
    %v2615 = vld [vmem:[%s2607 + $0x1c] sm:$0xf]
    %s2616 = scalar_lea.vmem [#allocation9], 96
    %v2617 = vld [vmem:[%s2616] sm:$0xf]
    %v2618 = vld [vmem:[%s2616 + $0x4] sm:$0xf]
    %v2619 = vld [vmem:[%s2616 + $0x8] sm:$0xf]
    %v2620 = vld [vmem:[%s2616 + $0xc] sm:$0xf]
    %v2621 = vld [vmem:[%s2616 + $0x10] sm:$0xf]
    %v2622 = vld [vmem:[%s2616 + $0x14] sm:$0xf]
    %v2623 = vld [vmem:[%s2616 + $0x18] sm:$0xf]
    %v2624 = vld [vmem:[%s2616 + $0x1c] sm:$0xf]
    %s2625 = scalar_lea.vmem [#allocation10], 3
    %v2626 = vld [vmem:[%s2625] sm:$0x1]
    %v2627 = vld [vmem:[#allocation2] sm:$0xf]
    %v2628 = vld [vmem:[#allocation2 + $0x4] sm:$0xf]
    %v2629 = vld [vmem:[#allocation2 + $0x8] sm:$0xf]
    %v2630 = vld [vmem:[#allocation2 + $0xc] sm:$0xf]
    %v2631 = vld [vmem:[#allocation2 + $0x10] sm:$0xf]
    %v2632 = vld [vmem:[#allocation2 + $0x14] sm:$0xf]
    %v2633 = vld [vmem:[#allocation2 + $0x18] sm:$0xf]
    %v2634 = vld [vmem:[#allocation2 + $0x1c] sm:$0xf]
    %v2635 = vld [vmem:[#allocation2 + $0x20] sm:$0xf]
    %v2636 = vld [vmem:[#allocation2 + $0x24] sm:$0xf]
    %v2637 = vld [vmem:[#allocation2 + $0x28] sm:$0xf]
    %v2638 = vld [vmem:[#allocation2 + $0x2c] sm:$0xf]
    %v2639 = vld [vmem:[#allocation2 + $0x30] sm:$0xf]
    %v2640 = vld [vmem:[#allocation2 + $0x34] sm:$0xf]
    %v2641 = vld [vmem:[#allocation2 + $0x38] sm:$0xf]
    %v2642 = vld [vmem:[#allocation2 + $0x3c] sm:$0xf]
    %v2643 = vld [vmem:[#allocation2 + $0x40] sm:$0xf]
    %v2644 = vld [vmem:[#allocation2 + $0x44] sm:$0xf]
    %v2645 = vld [vmem:[#allocation2 + $0x48] sm:$0xf]
    %v2646 = vld [vmem:[#allocation2 + $0x4c] sm:$0xf]
    %v2647 = vld [vmem:[#allocation2 + $0x50] sm:$0xf]
    %v2648 = vld [vmem:[#allocation2 + $0x54] sm:$0xf]
    %v2649 = vld [vmem:[#allocation2 + $0x58] sm:$0xf]
    %v2650 = vld [vmem:[#allocation2 + $0x5c] sm:$0xf]
    %v2651 = vld [vmem:[#allocation2 + $0x60] sm:$0xf]
    %v2652 = vld [vmem:[#allocation2 + $0x64] sm:$0xf]
    %v2653 = vld [vmem:[#allocation2 + $0x68] sm:$0xf]
    %v2654 = vld [vmem:[#allocation2 + $0x6c] sm:$0xf]
    %v2655 = vld [vmem:[#allocation2 + $0x70] sm:$0xf]
    %v2656 = vld [vmem:[#allocation2 + $0x74] sm:$0xf]
    %v2657 = vld [vmem:[#allocation2 + $0x78] sm:$0xf]
    %v2658 = vld [vmem:[#allocation2 + $0x7c] sm:$0xf]
    %v2660 = vperm.slane %v2626, 0
    %v2694 = vunpack.c.l.b16 %v2627
    %v2695 = vunpack.c.l.b16 %v2628
    %v2696 = vunpack.c.l.b16 %v2629
    %v2697 = vunpack.c.l.b16 %v2630
    %v2698 = vunpack.c.l.b16 %v2631
    %v2699 = vunpack.c.l.b16 %v2632
    %v2700 = vunpack.c.l.b16 %v2633
    %v2701 = vunpack.c.l.b16 %v2634
    %v2702 = vunpack.c.l.b16 %v2635
    %v2703 = vunpack.c.l.b16 %v2636
    %v2704 = vunpack.c.l.b16 %v2637
    %v2705 = vunpack.c.l.b16 %v2638
    %v2706 = vunpack.c.l.b16 %v2639
    %v2707 = vunpack.c.l.b16 %v2640
    %v2708 = vunpack.c.l.b16 %v2641
    %v2709 = vunpack.c.l.b16 %v2642
    %v2710 = vunpack.c.l.b16 %v2643
    %v2711 = vunpack.c.l.b16 %v2644
    %v2712 = vunpack.c.l.b16 %v2645
    %v2713 = vunpack.c.l.b16 %v2646
    %v2714 = vunpack.c.l.b16 %v2647
    %v2715 = vunpack.c.l.b16 %v2648
    %v2716 = vunpack.c.l.b16 %v2649
    %v2717 = vunpack.c.l.b16 %v2650
    %v2718 = vunpack.c.l.b16 %v2651
    %v2719 = vunpack.c.l.b16 %v2652
    %v2720 = vunpack.c.l.b16 %v2653
    %v2721 = vunpack.c.l.b16 %v2654
    %v2722 = vunpack.c.l.b16 %v2655
    %v2723 = vunpack.c.l.b16 %v2656
    %v2724 = vunpack.c.l.b16 %v2657
    %v2725 = vunpack.c.l.b16 %v2658
    %v2726 = vpack.c.b16 %v2695, %v2694
    %v2727 = vpack.c.b16 %v2697, %v2696
    %v2728 = vpack.c.b16 %v2699, %v2698
    %v2729 = vpack.c.b16 %v2701, %v2700
    %v2730 = vpack.c.b16 %v2703, %v2702
    %v2731 = vpack.c.b16 %v2705, %v2704
    %v2732 = vpack.c.b16 %v2707, %v2706
    %v2733 = vpack.c.b16 %v2709, %v2708
    %v2734 = vpack.c.b16 %v2711, %v2710
    %v2735 = vpack.c.b16 %v2713, %v2712
    %v2736 = vpack.c.b16 %v2715, %v2714
    %v2737 = vpack.c.b16 %v2717, %v2716
    %v2738 = vpack.c.b16 %v2719, %v2718
    %v2739 = vpack.c.b16 %v2721, %v2720
    %v2740 = vpack.c.b16 %v2723, %v2722
    %v2741 = vpack.c.b16 %v2725, %v2724
    %v2750 = vunpack.c.l.b16 %v2608
    %v2751 = vunpack.c.l.b16 %v2609
    %v2752 = vunpack.c.l.b16 %v2610
    %v2753 = vunpack.c.l.b16 %v2611
    %v2754 = vunpack.c.l.b16 %v2612
    %v2755 = vunpack.c.l.b16 %v2613
    %v2756 = vunpack.c.l.b16 %v2614
    %v2757 = vunpack.c.l.b16 %v2615
    %v2758 = vpack.c.b16 %v2751, %v2750
    %v2759 = vpack.c.b16 %v2753, %v2752
    %v2760 = vpack.c.b16 %v2755, %v2754
    %v2761 = vpack.c.b16 %v2757, %v2756
    %v2767 = vsel %vm259, %v2726, 0
    %v2770 = vsel %vm259, %v2727, 0
    %v2773 = vsel %vm259, %v2728, 0
    %v2776 = vsel %vm259, %v2729, 0
    %v2779 = vsel %vm259, %v2730, 0
    %v2782 = vsel %vm259, %v2731, 0
    %v2785 = vsel %vm259, %v2732, 0
    %v2788 = vsel %vm259, %v2733, 0
    %v2791 = vsel %vm259, %v2734, 0
    %v2794 = vsel %vm259, %v2735, 0
    %v2797 = vsel %vm259, %v2736, 0
    %v2800 = vsel %vm259, %v2737, 0
    %v2803 = vsel %vm259, %v2738, 0
    %v2806 = vsel %vm259, %v2739, 0
    %v2809 = vsel %vm259, %v2740, 0
    %v2812 = vsel %vm259, %v2741, 0
    %2814 = vmatpush.bf16.msra.mxu0 0
    %2815 = vmatpush.bf16.msra.mxu0 0
    %2816 = vmatpush.bf16.msra.mxu0 0
    %2817 = vmatpush.bf16.msra.mxu0 0
    %2818 = vmatpush.bf16.msra.mxu0 %v2761
    %2819 = vmatpush.bf16.msra.mxu0 %v2760
    %2820 = vmatpush.bf16.msra.mxu0 %v2759
    %2821 = vmatpush.bf16.msra.mxu0 %v2758
    %2822 = vmatmul.bf16.gmra.mxu0 %v2767
    %v2823 = vpop.f32.mrf.mxu0
    %v2824 = vadd.f32 %v2660, %v2823
    %v2825 = vpop.f32.mrf.mxu0
    %v2826 = vadd.f32 %v2660, %v2825
    %2827 = vmatmul.bf16.gmra.mxu0 %v2770
    %v2828 = vpop.f32.mrf.mxu0
    %v2829 = vadd.f32 %v2660, %v2828
    %v2830 = vpop.f32.mrf.mxu0
    %v2831 = vadd.f32 %v2660, %v2830
    %2832 = vmatmul.bf16.gmra.mxu0 %v2773
    %v2833 = vpop.f32.mrf.mxu0
    %v2834 = vadd.f32 %v2660, %v2833
    %v2835 = vpop.f32.mrf.mxu0
    %v2836 = vadd.f32 %v2660, %v2835
    %2837 = vmatmul.bf16.gmra.mxu0 %v2776
    %v2838 = vpop.f32.mrf.mxu0
    %v2839 = vadd.f32 %v2660, %v2838
    %v2840 = vpop.f32.mrf.mxu0
    %v2841 = vadd.f32 %v2660, %v2840
    %2842 = vmatmul.bf16.gmra.mxu0 %v2779
    %v2843 = vpop.f32.mrf.mxu0
    %v2844 = vadd.f32 %v2660, %v2843
    %v2845 = vpop.f32.mrf.mxu0
    %v2846 = vadd.f32 %v2660, %v2845
    %2847 = vmatmul.bf16.gmra.mxu0 %v2782
    %v2848 = vpop.f32.mrf.mxu0
    %v2849 = vadd.f32 %v2660, %v2848
    %v2850 = vpop.f32.mrf.mxu0
    %v2851 = vadd.f32 %v2660, %v2850
    %2852 = vmatmul.bf16.gmra.mxu0 %v2785
    %v2853 = vpop.f32.mrf.mxu0
    %v2854 = vadd.f32 %v2660, %v2853
    %v2855 = vpop.f32.mrf.mxu0
    %v2856 = vadd.f32 %v2660, %v2855
    %2857 = vmatmul.bf16.gmra.mxu0 %v2788
    %v2858 = vpop.f32.mrf.mxu0
    %v2859 = vadd.f32 %v2660, %v2858
    %v2860 = vpop.f32.mrf.mxu0
    %v2861 = vadd.f32 %v2660, %v2860
    %2862 = vmatmul.bf16.gmra.mxu0 %v2791
    %v2863 = vpop.f32.mrf.mxu0
    %v2864 = vadd.f32 %v2660, %v2863
    %v2865 = vpop.f32.mrf.mxu0
    %v2866 = vadd.f32 %v2660, %v2865
    %2867 = vmatmul.bf16.gmra.mxu0 %v2794
    %v2868 = vpop.f32.mrf.mxu0
    %v2869 = vadd.f32 %v2660, %v2868
    %v2870 = vpop.f32.mrf.mxu0
    %v2871 = vadd.f32 %v2660, %v2870
    %2872 = vmatmul.bf16.gmra.mxu0 %v2797
    %v2873 = vpop.f32.mrf.mxu0
    %v2874 = vadd.f32 %v2660, %v2873
    %v2875 = vpop.f32.mrf.mxu0
    %v2876 = vadd.f32 %v2660, %v2875
    %2877 = vmatmul.bf16.gmra.mxu0 %v2800
    %v2878 = vpop.f32.mrf.mxu0
    %v2879 = vadd.f32 %v2660, %v2878
    %v2880 = vpop.f32.mrf.mxu0
    %v2881 = vadd.f32 %v2660, %v2880
    %2882 = vmatmul.bf16.gmra.mxu0 %v2803
    %v2883 = vpop.f32.mrf.mxu0
    %v2884 = vadd.f32 %v2660, %v2883
    %v2885 = vpop.f32.mrf.mxu0
    %v2886 = vadd.f32 %v2660, %v2885
    %2887 = vmatmul.bf16.gmra.mxu0 %v2806
    %v2888 = vpop.f32.mrf.mxu0
    %v2889 = vadd.f32 %v2660, %v2888
    %v2890 = vpop.f32.mrf.mxu0
    %v2891 = vadd.f32 %v2660, %v2890
    %2892 = vmatmul.bf16.gmra.mxu0 %v2809
    %v2893 = vpop.f32.mrf.mxu0
    %v2894 = vadd.f32 %v2660, %v2893
    %v2895 = vpop.f32.mrf.mxu0
    %v2896 = vadd.f32 %v2660, %v2895
    %2897 = vmatmul.bf16.gmra.mxu0 %v2812
    %v2898 = vpop.f32.mrf.mxu0
    %v2899 = vadd.f32 %v2660, %v2898
    %v2900 = vpop.f32.mrf.mxu0
    %v2901 = vadd.f32 %v2660, %v2900
    %2902 = vdwg.mxu0
    %2903 = vst.msk [vmem:[#allocation3] sm:$0xff] %vm259, %v2824
    %2904 = vst.msk [vmem:[#allocation3 + $0x8] sm:$0xff] %vm259, %v2826
    %2905 = vst.msk [vmem:[#allocation3 + $0x10] sm:$0xff] %vm259, %v2829
    %2906 = vst.msk [vmem:[#allocation3 + $0x18] sm:$0xff] %vm259, %v2831
    %2907 = vst.msk [vmem:[#allocation3 + $0x20] sm:$0xff] %vm259, %v2834
    %2908 = vst.msk [vmem:[#allocation3 + $0x28] sm:$0xff] %vm259, %v2836
    %2909 = vst.msk [vmem:[#allocation3 + $0x30] sm:$0xff] %vm259, %v2839
    %2910 = vst.msk [vmem:[#allocation3 + $0x38] sm:$0xff] %vm259, %v2841
    %2911 = vst.msk [vmem:[#allocation3 + $0x40] sm:$0xff] %vm259, %v2844
    %2912 = vst.msk [vmem:[#allocation3 + $0x48] sm:$0xff] %vm259, %v2846
    %2913 = vst.msk [vmem:[#allocation3 + $0x50] sm:$0xff] %vm259, %v2849
    %2914 = vst.msk [vmem:[#allocation3 + $0x58] sm:$0xff] %vm259, %v2851
    %2915 = vst.msk [vmem:[#allocation3 + $0x60] sm:$0xff] %vm259, %v2854
    %2916 = vst.msk [vmem:[#allocation3 + $0x68] sm:$0xff] %vm259, %v2856
    %2917 = vst.msk [vmem:[#allocation3 + $0x70] sm:$0xff] %vm259, %v2859
    %2918 = vst.msk [vmem:[#allocation3 + $0x78] sm:$0xff] %vm259, %v2861
    %2919 = vst.msk [vmem:[#allocation3 + $0x80] sm:$0xff] %vm259, %v2864
    %2920 = vst.msk [vmem:[#allocation3 + $0x88] sm:$0xff] %vm259, %v2866
    %2921 = vst.msk [vmem:[#allocation3 + $0x90] sm:$0xff] %vm259, %v2869
    %2922 = vst.msk [vmem:[#allocation3 + $0x98] sm:$0xff] %vm259, %v2871
    %2923 = vst.msk [vmem:[#allocation3 + $0xa0] sm:$0xff] %vm259, %v2874
    %2924 = vst.msk [vmem:[#allocation3 + $0xa8] sm:$0xff] %vm259, %v2876
    %2925 = vst.msk [vmem:[#allocation3 + $0xb0] sm:$0xff] %vm259, %v2879
    %2926 = vst.msk [vmem:[#allocation3 + $0xb8] sm:$0xff] %vm259, %v2881
    %2927 = vst.msk [vmem:[#allocation3 + $0xc0] sm:$0xff] %vm259, %v2884
    %2928 = vst.msk [vmem:[#allocation3 + $0xc8] sm:$0xff] %vm259, %v2886
    %2929 = vst.msk [vmem:[#allocation3 + $0xd0] sm:$0xff] %vm259, %v2889
    %2930 = vst.msk [vmem:[#allocation3 + $0xd8] sm:$0xff] %vm259, %v2891
    %2931 = vst.msk [vmem:[#allocation3 + $0xe0] sm:$0xff] %vm259, %v2894
    %2932 = vst.msk [vmem:[#allocation3 + $0xe8] sm:$0xff] %vm259, %v2896
    %2933 = vst.msk [vmem:[#allocation3 + $0xf0] sm:$0xff] %vm259, %v2899
    %2934 = vst.msk [vmem:[#allocation3 + $0xf8] sm:$0xff] %vm259, %v2901
    %v2935 = vld [vmem:[#allocation3] sm:$0xff]
    %v2936 = vld [vmem:[#allocation3 + $0x8] sm:$0xff]
    %v2945 = vunpack.c.l.b16 %v2617
    %v2946 = vunpack.c.l.b16 %v2618
    %v2947 = vunpack.c.l.b16 %v2619
    %v2948 = vunpack.c.l.b16 %v2620
    %v2949 = vunpack.c.l.b16 %v2621
    %v2950 = vunpack.c.l.b16 %v2622
    %v2951 = vunpack.c.l.b16 %v2623
    %v2952 = vunpack.c.l.b16 %v2624
    %v2953 = vpack.c.b16 %v2946, %v2945
    %v2954 = vpack.c.b16 %v2948, %v2947
    %v2955 = vpack.c.b16 %v2950, %v2949
    %v2956 = vpack.c.b16 %v2952, %v2951
    %2961 = vmatpush.bf16.msra.mxu0 0
    %2962 = vmatpush.bf16.msra.mxu0 0
    %2963 = vmatpush.bf16.msra.mxu0 0
    %2964 = vmatpush.bf16.msra.mxu0 0
    %2965 = vmatpush.bf16.msra.mxu0 %v2956
    %2966 = vmatpush.bf16.msra.mxu0 %v2955
    %2967 = vmatpush.bf16.msra.mxu0 %v2954
    %2968 = vmatpush.bf16.msra.mxu0 %v2953
    %2969 = vmatmul.bf16.gmra.mxu0 %v456
    %v2970 = vpop.f32.mrf.mxu0
    %v2971 = vadd.f32 0.0, %v2970
    %v2972 = vpop.f32.mrf.mxu0
    %v2973 = vadd.f32 0.0, %v2972
    %2974 = vdwg.mxu0
    %v2975 = vadd.f32 %v2935, %v2971
    %v2976 = vadd.f32 %v2936, %v2973
    %v2977 = vtanh.pop %v2975
    %v2978 = vtanh.pop %v2976
    %v2979 = vpack.c.bf16 %v2977, %v2977
    %v2980 = vpack.c.bf16 %v2978, %v2978
    %v2981 = vld [vmem:[#allocation3 + $0x10] sm:$0xff]
    %v2982 = vld [vmem:[#allocation3 + $0x18] sm:$0xff]
    %v2983 = vadd.f32 %v2981, %v2971
    %v2984 = vadd.f32 %v2982, %v2973
    %v2985 = vtanh.pop %v2983
    %v2986 = vtanh.pop %v2984
    %v2987 = vpack.c.bf16 %v2985, %v2985
    %v2988 = vpack.c.bf16 %v2986, %v2986
    %2989 = vst.msk [vmem:[#allocation2] sm:$0xf] %vm486, %v2979
    %2990 = vst.msk [vmem:[#allocation2 + $0x4] sm:$0xf] %vm486, %v2980
    %2991 = vst.msk [vmem:[#allocation2 + $0x8] sm:$0xf] %vm486, %v2987
    %2992 = vst.msk [vmem:[#allocation2 + $0xc] sm:$0xf] %vm486, %v2988
    %v2993 = vld [vmem:[#allocation3 + $0x20] sm:$0xff]
    %v2994 = vld [vmem:[#allocation3 + $0x28] sm:$0xff]
    %v2997 = vunpack.c.l.b16 %v2979
    %v2998 = vunpack.c.l.b16 %v2980
    %v2999 = vpack.c.b16 %v2998, %v2997
    %v3001 = vsel %vm259, %v2999, 0
    %3003 = vmatpush.bf16.msra.mxu0 0
    %3004 = vmatpush.bf16.msra.mxu0 0
    %3005 = vmatpush.bf16.msra.mxu0 0
    %3006 = vmatpush.bf16.msra.mxu0 0
    %3007 = vmatpush.bf16.msra.mxu0 %v2956
    %3008 = vmatpush.bf16.msra.mxu0 %v2955
    %3009 = vmatpush.bf16.msra.mxu0 %v2954
    %3010 = vmatpush.bf16.msra.mxu0 %v2953
    %3011 = vmatmul.bf16.gmra.mxu0 %v3001
    %v3012 = vpop.f32.mrf.mxu0
    %v3013 = vadd.f32 0.0, %v3012
    %v3014 = vpop.f32.mrf.mxu0
    %v3015 = vadd.f32 0.0, %v3014
    %3016 = vdwg.mxu0
    %v3017 = vadd.f32 %v2993, %v3013
    %v3018 = vadd.f32 %v2994, %v3015
    %v3019 = vtanh.pop %v3017
    %v3020 = vtanh.pop %v3018
    %v3021 = vpack.c.bf16 %v3019, %v3019
    %v3022 = vpack.c.bf16 %v3020, %v3020
    %v3023 = vld [vmem:[#allocation3 + $0x30] sm:$0xff]
    %v3024 = vld [vmem:[#allocation3 + $0x38] sm:$0xff]
    %v3027 = vunpack.c.l.b16 %v2987
    %v3028 = vunpack.c.l.b16 %v2988
    %v3029 = vpack.c.b16 %v3028, %v3027
    %v3031 = vsel %vm259, %v3029, 0
    %3033 = vmatpush.bf16.msra.mxu0 0
    %3034 = vmatpush.bf16.msra.mxu0 0
    %3035 = vmatpush.bf16.msra.mxu0 0
    %3036 = vmatpush.bf16.msra.mxu0 0
    %3037 = vmatpush.bf16.msra.mxu0 %v2956
    %3038 = vmatpush.bf16.msra.mxu0 %v2955
    %3039 = vmatpush.bf16.msra.mxu0 %v2954
    %3040 = vmatpush.bf16.msra.mxu0 %v2953
    %3041 = vmatmul.bf16.gmra.mxu0 %v3031
    %v3042 = vpop.f32.mrf.mxu0
    %v3043 = vadd.f32 0.0, %v3042
    %v3044 = vpop.f32.mrf.mxu0
    %v3045 = vadd.f32 0.0, %v3044
    %3046 = vdwg.mxu0
    %v3047 = vadd.f32 %v3023, %v3043
    %v3048 = vadd.f32 %v3024, %v3045
    %v3049 = vtanh.pop %v3047
    %v3050 = vtanh.pop %v3048
    %v3051 = vpack.c.bf16 %v3049, %v3049
    %v3052 = vpack.c.bf16 %v3050, %v3050
    %3053 = vst.msk [vmem:[#allocation2 + $0x10] sm:$0xf] %vm486, %v3021
    %3054 = vst.msk [vmem:[#allocation2 + $0x14] sm:$0xf] %vm486, %v3022
    %3055 = vst.msk [vmem:[#allocation2 + $0x18] sm:$0xf] %vm486, %v3051
    %3056 = vst.msk [vmem:[#allocation2 + $0x1c] sm:$0xf] %vm486, %v3052
    %v3057 = vld [vmem:[#allocation3 + $0x40] sm:$0xff]
    %v3058 = vld [vmem:[#allocation3 + $0x48] sm:$0xff]
    %v3061 = vunpack.c.l.b16 %v3021
    %v3062 = vunpack.c.l.b16 %v3022
    %v3063 = vpack.c.b16 %v3062, %v3061
    %v3065 = vsel %vm259, %v3063, 0
    %3067 = vmatpush.bf16.msra.mxu0 0
    %3068 = vmatpush.bf16.msra.mxu0 0
    %3069 = vmatpush.bf16.msra.mxu0 0
    %3070 = vmatpush.bf16.msra.mxu0 0
    %3071 = vmatpush.bf16.msra.mxu0 %v2956
    %3072 = vmatpush.bf16.msra.mxu0 %v2955
    %3073 = vmatpush.bf16.msra.mxu0 %v2954
    %3074 = vmatpush.bf16.msra.mxu0 %v2953
    %3075 = vmatmul.bf16.gmra.mxu0 %v3065
    %v3076 = vpop.f32.mrf.mxu0
    %v3077 = vadd.f32 0.0, %v3076
    %v3078 = vpop.f32.mrf.mxu0
    %v3079 = vadd.f32 0.0, %v3078
    %3080 = vdwg.mxu0
    %v3081 = vadd.f32 %v3057, %v3077
    %v3082 = vadd.f32 %v3058, %v3079
    %v3083 = vtanh.pop %v3081
    %v3084 = vtanh.pop %v3082
    %v3085 = vpack.c.bf16 %v3083, %v3083
    %v3086 = vpack.c.bf16 %v3084, %v3084
    %v3087 = vld [vmem:[#allocation3 + $0x50] sm:$0xff]
    %v3088 = vld [vmem:[#allocation3 + $0x58] sm:$0xff]
    %v3091 = vunpack.c.l.b16 %v3051
    %v3092 = vunpack.c.l.b16 %v3052
    %v3093 = vpack.c.b16 %v3092, %v3091
    %v3095 = vsel %vm259, %v3093, 0
    %3097 = vmatpush.bf16.msra.mxu0 0
    %3098 = vmatpush.bf16.msra.mxu0 0
    %3099 = vmatpush.bf16.msra.mxu0 0
    %3100 = vmatpush.bf16.msra.mxu0 0
    %3101 = vmatpush.bf16.msra.mxu0 %v2956
    %3102 = vmatpush.bf16.msra.mxu0 %v2955
    %3103 = vmatpush.bf16.msra.mxu0 %v2954
    %3104 = vmatpush.bf16.msra.mxu0 %v2953
    %3105 = vmatmul.bf16.gmra.mxu0 %v3095
    %v3106 = vpop.f32.mrf.mxu0
    %v3107 = vadd.f32 0.0, %v3106
    %v3108 = vpop.f32.mrf.mxu0
    %v3109 = vadd.f32 0.0, %v3108
    %3110 = vdwg.mxu0
    %v3111 = vadd.f32 %v3087, %v3107
    %v3112 = vadd.f32 %v3088, %v3109
    %v3113 = vtanh.pop %v3111
    %v3114 = vtanh.pop %v3112
    %v3115 = vpack.c.bf16 %v3113, %v3113
    %v3116 = vpack.c.bf16 %v3114, %v3114
    %3117 = vst.msk [vmem:[#allocation2 + $0x20] sm:$0xf] %vm486, %v3085
    %3118 = vst.msk [vmem:[#allocation2 + $0x24] sm:$0xf] %vm486, %v3086
    %3119 = vst.msk [vmem:[#allocation2 + $0x28] sm:$0xf] %vm486, %v3115
    %3120 = vst.msk [vmem:[#allocation2 + $0x2c] sm:$0xf] %vm486, %v3116
    %v3121 = vld [vmem:[#allocation3 + $0x60] sm:$0xff]
    %v3122 = vld [vmem:[#allocation3 + $0x68] sm:$0xff]
    %v3125 = vunpack.c.l.b16 %v3085
    %v3126 = vunpack.c.l.b16 %v3086
    %v3127 = vpack.c.b16 %v3126, %v3125
    %v3129 = vsel %vm259, %v3127, 0
    %3131 = vmatpush.bf16.msra.mxu0 0
    %3132 = vmatpush.bf16.msra.mxu0 0
    %3133 = vmatpush.bf16.msra.mxu0 0
    %3134 = vmatpush.bf16.msra.mxu0 0
    %3135 = vmatpush.bf16.msra.mxu0 %v2956
    %3136 = vmatpush.bf16.msra.mxu0 %v2955
    %3137 = vmatpush.bf16.msra.mxu0 %v2954
    %3138 = vmatpush.bf16.msra.mxu0 %v2953
    %3139 = vmatmul.bf16.gmra.mxu0 %v3129
    %v3140 = vpop.f32.mrf.mxu0
    %v3141 = vadd.f32 0.0, %v3140
    %v3142 = vpop.f32.mrf.mxu0
    %v3143 = vadd.f32 0.0, %v3142
    %3144 = vdwg.mxu0
    %v3145 = vadd.f32 %v3121, %v3141
    %v3146 = vadd.f32 %v3122, %v3143
    %v3147 = vtanh.pop %v3145
    %v3148 = vtanh.pop %v3146
    %v3149 = vpack.c.bf16 %v3147, %v3147
    %v3150 = vpack.c.bf16 %v3148, %v3148
    %v3151 = vld [vmem:[#allocation3 + $0x70] sm:$0xff]
    %v3152 = vld [vmem:[#allocation3 + $0x78] sm:$0xff]
    %v3155 = vunpack.c.l.b16 %v3115
    %v3156 = vunpack.c.l.b16 %v3116
    %v3157 = vpack.c.b16 %v3156, %v3155
    %v3159 = vsel %vm259, %v3157, 0
    %3161 = vmatpush.bf16.msra.mxu0 0
    %3162 = vmatpush.bf16.msra.mxu0 0
    %3163 = vmatpush.bf16.msra.mxu0 0
    %3164 = vmatpush.bf16.msra.mxu0 0
    %3165 = vmatpush.bf16.msra.mxu0 %v2956
    %3166 = vmatpush.bf16.msra.mxu0 %v2955
    %3167 = vmatpush.bf16.msra.mxu0 %v2954
    %3168 = vmatpush.bf16.msra.mxu0 %v2953
    %3169 = vmatmul.bf16.gmra.mxu0 %v3159
    %v3170 = vpop.f32.mrf.mxu0
    %v3171 = vadd.f32 0.0, %v3170
    %v3172 = vpop.f32.mrf.mxu0
    %v3173 = vadd.f32 0.0, %v3172
    %3174 = vdwg.mxu0
    %v3175 = vadd.f32 %v3151, %v3171
    %v3176 = vadd.f32 %v3152, %v3173
    %v3177 = vtanh.pop %v3175
    %v3178 = vtanh.pop %v3176
    %v3179 = vpack.c.bf16 %v3177, %v3177
    %v3180 = vpack.c.bf16 %v3178, %v3178
    %3181 = vst.msk [vmem:[#allocation2 + $0x30] sm:$0xf] %vm486, %v3149
    %3182 = vst.msk [vmem:[#allocation2 + $0x34] sm:$0xf] %vm486, %v3150
    %3183 = vst.msk [vmem:[#allocation2 + $0x38] sm:$0xf] %vm486, %v3179
    %3184 = vst.msk [vmem:[#allocation2 + $0x3c] sm:$0xf] %vm486, %v3180
    %v3185 = vld [vmem:[#allocation3 + $0x80] sm:$0xff]
    %v3186 = vld [vmem:[#allocation3 + $0x88] sm:$0xff]
    %v3189 = vunpack.c.l.b16 %v3149
    %v3190 = vunpack.c.l.b16 %v3150
    %v3191 = vpack.c.b16 %v3190, %v3189
    %v3193 = vsel %vm259, %v3191, 0
    %3195 = vmatpush.bf16.msra.mxu0 0
    %3196 = vmatpush.bf16.msra.mxu0 0
    %3197 = vmatpush.bf16.msra.mxu0 0
    %3198 = vmatpush.bf16.msra.mxu0 0
    %3199 = vmatpush.bf16.msra.mxu0 %v2956
    %3200 = vmatpush.bf16.msra.mxu0 %v2955
    %3201 = vmatpush.bf16.msra.mxu0 %v2954
    %3202 = vmatpush.bf16.msra.mxu0 %v2953
    %3203 = vmatmul.bf16.gmra.mxu0 %v3193
    %v3204 = vpop.f32.mrf.mxu0
    %v3205 = vadd.f32 0.0, %v3204
    %v3206 = vpop.f32.mrf.mxu0
    %v3207 = vadd.f32 0.0, %v3206
    %3208 = vdwg.mxu0
    %v3209 = vadd.f32 %v3185, %v3205
    %v3210 = vadd.f32 %v3186, %v3207
    %v3211 = vtanh.pop %v3209
    %v3212 = vtanh.pop %v3210
    %v3213 = vpack.c.bf16 %v3211, %v3211
    %v3214 = vpack.c.bf16 %v3212, %v3212
    %v3215 = vld [vmem:[#allocation3 + $0x90] sm:$0xff]
    %v3216 = vld [vmem:[#allocation3 + $0x98] sm:$0xff]
    %v3219 = vunpack.c.l.b16 %v3179
    %v3220 = vunpack.c.l.b16 %v3180
    %v3221 = vpack.c.b16 %v3220, %v3219
    %v3223 = vsel %vm259, %v3221, 0
    %3225 = vmatpush.bf16.msra.mxu0 0
    %3226 = vmatpush.bf16.msra.mxu0 0
    %3227 = vmatpush.bf16.msra.mxu0 0
    %3228 = vmatpush.bf16.msra.mxu0 0
    %3229 = vmatpush.bf16.msra.mxu0 %v2956
    %3230 = vmatpush.bf16.msra.mxu0 %v2955
    %3231 = vmatpush.bf16.msra.mxu0 %v2954
    %3232 = vmatpush.bf16.msra.mxu0 %v2953
    %3233 = vmatmul.bf16.gmra.mxu0 %v3223
    %v3234 = vpop.f32.mrf.mxu0
    %v3235 = vadd.f32 0.0, %v3234
    %v3236 = vpop.f32.mrf.mxu0
    %v3237 = vadd.f32 0.0, %v3236
    %3238 = vdwg.mxu0
    %v3239 = vadd.f32 %v3215, %v3235
    %v3240 = vadd.f32 %v3216, %v3237
    %v3241 = vtanh.pop %v3239
    %v3242 = vtanh.pop %v3240
    %v3243 = vpack.c.bf16 %v3241, %v3241
    %v3244 = vpack.c.bf16 %v3242, %v3242
    %3245 = vst.msk [vmem:[#allocation2 + $0x40] sm:$0xf] %vm486, %v3213
    %3246 = vst.msk [vmem:[#allocation2 + $0x44] sm:$0xf] %vm486, %v3214
    %3247 = vst.msk [vmem:[#allocation2 + $0x48] sm:$0xf] %vm486, %v3243
    %3248 = vst.msk [vmem:[#allocation2 + $0x4c] sm:$0xf] %vm486, %v3244
    %v3249 = vld [vmem:[#allocation3 + $0xa0] sm:$0xff]
    %v3250 = vld [vmem:[#allocation3 + $0xa8] sm:$0xff]
    %v3253 = vunpack.c.l.b16 %v3213
    %v3254 = vunpack.c.l.b16 %v3214
    %v3255 = vpack.c.b16 %v3254, %v3253
    %v3257 = vsel %vm259, %v3255, 0
    %3259 = vmatpush.bf16.msra.mxu0 0
    %3260 = vmatpush.bf16.msra.mxu0 0
    %3261 = vmatpush.bf16.msra.mxu0 0
    %3262 = vmatpush.bf16.msra.mxu0 0
    %3263 = vmatpush.bf16.msra.mxu0 %v2956
    %3264 = vmatpush.bf16.msra.mxu0 %v2955
    %3265 = vmatpush.bf16.msra.mxu0 %v2954
    %3266 = vmatpush.bf16.msra.mxu0 %v2953
    %3267 = vmatmul.bf16.gmra.mxu0 %v3257
    %v3268 = vpop.f32.mrf.mxu0
    %v3269 = vadd.f32 0.0, %v3268
    %v3270 = vpop.f32.mrf.mxu0
    %v3271 = vadd.f32 0.0, %v3270
    %3272 = vdwg.mxu0
    %v3273 = vadd.f32 %v3249, %v3269
    %v3274 = vadd.f32 %v3250, %v3271
    %v3275 = vtanh.pop %v3273
    %v3276 = vtanh.pop %v3274
    %v3277 = vpack.c.bf16 %v3275, %v3275
    %v3278 = vpack.c.bf16 %v3276, %v3276
    %v3279 = vld [vmem:[#allocation3 + $0xb0] sm:$0xff]
    %v3280 = vld [vmem:[#allocation3 + $0xb8] sm:$0xff]
    %v3283 = vunpack.c.l.b16 %v3243
    %v3284 = vunpack.c.l.b16 %v3244
    %v3285 = vpack.c.b16 %v3284, %v3283
    %v3287 = vsel %vm259, %v3285, 0
    %3289 = vmatpush.bf16.msra.mxu0 0
    %3290 = vmatpush.bf16.msra.mxu0 0
    %3291 = vmatpush.bf16.msra.mxu0 0
    %3292 = vmatpush.bf16.msra.mxu0 0
    %3293 = vmatpush.bf16.msra.mxu0 %v2956
    %3294 = vmatpush.bf16.msra.mxu0 %v2955
    %3295 = vmatpush.bf16.msra.mxu0 %v2954
    %3296 = vmatpush.bf16.msra.mxu0 %v2953
    %3297 = vmatmul.bf16.gmra.mxu0 %v3287
    %v3298 = vpop.f32.mrf.mxu0
    %v3299 = vadd.f32 0.0, %v3298
    %v3300 = vpop.f32.mrf.mxu0
    %v3301 = vadd.f32 0.0, %v3300
    %3302 = vdwg.mxu0
    %v3303 = vadd.f32 %v3279, %v3299
    %v3304 = vadd.f32 %v3280, %v3301
    %v3305 = vtanh.pop %v3303
    %v3306 = vtanh.pop %v3304
    %v3307 = vpack.c.bf16 %v3305, %v3305
    %v3308 = vpack.c.bf16 %v3306, %v3306
    %3309 = vst.msk [vmem:[#allocation2 + $0x50] sm:$0xf] %vm486, %v3277
    %3310 = vst.msk [vmem:[#allocation2 + $0x54] sm:$0xf] %vm486, %v3278
    %3311 = vst.msk [vmem:[#allocation2 + $0x58] sm:$0xf] %vm486, %v3307
    %3312 = vst.msk [vmem:[#allocation2 + $0x5c] sm:$0xf] %vm486, %v3308
    %v3313 = vld [vmem:[#allocation3 + $0xc0] sm:$0xff]
    %v3314 = vld [vmem:[#allocation3 + $0xc8] sm:$0xff]
    %v3317 = vunpack.c.l.b16 %v3277
    %v3318 = vunpack.c.l.b16 %v3278
    %v3319 = vpack.c.b16 %v3318, %v3317
    %v3321 = vsel %vm259, %v3319, 0
    %3323 = vmatpush.bf16.msra.mxu0 0
    %3324 = vmatpush.bf16.msra.mxu0 0
    %3325 = vmatpush.bf16.msra.mxu0 0
    %3326 = vmatpush.bf16.msra.mxu0 0
    %3327 = vmatpush.bf16.msra.mxu0 %v2956
    %3328 = vmatpush.bf16.msra.mxu0 %v2955
    %3329 = vmatpush.bf16.msra.mxu0 %v2954
    %3330 = vmatpush.bf16.msra.mxu0 %v2953
    %3331 = vmatmul.bf16.gmra.mxu0 %v3321
    %v3332 = vpop.f32.mrf.mxu0
    %v3333 = vadd.f32 0.0, %v3332
    %v3334 = vpop.f32.mrf.mxu0
    %v3335 = vadd.f32 0.0, %v3334
    %3336 = vdwg.mxu0
    %v3337 = vadd.f32 %v3313, %v3333
    %v3338 = vadd.f32 %v3314, %v3335
    %v3339 = vtanh.pop %v3337
    %v3340 = vtanh.pop %v3338
    %v3341 = vpack.c.bf16 %v3339, %v3339
    %v3342 = vpack.c.bf16 %v3340, %v3340
    %v3343 = vld [vmem:[#allocation3 + $0xd0] sm:$0xff]
    %v3344 = vld [vmem:[#allocation3 + $0xd8] sm:$0xff]
    %v3347 = vunpack.c.l.b16 %v3307
    %v3348 = vunpack.c.l.b16 %v3308
    %v3349 = vpack.c.b16 %v3348, %v3347
    %v3351 = vsel %vm259, %v3349, 0
    %3353 = vmatpush.bf16.msra.mxu0 0
    %3354 = vmatpush.bf16.msra.mxu0 0
    %3355 = vmatpush.bf16.msra.mxu0 0
    %3356 = vmatpush.bf16.msra.mxu0 0
    %3357 = vmatpush.bf16.msra.mxu0 %v2956
    %3358 = vmatpush.bf16.msra.mxu0 %v2955
    %3359 = vmatpush.bf16.msra.mxu0 %v2954
    %3360 = vmatpush.bf16.msra.mxu0 %v2953
    %3361 = vmatmul.bf16.gmra.mxu0 %v3351
    %v3362 = vpop.f32.mrf.mxu0
    %v3363 = vadd.f32 0.0, %v3362
    %v3364 = vpop.f32.mrf.mxu0
    %v3365 = vadd.f32 0.0, %v3364
    %3366 = vdwg.mxu0
    %v3367 = vadd.f32 %v3343, %v3363
    %v3368 = vadd.f32 %v3344, %v3365
    %v3369 = vtanh.pop %v3367
    %v3370 = vtanh.pop %v3368
    %v3371 = vpack.c.bf16 %v3369, %v3369
    %v3372 = vpack.c.bf16 %v3370, %v3370
    %3373 = vst.msk [vmem:[#allocation2 + $0x60] sm:$0xf] %vm486, %v3341
    %3374 = vst.msk [vmem:[#allocation2 + $0x64] sm:$0xf] %vm486, %v3342
    %3375 = vst.msk [vmem:[#allocation2 + $0x68] sm:$0xf] %vm486, %v3371
    %3376 = vst.msk [vmem:[#allocation2 + $0x6c] sm:$0xf] %vm486, %v3372
    %v3377 = vld [vmem:[#allocation3 + $0xe0] sm:$0xff]
    %v3378 = vld [vmem:[#allocation3 + $0xe8] sm:$0xff]
    %v3381 = vunpack.c.l.b16 %v3341
    %v3382 = vunpack.c.l.b16 %v3342
    %v3383 = vpack.c.b16 %v3382, %v3381
    %v3385 = vsel %vm259, %v3383, 0
    %3387 = vmatpush.bf16.msra.mxu0 0
    %3388 = vmatpush.bf16.msra.mxu0 0
    %3389 = vmatpush.bf16.msra.mxu0 0
    %3390 = vmatpush.bf16.msra.mxu0 0
    %3391 = vmatpush.bf16.msra.mxu0 %v2956
    %3392 = vmatpush.bf16.msra.mxu0 %v2955
    %3393 = vmatpush.bf16.msra.mxu0 %v2954
    %3394 = vmatpush.bf16.msra.mxu0 %v2953
    %3395 = vmatmul.bf16.gmra.mxu0 %v3385
    %v3396 = vpop.f32.mrf.mxu0
    %v3397 = vadd.f32 0.0, %v3396
    %v3398 = vpop.f32.mrf.mxu0
    %v3399 = vadd.f32 0.0, %v3398
    %3400 = vdwg.mxu0
    %v3401 = vadd.f32 %v3377, %v3397
    %v3402 = vadd.f32 %v3378, %v3399
    %v3403 = vtanh.pop %v3401
    %v3404 = vtanh.pop %v3402
    %v3405 = vpack.c.bf16 %v3403, %v3403
    %v3406 = vpack.c.bf16 %v3404, %v3404
    %v3407 = vld [vmem:[#allocation3 + $0xf0] sm:$0xff]
    %v3408 = vld [vmem:[#allocation3 + $0xf8] sm:$0xff]
    %v3411 = vunpack.c.l.b16 %v3371
    %v3412 = vunpack.c.l.b16 %v3372
    %v3413 = vpack.c.b16 %v3412, %v3411
    %v3415 = vsel %vm259, %v3413, 0
    %3417 = vmatpush.bf16.msra.mxu0 0
    %3418 = vmatpush.bf16.msra.mxu0 0
    %3419 = vmatpush.bf16.msra.mxu0 0
    %3420 = vmatpush.bf16.msra.mxu0 0
    %3421 = vmatpush.bf16.msra.mxu0 %v2956
    %3422 = vmatpush.bf16.msra.mxu0 %v2955
    %3423 = vmatpush.bf16.msra.mxu0 %v2954
    %3424 = vmatpush.bf16.msra.mxu0 %v2953
    %3425 = vmatmul.bf16.gmra.mxu0 %v3415
    %v3426 = vpop.f32.mrf.mxu0
    %v3427 = vadd.f32 0.0, %v3426
    %v3428 = vpop.f32.mrf.mxu0
    %v3429 = vadd.f32 0.0, %v3428
    %3430 = vdwg.mxu0
    %v3431 = vadd.f32 %v3407, %v3427
    %v3432 = vadd.f32 %v3408, %v3429
    %v3433 = vtanh.pop %v3431
    %v3434 = vtanh.pop %v3432
    %v3435 = vpack.c.bf16 %v3433, %v3433
    %v3436 = vpack.c.bf16 %v3434, %v3434
    %3437 = vst.msk [vmem:[#allocation2 + $0x70] sm:$0xf] %vm486, %v3405
    %3438 = vst.msk [vmem:[#allocation2 + $0x74] sm:$0xf] %vm486, %v3406
    %3439 = vst.msk [vmem:[#allocation2 + $0x78] sm:$0xf] %vm486, %v3435
    %3440 = vst.msk [vmem:[#allocation2 + $0x7c] sm:$0xf] %vm486, %v3436
    %s3441 = scalar_lea.vmem [#allocation7], 128
    %v3442 = vld [vmem:[%s3441] sm:$0xf]
    %v3443 = vld [vmem:[%s3441 + $0x4] sm:$0xf]
    %v3444 = vld [vmem:[%s3441 + $0x8] sm:$0xf]
    %v3445 = vld [vmem:[%s3441 + $0xc] sm:$0xf]
    %v3446 = vld [vmem:[%s3441 + $0x10] sm:$0xf]
    %v3447 = vld [vmem:[%s3441 + $0x14] sm:$0xf]
    %v3448 = vld [vmem:[%s3441 + $0x18] sm:$0xf]
    %v3449 = vld [vmem:[%s3441 + $0x1c] sm:$0xf]
    %s3450 = scalar_lea.vmem [#allocation9], 128
    %v3451 = vld [vmem:[%s3450] sm:$0xf]
    %v3452 = vld [vmem:[%s3450 + $0x4] sm:$0xf]
    %v3453 = vld [vmem:[%s3450 + $0x8] sm:$0xf]
    %v3454 = vld [vmem:[%s3450 + $0xc] sm:$0xf]
    %v3455 = vld [vmem:[%s3450 + $0x10] sm:$0xf]
    %v3456 = vld [vmem:[%s3450 + $0x14] sm:$0xf]
    %v3457 = vld [vmem:[%s3450 + $0x18] sm:$0xf]
    %v3458 = vld [vmem:[%s3450 + $0x1c] sm:$0xf]
    %s3459 = scalar_lea.vmem [#allocation10], 4
    %v3460 = vld [vmem:[%s3459] sm:$0x1]
    %v3461 = vld [vmem:[#allocation2] sm:$0xf]
    %v3462 = vld [vmem:[#allocation2 + $0x4] sm:$0xf]
    %v3463 = vld [vmem:[#allocation2 + $0x8] sm:$0xf]
    %v3464 = vld [vmem:[#allocation2 + $0xc] sm:$0xf]
    %v3465 = vld [vmem:[#allocation2 + $0x10] sm:$0xf]
    %v3466 = vld [vmem:[#allocation2 + $0x14] sm:$0xf]
    %v3467 = vld [vmem:[#allocation2 + $0x18] sm:$0xf]
    %v3468 = vld [vmem:[#allocation2 + $0x1c] sm:$0xf]
    %v3469 = vld [vmem:[#allocation2 + $0x20] sm:$0xf]
    %v3470 = vld [vmem:[#allocation2 + $0x24] sm:$0xf]
    %v3471 = vld [vmem:[#allocation2 + $0x28] sm:$0xf]
    %v3472 = vld [vmem:[#allocation2 + $0x2c] sm:$0xf]
    %v3473 = vld [vmem:[#allocation2 + $0x30] sm:$0xf]
    %v3474 = vld [vmem:[#allocation2 + $0x34] sm:$0xf]
    %v3475 = vld [vmem:[#allocation2 + $0x38] sm:$0xf]
    %v3476 = vld [vmem:[#allocation2 + $0x3c] sm:$0xf]
    %v3477 = vld [vmem:[#allocation2 + $0x40] sm:$0xf]
    %v3478 = vld [vmem:[#allocation2 + $0x44] sm:$0xf]
    %v3479 = vld [vmem:[#allocation2 + $0x48] sm:$0xf]
    %v3480 = vld [vmem:[#allocation2 + $0x4c] sm:$0xf]
    %v3481 = vld [vmem:[#allocation2 + $0x50] sm:$0xf]
    %v3482 = vld [vmem:[#allocation2 + $0x54] sm:$0xf]
    %v3483 = vld [vmem:[#allocation2 + $0x58] sm:$0xf]
    %v3484 = vld [vmem:[#allocation2 + $0x5c] sm:$0xf]
    %v3485 = vld [vmem:[#allocation2 + $0x60] sm:$0xf]
    %v3486 = vld [vmem:[#allocation2 + $0x64] sm:$0xf]
    %v3487 = vld [vmem:[#allocation2 + $0x68] sm:$0xf]
    %v3488 = vld [vmem:[#allocation2 + $0x6c] sm:$0xf]
    %v3489 = vld [vmem:[#allocation2 + $0x70] sm:$0xf]
    %v3490 = vld [vmem:[#allocation2 + $0x74] sm:$0xf]
    %v3491 = vld [vmem:[#allocation2 + $0x78] sm:$0xf]
    %v3492 = vld [vmem:[#allocation2 + $0x7c] sm:$0xf]
    %v3494 = vperm.slane %v3460, 0
    %v3528 = vunpack.c.l.b16 %v3461
    %v3529 = vunpack.c.l.b16 %v3462
    %v3530 = vunpack.c.l.b16 %v3463
    %v3531 = vunpack.c.l.b16 %v3464
    %v3532 = vunpack.c.l.b16 %v3465
    %v3533 = vunpack.c.l.b16 %v3466
    %v3534 = vunpack.c.l.b16 %v3467
    %v3535 = vunpack.c.l.b16 %v3468
    %v3536 = vunpack.c.l.b16 %v3469
    %v3537 = vunpack.c.l.b16 %v3470
    %v3538 = vunpack.c.l.b16 %v3471
    %v3539 = vunpack.c.l.b16 %v3472
    %v3540 = vunpack.c.l.b16 %v3473
    %v3541 = vunpack.c.l.b16 %v3474
    %v3542 = vunpack.c.l.b16 %v3475
    %v3543 = vunpack.c.l.b16 %v3476
    %v3544 = vunpack.c.l.b16 %v3477
    %v3545 = vunpack.c.l.b16 %v3478
    %v3546 = vunpack.c.l.b16 %v3479
    %v3547 = vunpack.c.l.b16 %v3480
    %v3548 = vunpack.c.l.b16 %v3481
    %v3549 = vunpack.c.l.b16 %v3482
    %v3550 = vunpack.c.l.b16 %v3483
    %v3551 = vunpack.c.l.b16 %v3484
    %v3552 = vunpack.c.l.b16 %v3485
    %v3553 = vunpack.c.l.b16 %v3486
    %v3554 = vunpack.c.l.b16 %v3487
    %v3555 = vunpack.c.l.b16 %v3488
    %v3556 = vunpack.c.l.b16 %v3489
    %v3557 = vunpack.c.l.b16 %v3490
    %v3558 = vunpack.c.l.b16 %v3491
    %v3559 = vunpack.c.l.b16 %v3492
    %v3560 = vpack.c.b16 %v3529, %v3528
    %v3561 = vpack.c.b16 %v3531, %v3530
    %v3562 = vpack.c.b16 %v3533, %v3532
    %v3563 = vpack.c.b16 %v3535, %v3534
    %v3564 = vpack.c.b16 %v3537, %v3536
    %v3565 = vpack.c.b16 %v3539, %v3538
    %v3566 = vpack.c.b16 %v3541, %v3540
    %v3567 = vpack.c.b16 %v3543, %v3542
    %v3568 = vpack.c.b16 %v3545, %v3544
    %v3569 = vpack.c.b16 %v3547, %v3546
    %v3570 = vpack.c.b16 %v3549, %v3548
    %v3571 = vpack.c.b16 %v3551, %v3550
    %v3572 = vpack.c.b16 %v3553, %v3552
    %v3573 = vpack.c.b16 %v3555, %v3554
    %v3574 = vpack.c.b16 %v3557, %v3556
    %v3575 = vpack.c.b16 %v3559, %v3558
    %v3584 = vunpack.c.l.b16 %v3442
    %v3585 = vunpack.c.l.b16 %v3443
    %v3586 = vunpack.c.l.b16 %v3444
    %v3587 = vunpack.c.l.b16 %v3445
    %v3588 = vunpack.c.l.b16 %v3446
    %v3589 = vunpack.c.l.b16 %v3447
    %v3590 = vunpack.c.l.b16 %v3448
    %v3591 = vunpack.c.l.b16 %v3449
    %v3592 = vpack.c.b16 %v3585, %v3584
    %v3593 = vpack.c.b16 %v3587, %v3586
    %v3594 = vpack.c.b16 %v3589, %v3588
    %v3595 = vpack.c.b16 %v3591, %v3590
    %v3601 = vsel %vm259, %v3560, 0
    %v3604 = vsel %vm259, %v3561, 0
    %v3607 = vsel %vm259, %v3562, 0
    %v3610 = vsel %vm259, %v3563, 0
    %v3613 = vsel %vm259, %v3564, 0
    %v3616 = vsel %vm259, %v3565, 0
    %v3619 = vsel %vm259, %v3566, 0
    %v3622 = vsel %vm259, %v3567, 0
    %v3625 = vsel %vm259, %v3568, 0
    %v3628 = vsel %vm259, %v3569, 0
    %v3631 = vsel %vm259, %v3570, 0
    %v3634 = vsel %vm259, %v3571, 0
    %v3637 = vsel %vm259, %v3572, 0
    %v3640 = vsel %vm259, %v3573, 0
    %v3643 = vsel %vm259, %v3574, 0
    %v3646 = vsel %vm259, %v3575, 0
    %3648 = vmatpush.bf16.msra.mxu0 0
    %3649 = vmatpush.bf16.msra.mxu0 0
    %3650 = vmatpush.bf16.msra.mxu0 0
    %3651 = vmatpush.bf16.msra.mxu0 0
    %3652 = vmatpush.bf16.msra.mxu0 %v3595
    %3653 = vmatpush.bf16.msra.mxu0 %v3594
    %3654 = vmatpush.bf16.msra.mxu0 %v3593
    %3655 = vmatpush.bf16.msra.mxu0 %v3592
    %3656 = vmatmul.bf16.gmra.mxu0 %v3601
    %v3657 = vpop.f32.mrf.mxu0
    %v3658 = vadd.f32 %v3494, %v3657
    %v3659 = vpop.f32.mrf.mxu0
    %v3660 = vadd.f32 %v3494, %v3659
    %3661 = vmatmul.bf16.gmra.mxu0 %v3604
    %v3662 = vpop.f32.mrf.mxu0
    %v3663 = vadd.f32 %v3494, %v3662
    %v3664 = vpop.f32.mrf.mxu0
    %v3665 = vadd.f32 %v3494, %v3664
    %3666 = vmatmul.bf16.gmra.mxu0 %v3607
    %v3667 = vpop.f32.mrf.mxu0
    %v3668 = vadd.f32 %v3494, %v3667
    %v3669 = vpop.f32.mrf.mxu0
    %v3670 = vadd.f32 %v3494, %v3669
    %3671 = vmatmul.bf16.gmra.mxu0 %v3610
    %v3672 = vpop.f32.mrf.mxu0
    %v3673 = vadd.f32 %v3494, %v3672
    %v3674 = vpop.f32.mrf.mxu0
    %v3675 = vadd.f32 %v3494, %v3674
    %3676 = vmatmul.bf16.gmra.mxu0 %v3613
    %v3677 = vpop.f32.mrf.mxu0
    %v3678 = vadd.f32 %v3494, %v3677
    %v3679 = vpop.f32.mrf.mxu0
    %v3680 = vadd.f32 %v3494, %v3679
    %3681 = vmatmul.bf16.gmra.mxu0 %v3616
    %v3682 = vpop.f32.mrf.mxu0
    %v3683 = vadd.f32 %v3494, %v3682
    %v3684 = vpop.f32.mrf.mxu0
    %v3685 = vadd.f32 %v3494, %v3684
    %3686 = vmatmul.bf16.gmra.mxu0 %v3619
    %v3687 = vpop.f32.mrf.mxu0
    %v3688 = vadd.f32 %v3494, %v3687
    %v3689 = vpop.f32.mrf.mxu0
    %v3690 = vadd.f32 %v3494, %v3689
    %3691 = vmatmul.bf16.gmra.mxu0 %v3622
    %v3692 = vpop.f32.mrf.mxu0
    %v3693 = vadd.f32 %v3494, %v3692
    %v3694 = vpop.f32.mrf.mxu0
    %v3695 = vadd.f32 %v3494, %v3694
    %3696 = vmatmul.bf16.gmra.mxu0 %v3625
    %v3697 = vpop.f32.mrf.mxu0
    %v3698 = vadd.f32 %v3494, %v3697
    %v3699 = vpop.f32.mrf.mxu0
    %v3700 = vadd.f32 %v3494, %v3699
    %3701 = vmatmul.bf16.gmra.mxu0 %v3628
    %v3702 = vpop.f32.mrf.mxu0
    %v3703 = vadd.f32 %v3494, %v3702
    %v3704 = vpop.f32.mrf.mxu0
    %v3705 = vadd.f32 %v3494, %v3704
    %3706 = vmatmul.bf16.gmra.mxu0 %v3631
    %v3707 = vpop.f32.mrf.mxu0
    %v3708 = vadd.f32 %v3494, %v3707
    %v3709 = vpop.f32.mrf.mxu0
    %v3710 = vadd.f32 %v3494, %v3709
    %3711 = vmatmul.bf16.gmra.mxu0 %v3634
    %v3712 = vpop.f32.mrf.mxu0
    %v3713 = vadd.f32 %v3494, %v3712
    %v3714 = vpop.f32.mrf.mxu0
    %v3715 = vadd.f32 %v3494, %v3714
    %3716 = vmatmul.bf16.gmra.mxu0 %v3637
    %v3717 = vpop.f32.mrf.mxu0
    %v3718 = vadd.f32 %v3494, %v3717
    %v3719 = vpop.f32.mrf.mxu0
    %v3720 = vadd.f32 %v3494, %v3719
    %3721 = vmatmul.bf16.gmra.mxu0 %v3640
    %v3722 = vpop.f32.mrf.mxu0
    %v3723 = vadd.f32 %v3494, %v3722
    %v3724 = vpop.f32.mrf.mxu0
    %v3725 = vadd.f32 %v3494, %v3724
    %3726 = vmatmul.bf16.gmra.mxu0 %v3643
    %v3727 = vpop.f32.mrf.mxu0
    %v3728 = vadd.f32 %v3494, %v3727
    %v3729 = vpop.f32.mrf.mxu0
    %v3730 = vadd.f32 %v3494, %v3729
    %3731 = vmatmul.bf16.gmra.mxu0 %v3646
    %v3732 = vpop.f32.mrf.mxu0
    %v3733 = vadd.f32 %v3494, %v3732
    %v3734 = vpop.f32.mrf.mxu0
    %v3735 = vadd.f32 %v3494, %v3734
    %3736 = vdwg.mxu0
    %3737 = vst.msk [vmem:[#allocation3] sm:$0xff] %vm259, %v3658
    %3738 = vst.msk [vmem:[#allocation3 + $0x8] sm:$0xff] %vm259, %v3660
    %3739 = vst.msk [vmem:[#allocation3 + $0x10] sm:$0xff] %vm259, %v3663
    %3740 = vst.msk [vmem:[#allocation3 + $0x18] sm:$0xff] %vm259, %v3665
    %3741 = vst.msk [vmem:[#allocation3 + $0x20] sm:$0xff] %vm259, %v3668
    %3742 = vst.msk [vmem:[#allocation3 + $0x28] sm:$0xff] %vm259, %v3670
    %3743 = vst.msk [vmem:[#allocation3 + $0x30] sm:$0xff] %vm259, %v3673
    %3744 = vst.msk [vmem:[#allocation3 + $0x38] sm:$0xff] %vm259, %v3675
    %3745 = vst.msk [vmem:[#allocation3 + $0x40] sm:$0xff] %vm259, %v3678
    %3746 = vst.msk [vmem:[#allocation3 + $0x48] sm:$0xff] %vm259, %v3680
    %3747 = vst.msk [vmem:[#allocation3 + $0x50] sm:$0xff] %vm259, %v3683
    %3748 = vst.msk [vmem:[#allocation3 + $0x58] sm:$0xff] %vm259, %v3685
    %3749 = vst.msk [vmem:[#allocation3 + $0x60] sm:$0xff] %vm259, %v3688
    %3750 = vst.msk [vmem:[#allocation3 + $0x68] sm:$0xff] %vm259, %v3690
    %3751 = vst.msk [vmem:[#allocation3 + $0x70] sm:$0xff] %vm259, %v3693
    %3752 = vst.msk [vmem:[#allocation3 + $0x78] sm:$0xff] %vm259, %v3695
    %3753 = vst.msk [vmem:[#allocation3 + $0x80] sm:$0xff] %vm259, %v3698
    %3754 = vst.msk [vmem:[#allocation3 + $0x88] sm:$0xff] %vm259, %v3700
    %3755 = vst.msk [vmem:[#allocation3 + $0x90] sm:$0xff] %vm259, %v3703
    %3756 = vst.msk [vmem:[#allocation3 + $0x98] sm:$0xff] %vm259, %v3705
    %3757 = vst.msk [vmem:[#allocation3 + $0xa0] sm:$0xff] %vm259, %v3708
    %3758 = vst.msk [vmem:[#allocation3 + $0xa8] sm:$0xff] %vm259, %v3710
    %3759 = vst.msk [vmem:[#allocation3 + $0xb0] sm:$0xff] %vm259, %v3713
    %3760 = vst.msk [vmem:[#allocation3 + $0xb8] sm:$0xff] %vm259, %v3715
    %3761 = vst.msk [vmem:[#allocation3 + $0xc0] sm:$0xff] %vm259, %v3718
    %3762 = vst.msk [vmem:[#allocation3 + $0xc8] sm:$0xff] %vm259, %v3720
    %3763 = vst.msk [vmem:[#allocation3 + $0xd0] sm:$0xff] %vm259, %v3723
    %3764 = vst.msk [vmem:[#allocation3 + $0xd8] sm:$0xff] %vm259, %v3725
    %3765 = vst.msk [vmem:[#allocation3 + $0xe0] sm:$0xff] %vm259, %v3728
    %3766 = vst.msk [vmem:[#allocation3 + $0xe8] sm:$0xff] %vm259, %v3730
    %3767 = vst.msk [vmem:[#allocation3 + $0xf0] sm:$0xff] %vm259, %v3733
    %3768 = vst.msk [vmem:[#allocation3 + $0xf8] sm:$0xff] %vm259, %v3735
    %v3769 = vld [vmem:[#allocation3] sm:$0xff]
    %v3770 = vld [vmem:[#allocation3 + $0x8] sm:$0xff]
    %v3779 = vunpack.c.l.b16 %v3451
    %v3780 = vunpack.c.l.b16 %v3452
    %v3781 = vunpack.c.l.b16 %v3453
    %v3782 = vunpack.c.l.b16 %v3454
    %v3783 = vunpack.c.l.b16 %v3455
    %v3784 = vunpack.c.l.b16 %v3456
    %v3785 = vunpack.c.l.b16 %v3457
    %v3786 = vunpack.c.l.b16 %v3458
    %v3787 = vpack.c.b16 %v3780, %v3779
    %v3788 = vpack.c.b16 %v3782, %v3781
    %v3789 = vpack.c.b16 %v3784, %v3783
    %v3790 = vpack.c.b16 %v3786, %v3785
    %3795 = vmatpush.bf16.msra.mxu0 0
    %3796 = vmatpush.bf16.msra.mxu0 0
    %3797 = vmatpush.bf16.msra.mxu0 0
    %3798 = vmatpush.bf16.msra.mxu0 0
    %3799 = vmatpush.bf16.msra.mxu0 %v3790
    %3800 = vmatpush.bf16.msra.mxu0 %v3789
    %3801 = vmatpush.bf16.msra.mxu0 %v3788
    %3802 = vmatpush.bf16.msra.mxu0 %v3787
    %3803 = vmatmul.bf16.gmra.mxu0 %v456
    %v3804 = vpop.f32.mrf.mxu0
    %v3805 = vadd.f32 0.0, %v3804
    %v3806 = vpop.f32.mrf.mxu0
    %v3807 = vadd.f32 0.0, %v3806
    %3808 = vdwg.mxu0
    %v3809 = vadd.f32 %v3769, %v3805
    %v3810 = vadd.f32 %v3770, %v3807
    %v3811 = vtanh.pop %v3809
    %v3812 = vtanh.pop %v3810
    %v3813 = vpack.c.bf16 %v3811, %v3811
    %v3814 = vpack.c.bf16 %v3812, %v3812
    %v3815 = vld [vmem:[#allocation3 + $0x10] sm:$0xff]
    %v3816 = vld [vmem:[#allocation3 + $0x18] sm:$0xff]
    %v3817 = vadd.f32 %v3815, %v3805
    %v3818 = vadd.f32 %v3816, %v3807
    %v3819 = vtanh.pop %v3817
    %v3820 = vtanh.pop %v3818
    %v3821 = vpack.c.bf16 %v3819, %v3819
    %v3822 = vpack.c.bf16 %v3820, %v3820
    %3823 = vst.msk [vmem:[#allocation2] sm:$0xf] %vm486, %v3813
    %3824 = vst.msk [vmem:[#allocation2 + $0x4] sm:$0xf] %vm486, %v3814
    %3825 = vst.msk [vmem:[#allocation2 + $0x8] sm:$0xf] %vm486, %v3821
    %3826 = vst.msk [vmem:[#allocation2 + $0xc] sm:$0xf] %vm486, %v3822
    %v3827 = vld [vmem:[#allocation3 + $0x20] sm:$0xff]
    %v3828 = vld [vmem:[#allocation3 + $0x28] sm:$0xff]
    %v3831 = vunpack.c.l.b16 %v3813
    %v3832 = vunpack.c.l.b16 %v3814
    %v3833 = vpack.c.b16 %v3832, %v3831
    %v3835 = vsel %vm259, %v3833, 0
    %3837 = vmatpush.bf16.msra.mxu0 0
    %3838 = vmatpush.bf16.msra.mxu0 0
    %3839 = vmatpush.bf16.msra.mxu0 0
    %3840 = vmatpush.bf16.msra.mxu0 0
    %3841 = vmatpush.bf16.msra.mxu0 %v3790
    %3842 = vmatpush.bf16.msra.mxu0 %v3789
    %3843 = vmatpush.bf16.msra.mxu0 %v3788
    %3844 = vmatpush.bf16.msra.mxu0 %v3787
    %3845 = vmatmul.bf16.gmra.mxu0 %v3835
    %v3846 = vpop.f32.mrf.mxu0
    %v3847 = vadd.f32 0.0, %v3846
    %v3848 = vpop.f32.mrf.mxu0
    %v3849 = vadd.f32 0.0, %v3848
    %3850 = vdwg.mxu0
    %v3851 = vadd.f32 %v3827, %v3847
    %v3852 = vadd.f32 %v3828, %v3849
    %v3853 = vtanh.pop %v3851
    %v3854 = vtanh.pop %v3852
    %v3855 = vpack.c.bf16 %v3853, %v3853
    %v3856 = vpack.c.bf16 %v3854, %v3854
    %v3857 = vld [vmem:[#allocation3 + $0x30] sm:$0xff]
    %v3858 = vld [vmem:[#allocation3 + $0x38] sm:$0xff]
    %v3861 = vunpack.c.l.b16 %v3821
    %v3862 = vunpack.c.l.b16 %v3822
    %v3863 = vpack.c.b16 %v3862, %v3861
    %v3865 = vsel %vm259, %v3863, 0
    %3867 = vmatpush.bf16.msra.mxu0 0
    %3868 = vmatpush.bf16.msra.mxu0 0
    %3869 = vmatpush.bf16.msra.mxu0 0
    %3870 = vmatpush.bf16.msra.mxu0 0
    %3871 = vmatpush.bf16.msra.mxu0 %v3790
    %3872 = vmatpush.bf16.msra.mxu0 %v3789
    %3873 = vmatpush.bf16.msra.mxu0 %v3788
    %3874 = vmatpush.bf16.msra.mxu0 %v3787
    %3875 = vmatmul.bf16.gmra.mxu0 %v3865
    %v3876 = vpop.f32.mrf.mxu0
    %v3877 = vadd.f32 0.0, %v3876
    %v3878 = vpop.f32.mrf.mxu0
    %v3879 = vadd.f32 0.0, %v3878
    %3880 = vdwg.mxu0
    %v3881 = vadd.f32 %v3857, %v3877
    %v3882 = vadd.f32 %v3858, %v3879
    %v3883 = vtanh.pop %v3881
    %v3884 = vtanh.pop %v3882
    %v3885 = vpack.c.bf16 %v3883, %v3883
    %v3886 = vpack.c.bf16 %v3884, %v3884
    %3887 = vst.msk [vmem:[#allocation2 + $0x10] sm:$0xf] %vm486, %v3855
    %3888 = vst.msk [vmem:[#allocation2 + $0x14] sm:$0xf] %vm486, %v3856
    %3889 = vst.msk [vmem:[#allocation2 + $0x18] sm:$0xf] %vm486, %v3885
    %3890 = vst.msk [vmem:[#allocation2 + $0x1c] sm:$0xf] %vm486, %v3886
    %v3891 = vld [vmem:[#allocation3 + $0x40] sm:$0xff]
    %v3892 = vld [vmem:[#allocation3 + $0x48] sm:$0xff]
    %v3895 = vunpack.c.l.b16 %v3855
    %v3896 = vunpack.c.l.b16 %v3856
    %v3897 = vpack.c.b16 %v3896, %v3895
    %v3899 = vsel %vm259, %v3897, 0
    %3901 = vmatpush.bf16.msra.mxu0 0
    %3902 = vmatpush.bf16.msra.mxu0 0
    %3903 = vmatpush.bf16.msra.mxu0 0
    %3904 = vmatpush.bf16.msra.mxu0 0
    %3905 = vmatpush.bf16.msra.mxu0 %v3790
    %3906 = vmatpush.bf16.msra.mxu0 %v3789
    %3907 = vmatpush.bf16.msra.mxu0 %v3788
    %3908 = vmatpush.bf16.msra.mxu0 %v3787
    %3909 = vmatmul.bf16.gmra.mxu0 %v3899
    %v3910 = vpop.f32.mrf.mxu0
    %v3911 = vadd.f32 0.0, %v3910
    %v3912 = vpop.f32.mrf.mxu0
    %v3913 = vadd.f32 0.0, %v3912
    %3914 = vdwg.mxu0
    %v3915 = vadd.f32 %v3891, %v3911
    %v3916 = vadd.f32 %v3892, %v3913
    %v3917 = vtanh.pop %v3915
    %v3918 = vtanh.pop %v3916
    %v3919 = vpack.c.bf16 %v3917, %v3917
    %v3920 = vpack.c.bf16 %v3918, %v3918
    %v3921 = vld [vmem:[#allocation3 + $0x50] sm:$0xff]
    %v3922 = vld [vmem:[#allocation3 + $0x58] sm:$0xff]
    %v3925 = vunpack.c.l.b16 %v3885
    %v3926 = vunpack.c.l.b16 %v3886
    %v3927 = vpack.c.b16 %v3926, %v3925
    %v3929 = vsel %vm259, %v3927, 0
    %3931 = vmatpush.bf16.msra.mxu0 0
    %3932 = vmatpush.bf16.msra.mxu0 0
    %3933 = vmatpush.bf16.msra.mxu0 0
    %3934 = vmatpush.bf16.msra.mxu0 0
    %3935 = vmatpush.bf16.msra.mxu0 %v3790
    %3936 = vmatpush.bf16.msra.mxu0 %v3789
    %3937 = vmatpush.bf16.msra.mxu0 %v3788
    %3938 = vmatpush.bf16.msra.mxu0 %v3787
    %3939 = vmatmul.bf16.gmra.mxu0 %v3929
    %v3940 = vpop.f32.mrf.mxu0
    %v3941 = vadd.f32 0.0, %v3940
    %v3942 = vpop.f32.mrf.mxu0
    %v3943 = vadd.f32 0.0, %v3942
    %3944 = vdwg.mxu0
    %v3945 = vadd.f32 %v3921, %v3941
    %v3946 = vadd.f32 %v3922, %v3943
    %v3947 = vtanh.pop %v3945
    %v3948 = vtanh.pop %v3946
    %v3949 = vpack.c.bf16 %v3947, %v3947
    %v3950 = vpack.c.bf16 %v3948, %v3948
    %3951 = vst.msk [vmem:[#allocation2 + $0x20] sm:$0xf] %vm486, %v3919
    %3952 = vst.msk [vmem:[#allocation2 + $0x24] sm:$0xf] %vm486, %v3920
    %3953 = vst.msk [vmem:[#allocation2 + $0x28] sm:$0xf] %vm486, %v3949
    %3954 = vst.msk [vmem:[#allocation2 + $0x2c] sm:$0xf] %vm486, %v3950
    %v3955 = vld [vmem:[#allocation3 + $0x60] sm:$0xff]
    %v3956 = vld [vmem:[#allocation3 + $0x68] sm:$0xff]
    %v3959 = vunpack.c.l.b16 %v3919
    %v3960 = vunpack.c.l.b16 %v3920
    %v3961 = vpack.c.b16 %v3960, %v3959
    %v3963 = vsel %vm259, %v3961, 0
    %3965 = vmatpush.bf16.msra.mxu0 0
    %3966 = vmatpush.bf16.msra.mxu0 0
    %3967 = vmatpush.bf16.msra.mxu0 0
    %3968 = vmatpush.bf16.msra.mxu0 0
    %3969 = vmatpush.bf16.msra.mxu0 %v3790
    %3970 = vmatpush.bf16.msra.mxu0 %v3789
    %3971 = vmatpush.bf16.msra.mxu0 %v3788
    %3972 = vmatpush.bf16.msra.mxu0 %v3787
    %3973 = vmatmul.bf16.gmra.mxu0 %v3963
    %v3974 = vpop.f32.mrf.mxu0
    %v3975 = vadd.f32 0.0, %v3974
    %v3976 = vpop.f32.mrf.mxu0
    %v3977 = vadd.f32 0.0, %v3976
    %3978 = vdwg.mxu0
    %v3979 = vadd.f32 %v3955, %v3975
    %v3980 = vadd.f32 %v3956, %v3977
    %v3981 = vtanh.pop %v3979
    %v3982 = vtanh.pop %v3980
    %v3983 = vpack.c.bf16 %v3981, %v3981
    %v3984 = vpack.c.bf16 %v3982, %v3982
    %v3985 = vld [vmem:[#allocation3 + $0x70] sm:$0xff]
    %v3986 = vld [vmem:[#allocation3 + $0x78] sm:$0xff]
    %v3989 = vunpack.c.l.b16 %v3949
    %v3990 = vunpack.c.l.b16 %v3950
    %v3991 = vpack.c.b16 %v3990, %v3989
    %v3993 = vsel %vm259, %v3991, 0
    %3995 = vmatpush.bf16.msra.mxu0 0
    %3996 = vmatpush.bf16.msra.mxu0 0
    %3997 = vmatpush.bf16.msra.mxu0 0
    %3998 = vmatpush.bf16.msra.mxu0 0
    %3999 = vmatpush.bf16.msra.mxu0 %v3790
    %4000 = vmatpush.bf16.msra.mxu0 %v3789
    %4001 = vmatpush.bf16.msra.mxu0 %v3788
    %4002 = vmatpush.bf16.msra.mxu0 %v3787
    %4003 = vmatmul.bf16.gmra.mxu0 %v3993
    %v4004 = vpop.f32.mrf.mxu0
    %v4005 = vadd.f32 0.0, %v4004
    %v4006 = vpop.f32.mrf.mxu0
    %v4007 = vadd.f32 0.0, %v4006
    %4008 = vdwg.mxu0
    %v4009 = vadd.f32 %v3985, %v4005
    %v4010 = vadd.f32 %v3986, %v4007
    %v4011 = vtanh.pop %v4009
    %v4012 = vtanh.pop %v4010
    %v4013 = vpack.c.bf16 %v4011, %v4011
    %v4014 = vpack.c.bf16 %v4012, %v4012
    %4015 = vst.msk [vmem:[#allocation2 + $0x30] sm:$0xf] %vm486, %v3983
    %4016 = vst.msk [vmem:[#allocation2 + $0x34] sm:$0xf] %vm486, %v3984
    %4017 = vst.msk [vmem:[#allocation2 + $0x38] sm:$0xf] %vm486, %v4013
    %4018 = vst.msk [vmem:[#allocation2 + $0x3c] sm:$0xf] %vm486, %v4014
    %v4019 = vld [vmem:[#allocation3 + $0x80] sm:$0xff]
    %v4020 = vld [vmem:[#allocation3 + $0x88] sm:$0xff]
    %v4023 = vunpack.c.l.b16 %v3983
    %v4024 = vunpack.c.l.b16 %v3984
    %v4025 = vpack.c.b16 %v4024, %v4023
    %v4027 = vsel %vm259, %v4025, 0
    %4029 = vmatpush.bf16.msra.mxu0 0
    %4030 = vmatpush.bf16.msra.mxu0 0
    %4031 = vmatpush.bf16.msra.mxu0 0
    %4032 = vmatpush.bf16.msra.mxu0 0
    %4033 = vmatpush.bf16.msra.mxu0 %v3790
    %4034 = vmatpush.bf16.msra.mxu0 %v3789
    %4035 = vmatpush.bf16.msra.mxu0 %v3788
    %4036 = vmatpush.bf16.msra.mxu0 %v3787
    %4037 = vmatmul.bf16.gmra.mxu0 %v4027
    %v4038 = vpop.f32.mrf.mxu0
    %v4039 = vadd.f32 0.0, %v4038
    %v4040 = vpop.f32.mrf.mxu0
    %v4041 = vadd.f32 0.0, %v4040
    %4042 = vdwg.mxu0
    %v4043 = vadd.f32 %v4019, %v4039
    %v4044 = vadd.f32 %v4020, %v4041
    %v4045 = vtanh.pop %v4043
    %v4046 = vtanh.pop %v4044
    %v4047 = vpack.c.bf16 %v4045, %v4045
    %v4048 = vpack.c.bf16 %v4046, %v4046
    %v4049 = vld [vmem:[#allocation3 + $0x90] sm:$0xff]
    %v4050 = vld [vmem:[#allocation3 + $0x98] sm:$0xff]
    %v4053 = vunpack.c.l.b16 %v4013
    %v4054 = vunpack.c.l.b16 %v4014
    %v4055 = vpack.c.b16 %v4054, %v4053
    %v4057 = vsel %vm259, %v4055, 0
    %4059 = vmatpush.bf16.msra.mxu0 0
    %4060 = vmatpush.bf16.msra.mxu0 0
    %4061 = vmatpush.bf16.msra.mxu0 0
    %4062 = vmatpush.bf16.msra.mxu0 0
    %4063 = vmatpush.bf16.msra.mxu0 %v3790
    %4064 = vmatpush.bf16.msra.mxu0 %v3789
    %4065 = vmatpush.bf16.msra.mxu0 %v3788
    %4066 = vmatpush.bf16.msra.mxu0 %v3787
    %4067 = vmatmul.bf16.gmra.mxu0 %v4057
    %v4068 = vpop.f32.mrf.mxu0
    %v4069 = vadd.f32 0.0, %v4068
    %v4070 = vpop.f32.mrf.mxu0
    %v4071 = vadd.f32 0.0, %v4070
    %4072 = vdwg.mxu0
    %v4073 = vadd.f32 %v4049, %v4069
    %v4074 = vadd.f32 %v4050, %v4071
    %v4075 = vtanh.pop %v4073
    %v4076 = vtanh.pop %v4074
    %v4077 = vpack.c.bf16 %v4075, %v4075
    %v4078 = vpack.c.bf16 %v4076, %v4076
    %4079 = vst.msk [vmem:[#allocation2 + $0x40] sm:$0xf] %vm486, %v4047
    %4080 = vst.msk [vmem:[#allocation2 + $0x44] sm:$0xf] %vm486, %v4048
    %4081 = vst.msk [vmem:[#allocation2 + $0x48] sm:$0xf] %vm486, %v4077
    %4082 = vst.msk [vmem:[#allocation2 + $0x4c] sm:$0xf] %vm486, %v4078
    %v4083 = vld [vmem:[#allocation3 + $0xa0] sm:$0xff]
    %v4084 = vld [vmem:[#allocation3 + $0xa8] sm:$0xff]
    %v4087 = vunpack.c.l.b16 %v4047
    %v4088 = vunpack.c.l.b16 %v4048
    %v4089 = vpack.c.b16 %v4088, %v4087
    %v4091 = vsel %vm259, %v4089, 0
    %4093 = vmatpush.bf16.msra.mxu0 0
    %4094 = vmatpush.bf16.msra.mxu0 0
    %4095 = vmatpush.bf16.msra.mxu0 0
    %4096 = vmatpush.bf16.msra.mxu0 0
    %4097 = vmatpush.bf16.msra.mxu0 %v3790
    %4098 = vmatpush.bf16.msra.mxu0 %v3789
    %4099 = vmatpush.bf16.msra.mxu0 %v3788
    %4100 = vmatpush.bf16.msra.mxu0 %v3787
    %4101 = vmatmul.bf16.gmra.mxu0 %v4091
    %v4102 = vpop.f32.mrf.mxu0
    %v4103 = vadd.f32 0.0, %v4102
    %v4104 = vpop.f32.mrf.mxu0
    %v4105 = vadd.f32 0.0, %v4104
    %4106 = vdwg.mxu0
    %v4107 = vadd.f32 %v4083, %v4103
    %v4108 = vadd.f32 %v4084, %v4105
    %v4109 = vtanh.pop %v4107
    %v4110 = vtanh.pop %v4108
    %v4111 = vpack.c.bf16 %v4109, %v4109
    %v4112 = vpack.c.bf16 %v4110, %v4110
    %v4113 = vld [vmem:[#allocation3 + $0xb0] sm:$0xff]
    %v4114 = vld [vmem:[#allocation3 + $0xb8] sm:$0xff]
    %v4117 = vunpack.c.l.b16 %v4077
    %v4118 = vunpack.c.l.b16 %v4078
    %v4119 = vpack.c.b16 %v4118, %v4117
    %v4121 = vsel %vm259, %v4119, 0
    %4123 = vmatpush.bf16.msra.mxu0 0
    %4124 = vmatpush.bf16.msra.mxu0 0
    %4125 = vmatpush.bf16.msra.mxu0 0
    %4126 = vmatpush.bf16.msra.mxu0 0
    %4127 = vmatpush.bf16.msra.mxu0 %v3790
    %4128 = vmatpush.bf16.msra.mxu0 %v3789
    %4129 = vmatpush.bf16.msra.mxu0 %v3788
    %4130 = vmatpush.bf16.msra.mxu0 %v3787
    %4131 = vmatmul.bf16.gmra.mxu0 %v4121
    %v4132 = vpop.f32.mrf.mxu0
    %v4133 = vadd.f32 0.0, %v4132
    %v4134 = vpop.f32.mrf.mxu0
    %v4135 = vadd.f32 0.0, %v4134
    %4136 = vdwg.mxu0
    %v4137 = vadd.f32 %v4113, %v4133
    %v4138 = vadd.f32 %v4114, %v4135
    %v4139 = vtanh.pop %v4137
    %v4140 = vtanh.pop %v4138
    %v4141 = vpack.c.bf16 %v4139, %v4139
    %v4142 = vpack.c.bf16 %v4140, %v4140
    %4143 = vst.msk [vmem:[#allocation2 + $0x50] sm:$0xf] %vm486, %v4111
    %4144 = vst.msk [vmem:[#allocation2 + $0x54] sm:$0xf] %vm486, %v4112
    %4145 = vst.msk [vmem:[#allocation2 + $0x58] sm:$0xf] %vm486, %v4141
    %4146 = vst.msk [vmem:[#allocation2 + $0x5c] sm:$0xf] %vm486, %v4142
    %v4147 = vld [vmem:[#allocation3 + $0xc0] sm:$0xff]
    %v4148 = vld [vmem:[#allocation3 + $0xc8] sm:$0xff]
    %v4151 = vunpack.c.l.b16 %v4111
    %v4152 = vunpack.c.l.b16 %v4112
    %v4153 = vpack.c.b16 %v4152, %v4151
    %v4155 = vsel %vm259, %v4153, 0
    %4157 = vmatpush.bf16.msra.mxu0 0
    %4158 = vmatpush.bf16.msra.mxu0 0
    %4159 = vmatpush.bf16.msra.mxu0 0
    %4160 = vmatpush.bf16.msra.mxu0 0
    %4161 = vmatpush.bf16.msra.mxu0 %v3790
    %4162 = vmatpush.bf16.msra.mxu0 %v3789
    %4163 = vmatpush.bf16.msra.mxu0 %v3788
    %4164 = vmatpush.bf16.msra.mxu0 %v3787
    %4165 = vmatmul.bf16.gmra.mxu0 %v4155
    %v4166 = vpop.f32.mrf.mxu0
    %v4167 = vadd.f32 0.0, %v4166
    %v4168 = vpop.f32.mrf.mxu0
    %v4169 = vadd.f32 0.0, %v4168
    %4170 = vdwg.mxu0
    %v4171 = vadd.f32 %v4147, %v4167
    %v4172 = vadd.f32 %v4148, %v4169
    %v4173 = vtanh.pop %v4171
    %v4174 = vtanh.pop %v4172
    %v4175 = vpack.c.bf16 %v4173, %v4173
    %v4176 = vpack.c.bf16 %v4174, %v4174
    %v4177 = vld [vmem:[#allocation3 + $0xd0] sm:$0xff]
    %v4178 = vld [vmem:[#allocation3 + $0xd8] sm:$0xff]
    %v4181 = vunpack.c.l.b16 %v4141
    %v4182 = vunpack.c.l.b16 %v4142
    %v4183 = vpack.c.b16 %v4182, %v4181
    %v4185 = vsel %vm259, %v4183, 0
    %4187 = vmatpush.bf16.msra.mxu0 0
    %4188 = vmatpush.bf16.msra.mxu0 0
    %4189 = vmatpush.bf16.msra.mxu0 0
    %4190 = vmatpush.bf16.msra.mxu0 0
    %4191 = vmatpush.bf16.msra.mxu0 %v3790
    %4192 = vmatpush.bf16.msra.mxu0 %v3789
    %4193 = vmatpush.bf16.msra.mxu0 %v3788
    %4194 = vmatpush.bf16.msra.mxu0 %v3787
    %4195 = vmatmul.bf16.gmra.mxu0 %v4185
    %v4196 = vpop.f32.mrf.mxu0
    %v4197 = vadd.f32 0.0, %v4196
    %v4198 = vpop.f32.mrf.mxu0
    %v4199 = vadd.f32 0.0, %v4198
    %4200 = vdwg.mxu0
    %v4201 = vadd.f32 %v4177, %v4197
    %v4202 = vadd.f32 %v4178, %v4199
    %v4203 = vtanh.pop %v4201
    %v4204 = vtanh.pop %v4202
    %v4205 = vpack.c.bf16 %v4203, %v4203
    %v4206 = vpack.c.bf16 %v4204, %v4204
    %4207 = vst.msk [vmem:[#allocation2 + $0x60] sm:$0xf] %vm486, %v4175
    %4208 = vst.msk [vmem:[#allocation2 + $0x64] sm:$0xf] %vm486, %v4176
    %4209 = vst.msk [vmem:[#allocation2 + $0x68] sm:$0xf] %vm486, %v4205
    %4210 = vst.msk [vmem:[#allocation2 + $0x6c] sm:$0xf] %vm486, %v4206
    %v4211 = vld [vmem:[#allocation3 + $0xe0] sm:$0xff]
    %v4212 = vld [vmem:[#allocation3 + $0xe8] sm:$0xff]
    %v4215 = vunpack.c.l.b16 %v4175
    %v4216 = vunpack.c.l.b16 %v4176
    %v4217 = vpack.c.b16 %v4216, %v4215
    %v4219 = vsel %vm259, %v4217, 0
    %4221 = vmatpush.bf16.msra.mxu0 0
    %4222 = vmatpush.bf16.msra.mxu0 0
    %4223 = vmatpush.bf16.msra.mxu0 0
    %4224 = vmatpush.bf16.msra.mxu0 0
    %4225 = vmatpush.bf16.msra.mxu0 %v3790
    %4226 = vmatpush.bf16.msra.mxu0 %v3789
    %4227 = vmatpush.bf16.msra.mxu0 %v3788
    %4228 = vmatpush.bf16.msra.mxu0 %v3787
    %4229 = vmatmul.bf16.gmra.mxu0 %v4219
    %v4230 = vpop.f32.mrf.mxu0
    %v4231 = vadd.f32 0.0, %v4230
    %v4232 = vpop.f32.mrf.mxu0
    %v4233 = vadd.f32 0.0, %v4232
    %4234 = vdwg.mxu0
    %v4235 = vadd.f32 %v4211, %v4231
    %v4236 = vadd.f32 %v4212, %v4233
    %v4237 = vtanh.pop %v4235
    %v4238 = vtanh.pop %v4236
    %v4239 = vpack.c.bf16 %v4237, %v4237
    %v4240 = vpack.c.bf16 %v4238, %v4238
    %v4241 = vld [vmem:[#allocation3 + $0xf0] sm:$0xff]
    %v4242 = vld [vmem:[#allocation3 + $0xf8] sm:$0xff]
    %v4245 = vunpack.c.l.b16 %v4205
    %v4246 = vunpack.c.l.b16 %v4206
    %v4247 = vpack.c.b16 %v4246, %v4245
    %v4249 = vsel %vm259, %v4247, 0
    %4251 = vmatpush.bf16.msra.mxu0 0
    %4252 = vmatpush.bf16.msra.mxu0 0
    %4253 = vmatpush.bf16.msra.mxu0 0
    %4254 = vmatpush.bf16.msra.mxu0 0
    %4255 = vmatpush.bf16.msra.mxu0 %v3790
    %4256 = vmatpush.bf16.msra.mxu0 %v3789
    %4257 = vmatpush.bf16.msra.mxu0 %v3788
    %4258 = vmatpush.bf16.msra.mxu0 %v3787
    %4259 = vmatmul.bf16.gmra.mxu0 %v4249
    %v4260 = vpop.f32.mrf.mxu0
    %v4261 = vadd.f32 0.0, %v4260
    %v4262 = vpop.f32.mrf.mxu0
    %v4263 = vadd.f32 0.0, %v4262
    %4264 = vdwg.mxu0
    %v4265 = vadd.f32 %v4241, %v4261
    %v4266 = vadd.f32 %v4242, %v4263
    %v4267 = vtanh.pop %v4265
    %v4268 = vtanh.pop %v4266
    %v4269 = vpack.c.bf16 %v4267, %v4267
    %v4270 = vpack.c.bf16 %v4268, %v4268
    %4271 = vst.msk [vmem:[#allocation2 + $0x70] sm:$0xf] %vm486, %v4239
    %4272 = vst.msk [vmem:[#allocation2 + $0x74] sm:$0xf] %vm486, %v4240
    %4273 = vst.msk [vmem:[#allocation2 + $0x78] sm:$0xf] %vm486, %v4269
    %4274 = vst.msk [vmem:[#allocation2 + $0x7c] sm:$0xf] %vm486, %v4270
    %s4275 = scalar_lea.vmem [#allocation7], 160
    %v4276 = vld [vmem:[%s4275] sm:$0xf]
    %v4277 = vld [vmem:[%s4275 + $0x4] sm:$0xf]
    %v4278 = vld [vmem:[%s4275 + $0x8] sm:$0xf]
    %v4279 = vld [vmem:[%s4275 + $0xc] sm:$0xf]
    %v4280 = vld [vmem:[%s4275 + $0x10] sm:$0xf]
    %v4281 = vld [vmem:[%s4275 + $0x14] sm:$0xf]
    %v4282 = vld [vmem:[%s4275 + $0x18] sm:$0xf]
    %v4283 = vld [vmem:[%s4275 + $0x1c] sm:$0xf]
    %s4284 = scalar_lea.vmem [#allocation9], 160
    %v4285 = vld [vmem:[%s4284] sm:$0xf]
    %v4286 = vld [vmem:[%s4284 + $0x4] sm:$0xf]
    %v4287 = vld [vmem:[%s4284 + $0x8] sm:$0xf]
    %v4288 = vld [vmem:[%s4284 + $0xc] sm:$0xf]
    %v4289 = vld [vmem:[%s4284 + $0x10] sm:$0xf]
    %v4290 = vld [vmem:[%s4284 + $0x14] sm:$0xf]
    %v4291 = vld [vmem:[%s4284 + $0x18] sm:$0xf]
    %v4292 = vld [vmem:[%s4284 + $0x1c] sm:$0xf]
    %s4293 = scalar_lea.vmem [#allocation10], 5
    %v4294 = vld [vmem:[%s4293] sm:$0x1]
    %v4295 = vld [vmem:[#allocation2] sm:$0xf]
    %v4296 = vld [vmem:[#allocation2 + $0x4] sm:$0xf]
    %v4297 = vld [vmem:[#allocation2 + $0x8] sm:$0xf]
    %v4298 = vld [vmem:[#allocation2 + $0xc] sm:$0xf]
    %v4299 = vld [vmem:[#allocation2 + $0x10] sm:$0xf]
    %v4300 = vld [vmem:[#allocation2 + $0x14] sm:$0xf]
    %v4301 = vld [vmem:[#allocation2 + $0x18] sm:$0xf]
    %v4302 = vld [vmem:[#allocation2 + $0x1c] sm:$0xf]
    %v4303 = vld [vmem:[#allocation2 + $0x20] sm:$0xf]
    %v4304 = vld [vmem:[#allocation2 + $0x24] sm:$0xf]
    %v4305 = vld [vmem:[#allocation2 + $0x28] sm:$0xf]
    %v4306 = vld [vmem:[#allocation2 + $0x2c] sm:$0xf]
    %v4307 = vld [vmem:[#allocation2 + $0x30] sm:$0xf]
    %v4308 = vld [vmem:[#allocation2 + $0x34] sm:$0xf]
    %v4309 = vld [vmem:[#allocation2 + $0x38] sm:$0xf]
    %v4310 = vld [vmem:[#allocation2 + $0x3c] sm:$0xf]
    %v4311 = vld [vmem:[#allocation2 + $0x40] sm:$0xf]
    %v4312 = vld [vmem:[#allocation2 + $0x44] sm:$0xf]
    %v4313 = vld [vmem:[#allocation2 + $0x48] sm:$0xf]
    %v4314 = vld [vmem:[#allocation2 + $0x4c] sm:$0xf]
    %v4315 = vld [vmem:[#allocation2 + $0x50] sm:$0xf]
    %v4316 = vld [vmem:[#allocation2 + $0x54] sm:$0xf]
    %v4317 = vld [vmem:[#allocation2 + $0x58] sm:$0xf]
    %v4318 = vld [vmem:[#allocation2 + $0x5c] sm:$0xf]
    %v4319 = vld [vmem:[#allocation2 + $0x60] sm:$0xf]
    %v4320 = vld [vmem:[#allocation2 + $0x64] sm:$0xf]
    %v4321 = vld [vmem:[#allocation2 + $0x68] sm:$0xf]
    %v4322 = vld [vmem:[#allocation2 + $0x6c] sm:$0xf]
    %v4323 = vld [vmem:[#allocation2 + $0x70] sm:$0xf]
    %v4324 = vld [vmem:[#allocation2 + $0x74] sm:$0xf]
    %v4325 = vld [vmem:[#allocation2 + $0x78] sm:$0xf]
    %v4326 = vld [vmem:[#allocation2 + $0x7c] sm:$0xf]
    %v4328 = vperm.slane %v4294, 0
    %v4362 = vunpack.c.l.b16 %v4295
    %v4363 = vunpack.c.l.b16 %v4296
    %v4364 = vunpack.c.l.b16 %v4297
    %v4365 = vunpack.c.l.b16 %v4298
    %v4366 = vunpack.c.l.b16 %v4299
    %v4367 = vunpack.c.l.b16 %v4300
    %v4368 = vunpack.c.l.b16 %v4301
    %v4369 = vunpack.c.l.b16 %v4302
    %v4370 = vunpack.c.l.b16 %v4303
    %v4371 = vunpack.c.l.b16 %v4304
    %v4372 = vunpack.c.l.b16 %v4305
    %v4373 = vunpack.c.l.b16 %v4306
    %v4374 = vunpack.c.l.b16 %v4307
    %v4375 = vunpack.c.l.b16 %v4308
    %v4376 = vunpack.c.l.b16 %v4309
    %v4377 = vunpack.c.l.b16 %v4310
    %v4378 = vunpack.c.l.b16 %v4311
    %v4379 = vunpack.c.l.b16 %v4312
    %v4380 = vunpack.c.l.b16 %v4313
    %v4381 = vunpack.c.l.b16 %v4314
    %v4382 = vunpack.c.l.b16 %v4315
    %v4383 = vunpack.c.l.b16 %v4316
    %v4384 = vunpack.c.l.b16 %v4317
    %v4385 = vunpack.c.l.b16 %v4318
    %v4386 = vunpack.c.l.b16 %v4319
    %v4387 = vunpack.c.l.b16 %v4320
    %v4388 = vunpack.c.l.b16 %v4321
    %v4389 = vunpack.c.l.b16 %v4322
    %v4390 = vunpack.c.l.b16 %v4323
    %v4391 = vunpack.c.l.b16 %v4324
    %v4392 = vunpack.c.l.b16 %v4325
    %v4393 = vunpack.c.l.b16 %v4326
    %v4394 = vpack.c.b16 %v4363, %v4362
    %v4395 = vpack.c.b16 %v4365, %v4364
    %v4396 = vpack.c.b16 %v4367, %v4366
    %v4397 = vpack.c.b16 %v4369, %v4368
    %v4398 = vpack.c.b16 %v4371, %v4370
    %v4399 = vpack.c.b16 %v4373, %v4372
    %v4400 = vpack.c.b16 %v4375, %v4374
    %v4401 = vpack.c.b16 %v4377, %v4376
    %v4402 = vpack.c.b16 %v4379, %v4378
    %v4403 = vpack.c.b16 %v4381, %v4380
    %v4404 = vpack.c.b16 %v4383, %v4382
    %v4405 = vpack.c.b16 %v4385, %v4384
    %v4406 = vpack.c.b16 %v4387, %v4386
    %v4407 = vpack.c.b16 %v4389, %v4388
    %v4408 = vpack.c.b16 %v4391, %v4390
    %v4409 = vpack.c.b16 %v4393, %v4392
    %v4418 = vunpack.c.l.b16 %v4276
    %v4419 = vunpack.c.l.b16 %v4277
    %v4420 = vunpack.c.l.b16 %v4278
    %v4421 = vunpack.c.l.b16 %v4279
    %v4422 = vunpack.c.l.b16 %v4280
    %v4423 = vunpack.c.l.b16 %v4281
    %v4424 = vunpack.c.l.b16 %v4282
    %v4425 = vunpack.c.l.b16 %v4283
    %v4426 = vpack.c.b16 %v4419, %v4418
    %v4427 = vpack.c.b16 %v4421, %v4420
    %v4428 = vpack.c.b16 %v4423, %v4422
    %v4429 = vpack.c.b16 %v4425, %v4424
    %v4435 = vsel %vm259, %v4394, 0
    %v4438 = vsel %vm259, %v4395, 0
    %v4441 = vsel %vm259, %v4396, 0
    %v4444 = vsel %vm259, %v4397, 0
    %v4447 = vsel %vm259, %v4398, 0
    %v4450 = vsel %vm259, %v4399, 0
    %v4453 = vsel %vm259, %v4400, 0
    %v4456 = vsel %vm259, %v4401, 0
    %v4459 = vsel %vm259, %v4402, 0
    %v4462 = vsel %vm259, %v4403, 0
    %v4465 = vsel %vm259, %v4404, 0
    %v4468 = vsel %vm259, %v4405, 0
    %v4471 = vsel %vm259, %v4406, 0
    %v4474 = vsel %vm259, %v4407, 0
    %v4477 = vsel %vm259, %v4408, 0
    %v4480 = vsel %vm259, %v4409, 0
    %4482 = vmatpush.bf16.msra.mxu0 0
    %4483 = vmatpush.bf16.msra.mxu0 0
    %4484 = vmatpush.bf16.msra.mxu0 0
    %4485 = vmatpush.bf16.msra.mxu0 0
    %4486 = vmatpush.bf16.msra.mxu0 %v4429
    %4487 = vmatpush.bf16.msra.mxu0 %v4428
    %4488 = vmatpush.bf16.msra.mxu0 %v4427
    %4489 = vmatpush.bf16.msra.mxu0 %v4426
    %4490 = vmatmul.bf16.gmra.mxu0 %v4435
    %v4491 = vpop.f32.mrf.mxu0
    %v4492 = vadd.f32 %v4328, %v4491
    %v4493 = vpop.f32.mrf.mxu0
    %v4494 = vadd.f32 %v4328, %v4493
    %4495 = vmatmul.bf16.gmra.mxu0 %v4438
    %v4496 = vpop.f32.mrf.mxu0
    %v4497 = vadd.f32 %v4328, %v4496
    %v4498 = vpop.f32.mrf.mxu0
    %v4499 = vadd.f32 %v4328, %v4498
    %4500 = vmatmul.bf16.gmra.mxu0 %v4441
    %v4501 = vpop.f32.mrf.mxu0
    %v4502 = vadd.f32 %v4328, %v4501
    %v4503 = vpop.f32.mrf.mxu0
    %v4504 = vadd.f32 %v4328, %v4503
    %4505 = vmatmul.bf16.gmra.mxu0 %v4444
    %v4506 = vpop.f32.mrf.mxu0
    %v4507 = vadd.f32 %v4328, %v4506
    %v4508 = vpop.f32.mrf.mxu0
    %v4509 = vadd.f32 %v4328, %v4508
    %4510 = vmatmul.bf16.gmra.mxu0 %v4447
    %v4511 = vpop.f32.mrf.mxu0
    %v4512 = vadd.f32 %v4328, %v4511
    %v4513 = vpop.f32.mrf.mxu0
    %v4514 = vadd.f32 %v4328, %v4513
    %4515 = vmatmul.bf16.gmra.mxu0 %v4450
    %v4516 = vpop.f32.mrf.mxu0
    %v4517 = vadd.f32 %v4328, %v4516
    %v4518 = vpop.f32.mrf.mxu0
    %v4519 = vadd.f32 %v4328, %v4518
    %4520 = vmatmul.bf16.gmra.mxu0 %v4453
    %v4521 = vpop.f32.mrf.mxu0
    %v4522 = vadd.f32 %v4328, %v4521
    %v4523 = vpop.f32.mrf.mxu0
    %v4524 = vadd.f32 %v4328, %v4523
    %4525 = vmatmul.bf16.gmra.mxu0 %v4456
    %v4526 = vpop.f32.mrf.mxu0
    %v4527 = vadd.f32 %v4328, %v4526
    %v4528 = vpop.f32.mrf.mxu0
    %v4529 = vadd.f32 %v4328, %v4528
    %4530 = vmatmul.bf16.gmra.mxu0 %v4459
    %v4531 = vpop.f32.mrf.mxu0
    %v4532 = vadd.f32 %v4328, %v4531
    %v4533 = vpop.f32.mrf.mxu0
    %v4534 = vadd.f32 %v4328, %v4533
    %4535 = vmatmul.bf16.gmra.mxu0 %v4462
    %v4536 = vpop.f32.mrf.mxu0
    %v4537 = vadd.f32 %v4328, %v4536
    %v4538 = vpop.f32.mrf.mxu0
    %v4539 = vadd.f32 %v4328, %v4538
    %4540 = vmatmul.bf16.gmra.mxu0 %v4465
    %v4541 = vpop.f32.mrf.mxu0
    %v4542 = vadd.f32 %v4328, %v4541
    %v4543 = vpop.f32.mrf.mxu0
    %v4544 = vadd.f32 %v4328, %v4543
    %4545 = vmatmul.bf16.gmra.mxu0 %v4468
    %v4546 = vpop.f32.mrf.mxu0
    %v4547 = vadd.f32 %v4328, %v4546
    %v4548 = vpop.f32.mrf.mxu0
    %v4549 = vadd.f32 %v4328, %v4548
    %4550 = vmatmul.bf16.gmra.mxu0 %v4471
    %v4551 = vpop.f32.mrf.mxu0
    %v4552 = vadd.f32 %v4328, %v4551
    %v4553 = vpop.f32.mrf.mxu0
    %v4554 = vadd.f32 %v4328, %v4553
    %4555 = vmatmul.bf16.gmra.mxu0 %v4474
    %v4556 = vpop.f32.mrf.mxu0
    %v4557 = vadd.f32 %v4328, %v4556
    %v4558 = vpop.f32.mrf.mxu0
    %v4559 = vadd.f32 %v4328, %v4558
    %4560 = vmatmul.bf16.gmra.mxu0 %v4477
    %v4561 = vpop.f32.mrf.mxu0
    %v4562 = vadd.f32 %v4328, %v4561
    %v4563 = vpop.f32.mrf.mxu0
    %v4564 = vadd.f32 %v4328, %v4563
    %4565 = vmatmul.bf16.gmra.mxu0 %v4480
    %v4566 = vpop.f32.mrf.mxu0
    %v4567 = vadd.f32 %v4328, %v4566
    %v4568 = vpop.f32.mrf.mxu0
    %v4569 = vadd.f32 %v4328, %v4568
    %4570 = vdwg.mxu0
    %4571 = vst.msk [vmem:[#allocation3] sm:$0xff] %vm259, %v4492
    %4572 = vst.msk [vmem:[#allocation3 + $0x8] sm:$0xff] %vm259, %v4494
    %4573 = vst.msk [vmem:[#allocation3 + $0x10] sm:$0xff] %vm259, %v4497
    %4574 = vst.msk [vmem:[#allocation3 + $0x18] sm:$0xff] %vm259, %v4499
    %4575 = vst.msk [vmem:[#allocation3 + $0x20] sm:$0xff] %vm259, %v4502
    %4576 = vst.msk [vmem:[#allocation3 + $0x28] sm:$0xff] %vm259, %v4504
    %4577 = vst.msk [vmem:[#allocation3 + $0x30] sm:$0xff] %vm259, %v4507
    %4578 = vst.msk [vmem:[#allocation3 + $0x38] sm:$0xff] %vm259, %v4509
    %4579 = vst.msk [vmem:[#allocation3 + $0x40] sm:$0xff] %vm259, %v4512
    %4580 = vst.msk [vmem:[#allocation3 + $0x48] sm:$0xff] %vm259, %v4514
    %4581 = vst.msk [vmem:[#allocation3 + $0x50] sm:$0xff] %vm259, %v4517
    %4582 = vst.msk [vmem:[#allocation3 + $0x58] sm:$0xff] %vm259, %v4519
    %4583 = vst.msk [vmem:[#allocation3 + $0x60] sm:$0xff] %vm259, %v4522
    %4584 = vst.msk [vmem:[#allocation3 + $0x68] sm:$0xff] %vm259, %v4524
    %4585 = vst.msk [vmem:[#allocation3 + $0x70] sm:$0xff] %vm259, %v4527
    %4586 = vst.msk [vmem:[#allocation3 + $0x78] sm:$0xff] %vm259, %v4529
    %4587 = vst.msk [vmem:[#allocation3 + $0x80] sm:$0xff] %vm259, %v4532
    %4588 = vst.msk [vmem:[#allocation3 + $0x88] sm:$0xff] %vm259, %v4534
    %4589 = vst.msk [vmem:[#allocation3 + $0x90] sm:$0xff] %vm259, %v4537
    %4590 = vst.msk [vmem:[#allocation3 + $0x98] sm:$0xff] %vm259, %v4539
    %4591 = vst.msk [vmem:[#allocation3 + $0xa0] sm:$0xff] %vm259, %v4542
    %4592 = vst.msk [vmem:[#allocation3 + $0xa8] sm:$0xff] %vm259, %v4544
    %4593 = vst.msk [vmem:[#allocation3 + $0xb0] sm:$0xff] %vm259, %v4547
    %4594 = vst.msk [vmem:[#allocation3 + $0xb8] sm:$0xff] %vm259, %v4549
    %4595 = vst.msk [vmem:[#allocation3 + $0xc0] sm:$0xff] %vm259, %v4552
    %4596 = vst.msk [vmem:[#allocation3 + $0xc8] sm:$0xff] %vm259, %v4554
    %4597 = vst.msk [vmem:[#allocation3 + $0xd0] sm:$0xff] %vm259, %v4557
    %4598 = vst.msk [vmem:[#allocation3 + $0xd8] sm:$0xff] %vm259, %v4559
    %4599 = vst.msk [vmem:[#allocation3 + $0xe0] sm:$0xff] %vm259, %v4562
    %4600 = vst.msk [vmem:[#allocation3 + $0xe8] sm:$0xff] %vm259, %v4564
    %4601 = vst.msk [vmem:[#allocation3 + $0xf0] sm:$0xff] %vm259, %v4567
    %4602 = vst.msk [vmem:[#allocation3 + $0xf8] sm:$0xff] %vm259, %v4569
    %v4603 = vld [vmem:[#allocation3] sm:$0xff]
    %v4604 = vld [vmem:[#allocation3 + $0x8] sm:$0xff]
    %v4613 = vunpack.c.l.b16 %v4285
    %v4614 = vunpack.c.l.b16 %v4286
    %v4615 = vunpack.c.l.b16 %v4287
    %v4616 = vunpack.c.l.b16 %v4288
    %v4617 = vunpack.c.l.b16 %v4289
    %v4618 = vunpack.c.l.b16 %v4290
    %v4619 = vunpack.c.l.b16 %v4291
    %v4620 = vunpack.c.l.b16 %v4292
    %v4621 = vpack.c.b16 %v4614, %v4613
    %v4622 = vpack.c.b16 %v4616, %v4615
    %v4623 = vpack.c.b16 %v4618, %v4617
    %v4624 = vpack.c.b16 %v4620, %v4619
    %4629 = vmatpush.bf16.msra.mxu0 0
    %4630 = vmatpush.bf16.msra.mxu0 0
    %4631 = vmatpush.bf16.msra.mxu0 0
    %4632 = vmatpush.bf16.msra.mxu0 0
    %4633 = vmatpush.bf16.msra.mxu0 %v4624
    %4634 = vmatpush.bf16.msra.mxu0 %v4623
    %4635 = vmatpush.bf16.msra.mxu0 %v4622
    %4636 = vmatpush.bf16.msra.mxu0 %v4621
    %4637 = vmatmul.bf16.gmra.mxu0 %v456
    %v4638 = vpop.f32.mrf.mxu0
    %v4639 = vadd.f32 0.0, %v4638
    %v4640 = vpop.f32.mrf.mxu0
    %v4641 = vadd.f32 0.0, %v4640
    %4642 = vdwg.mxu0
    %v4643 = vadd.f32 %v4603, %v4639
    %v4644 = vadd.f32 %v4604, %v4641
    %v4645 = vtanh.pop %v4643
    %v4646 = vtanh.pop %v4644
    %v4647 = vpack.c.bf16 %v4645, %v4645
    %v4648 = vpack.c.bf16 %v4646, %v4646
    %v4649 = vld [vmem:[#allocation3 + $0x10] sm:$0xff]
    %v4650 = vld [vmem:[#allocation3 + $0x18] sm:$0xff]
    %v4651 = vadd.f32 %v4649, %v4639
    %v4652 = vadd.f32 %v4650, %v4641
    %v4653 = vtanh.pop %v4651
    %v4654 = vtanh.pop %v4652
    %v4655 = vpack.c.bf16 %v4653, %v4653
    %v4656 = vpack.c.bf16 %v4654, %v4654
    %4657 = vst.msk [vmem:[#allocation2] sm:$0xf] %vm486, %v4647
    %4658 = vst.msk [vmem:[#allocation2 + $0x4] sm:$0xf] %vm486, %v4648
    %4659 = vst.msk [vmem:[#allocation2 + $0x8] sm:$0xf] %vm486, %v4655
    %4660 = vst.msk [vmem:[#allocation2 + $0xc] sm:$0xf] %vm486, %v4656
    %v4661 = vld [vmem:[#allocation3 + $0x20] sm:$0xff]
    %v4662 = vld [vmem:[#allocation3 + $0x28] sm:$0xff]
    %v4665 = vunpack.c.l.b16 %v4647
    %v4666 = vunpack.c.l.b16 %v4648
    %v4667 = vpack.c.b16 %v4666, %v4665
    %v4669 = vsel %vm259, %v4667, 0
    %4671 = vmatpush.bf16.msra.mxu0 0
    %4672 = vmatpush.bf16.msra.mxu0 0
    %4673 = vmatpush.bf16.msra.mxu0 0
    %4674 = vmatpush.bf16.msra.mxu0 0
    %4675 = vmatpush.bf16.msra.mxu0 %v4624
    %4676 = vmatpush.bf16.msra.mxu0 %v4623
    %4677 = vmatpush.bf16.msra.mxu0 %v4622
    %4678 = vmatpush.bf16.msra.mxu0 %v4621
    %4679 = vmatmul.bf16.gmra.mxu0 %v4669
    %v4680 = vpop.f32.mrf.mxu0
    %v4681 = vadd.f32 0.0, %v4680
    %v4682 = vpop.f32.mrf.mxu0
    %v4683 = vadd.f32 0.0, %v4682
    %4684 = vdwg.mxu0
    %v4685 = vadd.f32 %v4661, %v4681
    %v4686 = vadd.f32 %v4662, %v4683
    %v4687 = vtanh.pop %v4685
    %v4688 = vtanh.pop %v4686
    %v4689 = vpack.c.bf16 %v4687, %v4687
    %v4690 = vpack.c.bf16 %v4688, %v4688
    %v4691 = vld [vmem:[#allocation3 + $0x30] sm:$0xff]
    %v4692 = vld [vmem:[#allocation3 + $0x38] sm:$0xff]
    %v4695 = vunpack.c.l.b16 %v4655
    %v4696 = vunpack.c.l.b16 %v4656
    %v4697 = vpack.c.b16 %v4696, %v4695
    %v4699 = vsel %vm259, %v4697, 0
    %4701 = vmatpush.bf16.msra.mxu0 0
    %4702 = vmatpush.bf16.msra.mxu0 0
    %4703 = vmatpush.bf16.msra.mxu0 0
    %4704 = vmatpush.bf16.msra.mxu0 0
    %4705 = vmatpush.bf16.msra.mxu0 %v4624
    %4706 = vmatpush.bf16.msra.mxu0 %v4623
    %4707 = vmatpush.bf16.msra.mxu0 %v4622
    %4708 = vmatpush.bf16.msra.mxu0 %v4621
    %4709 = vmatmul.bf16.gmra.mxu0 %v4699
    %v4710 = vpop.f32.mrf.mxu0
    %v4711 = vadd.f32 0.0, %v4710
    %v4712 = vpop.f32.mrf.mxu0
    %v4713 = vadd.f32 0.0, %v4712
    %4714 = vdwg.mxu0
    %v4715 = vadd.f32 %v4691, %v4711
    %v4716 = vadd.f32 %v4692, %v4713
    %v4717 = vtanh.pop %v4715
    %v4718 = vtanh.pop %v4716
    %v4719 = vpack.c.bf16 %v4717, %v4717
    %v4720 = vpack.c.bf16 %v4718, %v4718
    %4721 = vst.msk [vmem:[#allocation2 + $0x10] sm:$0xf] %vm486, %v4689
    %4722 = vst.msk [vmem:[#allocation2 + $0x14] sm:$0xf] %vm486, %v4690
    %4723 = vst.msk [vmem:[#allocation2 + $0x18] sm:$0xf] %vm486, %v4719
    %4724 = vst.msk [vmem:[#allocation2 + $0x1c] sm:$0xf] %vm486, %v4720
    %v4725 = vld [vmem:[#allocation3 + $0x40] sm:$0xff]
    %v4726 = vld [vmem:[#allocation3 + $0x48] sm:$0xff]
    %v4729 = vunpack.c.l.b16 %v4689
    %v4730 = vunpack.c.l.b16 %v4690
    %v4731 = vpack.c.b16 %v4730, %v4729
    %v4733 = vsel %vm259, %v4731, 0
    %4735 = vmatpush.bf16.msra.mxu0 0
    %4736 = vmatpush.bf16.msra.mxu0 0
    %4737 = vmatpush.bf16.msra.mxu0 0
    %4738 = vmatpush.bf16.msra.mxu0 0
    %4739 = vmatpush.bf16.msra.mxu0 %v4624
    %4740 = vmatpush.bf16.msra.mxu0 %v4623
    %4741 = vmatpush.bf16.msra.mxu0 %v4622
    %4742 = vmatpush.bf16.msra.mxu0 %v4621
    %4743 = vmatmul.bf16.gmra.mxu0 %v4733
    %v4744 = vpop.f32.mrf.mxu0
    %v4745 = vadd.f32 0.0, %v4744
    %v4746 = vpop.f32.mrf.mxu0
    %v4747 = vadd.f32 0.0, %v4746
    %4748 = vdwg.mxu0
    %v4749 = vadd.f32 %v4725, %v4745
    %v4750 = vadd.f32 %v4726, %v4747
    %v4751 = vtanh.pop %v4749
    %v4752 = vtanh.pop %v4750
    %v4753 = vpack.c.bf16 %v4751, %v4751
    %v4754 = vpack.c.bf16 %v4752, %v4752
    %v4755 = vld [vmem:[#allocation3 + $0x50] sm:$0xff]
    %v4756 = vld [vmem:[#allocation3 + $0x58] sm:$0xff]
    %v4759 = vunpack.c.l.b16 %v4719
    %v4760 = vunpack.c.l.b16 %v4720
    %v4761 = vpack.c.b16 %v4760, %v4759
    %v4763 = vsel %vm259, %v4761, 0
    %4765 = vmatpush.bf16.msra.mxu0 0
    %4766 = vmatpush.bf16.msra.mxu0 0
    %4767 = vmatpush.bf16.msra.mxu0 0
    %4768 = vmatpush.bf16.msra.mxu0 0
    %4769 = vmatpush.bf16.msra.mxu0 %v4624
    %4770 = vmatpush.bf16.msra.mxu0 %v4623
    %4771 = vmatpush.bf16.msra.mxu0 %v4622
    %4772 = vmatpush.bf16.msra.mxu0 %v4621
    %4773 = vmatmul.bf16.gmra.mxu0 %v4763
    %v4774 = vpop.f32.mrf.mxu0
    %v4775 = vadd.f32 0.0, %v4774
    %v4776 = vpop.f32.mrf.mxu0
    %v4777 = vadd.f32 0.0, %v4776
    %4778 = vdwg.mxu0
    %v4779 = vadd.f32 %v4755, %v4775
    %v4780 = vadd.f32 %v4756, %v4777
    %v4781 = vtanh.pop %v4779
    %v4782 = vtanh.pop %v4780
    %v4783 = vpack.c.bf16 %v4781, %v4781
    %v4784 = vpack.c.bf16 %v4782, %v4782
    %4785 = vst.msk [vmem:[#allocation2 + $0x20] sm:$0xf] %vm486, %v4753
    %4786 = vst.msk [vmem:[#allocation2 + $0x24] sm:$0xf] %vm486, %v4754
    %4787 = vst.msk [vmem:[#allocation2 + $0x28] sm:$0xf] %vm486, %v4783
    %4788 = vst.msk [vmem:[#allocation2 + $0x2c] sm:$0xf] %vm486, %v4784
    %v4789 = vld [vmem:[#allocation3 + $0x60] sm:$0xff]
    %v4790 = vld [vmem:[#allocation3 + $0x68] sm:$0xff]
    %v4793 = vunpack.c.l.b16 %v4753
    %v4794 = vunpack.c.l.b16 %v4754
    %v4795 = vpack.c.b16 %v4794, %v4793
    %v4797 = vsel %vm259, %v4795, 0
    %4799 = vmatpush.bf16.msra.mxu0 0
    %4800 = vmatpush.bf16.msra.mxu0 0
    %4801 = vmatpush.bf16.msra.mxu0 0
    %4802 = vmatpush.bf16.msra.mxu0 0
    %4803 = vmatpush.bf16.msra.mxu0 %v4624
    %4804 = vmatpush.bf16.msra.mxu0 %v4623
    %4805 = vmatpush.bf16.msra.mxu0 %v4622
    %4806 = vmatpush.bf16.msra.mxu0 %v4621
    %4807 = vmatmul.bf16.gmra.mxu0 %v4797
    %v4808 = vpop.f32.mrf.mxu0
    %v4809 = vadd.f32 0.0, %v4808
    %v4810 = vpop.f32.mrf.mxu0
    %v4811 = vadd.f32 0.0, %v4810
    %4812 = vdwg.mxu0
    %v4813 = vadd.f32 %v4789, %v4809
    %v4814 = vadd.f32 %v4790, %v4811
    %v4815 = vtanh.pop %v4813
    %v4816 = vtanh.pop %v4814
    %v4817 = vpack.c.bf16 %v4815, %v4815
    %v4818 = vpack.c.bf16 %v4816, %v4816
    %v4819 = vld [vmem:[#allocation3 + $0x70] sm:$0xff]
    %v4820 = vld [vmem:[#allocation3 + $0x78] sm:$0xff]
    %v4823 = vunpack.c.l.b16 %v4783
    %v4824 = vunpack.c.l.b16 %v4784
    %v4825 = vpack.c.b16 %v4824, %v4823
    %v4827 = vsel %vm259, %v4825, 0
    %4829 = vmatpush.bf16.msra.mxu0 0
    %4830 = vmatpush.bf16.msra.mxu0 0
    %4831 = vmatpush.bf16.msra.mxu0 0
    %4832 = vmatpush.bf16.msra.mxu0 0
    %4833 = vmatpush.bf16.msra.mxu0 %v4624
    %4834 = vmatpush.bf16.msra.mxu0 %v4623
    %4835 = vmatpush.bf16.msra.mxu0 %v4622
    %4836 = vmatpush.bf16.msra.mxu0 %v4621
    %4837 = vmatmul.bf16.gmra.mxu0 %v4827
    %v4838 = vpop.f32.mrf.mxu0
    %v4839 = vadd.f32 0.0, %v4838
    %v4840 = vpop.f32.mrf.mxu0
    %v4841 = vadd.f32 0.0, %v4840
    %4842 = vdwg.mxu0
    %v4843 = vadd.f32 %v4819, %v4839
    %v4844 = vadd.f32 %v4820, %v4841
    %v4845 = vtanh.pop %v4843
    %v4846 = vtanh.pop %v4844
    %v4847 = vpack.c.bf16 %v4845, %v4845
    %v4848 = vpack.c.bf16 %v4846, %v4846
    %4849 = vst.msk [vmem:[#allocation2 + $0x30] sm:$0xf] %vm486, %v4817
    %4850 = vst.msk [vmem:[#allocation2 + $0x34] sm:$0xf] %vm486, %v4818
    %4851 = vst.msk [vmem:[#allocation2 + $0x38] sm:$0xf] %vm486, %v4847
    %4852 = vst.msk [vmem:[#allocation2 + $0x3c] sm:$0xf] %vm486, %v4848
    %v4853 = vld [vmem:[#allocation3 + $0x80] sm:$0xff]
    %v4854 = vld [vmem:[#allocation3 + $0x88] sm:$0xff]
    %v4857 = vunpack.c.l.b16 %v4817
    %v4858 = vunpack.c.l.b16 %v4818
    %v4859 = vpack.c.b16 %v4858, %v4857
    %v4861 = vsel %vm259, %v4859, 0
    %4863 = vmatpush.bf16.msra.mxu0 0
    %4864 = vmatpush.bf16.msra.mxu0 0
    %4865 = vmatpush.bf16.msra.mxu0 0
    %4866 = vmatpush.bf16.msra.mxu0 0
    %4867 = vmatpush.bf16.msra.mxu0 %v4624
    %4868 = vmatpush.bf16.msra.mxu0 %v4623
    %4869 = vmatpush.bf16.msra.mxu0 %v4622
    %4870 = vmatpush.bf16.msra.mxu0 %v4621
    %4871 = vmatmul.bf16.gmra.mxu0 %v4861
    %v4872 = vpop.f32.mrf.mxu0
    %v4873 = vadd.f32 0.0, %v4872
    %v4874 = vpop.f32.mrf.mxu0
    %v4875 = vadd.f32 0.0, %v4874
    %4876 = vdwg.mxu0
    %v4877 = vadd.f32 %v4853, %v4873
    %v4878 = vadd.f32 %v4854, %v4875
    %v4879 = vtanh.pop %v4877
    %v4880 = vtanh.pop %v4878
    %v4881 = vpack.c.bf16 %v4879, %v4879
    %v4882 = vpack.c.bf16 %v4880, %v4880
    %v4883 = vld [vmem:[#allocation3 + $0x90] sm:$0xff]
    %v4884 = vld [vmem:[#allocation3 + $0x98] sm:$0xff]
    %v4887 = vunpack.c.l.b16 %v4847
    %v4888 = vunpack.c.l.b16 %v4848
    %v4889 = vpack.c.b16 %v4888, %v4887
    %v4891 = vsel %vm259, %v4889, 0
    %4893 = vmatpush.bf16.msra.mxu0 0
    %4894 = vmatpush.bf16.msra.mxu0 0
    %4895 = vmatpush.bf16.msra.mxu0 0
    %4896 = vmatpush.bf16.msra.mxu0 0
    %4897 = vmatpush.bf16.msra.mxu0 %v4624
    %4898 = vmatpush.bf16.msra.mxu0 %v4623
    %4899 = vmatpush.bf16.msra.mxu0 %v4622
    %4900 = vmatpush.bf16.msra.mxu0 %v4621
    %4901 = vmatmul.bf16.gmra.mxu0 %v4891
    %v4902 = vpop.f32.mrf.mxu0
    %v4903 = vadd.f32 0.0, %v4902
    %v4904 = vpop.f32.mrf.mxu0
    %v4905 = vadd.f32 0.0, %v4904
    %4906 = vdwg.mxu0
    %v4907 = vadd.f32 %v4883, %v4903
    %v4908 = vadd.f32 %v4884, %v4905
    %v4909 = vtanh.pop %v4907
    %v4910 = vtanh.pop %v4908
    %v4911 = vpack.c.bf16 %v4909, %v4909
    %v4912 = vpack.c.bf16 %v4910, %v4910
    %4913 = vst.msk [vmem:[#allocation2 + $0x40] sm:$0xf] %vm486, %v4881
    %4914 = vst.msk [vmem:[#allocation2 + $0x44] sm:$0xf] %vm486, %v4882
    %4915 = vst.msk [vmem:[#allocation2 + $0x48] sm:$0xf] %vm486, %v4911
    %4916 = vst.msk [vmem:[#allocation2 + $0x4c] sm:$0xf] %vm486, %v4912
    %v4917 = vld [vmem:[#allocation3 + $0xa0] sm:$0xff]
    %v4918 = vld [vmem:[#allocation3 + $0xa8] sm:$0xff]
    %v4921 = vunpack.c.l.b16 %v4881
    %v4922 = vunpack.c.l.b16 %v4882
    %v4923 = vpack.c.b16 %v4922, %v4921
    %v4925 = vsel %vm259, %v4923, 0
    %4927 = vmatpush.bf16.msra.mxu0 0
    %4928 = vmatpush.bf16.msra.mxu0 0
    %4929 = vmatpush.bf16.msra.mxu0 0
    %4930 = vmatpush.bf16.msra.mxu0 0
    %4931 = vmatpush.bf16.msra.mxu0 %v4624
    %4932 = vmatpush.bf16.msra.mxu0 %v4623
    %4933 = vmatpush.bf16.msra.mxu0 %v4622
    %4934 = vmatpush.bf16.msra.mxu0 %v4621
    %4935 = vmatmul.bf16.gmra.mxu0 %v4925
    %v4936 = vpop.f32.mrf.mxu0
    %v4937 = vadd.f32 0.0, %v4936
    %v4938 = vpop.f32.mrf.mxu0
    %v4939 = vadd.f32 0.0, %v4938
    %4940 = vdwg.mxu0
    %v4941 = vadd.f32 %v4917, %v4937
    %v4942 = vadd.f32 %v4918, %v4939
    %v4943 = vtanh.pop %v4941
    %v4944 = vtanh.pop %v4942
    %v4945 = vpack.c.bf16 %v4943, %v4943
    %v4946 = vpack.c.bf16 %v4944, %v4944
    %v4947 = vld [vmem:[#allocation3 + $0xb0] sm:$0xff]
    %v4948 = vld [vmem:[#allocation3 + $0xb8] sm:$0xff]
    %v4951 = vunpack.c.l.b16 %v4911
    %v4952 = vunpack.c.l.b16 %v4912
    %v4953 = vpack.c.b16 %v4952, %v4951
    %v4955 = vsel %vm259, %v4953, 0
    %4957 = vmatpush.bf16.msra.mxu0 0
    %4958 = vmatpush.bf16.msra.mxu0 0
    %4959 = vmatpush.bf16.msra.mxu0 0
    %4960 = vmatpush.bf16.msra.mxu0 0
    %4961 = vmatpush.bf16.msra.mxu0 %v4624
    %4962 = vmatpush.bf16.msra.mxu0 %v4623
    %4963 = vmatpush.bf16.msra.mxu0 %v4622
    %4964 = vmatpush.bf16.msra.mxu0 %v4621
    %4965 = vmatmul.bf16.gmra.mxu0 %v4955
    %v4966 = vpop.f32.mrf.mxu0
    %v4967 = vadd.f32 0.0, %v4966
    %v4968 = vpop.f32.mrf.mxu0
    %v4969 = vadd.f32 0.0, %v4968
    %4970 = vdwg.mxu0
    %v4971 = vadd.f32 %v4947, %v4967
    %v4972 = vadd.f32 %v4948, %v4969
    %v4973 = vtanh.pop %v4971
    %v4974 = vtanh.pop %v4972
    %v4975 = vpack.c.bf16 %v4973, %v4973
    %v4976 = vpack.c.bf16 %v4974, %v4974
    %4977 = vst.msk [vmem:[#allocation2 + $0x50] sm:$0xf] %vm486, %v4945
    %4978 = vst.msk [vmem:[#allocation2 + $0x54] sm:$0xf] %vm486, %v4946
    %4979 = vst.msk [vmem:[#allocation2 + $0x58] sm:$0xf] %vm486, %v4975
    %4980 = vst.msk [vmem:[#allocation2 + $0x5c] sm:$0xf] %vm486, %v4976
    %v4981 = vld [vmem:[#allocation3 + $0xc0] sm:$0xff]
    %v4982 = vld [vmem:[#allocation3 + $0xc8] sm:$0xff]
    %v4985 = vunpack.c.l.b16 %v4945
    %v4986 = vunpack.c.l.b16 %v4946
    %v4987 = vpack.c.b16 %v4986, %v4985
    %v4989 = vsel %vm259, %v4987, 0
    %4991 = vmatpush.bf16.msra.mxu0 0
    %4992 = vmatpush.bf16.msra.mxu0 0
    %4993 = vmatpush.bf16.msra.mxu0 0
    %4994 = vmatpush.bf16.msra.mxu0 0
    %4995 = vmatpush.bf16.msra.mxu0 %v4624
    %4996 = vmatpush.bf16.msra.mxu0 %v4623
    %4997 = vmatpush.bf16.msra.mxu0 %v4622
    %4998 = vmatpush.bf16.msra.mxu0 %v4621
    %4999 = vmatmul.bf16.gmra.mxu0 %v4989
    %v5000 = vpop.f32.mrf.mxu0
    %v5001 = vadd.f32 0.0, %v5000
    %v5002 = vpop.f32.mrf.mxu0
    %v5003 = vadd.f32 0.0, %v5002
    %5004 = vdwg.mxu0
    %v5005 = vadd.f32 %v4981, %v5001
    %v5006 = vadd.f32 %v4982, %v5003
    %v5007 = vtanh.pop %v5005
    %v5008 = vtanh.pop %v5006
    %v5009 = vpack.c.bf16 %v5007, %v5007
    %v5010 = vpack.c.bf16 %v5008, %v5008
    %v5011 = vld [vmem:[#allocation3 + $0xd0] sm:$0xff]
    %v5012 = vld [vmem:[#allocation3 + $0xd8] sm:$0xff]
    %v5015 = vunpack.c.l.b16 %v4975
    %v5016 = vunpack.c.l.b16 %v4976
    %v5017 = vpack.c.b16 %v5016, %v5015
    %v5019 = vsel %vm259, %v5017, 0
    %5021 = vmatpush.bf16.msra.mxu0 0
    %5022 = vmatpush.bf16.msra.mxu0 0
    %5023 = vmatpush.bf16.msra.mxu0 0
    %5024 = vmatpush.bf16.msra.mxu0 0
    %5025 = vmatpush.bf16.msra.mxu0 %v4624
    %5026 = vmatpush.bf16.msra.mxu0 %v4623
    %5027 = vmatpush.bf16.msra.mxu0 %v4622
    %5028 = vmatpush.bf16.msra.mxu0 %v4621
    %5029 = vmatmul.bf16.gmra.mxu0 %v5019
    %v5030 = vpop.f32.mrf.mxu0
    %v5031 = vadd.f32 0.0, %v5030
    %v5032 = vpop.f32.mrf.mxu0
    %v5033 = vadd.f32 0.0, %v5032
    %5034 = vdwg.mxu0
    %v5035 = vadd.f32 %v5011, %v5031
    %v5036 = vadd.f32 %v5012, %v5033
    %v5037 = vtanh.pop %v5035
    %v5038 = vtanh.pop %v5036
    %v5039 = vpack.c.bf16 %v5037, %v5037
    %v5040 = vpack.c.bf16 %v5038, %v5038
    %5041 = vst.msk [vmem:[#allocation2 + $0x60] sm:$0xf] %vm486, %v5009
    %5042 = vst.msk [vmem:[#allocation2 + $0x64] sm:$0xf] %vm486, %v5010
    %5043 = vst.msk [vmem:[#allocation2 + $0x68] sm:$0xf] %vm486, %v5039
    %5044 = vst.msk [vmem:[#allocation2 + $0x6c] sm:$0xf] %vm486, %v5040
    %v5045 = vld [vmem:[#allocation3 + $0xe0] sm:$0xff]
    %v5046 = vld [vmem:[#allocation3 + $0xe8] sm:$0xff]
    %v5049 = vunpack.c.l.b16 %v5009
    %v5050 = vunpack.c.l.b16 %v5010
    %v5051 = vpack.c.b16 %v5050, %v5049
    %v5053 = vsel %vm259, %v5051, 0
    %5055 = vmatpush.bf16.msra.mxu0 0
    %5056 = vmatpush.bf16.msra.mxu0 0
    %5057 = vmatpush.bf16.msra.mxu0 0
    %5058 = vmatpush.bf16.msra.mxu0 0
    %5059 = vmatpush.bf16.msra.mxu0 %v4624
    %5060 = vmatpush.bf16.msra.mxu0 %v4623
    %5061 = vmatpush.bf16.msra.mxu0 %v4622
    %5062 = vmatpush.bf16.msra.mxu0 %v4621
    %5063 = vmatmul.bf16.gmra.mxu0 %v5053
    %v5064 = vpop.f32.mrf.mxu0
    %v5065 = vadd.f32 0.0, %v5064
    %v5066 = vpop.f32.mrf.mxu0
    %v5067 = vadd.f32 0.0, %v5066
    %5068 = vdwg.mxu0
    %v5069 = vadd.f32 %v5045, %v5065
    %v5070 = vadd.f32 %v5046, %v5067
    %v5071 = vtanh.pop %v5069
    %v5072 = vtanh.pop %v5070
    %v5073 = vpack.c.bf16 %v5071, %v5071
    %v5074 = vpack.c.bf16 %v5072, %v5072
    %v5075 = vld [vmem:[#allocation3 + $0xf0] sm:$0xff]
    %v5076 = vld [vmem:[#allocation3 + $0xf8] sm:$0xff]
    %v5079 = vunpack.c.l.b16 %v5039
    %v5080 = vunpack.c.l.b16 %v5040
    %v5081 = vpack.c.b16 %v5080, %v5079
    %v5083 = vsel %vm259, %v5081, 0
    %5085 = vmatpush.bf16.msra.mxu0 0
    %5086 = vmatpush.bf16.msra.mxu0 0
    %5087 = vmatpush.bf16.msra.mxu0 0
    %5088 = vmatpush.bf16.msra.mxu0 0
    %5089 = vmatpush.bf16.msra.mxu0 %v4624
    %5090 = vmatpush.bf16.msra.mxu0 %v4623
    %5091 = vmatpush.bf16.msra.mxu0 %v4622
    %5092 = vmatpush.bf16.msra.mxu0 %v4621
    %5093 = vmatmul.bf16.gmra.mxu0 %v5083
    %v5094 = vpop.f32.mrf.mxu0
    %v5095 = vadd.f32 0.0, %v5094
    %v5096 = vpop.f32.mrf.mxu0
    %v5097 = vadd.f32 0.0, %v5096
    %5098 = vdwg.mxu0
    %v5099 = vadd.f32 %v5075, %v5095
    %v5100 = vadd.f32 %v5076, %v5097
    %v5101 = vtanh.pop %v5099
    %v5102 = vtanh.pop %v5100
    %v5103 = vpack.c.bf16 %v5101, %v5101
    %v5104 = vpack.c.bf16 %v5102, %v5102
    %5105 = vst.msk [vmem:[#allocation2 + $0x70] sm:$0xf] %vm486, %v5073
    %5106 = vst.msk [vmem:[#allocation2 + $0x74] sm:$0xf] %vm486, %v5074
    %5107 = vst.msk [vmem:[#allocation2 + $0x78] sm:$0xf] %vm486, %v5103
    %5108 = vst.msk [vmem:[#allocation2 + $0x7c] sm:$0xf] %vm486, %v5104
    %s5109 = scalar_lea.vmem [#allocation7], 192
    %v5110 = vld [vmem:[%s5109] sm:$0xf]
    %v5111 = vld [vmem:[%s5109 + $0x4] sm:$0xf]
    %v5112 = vld [vmem:[%s5109 + $0x8] sm:$0xf]
    %v5113 = vld [vmem:[%s5109 + $0xc] sm:$0xf]
    %v5114 = vld [vmem:[%s5109 + $0x10] sm:$0xf]
    %v5115 = vld [vmem:[%s5109 + $0x14] sm:$0xf]
    %v5116 = vld [vmem:[%s5109 + $0x18] sm:$0xf]
    %v5117 = vld [vmem:[%s5109 + $0x1c] sm:$0xf]
    %s5118 = scalar_lea.vmem [#allocation9], 192
    %v5119 = vld [vmem:[%s5118] sm:$0xf]
    %v5120 = vld [vmem:[%s5118 + $0x4] sm:$0xf]
    %v5121 = vld [vmem:[%s5118 + $0x8] sm:$0xf]
    %v5122 = vld [vmem:[%s5118 + $0xc] sm:$0xf]
    %v5123 = vld [vmem:[%s5118 + $0x10] sm:$0xf]
    %v5124 = vld [vmem:[%s5118 + $0x14] sm:$0xf]
    %v5125 = vld [vmem:[%s5118 + $0x18] sm:$0xf]
    %v5126 = vld [vmem:[%s5118 + $0x1c] sm:$0xf]
    %s5127 = scalar_lea.vmem [#allocation10], 6
    %v5128 = vld [vmem:[%s5127] sm:$0x1]
    %v5129 = vld [vmem:[#allocation2] sm:$0xf]
    %v5130 = vld [vmem:[#allocation2 + $0x4] sm:$0xf]
    %v5131 = vld [vmem:[#allocation2 + $0x8] sm:$0xf]
    %v5132 = vld [vmem:[#allocation2 + $0xc] sm:$0xf]
    %v5133 = vld [vmem:[#allocation2 + $0x10] sm:$0xf]
    %v5134 = vld [vmem:[#allocation2 + $0x14] sm:$0xf]
    %v5135 = vld [vmem:[#allocation2 + $0x18] sm:$0xf]
    %v5136 = vld [vmem:[#allocation2 + $0x1c] sm:$0xf]
    %v5137 = vld [vmem:[#allocation2 + $0x20] sm:$0xf]
    %v5138 = vld [vmem:[#allocation2 + $0x24] sm:$0xf]
    %v5139 = vld [vmem:[#allocation2 + $0x28] sm:$0xf]
    %v5140 = vld [vmem:[#allocation2 + $0x2c] sm:$0xf]
    %v5141 = vld [vmem:[#allocation2 + $0x30] sm:$0xf]
    %v5142 = vld [vmem:[#allocation2 + $0x34] sm:$0xf]
    %v5143 = vld [vmem:[#allocation2 + $0x38] sm:$0xf]
    %v5144 = vld [vmem:[#allocation2 + $0x3c] sm:$0xf]
    %v5145 = vld [vmem:[#allocation2 + $0x40] sm:$0xf]
    %v5146 = vld [vmem:[#allocation2 + $0x44] sm:$0xf]
    %v5147 = vld [vmem:[#allocation2 + $0x48] sm:$0xf]
    %v5148 = vld [vmem:[#allocation2 + $0x4c] sm:$0xf]
    %v5149 = vld [vmem:[#allocation2 + $0x50] sm:$0xf]
    %v5150 = vld [vmem:[#allocation2 + $0x54] sm:$0xf]
    %v5151 = vld [vmem:[#allocation2 + $0x58] sm:$0xf]
    %v5152 = vld [vmem:[#allocation2 + $0x5c] sm:$0xf]
    %v5153 = vld [vmem:[#allocation2 + $0x60] sm:$0xf]
    %v5154 = vld [vmem:[#allocation2 + $0x64] sm:$0xf]
    %v5155 = vld [vmem:[#allocation2 + $0x68] sm:$0xf]
    %v5156 = vld [vmem:[#allocation2 + $0x6c] sm:$0xf]
    %v5157 = vld [vmem:[#allocation2 + $0x70] sm:$0xf]
    %v5158 = vld [vmem:[#allocation2 + $0x74] sm:$0xf]
    %v5159 = vld [vmem:[#allocation2 + $0x78] sm:$0xf]
    %v5160 = vld [vmem:[#allocation2 + $0x7c] sm:$0xf]
    %v5162 = vperm.slane %v5128, 0
    %v5196 = vunpack.c.l.b16 %v5129
    %v5197 = vunpack.c.l.b16 %v5130
    %v5198 = vunpack.c.l.b16 %v5131
    %v5199 = vunpack.c.l.b16 %v5132
    %v5200 = vunpack.c.l.b16 %v5133
    %v5201 = vunpack.c.l.b16 %v5134
    %v5202 = vunpack.c.l.b16 %v5135
    %v5203 = vunpack.c.l.b16 %v5136
    %v5204 = vunpack.c.l.b16 %v5137
    %v5205 = vunpack.c.l.b16 %v5138
    %v5206 = vunpack.c.l.b16 %v5139
    %v5207 = vunpack.c.l.b16 %v5140
    %v5208 = vunpack.c.l.b16 %v5141
    %v5209 = vunpack.c.l.b16 %v5142
    %v5210 = vunpack.c.l.b16 %v5143
    %v5211 = vunpack.c.l.b16 %v5144
    %v5212 = vunpack.c.l.b16 %v5145
    %v5213 = vunpack.c.l.b16 %v5146
    %v5214 = vunpack.c.l.b16 %v5147
    %v5215 = vunpack.c.l.b16 %v5148
    %v5216 = vunpack.c.l.b16 %v5149
    %v5217 = vunpack.c.l.b16 %v5150
    %v5218 = vunpack.c.l.b16 %v5151
    %v5219 = vunpack.c.l.b16 %v5152
    %v5220 = vunpack.c.l.b16 %v5153
    %v5221 = vunpack.c.l.b16 %v5154
    %v5222 = vunpack.c.l.b16 %v5155
    %v5223 = vunpack.c.l.b16 %v5156
    %v5224 = vunpack.c.l.b16 %v5157
    %v5225 = vunpack.c.l.b16 %v5158
    %v5226 = vunpack.c.l.b16 %v5159
    %v5227 = vunpack.c.l.b16 %v5160
    %v5228 = vpack.c.b16 %v5197, %v5196
    %v5229 = vpack.c.b16 %v5199, %v5198
    %v5230 = vpack.c.b16 %v5201, %v5200
    %v5231 = vpack.c.b16 %v5203, %v5202
    %v5232 = vpack.c.b16 %v5205, %v5204
    %v5233 = vpack.c.b16 %v5207, %v5206
    %v5234 = vpack.c.b16 %v5209, %v5208
    %v5235 = vpack.c.b16 %v5211, %v5210
    %v5236 = vpack.c.b16 %v5213, %v5212
    %v5237 = vpack.c.b16 %v5215, %v5214
    %v5238 = vpack.c.b16 %v5217, %v5216
    %v5239 = vpack.c.b16 %v5219, %v5218
    %v5240 = vpack.c.b16 %v5221, %v5220
    %v5241 = vpack.c.b16 %v5223, %v5222
    %v5242 = vpack.c.b16 %v5225, %v5224
    %v5243 = vpack.c.b16 %v5227, %v5226
    %v5252 = vunpack.c.l.b16 %v5110
    %v5253 = vunpack.c.l.b16 %v5111
    %v5254 = vunpack.c.l.b16 %v5112
    %v5255 = vunpack.c.l.b16 %v5113
    %v5256 = vunpack.c.l.b16 %v5114
    %v5257 = vunpack.c.l.b16 %v5115
    %v5258 = vunpack.c.l.b16 %v5116
    %v5259 = vunpack.c.l.b16 %v5117
    %v5260 = vpack.c.b16 %v5253, %v5252
    %v5261 = vpack.c.b16 %v5255, %v5254
    %v5262 = vpack.c.b16 %v5257, %v5256
    %v5263 = vpack.c.b16 %v5259, %v5258
    %v5269 = vsel %vm259, %v5228, 0
    %v5272 = vsel %vm259, %v5229, 0
    %v5275 = vsel %vm259, %v5230, 0
    %v5278 = vsel %vm259, %v5231, 0
    %v5281 = vsel %vm259, %v5232, 0
    %v5284 = vsel %vm259, %v5233, 0
    %v5287 = vsel %vm259, %v5234, 0
    %v5290 = vsel %vm259, %v5235, 0
    %v5293 = vsel %vm259, %v5236, 0
    %v5296 = vsel %vm259, %v5237, 0
    %v5299 = vsel %vm259, %v5238, 0
    %v5302 = vsel %vm259, %v5239, 0
    %v5305 = vsel %vm259, %v5240, 0
    %v5308 = vsel %vm259, %v5241, 0
    %v5311 = vsel %vm259, %v5242, 0
    %v5314 = vsel %vm259, %v5243, 0
    %5316 = vmatpush.bf16.msra.mxu0 0
    %5317 = vmatpush.bf16.msra.mxu0 0
    %5318 = vmatpush.bf16.msra.mxu0 0
    %5319 = vmatpush.bf16.msra.mxu0 0
    %5320 = vmatpush.bf16.msra.mxu0 %v5263
    %5321 = vmatpush.bf16.msra.mxu0 %v5262
    %5322 = vmatpush.bf16.msra.mxu0 %v5261
    %5323 = vmatpush.bf16.msra.mxu0 %v5260
    %5324 = vmatmul.bf16.gmra.mxu0 %v5269
    %v5325 = vpop.f32.mrf.mxu0
    %v5326 = vadd.f32 %v5162, %v5325
    %v5327 = vpop.f32.mrf.mxu0
    %v5328 = vadd.f32 %v5162, %v5327
    %5329 = vmatmul.bf16.gmra.mxu0 %v5272
    %v5330 = vpop.f32.mrf.mxu0
    %v5331 = vadd.f32 %v5162, %v5330
    %v5332 = vpop.f32.mrf.mxu0
    %v5333 = vadd.f32 %v5162, %v5332
    %5334 = vmatmul.bf16.gmra.mxu0 %v5275
    %v5335 = vpop.f32.mrf.mxu0
    %v5336 = vadd.f32 %v5162, %v5335
    %v5337 = vpop.f32.mrf.mxu0
    %v5338 = vadd.f32 %v5162, %v5337
    %5339 = vmatmul.bf16.gmra.mxu0 %v5278
    %v5340 = vpop.f32.mrf.mxu0
    %v5341 = vadd.f32 %v5162, %v5340
    %v5342 = vpop.f32.mrf.mxu0
    %v5343 = vadd.f32 %v5162, %v5342
    %5344 = vmatmul.bf16.gmra.mxu0 %v5281
    %v5345 = vpop.f32.mrf.mxu0
    %v5346 = vadd.f32 %v5162, %v5345
    %v5347 = vpop.f32.mrf.mxu0
    %v5348 = vadd.f32 %v5162, %v5347
    %5349 = vmatmul.bf16.gmra.mxu0 %v5284
    %v5350 = vpop.f32.mrf.mxu0
    %v5351 = vadd.f32 %v5162, %v5350
    %v5352 = vpop.f32.mrf.mxu0
    %v5353 = vadd.f32 %v5162, %v5352
    %5354 = vmatmul.bf16.gmra.mxu0 %v5287
    %v5355 = vpop.f32.mrf.mxu0
    %v5356 = vadd.f32 %v5162, %v5355
    %v5357 = vpop.f32.mrf.mxu0
    %v5358 = vadd.f32 %v5162, %v5357
    %5359 = vmatmul.bf16.gmra.mxu0 %v5290
    %v5360 = vpop.f32.mrf.mxu0
    %v5361 = vadd.f32 %v5162, %v5360
    %v5362 = vpop.f32.mrf.mxu0
    %v5363 = vadd.f32 %v5162, %v5362
    %5364 = vmatmul.bf16.gmra.mxu0 %v5293
    %v5365 = vpop.f32.mrf.mxu0
    %v5366 = vadd.f32 %v5162, %v5365
    %v5367 = vpop.f32.mrf.mxu0
    %v5368 = vadd.f32 %v5162, %v5367
    %5369 = vmatmul.bf16.gmra.mxu0 %v5296
    %v5370 = vpop.f32.mrf.mxu0
    %v5371 = vadd.f32 %v5162, %v5370
    %v5372 = vpop.f32.mrf.mxu0
    %v5373 = vadd.f32 %v5162, %v5372
    %5374 = vmatmul.bf16.gmra.mxu0 %v5299
    %v5375 = vpop.f32.mrf.mxu0
    %v5376 = vadd.f32 %v5162, %v5375
    %v5377 = vpop.f32.mrf.mxu0
    %v5378 = vadd.f32 %v5162, %v5377
    %5379 = vmatmul.bf16.gmra.mxu0 %v5302
    %v5380 = vpop.f32.mrf.mxu0
    %v5381 = vadd.f32 %v5162, %v5380
    %v5382 = vpop.f32.mrf.mxu0
    %v5383 = vadd.f32 %v5162, %v5382
    %5384 = vmatmul.bf16.gmra.mxu0 %v5305
    %v5385 = vpop.f32.mrf.mxu0
    %v5386 = vadd.f32 %v5162, %v5385
    %v5387 = vpop.f32.mrf.mxu0
    %v5388 = vadd.f32 %v5162, %v5387
    %5389 = vmatmul.bf16.gmra.mxu0 %v5308
    %v5390 = vpop.f32.mrf.mxu0
    %v5391 = vadd.f32 %v5162, %v5390
    %v5392 = vpop.f32.mrf.mxu0
    %v5393 = vadd.f32 %v5162, %v5392
    %5394 = vmatmul.bf16.gmra.mxu0 %v5311
    %v5395 = vpop.f32.mrf.mxu0
    %v5396 = vadd.f32 %v5162, %v5395
    %v5397 = vpop.f32.mrf.mxu0
    %v5398 = vadd.f32 %v5162, %v5397
    %5399 = vmatmul.bf16.gmra.mxu0 %v5314
    %v5400 = vpop.f32.mrf.mxu0
    %v5401 = vadd.f32 %v5162, %v5400
    %v5402 = vpop.f32.mrf.mxu0
    %v5403 = vadd.f32 %v5162, %v5402
    %5404 = vdwg.mxu0
    %5405 = vst.msk [vmem:[#allocation3] sm:$0xff] %vm259, %v5326
    %5406 = vst.msk [vmem:[#allocation3 + $0x8] sm:$0xff] %vm259, %v5328
    %5407 = vst.msk [vmem:[#allocation3 + $0x10] sm:$0xff] %vm259, %v5331
    %5408 = vst.msk [vmem:[#allocation3 + $0x18] sm:$0xff] %vm259, %v5333
    %5409 = vst.msk [vmem:[#allocation3 + $0x20] sm:$0xff] %vm259, %v5336
    %5410 = vst.msk [vmem:[#allocation3 + $0x28] sm:$0xff] %vm259, %v5338
    %5411 = vst.msk [vmem:[#allocation3 + $0x30] sm:$0xff] %vm259, %v5341
    %5412 = vst.msk [vmem:[#allocation3 + $0x38] sm:$0xff] %vm259, %v5343
    %5413 = vst.msk [vmem:[#allocation3 + $0x40] sm:$0xff] %vm259, %v5346
    %5414 = vst.msk [vmem:[#allocation3 + $0x48] sm:$0xff] %vm259, %v5348
    %5415 = vst.msk [vmem:[#allocation3 + $0x50] sm:$0xff] %vm259, %v5351
    %5416 = vst.msk [vmem:[#allocation3 + $0x58] sm:$0xff] %vm259, %v5353
    %5417 = vst.msk [vmem:[#allocation3 + $0x60] sm:$0xff] %vm259, %v5356
    %5418 = vst.msk [vmem:[#allocation3 + $0x68] sm:$0xff] %vm259, %v5358
    %5419 = vst.msk [vmem:[#allocation3 + $0x70] sm:$0xff] %vm259, %v5361
    %5420 = vst.msk [vmem:[#allocation3 + $0x78] sm:$0xff] %vm259, %v5363
    %5421 = vst.msk [vmem:[#allocation3 + $0x80] sm:$0xff] %vm259, %v5366
    %5422 = vst.msk [vmem:[#allocation3 + $0x88] sm:$0xff] %vm259, %v5368
    %5423 = vst.msk [vmem:[#allocation3 + $0x90] sm:$0xff] %vm259, %v5371
    %5424 = vst.msk [vmem:[#allocation3 + $0x98] sm:$0xff] %vm259, %v5373
    %5425 = vst.msk [vmem:[#allocation3 + $0xa0] sm:$0xff] %vm259, %v5376
    %5426 = vst.msk [vmem:[#allocation3 + $0xa8] sm:$0xff] %vm259, %v5378
    %5427 = vst.msk [vmem:[#allocation3 + $0xb0] sm:$0xff] %vm259, %v5381
    %5428 = vst.msk [vmem:[#allocation3 + $0xb8] sm:$0xff] %vm259, %v5383
    %5429 = vst.msk [vmem:[#allocation3 + $0xc0] sm:$0xff] %vm259, %v5386
    %5430 = vst.msk [vmem:[#allocation3 + $0xc8] sm:$0xff] %vm259, %v5388
    %5431 = vst.msk [vmem:[#allocation3 + $0xd0] sm:$0xff] %vm259, %v5391
    %5432 = vst.msk [vmem:[#allocation3 + $0xd8] sm:$0xff] %vm259, %v5393
    %5433 = vst.msk [vmem:[#allocation3 + $0xe0] sm:$0xff] %vm259, %v5396
    %5434 = vst.msk [vmem:[#allocation3 + $0xe8] sm:$0xff] %vm259, %v5398
    %5435 = vst.msk [vmem:[#allocation3 + $0xf0] sm:$0xff] %vm259, %v5401
    %5436 = vst.msk [vmem:[#allocation3 + $0xf8] sm:$0xff] %vm259, %v5403
    %v5437 = vld [vmem:[#allocation3] sm:$0xff]
    %v5438 = vld [vmem:[#allocation3 + $0x8] sm:$0xff]
    %v5447 = vunpack.c.l.b16 %v5119
    %v5448 = vunpack.c.l.b16 %v5120
    %v5449 = vunpack.c.l.b16 %v5121
    %v5450 = vunpack.c.l.b16 %v5122
    %v5451 = vunpack.c.l.b16 %v5123
    %v5452 = vunpack.c.l.b16 %v5124
    %v5453 = vunpack.c.l.b16 %v5125
    %v5454 = vunpack.c.l.b16 %v5126
    %v5455 = vpack.c.b16 %v5448, %v5447
    %v5456 = vpack.c.b16 %v5450, %v5449
    %v5457 = vpack.c.b16 %v5452, %v5451
    %v5458 = vpack.c.b16 %v5454, %v5453
    %5463 = vmatpush.bf16.msra.mxu0 0
    %5464 = vmatpush.bf16.msra.mxu0 0
    %5465 = vmatpush.bf16.msra.mxu0 0
    %5466 = vmatpush.bf16.msra.mxu0 0
    %5467 = vmatpush.bf16.msra.mxu0 %v5458
    %5468 = vmatpush.bf16.msra.mxu0 %v5457
    %5469 = vmatpush.bf16.msra.mxu0 %v5456
    %5470 = vmatpush.bf16.msra.mxu0 %v5455
    %5471 = vmatmul.bf16.gmra.mxu0 %v456
    %v5472 = vpop.f32.mrf.mxu0
    %v5473 = vadd.f32 0.0, %v5472
    %v5474 = vpop.f32.mrf.mxu0
    %v5475 = vadd.f32 0.0, %v5474
    %5476 = vdwg.mxu0
    %v5477 = vadd.f32 %v5437, %v5473
    %v5478 = vadd.f32 %v5438, %v5475
    %v5479 = vtanh.pop %v5477
    %v5480 = vtanh.pop %v5478
    %v5481 = vpack.c.bf16 %v5479, %v5479
    %v5482 = vpack.c.bf16 %v5480, %v5480
    %v5483 = vld [vmem:[#allocation3 + $0x10] sm:$0xff]
    %v5484 = vld [vmem:[#allocation3 + $0x18] sm:$0xff]
    %v5485 = vadd.f32 %v5483, %v5473
    %v5486 = vadd.f32 %v5484, %v5475
    %v5487 = vtanh.pop %v5485
    %v5488 = vtanh.pop %v5486
    %v5489 = vpack.c.bf16 %v5487, %v5487
    %v5490 = vpack.c.bf16 %v5488, %v5488
    %5491 = vst.msk [vmem:[#allocation2] sm:$0xf] %vm486, %v5481
    %5492 = vst.msk [vmem:[#allocation2 + $0x4] sm:$0xf] %vm486, %v5482
    %5493 = vst.msk [vmem:[#allocation2 + $0x8] sm:$0xf] %vm486, %v5489
    %5494 = vst.msk [vmem:[#allocation2 + $0xc] sm:$0xf] %vm486, %v5490
    %v5495 = vld [vmem:[#allocation3 + $0x20] sm:$0xff]
    %v5496 = vld [vmem:[#allocation3 + $0x28] sm:$0xff]
    %v5499 = vunpack.c.l.b16 %v5481
    %v5500 = vunpack.c.l.b16 %v5482
    %v5501 = vpack.c.b16 %v5500, %v5499
    %v5503 = vsel %vm259, %v5501, 0
    %5505 = vmatpush.bf16.msra.mxu0 0
    %5506 = vmatpush.bf16.msra.mxu0 0
    %5507 = vmatpush.bf16.msra.mxu0 0
    %5508 = vmatpush.bf16.msra.mxu0 0
    %5509 = vmatpush.bf16.msra.mxu0 %v5458
    %5510 = vmatpush.bf16.msra.mxu0 %v5457
    %5511 = vmatpush.bf16.msra.mxu0 %v5456
    %5512 = vmatpush.bf16.msra.mxu0 %v5455
    %5513 = vmatmul.bf16.gmra.mxu0 %v5503
    %v5514 = vpop.f32.mrf.mxu0
    %v5515 = vadd.f32 0.0, %v5514
    %v5516 = vpop.f32.mrf.mxu0
    %v5517 = vadd.f32 0.0, %v5516
    %5518 = vdwg.mxu0
    %v5519 = vadd.f32 %v5495, %v5515
    %v5520 = vadd.f32 %v5496, %v5517
    %v5521 = vtanh.pop %v5519
    %v5522 = vtanh.pop %v5520
    %v5523 = vpack.c.bf16 %v5521, %v5521
    %v5524 = vpack.c.bf16 %v5522, %v5522
    %v5525 = vld [vmem:[#allocation3 + $0x30] sm:$0xff]
    %v5526 = vld [vmem:[#allocation3 + $0x38] sm:$0xff]
    %v5529 = vunpack.c.l.b16 %v5489
    %v5530 = vunpack.c.l.b16 %v5490
    %v5531 = vpack.c.b16 %v5530, %v5529
    %v5533 = vsel %vm259, %v5531, 0
    %5535 = vmatpush.bf16.msra.mxu0 0
    %5536 = vmatpush.bf16.msra.mxu0 0
    %5537 = vmatpush.bf16.msra.mxu0 0
    %5538 = vmatpush.bf16.msra.mxu0 0
    %5539 = vmatpush.bf16.msra.mxu0 %v5458
    %5540 = vmatpush.bf16.msra.mxu0 %v5457
    %5541 = vmatpush.bf16.msra.mxu0 %v5456
    %5542 = vmatpush.bf16.msra.mxu0 %v5455
    %5543 = vmatmul.bf16.gmra.mxu0 %v5533
    %v5544 = vpop.f32.mrf.mxu0
    %v5545 = vadd.f32 0.0, %v5544
    %v5546 = vpop.f32.mrf.mxu0
    %v5547 = vadd.f32 0.0, %v5546
    %5548 = vdwg.mxu0
    %v5549 = vadd.f32 %v5525, %v5545
    %v5550 = vadd.f32 %v5526, %v5547
    %v5551 = vtanh.pop %v5549
    %v5552 = vtanh.pop %v5550
    %v5553 = vpack.c.bf16 %v5551, %v5551
    %v5554 = vpack.c.bf16 %v5552, %v5552
    %5555 = vst.msk [vmem:[#allocation2 + $0x10] sm:$0xf] %vm486, %v5523
    %5556 = vst.msk [vmem:[#allocation2 + $0x14] sm:$0xf] %vm486, %v5524
    %5557 = vst.msk [vmem:[#allocation2 + $0x18] sm:$0xf] %vm486, %v5553
    %5558 = vst.msk [vmem:[#allocation2 + $0x1c] sm:$0xf] %vm486, %v5554
    %v5559 = vld [vmem:[#allocation3 + $0x40] sm:$0xff]
    %v5560 = vld [vmem:[#allocation3 + $0x48] sm:$0xff]
    %v5563 = vunpack.c.l.b16 %v5523
    %v5564 = vunpack.c.l.b16 %v5524
    %v5565 = vpack.c.b16 %v5564, %v5563
    %v5567 = vsel %vm259, %v5565, 0
    %5569 = vmatpush.bf16.msra.mxu0 0
    %5570 = vmatpush.bf16.msra.mxu0 0
    %5571 = vmatpush.bf16.msra.mxu0 0
    %5572 = vmatpush.bf16.msra.mxu0 0
    %5573 = vmatpush.bf16.msra.mxu0 %v5458
    %5574 = vmatpush.bf16.msra.mxu0 %v5457
    %5575 = vmatpush.bf16.msra.mxu0 %v5456
    %5576 = vmatpush.bf16.msra.mxu0 %v5455
    %5577 = vmatmul.bf16.gmra.mxu0 %v5567
    %v5578 = vpop.f32.mrf.mxu0
    %v5579 = vadd.f32 0.0, %v5578
    %v5580 = vpop.f32.mrf.mxu0
    %v5581 = vadd.f32 0.0, %v5580
    %5582 = vdwg.mxu0
    %v5583 = vadd.f32 %v5559, %v5579
    %v5584 = vadd.f32 %v5560, %v5581
    %v5585 = vtanh.pop %v5583
    %v5586 = vtanh.pop %v5584
    %v5587 = vpack.c.bf16 %v5585, %v5585
    %v5588 = vpack.c.bf16 %v5586, %v5586
    %v5589 = vld [vmem:[#allocation3 + $0x50] sm:$0xff]
    %v5590 = vld [vmem:[#allocation3 + $0x58] sm:$0xff]
    %v5593 = vunpack.c.l.b16 %v5553
    %v5594 = vunpack.c.l.b16 %v5554
    %v5595 = vpack.c.b16 %v5594, %v5593
    %v5597 = vsel %vm259, %v5595, 0
    %5599 = vmatpush.bf16.msra.mxu0 0
    %5600 = vmatpush.bf16.msra.mxu0 0
    %5601 = vmatpush.bf16.msra.mxu0 0
    %5602 = vmatpush.bf16.msra.mxu0 0
    %5603 = vmatpush.bf16.msra.mxu0 %v5458
    %5604 = vmatpush.bf16.msra.mxu0 %v5457
    %5605 = vmatpush.bf16.msra.mxu0 %v5456
    %5606 = vmatpush.bf16.msra.mxu0 %v5455
    %5607 = vmatmul.bf16.gmra.mxu0 %v5597
    %v5608 = vpop.f32.mrf.mxu0
    %v5609 = vadd.f32 0.0, %v5608
    %v5610 = vpop.f32.mrf.mxu0
    %v5611 = vadd.f32 0.0, %v5610
    %5612 = vdwg.mxu0
    %v5613 = vadd.f32 %v5589, %v5609
    %v5614 = vadd.f32 %v5590, %v5611
    %v5615 = vtanh.pop %v5613
    %v5616 = vtanh.pop %v5614
    %v5617 = vpack.c.bf16 %v5615, %v5615
    %v5618 = vpack.c.bf16 %v5616, %v5616
    %5619 = vst.msk [vmem:[#allocation2 + $0x20] sm:$0xf] %vm486, %v5587
    %5620 = vst.msk [vmem:[#allocation2 + $0x24] sm:$0xf] %vm486, %v5588
    %5621 = vst.msk [vmem:[#allocation2 + $0x28] sm:$0xf] %vm486, %v5617
    %5622 = vst.msk [vmem:[#allocation2 + $0x2c] sm:$0xf] %vm486, %v5618
    %v5623 = vld [vmem:[#allocation3 + $0x60] sm:$0xff]
    %v5624 = vld [vmem:[#allocation3 + $0x68] sm:$0xff]
    %v5627 = vunpack.c.l.b16 %v5587
    %v5628 = vunpack.c.l.b16 %v5588
    %v5629 = vpack.c.b16 %v5628, %v5627
    %v5631 = vsel %vm259, %v5629, 0
    %5633 = vmatpush.bf16.msra.mxu0 0
    %5634 = vmatpush.bf16.msra.mxu0 0
    %5635 = vmatpush.bf16.msra.mxu0 0
    %5636 = vmatpush.bf16.msra.mxu0 0
    %5637 = vmatpush.bf16.msra.mxu0 %v5458
    %5638 = vmatpush.bf16.msra.mxu0 %v5457
    %5639 = vmatpush.bf16.msra.mxu0 %v5456
    %5640 = vmatpush.bf16.msra.mxu0 %v5455
    %5641 = vmatmul.bf16.gmra.mxu0 %v5631
    %v5642 = vpop.f32.mrf.mxu0
    %v5643 = vadd.f32 0.0, %v5642
    %v5644 = vpop.f32.mrf.mxu0
    %v5645 = vadd.f32 0.0, %v5644
    %5646 = vdwg.mxu0
    %v5647 = vadd.f32 %v5623, %v5643
    %v5648 = vadd.f32 %v5624, %v5645
    %v5649 = vtanh.pop %v5647
    %v5650 = vtanh.pop %v5648
    %v5651 = vpack.c.bf16 %v5649, %v5649
    %v5652 = vpack.c.bf16 %v5650, %v5650
    %v5653 = vld [vmem:[#allocation3 + $0x70] sm:$0xff]
    %v5654 = vld [vmem:[#allocation3 + $0x78] sm:$0xff]
    %v5657 = vunpack.c.l.b16 %v5617
    %v5658 = vunpack.c.l.b16 %v5618
    %v5659 = vpack.c.b16 %v5658, %v5657
    %v5661 = vsel %vm259, %v5659, 0
    %5663 = vmatpush.bf16.msra.mxu0 0
    %5664 = vmatpush.bf16.msra.mxu0 0
    %5665 = vmatpush.bf16.msra.mxu0 0
    %5666 = vmatpush.bf16.msra.mxu0 0
    %5667 = vmatpush.bf16.msra.mxu0 %v5458
    %5668 = vmatpush.bf16.msra.mxu0 %v5457
    %5669 = vmatpush.bf16.msra.mxu0 %v5456
    %5670 = vmatpush.bf16.msra.mxu0 %v5455
    %5671 = vmatmul.bf16.gmra.mxu0 %v5661
    %v5672 = vpop.f32.mrf.mxu0
    %v5673 = vadd.f32 0.0, %v5672
    %v5674 = vpop.f32.mrf.mxu0
    %v5675 = vadd.f32 0.0, %v5674
    %5676 = vdwg.mxu0
    %v5677 = vadd.f32 %v5653, %v5673
    %v5678 = vadd.f32 %v5654, %v5675
    %v5679 = vtanh.pop %v5677
    %v5680 = vtanh.pop %v5678
    %v5681 = vpack.c.bf16 %v5679, %v5679
    %v5682 = vpack.c.bf16 %v5680, %v5680
    %5683 = vst.msk [vmem:[#allocation2 + $0x30] sm:$0xf] %vm486, %v5651
    %5684 = vst.msk [vmem:[#allocation2 + $0x34] sm:$0xf] %vm486, %v5652
    %5685 = vst.msk [vmem:[#allocation2 + $0x38] sm:$0xf] %vm486, %v5681
    %5686 = vst.msk [vmem:[#allocation2 + $0x3c] sm:$0xf] %vm486, %v5682
    %v5687 = vld [vmem:[#allocation3 + $0x80] sm:$0xff]
    %v5688 = vld [vmem:[#allocation3 + $0x88] sm:$0xff]
    %v5691 = vunpack.c.l.b16 %v5651
    %v5692 = vunpack.c.l.b16 %v5652
    %v5693 = vpack.c.b16 %v5692, %v5691
    %v5695 = vsel %vm259, %v5693, 0
    %5697 = vmatpush.bf16.msra.mxu0 0
    %5698 = vmatpush.bf16.msra.mxu0 0
    %5699 = vmatpush.bf16.msra.mxu0 0
    %5700 = vmatpush.bf16.msra.mxu0 0
    %5701 = vmatpush.bf16.msra.mxu0 %v5458
    %5702 = vmatpush.bf16.msra.mxu0 %v5457
    %5703 = vmatpush.bf16.msra.mxu0 %v5456
    %5704 = vmatpush.bf16.msra.mxu0 %v5455
    %5705 = vmatmul.bf16.gmra.mxu0 %v5695
    %v5706 = vpop.f32.mrf.mxu0
    %v5707 = vadd.f32 0.0, %v5706
    %v5708 = vpop.f32.mrf.mxu0
    %v5709 = vadd.f32 0.0, %v5708
    %5710 = vdwg.mxu0
    %v5711 = vadd.f32 %v5687, %v5707
    %v5712 = vadd.f32 %v5688, %v5709
    %v5713 = vtanh.pop %v5711
    %v5714 = vtanh.pop %v5712
    %v5715 = vpack.c.bf16 %v5713, %v5713
    %v5716 = vpack.c.bf16 %v5714, %v5714
    %v5717 = vld [vmem:[#allocation3 + $0x90] sm:$0xff]
    %v5718 = vld [vmem:[#allocation3 + $0x98] sm:$0xff]
    %v5721 = vunpack.c.l.b16 %v5681
    %v5722 = vunpack.c.l.b16 %v5682
    %v5723 = vpack.c.b16 %v5722, %v5721
    %v5725 = vsel %vm259, %v5723, 0
    %5727 = vmatpush.bf16.msra.mxu0 0
    %5728 = vmatpush.bf16.msra.mxu0 0
    %5729 = vmatpush.bf16.msra.mxu0 0
    %5730 = vmatpush.bf16.msra.mxu0 0
    %5731 = vmatpush.bf16.msra.mxu0 %v5458
    %5732 = vmatpush.bf16.msra.mxu0 %v5457
    %5733 = vmatpush.bf16.msra.mxu0 %v5456
    %5734 = vmatpush.bf16.msra.mxu0 %v5455
    %5735 = vmatmul.bf16.gmra.mxu0 %v5725
    %v5736 = vpop.f32.mrf.mxu0
    %v5737 = vadd.f32 0.0, %v5736
    %v5738 = vpop.f32.mrf.mxu0
    %v5739 = vadd.f32 0.0, %v5738
    %5740 = vdwg.mxu0
    %v5741 = vadd.f32 %v5717, %v5737
    %v5742 = vadd.f32 %v5718, %v5739
    %v5743 = vtanh.pop %v5741
    %v5744 = vtanh.pop %v5742
    %v5745 = vpack.c.bf16 %v5743, %v5743
    %v5746 = vpack.c.bf16 %v5744, %v5744
    %5747 = vst.msk [vmem:[#allocation2 + $0x40] sm:$0xf] %vm486, %v5715
    %5748 = vst.msk [vmem:[#allocation2 + $0x44] sm:$0xf] %vm486, %v5716
    %5749 = vst.msk [vmem:[#allocation2 + $0x48] sm:$0xf] %vm486, %v5745
    %5750 = vst.msk [vmem:[#allocation2 + $0x4c] sm:$0xf] %vm486, %v5746
    %v5751 = vld [vmem:[#allocation3 + $0xa0] sm:$0xff]
    %v5752 = vld [vmem:[#allocation3 + $0xa8] sm:$0xff]
    %v5755 = vunpack.c.l.b16 %v5715
    %v5756 = vunpack.c.l.b16 %v5716
    %v5757 = vpack.c.b16 %v5756, %v5755
    %v5759 = vsel %vm259, %v5757, 0
    %5761 = vmatpush.bf16.msra.mxu0 0
    %5762 = vmatpush.bf16.msra.mxu0 0
    %5763 = vmatpush.bf16.msra.mxu0 0
    %5764 = vmatpush.bf16.msra.mxu0 0
    %5765 = vmatpush.bf16.msra.mxu0 %v5458
    %5766 = vmatpush.bf16.msra.mxu0 %v5457
    %5767 = vmatpush.bf16.msra.mxu0 %v5456
    %5768 = vmatpush.bf16.msra.mxu0 %v5455
    %5769 = vmatmul.bf16.gmra.mxu0 %v5759
    %v5770 = vpop.f32.mrf.mxu0
    %v5771 = vadd.f32 0.0, %v5770
    %v5772 = vpop.f32.mrf.mxu0
    %v5773 = vadd.f32 0.0, %v5772
    %5774 = vdwg.mxu0
    %v5775 = vadd.f32 %v5751, %v5771
    %v5776 = vadd.f32 %v5752, %v5773
    %v5777 = vtanh.pop %v5775
    %v5778 = vtanh.pop %v5776
    %v5779 = vpack.c.bf16 %v5777, %v5777
    %v5780 = vpack.c.bf16 %v5778, %v5778
    %v5781 = vld [vmem:[#allocation3 + $0xb0] sm:$0xff]
    %v5782 = vld [vmem:[#allocation3 + $0xb8] sm:$0xff]
    %v5785 = vunpack.c.l.b16 %v5745
    %v5786 = vunpack.c.l.b16 %v5746
    %v5787 = vpack.c.b16 %v5786, %v5785
    %v5789 = vsel %vm259, %v5787, 0
    %5791 = vmatpush.bf16.msra.mxu0 0
    %5792 = vmatpush.bf16.msra.mxu0 0
    %5793 = vmatpush.bf16.msra.mxu0 0
    %5794 = vmatpush.bf16.msra.mxu0 0
    %5795 = vmatpush.bf16.msra.mxu0 %v5458
    %5796 = vmatpush.bf16.msra.mxu0 %v5457
    %5797 = vmatpush.bf16.msra.mxu0 %v5456
    %5798 = vmatpush.bf16.msra.mxu0 %v5455
    %5799 = vmatmul.bf16.gmra.mxu0 %v5789
    %v5800 = vpop.f32.mrf.mxu0
    %v5801 = vadd.f32 0.0, %v5800
    %v5802 = vpop.f32.mrf.mxu0
    %v5803 = vadd.f32 0.0, %v5802
    %5804 = vdwg.mxu0
    %v5805 = vadd.f32 %v5781, %v5801
    %v5806 = vadd.f32 %v5782, %v5803
    %v5807 = vtanh.pop %v5805
    %v5808 = vtanh.pop %v5806
    %v5809 = vpack.c.bf16 %v5807, %v5807
    %v5810 = vpack.c.bf16 %v5808, %v5808
    %5811 = vst.msk [vmem:[#allocation2 + $0x50] sm:$0xf] %vm486, %v5779
    %5812 = vst.msk [vmem:[#allocation2 + $0x54] sm:$0xf] %vm486, %v5780
    %5813 = vst.msk [vmem:[#allocation2 + $0x58] sm:$0xf] %vm486, %v5809
    %5814 = vst.msk [vmem:[#allocation2 + $0x5c] sm:$0xf] %vm486, %v5810
    %v5815 = vld [vmem:[#allocation3 + $0xc0] sm:$0xff]
    %v5816 = vld [vmem:[#allocation3 + $0xc8] sm:$0xff]
    %v5819 = vunpack.c.l.b16 %v5779
    %v5820 = vunpack.c.l.b16 %v5780
    %v5821 = vpack.c.b16 %v5820, %v5819
    %v5823 = vsel %vm259, %v5821, 0
    %5825 = vmatpush.bf16.msra.mxu0 0
    %5826 = vmatpush.bf16.msra.mxu0 0
    %5827 = vmatpush.bf16.msra.mxu0 0
    %5828 = vmatpush.bf16.msra.mxu0 0
    %5829 = vmatpush.bf16.msra.mxu0 %v5458
    %5830 = vmatpush.bf16.msra.mxu0 %v5457
    %5831 = vmatpush.bf16.msra.mxu0 %v5456
    %5832 = vmatpush.bf16.msra.mxu0 %v5455
    %5833 = vmatmul.bf16.gmra.mxu0 %v5823
    %v5834 = vpop.f32.mrf.mxu0
    %v5835 = vadd.f32 0.0, %v5834
    %v5836 = vpop.f32.mrf.mxu0
    %v5837 = vadd.f32 0.0, %v5836
    %5838 = vdwg.mxu0
    %v5839 = vadd.f32 %v5815, %v5835
    %v5840 = vadd.f32 %v5816, %v5837
    %v5841 = vtanh.pop %v5839
    %v5842 = vtanh.pop %v5840
    %v5843 = vpack.c.bf16 %v5841, %v5841
    %v5844 = vpack.c.bf16 %v5842, %v5842
    %v5845 = vld [vmem:[#allocation3 + $0xd0] sm:$0xff]
    %v5846 = vld [vmem:[#allocation3 + $0xd8] sm:$0xff]
    %v5849 = vunpack.c.l.b16 %v5809
    %v5850 = vunpack.c.l.b16 %v5810
    %v5851 = vpack.c.b16 %v5850, %v5849
    %v5853 = vsel %vm259, %v5851, 0
    %5855 = vmatpush.bf16.msra.mxu0 0
    %5856 = vmatpush.bf16.msra.mxu0 0
    %5857 = vmatpush.bf16.msra.mxu0 0
    %5858 = vmatpush.bf16.msra.mxu0 0
    %5859 = vmatpush.bf16.msra.mxu0 %v5458
    %5860 = vmatpush.bf16.msra.mxu0 %v5457
    %5861 = vmatpush.bf16.msra.mxu0 %v5456
    %5862 = vmatpush.bf16.msra.mxu0 %v5455
    %5863 = vmatmul.bf16.gmra.mxu0 %v5853
    %v5864 = vpop.f32.mrf.mxu0
    %v5865 = vadd.f32 0.0, %v5864
    %v5866 = vpop.f32.mrf.mxu0
    %v5867 = vadd.f32 0.0, %v5866
    %5868 = vdwg.mxu0
    %v5869 = vadd.f32 %v5845, %v5865
    %v5870 = vadd.f32 %v5846, %v5867
    %v5871 = vtanh.pop %v5869
    %v5872 = vtanh.pop %v5870
    %v5873 = vpack.c.bf16 %v5871, %v5871
    %v5874 = vpack.c.bf16 %v5872, %v5872
    %5875 = vst.msk [vmem:[#allocation2 + $0x60] sm:$0xf] %vm486, %v5843
    %5876 = vst.msk [vmem:[#allocation2 + $0x64] sm:$0xf] %vm486, %v5844
    %5877 = vst.msk [vmem:[#allocation2 + $0x68] sm:$0xf] %vm486, %v5873
    %5878 = vst.msk [vmem:[#allocation2 + $0x6c] sm:$0xf] %vm486, %v5874
    %v5879 = vld [vmem:[#allocation3 + $0xe0] sm:$0xff]
    %v5880 = vld [vmem:[#allocation3 + $0xe8] sm:$0xff]
    %v5883 = vunpack.c.l.b16 %v5843
    %v5884 = vunpack.c.l.b16 %v5844
    %v5885 = vpack.c.b16 %v5884, %v5883
    %v5887 = vsel %vm259, %v5885, 0
    %5889 = vmatpush.bf16.msra.mxu0 0
    %5890 = vmatpush.bf16.msra.mxu0 0
    %5891 = vmatpush.bf16.msra.mxu0 0
    %5892 = vmatpush.bf16.msra.mxu0 0
    %5893 = vmatpush.bf16.msra.mxu0 %v5458
    %5894 = vmatpush.bf16.msra.mxu0 %v5457
    %5895 = vmatpush.bf16.msra.mxu0 %v5456
    %5896 = vmatpush.bf16.msra.mxu0 %v5455
    %5897 = vmatmul.bf16.gmra.mxu0 %v5887
    %v5898 = vpop.f32.mrf.mxu0
    %v5899 = vadd.f32 0.0, %v5898
    %v5900 = vpop.f32.mrf.mxu0
    %v5901 = vadd.f32 0.0, %v5900
    %5902 = vdwg.mxu0
    %v5903 = vadd.f32 %v5879, %v5899
    %v5904 = vadd.f32 %v5880, %v5901
    %v5905 = vtanh.pop %v5903
    %v5906 = vtanh.pop %v5904
    %v5907 = vpack.c.bf16 %v5905, %v5905
    %v5908 = vpack.c.bf16 %v5906, %v5906
    %v5909 = vld [vmem:[#allocation3 + $0xf0] sm:$0xff]
    %v5910 = vld [vmem:[#allocation3 + $0xf8] sm:$0xff]
    %v5913 = vunpack.c.l.b16 %v5873
    %v5914 = vunpack.c.l.b16 %v5874
    %v5915 = vpack.c.b16 %v5914, %v5913
    %v5917 = vsel %vm259, %v5915, 0
    %5919 = vmatpush.bf16.msra.mxu0 0
    %5920 = vmatpush.bf16.msra.mxu0 0
    %5921 = vmatpush.bf16.msra.mxu0 0
    %5922 = vmatpush.bf16.msra.mxu0 0
    %5923 = vmatpush.bf16.msra.mxu0 %v5458
    %5924 = vmatpush.bf16.msra.mxu0 %v5457
    %5925 = vmatpush.bf16.msra.mxu0 %v5456
    %5926 = vmatpush.bf16.msra.mxu0 %v5455
    %5927 = vmatmul.bf16.gmra.mxu0 %v5917
    %v5928 = vpop.f32.mrf.mxu0
    %v5929 = vadd.f32 0.0, %v5928
    %v5930 = vpop.f32.mrf.mxu0
    %v5931 = vadd.f32 0.0, %v5930
    %5932 = vdwg.mxu0
    %v5933 = vadd.f32 %v5909, %v5929
    %v5934 = vadd.f32 %v5910, %v5931
    %v5935 = vtanh.pop %v5933
    %v5936 = vtanh.pop %v5934
    %v5937 = vpack.c.bf16 %v5935, %v5935
    %v5938 = vpack.c.bf16 %v5936, %v5936
    %5939 = vst.msk [vmem:[#allocation2 + $0x70] sm:$0xf] %vm486, %v5907
    %5940 = vst.msk [vmem:[#allocation2 + $0x74] sm:$0xf] %vm486, %v5908
    %5941 = vst.msk [vmem:[#allocation2 + $0x78] sm:$0xf] %vm486, %v5937
    %5942 = vst.msk [vmem:[#allocation2 + $0x7c] sm:$0xf] %vm486, %v5938
    %s5943 = scalar_lea.vmem [#allocation7], 224
    %v5944 = vld [vmem:[%s5943] sm:$0xf]
    %v5945 = vld [vmem:[%s5943 + $0x4] sm:$0xf]
    %v5946 = vld [vmem:[%s5943 + $0x8] sm:$0xf]
    %v5947 = vld [vmem:[%s5943 + $0xc] sm:$0xf]
    %v5948 = vld [vmem:[%s5943 + $0x10] sm:$0xf]
    %v5949 = vld [vmem:[%s5943 + $0x14] sm:$0xf]
    %v5950 = vld [vmem:[%s5943 + $0x18] sm:$0xf]
    %v5951 = vld [vmem:[%s5943 + $0x1c] sm:$0xf]
    %s5952 = scalar_lea.vmem [#allocation9], 224
    %v5953 = vld [vmem:[%s5952] sm:$0xf]
    %v5954 = vld [vmem:[%s5952 + $0x4] sm:$0xf]
    %v5955 = vld [vmem:[%s5952 + $0x8] sm:$0xf]
    %v5956 = vld [vmem:[%s5952 + $0xc] sm:$0xf]
    %v5957 = vld [vmem:[%s5952 + $0x10] sm:$0xf]
    %v5958 = vld [vmem:[%s5952 + $0x14] sm:$0xf]
    %v5959 = vld [vmem:[%s5952 + $0x18] sm:$0xf]
    %v5960 = vld [vmem:[%s5952 + $0x1c] sm:$0xf]
    %s5961 = scalar_lea.vmem [#allocation10], 7
    %v5962 = vld [vmem:[%s5961] sm:$0x1]
    %v5963 = vld [vmem:[#allocation2] sm:$0xf]
    %v5964 = vld [vmem:[#allocation2 + $0x4] sm:$0xf]
    %v5965 = vld [vmem:[#allocation2 + $0x8] sm:$0xf]
    %v5966 = vld [vmem:[#allocation2 + $0xc] sm:$0xf]
    %v5967 = vld [vmem:[#allocation2 + $0x10] sm:$0xf]
    %v5968 = vld [vmem:[#allocation2 + $0x14] sm:$0xf]
    %v5969 = vld [vmem:[#allocation2 + $0x18] sm:$0xf]
    %v5970 = vld [vmem:[#allocation2 + $0x1c] sm:$0xf]
    %v5971 = vld [vmem:[#allocation2 + $0x20] sm:$0xf]
    %v5972 = vld [vmem:[#allocation2 + $0x24] sm:$0xf]
    %v5973 = vld [vmem:[#allocation2 + $0x28] sm:$0xf]
    %v5974 = vld [vmem:[#allocation2 + $0x2c] sm:$0xf]
    %v5975 = vld [vmem:[#allocation2 + $0x30] sm:$0xf]
    %v5976 = vld [vmem:[#allocation2 + $0x34] sm:$0xf]
    %v5977 = vld [vmem:[#allocation2 + $0x38] sm:$0xf]
    %v5978 = vld [vmem:[#allocation2 + $0x3c] sm:$0xf]
    %v5979 = vld [vmem:[#allocation2 + $0x40] sm:$0xf]
    %v5980 = vld [vmem:[#allocation2 + $0x44] sm:$0xf]
    %v5981 = vld [vmem:[#allocation2 + $0x48] sm:$0xf]
    %v5982 = vld [vmem:[#allocation2 + $0x4c] sm:$0xf]
    %v5983 = vld [vmem:[#allocation2 + $0x50] sm:$0xf]
    %v5984 = vld [vmem:[#allocation2 + $0x54] sm:$0xf]
    %v5985 = vld [vmem:[#allocation2 + $0x58] sm:$0xf]
    %v5986 = vld [vmem:[#allocation2 + $0x5c] sm:$0xf]
    %v5987 = vld [vmem:[#allocation2 + $0x60] sm:$0xf]
    %v5988 = vld [vmem:[#allocation2 + $0x64] sm:$0xf]
    %v5989 = vld [vmem:[#allocation2 + $0x68] sm:$0xf]
    %v5990 = vld [vmem:[#allocation2 + $0x6c] sm:$0xf]
    %v5991 = vld [vmem:[#allocation2 + $0x70] sm:$0xf]
    %v5992 = vld [vmem:[#allocation2 + $0x74] sm:$0xf]
    %v5993 = vld [vmem:[#allocation2 + $0x78] sm:$0xf]
    %v5994 = vld [vmem:[#allocation2 + $0x7c] sm:$0xf]
    %v5996 = vperm.slane %v5962, 0
    %v6030 = vunpack.c.l.b16 %v5963
    %v6031 = vunpack.c.l.b16 %v5964
    %v6032 = vunpack.c.l.b16 %v5965
    %v6033 = vunpack.c.l.b16 %v5966
    %v6034 = vunpack.c.l.b16 %v5967
    %v6035 = vunpack.c.l.b16 %v5968
    %v6036 = vunpack.c.l.b16 %v5969
    %v6037 = vunpack.c.l.b16 %v5970
    %v6038 = vunpack.c.l.b16 %v5971
    %v6039 = vunpack.c.l.b16 %v5972
    %v6040 = vunpack.c.l.b16 %v5973
    %v6041 = vunpack.c.l.b16 %v5974
    %v6042 = vunpack.c.l.b16 %v5975
    %v6043 = vunpack.c.l.b16 %v5976
    %v6044 = vunpack.c.l.b16 %v5977
    %v6045 = vunpack.c.l.b16 %v5978
    %v6046 = vunpack.c.l.b16 %v5979
    %v6047 = vunpack.c.l.b16 %v5980
    %v6048 = vunpack.c.l.b16 %v5981
    %v6049 = vunpack.c.l.b16 %v5982
    %v6050 = vunpack.c.l.b16 %v5983
    %v6051 = vunpack.c.l.b16 %v5984
    %v6052 = vunpack.c.l.b16 %v5985
    %v6053 = vunpack.c.l.b16 %v5986
    %v6054 = vunpack.c.l.b16 %v5987
    %v6055 = vunpack.c.l.b16 %v5988
    %v6056 = vunpack.c.l.b16 %v5989
    %v6057 = vunpack.c.l.b16 %v5990
    %v6058 = vunpack.c.l.b16 %v5991
    %v6059 = vunpack.c.l.b16 %v5992
    %v6060 = vunpack.c.l.b16 %v5993
    %v6061 = vunpack.c.l.b16 %v5994
    %v6062 = vpack.c.b16 %v6031, %v6030
    %v6063 = vpack.c.b16 %v6033, %v6032
    %v6064 = vpack.c.b16 %v6035, %v6034
    %v6065 = vpack.c.b16 %v6037, %v6036
    %v6066 = vpack.c.b16 %v6039, %v6038
    %v6067 = vpack.c.b16 %v6041, %v6040
    %v6068 = vpack.c.b16 %v6043, %v6042
    %v6069 = vpack.c.b16 %v6045, %v6044
    %v6070 = vpack.c.b16 %v6047, %v6046
    %v6071 = vpack.c.b16 %v6049, %v6048
    %v6072 = vpack.c.b16 %v6051, %v6050
    %v6073 = vpack.c.b16 %v6053, %v6052
    %v6074 = vpack.c.b16 %v6055, %v6054
    %v6075 = vpack.c.b16 %v6057, %v6056
    %v6076 = vpack.c.b16 %v6059, %v6058
    %v6077 = vpack.c.b16 %v6061, %v6060
    %v6086 = vunpack.c.l.b16 %v5944
    %v6087 = vunpack.c.l.b16 %v5945
    %v6088 = vunpack.c.l.b16 %v5946
    %v6089 = vunpack.c.l.b16 %v5947
    %v6090 = vunpack.c.l.b16 %v5948
    %v6091 = vunpack.c.l.b16 %v5949
    %v6092 = vunpack.c.l.b16 %v5950
    %v6093 = vunpack.c.l.b16 %v5951
    %v6094 = vpack.c.b16 %v6087, %v6086
    %v6095 = vpack.c.b16 %v6089, %v6088
    %v6096 = vpack.c.b16 %v6091, %v6090
    %v6097 = vpack.c.b16 %v6093, %v6092
    %v6103 = vsel %vm259, %v6062, 0
    %v6106 = vsel %vm259, %v6063, 0
    %v6109 = vsel %vm259, %v6064, 0
    %v6112 = vsel %vm259, %v6065, 0
    %v6115 = vsel %vm259, %v6066, 0
    %v6118 = vsel %vm259, %v6067, 0
    %v6121 = vsel %vm259, %v6068, 0
    %v6124 = vsel %vm259, %v6069, 0
    %v6127 = vsel %vm259, %v6070, 0
    %v6130 = vsel %vm259, %v6071, 0
    %v6133 = vsel %vm259, %v6072, 0
    %v6136 = vsel %vm259, %v6073, 0
    %v6139 = vsel %vm259, %v6074, 0
    %v6142 = vsel %vm259, %v6075, 0
    %v6145 = vsel %vm259, %v6076, 0
    %v6148 = vsel %vm259, %v6077, 0
    %6150 = vmatpush.bf16.msra.mxu0 0
    %6151 = vmatpush.bf16.msra.mxu0 0
    %6152 = vmatpush.bf16.msra.mxu0 0
    %6153 = vmatpush.bf16.msra.mxu0 0
    %6154 = vmatpush.bf16.msra.mxu0 %v6097
    %6155 = vmatpush.bf16.msra.mxu0 %v6096
    %6156 = vmatpush.bf16.msra.mxu0 %v6095
    %6157 = vmatpush.bf16.msra.mxu0 %v6094
    %6158 = vmatmul.bf16.gmra.mxu0 %v6103
    %v6159 = vpop.f32.mrf.mxu0
    %v6160 = vadd.f32 %v5996, %v6159
    %v6161 = vpop.f32.mrf.mxu0
    %v6162 = vadd.f32 %v5996, %v6161
    %6163 = vmatmul.bf16.gmra.mxu0 %v6106
    %v6164 = vpop.f32.mrf.mxu0
    %v6165 = vadd.f32 %v5996, %v6164
    %v6166 = vpop.f32.mrf.mxu0
    %v6167 = vadd.f32 %v5996, %v6166
    %6168 = vmatmul.bf16.gmra.mxu0 %v6109
    %v6169 = vpop.f32.mrf.mxu0
    %v6170 = vadd.f32 %v5996, %v6169
    %v6171 = vpop.f32.mrf.mxu0
    %v6172 = vadd.f32 %v5996, %v6171
    %6173 = vmatmul.bf16.gmra.mxu0 %v6112
    %v6174 = vpop.f32.mrf.mxu0
    %v6175 = vadd.f32 %v5996, %v6174
    %v6176 = vpop.f32.mrf.mxu0
    %v6177 = vadd.f32 %v5996, %v6176
    %6178 = vmatmul.bf16.gmra.mxu0 %v6115
    %v6179 = vpop.f32.mrf.mxu0
    %v6180 = vadd.f32 %v5996, %v6179
    %v6181 = vpop.f32.mrf.mxu0
    %v6182 = vadd.f32 %v5996, %v6181
    %6183 = vmatmul.bf16.gmra.mxu0 %v6118
    %v6184 = vpop.f32.mrf.mxu0
    %v6185 = vadd.f32 %v5996, %v6184
    %v6186 = vpop.f32.mrf.mxu0
    %v6187 = vadd.f32 %v5996, %v6186
    %6188 = vmatmul.bf16.gmra.mxu0 %v6121
    %v6189 = vpop.f32.mrf.mxu0
    %v6190 = vadd.f32 %v5996, %v6189
    %v6191 = vpop.f32.mrf.mxu0
    %v6192 = vadd.f32 %v5996, %v6191
    %6193 = vmatmul.bf16.gmra.mxu0 %v6124
    %v6194 = vpop.f32.mrf.mxu0
    %v6195 = vadd.f32 %v5996, %v6194
    %v6196 = vpop.f32.mrf.mxu0
    %v6197 = vadd.f32 %v5996, %v6196
    %6198 = vmatmul.bf16.gmra.mxu0 %v6127
    %v6199 = vpop.f32.mrf.mxu0
    %v6200 = vadd.f32 %v5996, %v6199
    %v6201 = vpop.f32.mrf.mxu0
    %v6202 = vadd.f32 %v5996, %v6201
    %6203 = vmatmul.bf16.gmra.mxu0 %v6130
    %v6204 = vpop.f32.mrf.mxu0
    %v6205 = vadd.f32 %v5996, %v6204
    %v6206 = vpop.f32.mrf.mxu0
    %v6207 = vadd.f32 %v5996, %v6206
    %6208 = vmatmul.bf16.gmra.mxu0 %v6133
    %v6209 = vpop.f32.mrf.mxu0
    %v6210 = vadd.f32 %v5996, %v6209
    %v6211 = vpop.f32.mrf.mxu0
    %v6212 = vadd.f32 %v5996, %v6211
    %6213 = vmatmul.bf16.gmra.mxu0 %v6136
    %v6214 = vpop.f32.mrf.mxu0
    %v6215 = vadd.f32 %v5996, %v6214
    %v6216 = vpop.f32.mrf.mxu0
    %v6217 = vadd.f32 %v5996, %v6216
    %6218 = vmatmul.bf16.gmra.mxu0 %v6139
    %v6219 = vpop.f32.mrf.mxu0
    %v6220 = vadd.f32 %v5996, %v6219
    %v6221 = vpop.f32.mrf.mxu0
    %v6222 = vadd.f32 %v5996, %v6221
    %6223 = vmatmul.bf16.gmra.mxu0 %v6142
    %v6224 = vpop.f32.mrf.mxu0
    %v6225 = vadd.f32 %v5996, %v6224
    %v6226 = vpop.f32.mrf.mxu0
    %v6227 = vadd.f32 %v5996, %v6226
    %6228 = vmatmul.bf16.gmra.mxu0 %v6145
    %v6229 = vpop.f32.mrf.mxu0
    %v6230 = vadd.f32 %v5996, %v6229
    %v6231 = vpop.f32.mrf.mxu0
    %v6232 = vadd.f32 %v5996, %v6231
    %6233 = vmatmul.bf16.gmra.mxu0 %v6148
    %v6234 = vpop.f32.mrf.mxu0
    %v6235 = vadd.f32 %v5996, %v6234
    %v6236 = vpop.f32.mrf.mxu0
    %v6237 = vadd.f32 %v5996, %v6236
    %6238 = vdwg.mxu0
    %6239 = vst.msk [vmem:[#allocation3] sm:$0xff] %vm259, %v6160
    %6240 = vst.msk [vmem:[#allocation3 + $0x8] sm:$0xff] %vm259, %v6162
    %6241 = vst.msk [vmem:[#allocation3 + $0x10] sm:$0xff] %vm259, %v6165
    %6242 = vst.msk [vmem:[#allocation3 + $0x18] sm:$0xff] %vm259, %v6167
    %6243 = vst.msk [vmem:[#allocation3 + $0x20] sm:$0xff] %vm259, %v6170
    %6244 = vst.msk [vmem:[#allocation3 + $0x28] sm:$0xff] %vm259, %v6172
    %6245 = vst.msk [vmem:[#allocation3 + $0x30] sm:$0xff] %vm259, %v6175
    %6246 = vst.msk [vmem:[#allocation3 + $0x38] sm:$0xff] %vm259, %v6177
    %6247 = vst.msk [vmem:[#allocation3 + $0x40] sm:$0xff] %vm259, %v6180
    %6248 = vst.msk [vmem:[#allocation3 + $0x48] sm:$0xff] %vm259, %v6182
    %6249 = vst.msk [vmem:[#allocation3 + $0x50] sm:$0xff] %vm259, %v6185
    %6250 = vst.msk [vmem:[#allocation3 + $0x58] sm:$0xff] %vm259, %v6187
    %6251 = vst.msk [vmem:[#allocation3 + $0x60] sm:$0xff] %vm259, %v6190
    %6252 = vst.msk [vmem:[#allocation3 + $0x68] sm:$0xff] %vm259, %v6192
    %6253 = vst.msk [vmem:[#allocation3 + $0x70] sm:$0xff] %vm259, %v6195
    %6254 = vst.msk [vmem:[#allocation3 + $0x78] sm:$0xff] %vm259, %v6197
    %6255 = vst.msk [vmem:[#allocation3 + $0x80] sm:$0xff] %vm259, %v6200
    %6256 = vst.msk [vmem:[#allocation3 + $0x88] sm:$0xff] %vm259, %v6202
    %6257 = vst.msk [vmem:[#allocation3 + $0x90] sm:$0xff] %vm259, %v6205
    %6258 = vst.msk [vmem:[#allocation3 + $0x98] sm:$0xff] %vm259, %v6207
    %6259 = vst.msk [vmem:[#allocation3 + $0xa0] sm:$0xff] %vm259, %v6210
    %6260 = vst.msk [vmem:[#allocation3 + $0xa8] sm:$0xff] %vm259, %v6212
    %6261 = vst.msk [vmem:[#allocation3 + $0xb0] sm:$0xff] %vm259, %v6215
    %6262 = vst.msk [vmem:[#allocation3 + $0xb8] sm:$0xff] %vm259, %v6217
    %6263 = vst.msk [vmem:[#allocation3 + $0xc0] sm:$0xff] %vm259, %v6220
    %6264 = vst.msk [vmem:[#allocation3 + $0xc8] sm:$0xff] %vm259, %v6222
    %6265 = vst.msk [vmem:[#allocation3 + $0xd0] sm:$0xff] %vm259, %v6225
    %6266 = vst.msk [vmem:[#allocation3 + $0xd8] sm:$0xff] %vm259, %v6227
    %6267 = vst.msk [vmem:[#allocation3 + $0xe0] sm:$0xff] %vm259, %v6230
    %6268 = vst.msk [vmem:[#allocation3 + $0xe8] sm:$0xff] %vm259, %v6232
    %6269 = vst.msk [vmem:[#allocation3 + $0xf0] sm:$0xff] %vm259, %v6235
    %6270 = vst.msk [vmem:[#allocation3 + $0xf8] sm:$0xff] %vm259, %v6237
    %v6271 = vld [vmem:[#allocation3] sm:$0xff]
    %v6272 = vld [vmem:[#allocation3 + $0x8] sm:$0xff]
    %v6281 = vunpack.c.l.b16 %v5953
    %v6282 = vunpack.c.l.b16 %v5954
    %v6283 = vunpack.c.l.b16 %v5955
    %v6284 = vunpack.c.l.b16 %v5956
    %v6285 = vunpack.c.l.b16 %v5957
    %v6286 = vunpack.c.l.b16 %v5958
    %v6287 = vunpack.c.l.b16 %v5959
    %v6288 = vunpack.c.l.b16 %v5960
    %v6289 = vpack.c.b16 %v6282, %v6281
    %v6290 = vpack.c.b16 %v6284, %v6283
    %v6291 = vpack.c.b16 %v6286, %v6285
    %v6292 = vpack.c.b16 %v6288, %v6287
    %6297 = vmatpush.bf16.msra.mxu0 0
    %6298 = vmatpush.bf16.msra.mxu0 0
    %6299 = vmatpush.bf16.msra.mxu0 0
    %6300 = vmatpush.bf16.msra.mxu0 0
    %6301 = vmatpush.bf16.msra.mxu0 %v6292
    %6302 = vmatpush.bf16.msra.mxu0 %v6291
    %6303 = vmatpush.bf16.msra.mxu0 %v6290
    %6304 = vmatpush.bf16.msra.mxu0 %v6289
    %6305 = vmatmul.bf16.gmra.mxu0 %v456
    %v6306 = vpop.f32.mrf.mxu0
    %v6307 = vadd.f32 0.0, %v6306
    %v6308 = vpop.f32.mrf.mxu0
    %v6309 = vadd.f32 0.0, %v6308
    %6310 = vdwg.mxu0
    %v6311 = vadd.f32 %v6271, %v6307
    %v6312 = vadd.f32 %v6272, %v6309
    %v6313 = vtanh.pop %v6311
    %v6314 = vtanh.pop %v6312
    %v6315 = vpack.c.bf16 %v6313, %v6313
    %v6316 = vpack.c.bf16 %v6314, %v6314
    %v6317 = vld [vmem:[#allocation3 + $0x10] sm:$0xff]
    %v6318 = vld [vmem:[#allocation3 + $0x18] sm:$0xff]
    %v6319 = vadd.f32 %v6317, %v6307
    %v6320 = vadd.f32 %v6318, %v6309
    %v6321 = vtanh.pop %v6319
    %v6322 = vtanh.pop %v6320
    %v6323 = vpack.c.bf16 %v6321, %v6321
    %v6324 = vpack.c.bf16 %v6322, %v6322
    %6325 = vst.msk [vmem:[#allocation2] sm:$0xf] %vm486, %v6315
    %6326 = vst.msk [vmem:[#allocation2 + $0x4] sm:$0xf] %vm486, %v6316
    %6327 = vst.msk [vmem:[#allocation2 + $0x8] sm:$0xf] %vm486, %v6323
    %6328 = vst.msk [vmem:[#allocation2 + $0xc] sm:$0xf] %vm486, %v6324
    %v6329 = vld [vmem:[#allocation3 + $0x20] sm:$0xff]
    %v6330 = vld [vmem:[#allocation3 + $0x28] sm:$0xff]
    %v6333 = vunpack.c.l.b16 %v6315
    %v6334 = vunpack.c.l.b16 %v6316
    %v6335 = vpack.c.b16 %v6334, %v6333
    %v6337 = vsel %vm259, %v6335, 0
    %6339 = vmatpush.bf16.msra.mxu0 0
    %6340 = vmatpush.bf16.msra.mxu0 0
    %6341 = vmatpush.bf16.msra.mxu0 0
    %6342 = vmatpush.bf16.msra.mxu0 0
    %6343 = vmatpush.bf16.msra.mxu0 %v6292
    %6344 = vmatpush.bf16.msra.mxu0 %v6291
    %6345 = vmatpush.bf16.msra.mxu0 %v6290
    %6346 = vmatpush.bf16.msra.mxu0 %v6289
    %6347 = vmatmul.bf16.gmra.mxu0 %v6337
    %v6348 = vpop.f32.mrf.mxu0
    %v6349 = vadd.f32 0.0, %v6348
    %v6350 = vpop.f32.mrf.mxu0
    %v6351 = vadd.f32 0.0, %v6350
    %6352 = vdwg.mxu0
    %v6353 = vadd.f32 %v6329, %v6349
    %v6354 = vadd.f32 %v6330, %v6351
    %v6355 = vtanh.pop %v6353
    %v6356 = vtanh.pop %v6354
    %v6357 = vpack.c.bf16 %v6355, %v6355
    %v6358 = vpack.c.bf16 %v6356, %v6356
    %v6359 = vld [vmem:[#allocation3 + $0x30] sm:$0xff]
    %v6360 = vld [vmem:[#allocation3 + $0x38] sm:$0xff]
    %v6363 = vunpack.c.l.b16 %v6323
    %v6364 = vunpack.c.l.b16 %v6324
    %v6365 = vpack.c.b16 %v6364, %v6363
    %v6367 = vsel %vm259, %v6365, 0
    %6369 = vmatpush.bf16.msra.mxu0 0
    %6370 = vmatpush.bf16.msra.mxu0 0
    %6371 = vmatpush.bf16.msra.mxu0 0
    %6372 = vmatpush.bf16.msra.mxu0 0
    %6373 = vmatpush.bf16.msra.mxu0 %v6292
    %6374 = vmatpush.bf16.msra.mxu0 %v6291
    %6375 = vmatpush.bf16.msra.mxu0 %v6290
    %6376 = vmatpush.bf16.msra.mxu0 %v6289
    %6377 = vmatmul.bf16.gmra.mxu0 %v6367
    %v6378 = vpop.f32.mrf.mxu0
    %v6379 = vadd.f32 0.0, %v6378
    %v6380 = vpop.f32.mrf.mxu0
    %v6381 = vadd.f32 0.0, %v6380
    %6382 = vdwg.mxu0
    %v6383 = vadd.f32 %v6359, %v6379
    %v6384 = vadd.f32 %v6360, %v6381
    %v6385 = vtanh.pop %v6383
    %v6386 = vtanh.pop %v6384
    %v6387 = vpack.c.bf16 %v6385, %v6385
    %v6388 = vpack.c.bf16 %v6386, %v6386
    %6389 = vst.msk [vmem:[#allocation2 + $0x10] sm:$0xf] %vm486, %v6357
    %6390 = vst.msk [vmem:[#allocation2 + $0x14] sm:$0xf] %vm486, %v6358
    %6391 = vst.msk [vmem:[#allocation2 + $0x18] sm:$0xf] %vm486, %v6387
    %6392 = vst.msk [vmem:[#allocation2 + $0x1c] sm:$0xf] %vm486, %v6388
    %v6393 = vld [vmem:[#allocation3 + $0x40] sm:$0xff]
    %v6394 = vld [vmem:[#allocation3 + $0x48] sm:$0xff]
    %v6397 = vunpack.c.l.b16 %v6357
    %v6398 = vunpack.c.l.b16 %v6358
    %v6399 = vpack.c.b16 %v6398, %v6397
    %v6401 = vsel %vm259, %v6399, 0
    %6403 = vmatpush.bf16.msra.mxu0 0
    %6404 = vmatpush.bf16.msra.mxu0 0
    %6405 = vmatpush.bf16.msra.mxu0 0
    %6406 = vmatpush.bf16.msra.mxu0 0
    %6407 = vmatpush.bf16.msra.mxu0 %v6292
    %6408 = vmatpush.bf16.msra.mxu0 %v6291
    %6409 = vmatpush.bf16.msra.mxu0 %v6290
    %6410 = vmatpush.bf16.msra.mxu0 %v6289
    %6411 = vmatmul.bf16.gmra.mxu0 %v6401
    %v6412 = vpop.f32.mrf.mxu0
    %v6413 = vadd.f32 0.0, %v6412
    %v6414 = vpop.f32.mrf.mxu0
    %v6415 = vadd.f32 0.0, %v6414
    %6416 = vdwg.mxu0
    %v6417 = vadd.f32 %v6393, %v6413
    %v6418 = vadd.f32 %v6394, %v6415
    %v6419 = vtanh.pop %v6417
    %v6420 = vtanh.pop %v6418
    %v6421 = vpack.c.bf16 %v6419, %v6419
    %v6422 = vpack.c.bf16 %v6420, %v6420
    %v6423 = vld [vmem:[#allocation3 + $0x50] sm:$0xff]
    %v6424 = vld [vmem:[#allocation3 + $0x58] sm:$0xff]
    %v6427 = vunpack.c.l.b16 %v6387
    %v6428 = vunpack.c.l.b16 %v6388
    %v6429 = vpack.c.b16 %v6428, %v6427
    %v6431 = vsel %vm259, %v6429, 0
    %6433 = vmatpush.bf16.msra.mxu0 0
    %6434 = vmatpush.bf16.msra.mxu0 0
    %6435 = vmatpush.bf16.msra.mxu0 0
    %6436 = vmatpush.bf16.msra.mxu0 0
    %6437 = vmatpush.bf16.msra.mxu0 %v6292
    %6438 = vmatpush.bf16.msra.mxu0 %v6291
    %6439 = vmatpush.bf16.msra.mxu0 %v6290
    %6440 = vmatpush.bf16.msra.mxu0 %v6289
    %6441 = vmatmul.bf16.gmra.mxu0 %v6431
    %v6442 = vpop.f32.mrf.mxu0
    %v6443 = vadd.f32 0.0, %v6442
    %v6444 = vpop.f32.mrf.mxu0
    %v6445 = vadd.f32 0.0, %v6444
    %6446 = vdwg.mxu0
    %v6447 = vadd.f32 %v6423, %v6443
    %v6448 = vadd.f32 %v6424, %v6445
    %v6449 = vtanh.pop %v6447
    %v6450 = vtanh.pop %v6448
    %v6451 = vpack.c.bf16 %v6449, %v6449
    %v6452 = vpack.c.bf16 %v6450, %v6450
    %6453 = vst.msk [vmem:[#allocation2 + $0x20] sm:$0xf] %vm486, %v6421
    %6454 = vst.msk [vmem:[#allocation2 + $0x24] sm:$0xf] %vm486, %v6422
    %6455 = vst.msk [vmem:[#allocation2 + $0x28] sm:$0xf] %vm486, %v6451
    %6456 = vst.msk [vmem:[#allocation2 + $0x2c] sm:$0xf] %vm486, %v6452
    %v6457 = vld [vmem:[#allocation3 + $0x60] sm:$0xff]
    %v6458 = vld [vmem:[#allocation3 + $0x68] sm:$0xff]
    %v6461 = vunpack.c.l.b16 %v6421
    %v6462 = vunpack.c.l.b16 %v6422
    %v6463 = vpack.c.b16 %v6462, %v6461
    %v6465 = vsel %vm259, %v6463, 0
    %6467 = vmatpush.bf16.msra.mxu0 0
    %6468 = vmatpush.bf16.msra.mxu0 0
    %6469 = vmatpush.bf16.msra.mxu0 0
    %6470 = vmatpush.bf16.msra.mxu0 0
    %6471 = vmatpush.bf16.msra.mxu0 %v6292
    %6472 = vmatpush.bf16.msra.mxu0 %v6291
    %6473 = vmatpush.bf16.msra.mxu0 %v6290
    %6474 = vmatpush.bf16.msra.mxu0 %v6289
    %6475 = vmatmul.bf16.gmra.mxu0 %v6465
    %v6476 = vpop.f32.mrf.mxu0
    %v6477 = vadd.f32 0.0, %v6476
    %v6478 = vpop.f32.mrf.mxu0
    %v6479 = vadd.f32 0.0, %v6478
    %6480 = vdwg.mxu0
    %v6481 = vadd.f32 %v6457, %v6477
    %v6482 = vadd.f32 %v6458, %v6479
    %v6483 = vtanh.pop %v6481
    %v6484 = vtanh.pop %v6482
    %v6485 = vpack.c.bf16 %v6483, %v6483
    %v6486 = vpack.c.bf16 %v6484, %v6484
    %v6487 = vld [vmem:[#allocation3 + $0x70] sm:$0xff]
    %v6488 = vld [vmem:[#allocation3 + $0x78] sm:$0xff]
    %v6491 = vunpack.c.l.b16 %v6451
    %v6492 = vunpack.c.l.b16 %v6452
    %v6493 = vpack.c.b16 %v6492, %v6491
    %v6495 = vsel %vm259, %v6493, 0
    %6497 = vmatpush.bf16.msra.mxu0 0
    %6498 = vmatpush.bf16.msra.mxu0 0
    %6499 = vmatpush.bf16.msra.mxu0 0
    %6500 = vmatpush.bf16.msra.mxu0 0
    %6501 = vmatpush.bf16.msra.mxu0 %v6292
    %6502 = vmatpush.bf16.msra.mxu0 %v6291
    %6503 = vmatpush.bf16.msra.mxu0 %v6290
    %6504 = vmatpush.bf16.msra.mxu0 %v6289
    %6505 = vmatmul.bf16.gmra.mxu0 %v6495
    %v6506 = vpop.f32.mrf.mxu0
    %v6507 = vadd.f32 0.0, %v6506
    %v6508 = vpop.f32.mrf.mxu0
    %v6509 = vadd.f32 0.0, %v6508
    %6510 = vdwg.mxu0
    %v6511 = vadd.f32 %v6487, %v6507
    %v6512 = vadd.f32 %v6488, %v6509
    %v6513 = vtanh.pop %v6511
    %v6514 = vtanh.pop %v6512
    %v6515 = vpack.c.bf16 %v6513, %v6513
    %v6516 = vpack.c.bf16 %v6514, %v6514
    %6517 = vst.msk [vmem:[#allocation2 + $0x30] sm:$0xf] %vm486, %v6485
    %6518 = vst.msk [vmem:[#allocation2 + $0x34] sm:$0xf] %vm486, %v6486
    %6519 = vst.msk [vmem:[#allocation2 + $0x38] sm:$0xf] %vm486, %v6515
    %6520 = vst.msk [vmem:[#allocation2 + $0x3c] sm:$0xf] %vm486, %v6516
    %v6521 = vld [vmem:[#allocation3 + $0x80] sm:$0xff]
    %v6522 = vld [vmem:[#allocation3 + $0x88] sm:$0xff]
    %v6525 = vunpack.c.l.b16 %v6485
    %v6526 = vunpack.c.l.b16 %v6486
    %v6527 = vpack.c.b16 %v6526, %v6525
    %v6529 = vsel %vm259, %v6527, 0
    %6531 = vmatpush.bf16.msra.mxu0 0
    %6532 = vmatpush.bf16.msra.mxu0 0
    %6533 = vmatpush.bf16.msra.mxu0 0
    %6534 = vmatpush.bf16.msra.mxu0 0
    %6535 = vmatpush.bf16.msra.mxu0 %v6292
    %6536 = vmatpush.bf16.msra.mxu0 %v6291
    %6537 = vmatpush.bf16.msra.mxu0 %v6290
    %6538 = vmatpush.bf16.msra.mxu0 %v6289
    %6539 = vmatmul.bf16.gmra.mxu0 %v6529
    %v6540 = vpop.f32.mrf.mxu0
    %v6541 = vadd.f32 0.0, %v6540
    %v6542 = vpop.f32.mrf.mxu0
    %v6543 = vadd.f32 0.0, %v6542
    %6544 = vdwg.mxu0
    %v6545 = vadd.f32 %v6521, %v6541
    %v6546 = vadd.f32 %v6522, %v6543
    %v6547 = vtanh.pop %v6545
    %v6548 = vtanh.pop %v6546
    %v6549 = vpack.c.bf16 %v6547, %v6547
    %v6550 = vpack.c.bf16 %v6548, %v6548
    %v6551 = vld [vmem:[#allocation3 + $0x90] sm:$0xff]
    %v6552 = vld [vmem:[#allocation3 + $0x98] sm:$0xff]
    %v6555 = vunpack.c.l.b16 %v6515
    %v6556 = vunpack.c.l.b16 %v6516
    %v6557 = vpack.c.b16 %v6556, %v6555
    %v6559 = vsel %vm259, %v6557, 0
    %6561 = vmatpush.bf16.msra.mxu0 0
    %6562 = vmatpush.bf16.msra.mxu0 0
    %6563 = vmatpush.bf16.msra.mxu0 0
    %6564 = vmatpush.bf16.msra.mxu0 0
    %6565 = vmatpush.bf16.msra.mxu0 %v6292
    %6566 = vmatpush.bf16.msra.mxu0 %v6291
    %6567 = vmatpush.bf16.msra.mxu0 %v6290
    %6568 = vmatpush.bf16.msra.mxu0 %v6289
    %6569 = vmatmul.bf16.gmra.mxu0 %v6559
    %v6570 = vpop.f32.mrf.mxu0
    %v6571 = vadd.f32 0.0, %v6570
    %v6572 = vpop.f32.mrf.mxu0
    %v6573 = vadd.f32 0.0, %v6572
    %6574 = vdwg.mxu0
    %v6575 = vadd.f32 %v6551, %v6571
    %v6576 = vadd.f32 %v6552, %v6573
    %v6577 = vtanh.pop %v6575
    %v6578 = vtanh.pop %v6576
    %v6579 = vpack.c.bf16 %v6577, %v6577
    %v6580 = vpack.c.bf16 %v6578, %v6578
    %6581 = vst.msk [vmem:[#allocation2 + $0x40] sm:$0xf] %vm486, %v6549
    %6582 = vst.msk [vmem:[#allocation2 + $0x44] sm:$0xf] %vm486, %v6550
    %6583 = vst.msk [vmem:[#allocation2 + $0x48] sm:$0xf] %vm486, %v6579
    %6584 = vst.msk [vmem:[#allocation2 + $0x4c] sm:$0xf] %vm486, %v6580
    %v6585 = vld [vmem:[#allocation3 + $0xa0] sm:$0xff]
    %v6586 = vld [vmem:[#allocation3 + $0xa8] sm:$0xff]
    %v6589 = vunpack.c.l.b16 %v6549
    %v6590 = vunpack.c.l.b16 %v6550
    %v6591 = vpack.c.b16 %v6590, %v6589
    %v6593 = vsel %vm259, %v6591, 0
    %6595 = vmatpush.bf16.msra.mxu0 0
    %6596 = vmatpush.bf16.msra.mxu0 0
    %6597 = vmatpush.bf16.msra.mxu0 0
    %6598 = vmatpush.bf16.msra.mxu0 0
    %6599 = vmatpush.bf16.msra.mxu0 %v6292
    %6600 = vmatpush.bf16.msra.mxu0 %v6291
    %6601 = vmatpush.bf16.msra.mxu0 %v6290
    %6602 = vmatpush.bf16.msra.mxu0 %v6289
    %6603 = vmatmul.bf16.gmra.mxu0 %v6593
    %v6604 = vpop.f32.mrf.mxu0
    %v6605 = vadd.f32 0.0, %v6604
    %v6606 = vpop.f32.mrf.mxu0
    %v6607 = vadd.f32 0.0, %v6606
    %6608 = vdwg.mxu0
    %v6609 = vadd.f32 %v6585, %v6605
    %v6610 = vadd.f32 %v6586, %v6607
    %v6611 = vtanh.pop %v6609
    %v6612 = vtanh.pop %v6610
    %v6613 = vpack.c.bf16 %v6611, %v6611
    %v6614 = vpack.c.bf16 %v6612, %v6612
    %v6615 = vld [vmem:[#allocation3 + $0xb0] sm:$0xff]
    %v6616 = vld [vmem:[#allocation3 + $0xb8] sm:$0xff]
    %v6619 = vunpack.c.l.b16 %v6579
    %v6620 = vunpack.c.l.b16 %v6580
    %v6621 = vpack.c.b16 %v6620, %v6619
    %v6623 = vsel %vm259, %v6621, 0
    %6625 = vmatpush.bf16.msra.mxu0 0
    %6626 = vmatpush.bf16.msra.mxu0 0
    %6627 = vmatpush.bf16.msra.mxu0 0
    %6628 = vmatpush.bf16.msra.mxu0 0
    %6629 = vmatpush.bf16.msra.mxu0 %v6292
    %6630 = vmatpush.bf16.msra.mxu0 %v6291
    %6631 = vmatpush.bf16.msra.mxu0 %v6290
    %6632 = vmatpush.bf16.msra.mxu0 %v6289
    %6633 = vmatmul.bf16.gmra.mxu0 %v6623
    %v6634 = vpop.f32.mrf.mxu0
    %v6635 = vadd.f32 0.0, %v6634
    %v6636 = vpop.f32.mrf.mxu0
    %v6637 = vadd.f32 0.0, %v6636
    %6638 = vdwg.mxu0
    %v6639 = vadd.f32 %v6615, %v6635
    %v6640 = vadd.f32 %v6616, %v6637
    %v6641 = vtanh.pop %v6639
    %v6642 = vtanh.pop %v6640
    %v6643 = vpack.c.bf16 %v6641, %v6641
    %v6644 = vpack.c.bf16 %v6642, %v6642
    %6645 = vst.msk [vmem:[#allocation2 + $0x50] sm:$0xf] %vm486, %v6613
    %6646 = vst.msk [vmem:[#allocation2 + $0x54] sm:$0xf] %vm486, %v6614
    %6647 = vst.msk [vmem:[#allocation2 + $0x58] sm:$0xf] %vm486, %v6643
    %6648 = vst.msk [vmem:[#allocation2 + $0x5c] sm:$0xf] %vm486, %v6644
    %v6649 = vld [vmem:[#allocation3 + $0xc0] sm:$0xff]
    %v6650 = vld [vmem:[#allocation3 + $0xc8] sm:$0xff]
    %v6653 = vunpack.c.l.b16 %v6613
    %v6654 = vunpack.c.l.b16 %v6614
    %v6655 = vpack.c.b16 %v6654, %v6653
    %v6657 = vsel %vm259, %v6655, 0
    %6659 = vmatpush.bf16.msra.mxu0 0
    %6660 = vmatpush.bf16.msra.mxu0 0
    %6661 = vmatpush.bf16.msra.mxu0 0
    %6662 = vmatpush.bf16.msra.mxu0 0
    %6663 = vmatpush.bf16.msra.mxu0 %v6292
    %6664 = vmatpush.bf16.msra.mxu0 %v6291
    %6665 = vmatpush.bf16.msra.mxu0 %v6290
    %6666 = vmatpush.bf16.msra.mxu0 %v6289
    %6667 = vmatmul.bf16.gmra.mxu0 %v6657
    %v6668 = vpop.f32.mrf.mxu0
    %v6669 = vadd.f32 0.0, %v6668
    %v6670 = vpop.f32.mrf.mxu0
    %v6671 = vadd.f32 0.0, %v6670
    %6672 = vdwg.mxu0
    %v6673 = vadd.f32 %v6649, %v6669
    %v6674 = vadd.f32 %v6650, %v6671
    %v6675 = vtanh.pop %v6673
    %v6676 = vtanh.pop %v6674
    %v6677 = vpack.c.bf16 %v6675, %v6675
    %v6678 = vpack.c.bf16 %v6676, %v6676
    %v6679 = vld [vmem:[#allocation3 + $0xd0] sm:$0xff]
    %v6680 = vld [vmem:[#allocation3 + $0xd8] sm:$0xff]
    %v6683 = vunpack.c.l.b16 %v6643
    %v6684 = vunpack.c.l.b16 %v6644
    %v6685 = vpack.c.b16 %v6684, %v6683
    %v6687 = vsel %vm259, %v6685, 0
    %6689 = vmatpush.bf16.msra.mxu0 0
    %6690 = vmatpush.bf16.msra.mxu0 0
    %6691 = vmatpush.bf16.msra.mxu0 0
    %6692 = vmatpush.bf16.msra.mxu0 0
    %6693 = vmatpush.bf16.msra.mxu0 %v6292
    %6694 = vmatpush.bf16.msra.mxu0 %v6291
    %6695 = vmatpush.bf16.msra.mxu0 %v6290
    %6696 = vmatpush.bf16.msra.mxu0 %v6289
    %6697 = vmatmul.bf16.gmra.mxu0 %v6687
    %v6698 = vpop.f32.mrf.mxu0
    %v6699 = vadd.f32 0.0, %v6698
    %v6700 = vpop.f32.mrf.mxu0
    %v6701 = vadd.f32 0.0, %v6700
    %6702 = vdwg.mxu0
    %v6703 = vadd.f32 %v6679, %v6699
    %v6704 = vadd.f32 %v6680, %v6701
    %v6705 = vtanh.pop %v6703
    %v6706 = vtanh.pop %v6704
    %v6707 = vpack.c.bf16 %v6705, %v6705
    %v6708 = vpack.c.bf16 %v6706, %v6706
    %6709 = vst.msk [vmem:[#allocation2 + $0x60] sm:$0xf] %vm486, %v6677
    %6710 = vst.msk [vmem:[#allocation2 + $0x64] sm:$0xf] %vm486, %v6678
    %6711 = vst.msk [vmem:[#allocation2 + $0x68] sm:$0xf] %vm486, %v6707
    %6712 = vst.msk [vmem:[#allocation2 + $0x6c] sm:$0xf] %vm486, %v6708
    %v6713 = vld [vmem:[#allocation3 + $0xe0] sm:$0xff]
    %v6714 = vld [vmem:[#allocation3 + $0xe8] sm:$0xff]
    %v6717 = vunpack.c.l.b16 %v6677
    %v6718 = vunpack.c.l.b16 %v6678
    %v6719 = vpack.c.b16 %v6718, %v6717
    %v6721 = vsel %vm259, %v6719, 0
    %6723 = vmatpush.bf16.msra.mxu0 0
    %6724 = vmatpush.bf16.msra.mxu0 0
    %6725 = vmatpush.bf16.msra.mxu0 0
    %6726 = vmatpush.bf16.msra.mxu0 0
    %6727 = vmatpush.bf16.msra.mxu0 %v6292
    %6728 = vmatpush.bf16.msra.mxu0 %v6291
    %6729 = vmatpush.bf16.msra.mxu0 %v6290
    %6730 = vmatpush.bf16.msra.mxu0 %v6289
    %6731 = vmatmul.bf16.gmra.mxu0 %v6721
    %v6732 = vpop.f32.mrf.mxu0
    %v6733 = vadd.f32 0.0, %v6732
    %v6734 = vpop.f32.mrf.mxu0
    %v6735 = vadd.f32 0.0, %v6734
    %6736 = vdwg.mxu0
    %v6737 = vadd.f32 %v6713, %v6733
    %v6738 = vadd.f32 %v6714, %v6735
    %v6739 = vtanh.pop %v6737
    %v6740 = vtanh.pop %v6738
    %v6741 = vpack.c.bf16 %v6739, %v6739
    %v6742 = vpack.c.bf16 %v6740, %v6740
    %v6743 = vld [vmem:[#allocation3 + $0xf0] sm:$0xff]
    %v6744 = vld [vmem:[#allocation3 + $0xf8] sm:$0xff]
    %v6747 = vunpack.c.l.b16 %v6707
    %v6748 = vunpack.c.l.b16 %v6708
    %v6749 = vpack.c.b16 %v6748, %v6747
    %v6751 = vsel %vm259, %v6749, 0
    %6753 = vmatpush.bf16.msra.mxu0 0
    %6754 = vmatpush.bf16.msra.mxu0 0
    %6755 = vmatpush.bf16.msra.mxu0 0
    %6756 = vmatpush.bf16.msra.mxu0 0
    %6757 = vmatpush.bf16.msra.mxu0 %v6292
    %6758 = vmatpush.bf16.msra.mxu0 %v6291
    %6759 = vmatpush.bf16.msra.mxu0 %v6290
    %6760 = vmatpush.bf16.msra.mxu0 %v6289
    %6761 = vmatmul.bf16.gmra.mxu0 %v6751
    %v6762 = vpop.f32.mrf.mxu0
    %v6763 = vadd.f32 0.0, %v6762
    %v6764 = vpop.f32.mrf.mxu0
    %v6765 = vadd.f32 0.0, %v6764
    %6766 = vdwg.mxu0
    %v6767 = vadd.f32 %v6743, %v6763
    %v6768 = vadd.f32 %v6744, %v6765
    %v6769 = vtanh.pop %v6767
    %v6770 = vtanh.pop %v6768
    %v6771 = vpack.c.bf16 %v6769, %v6769
    %v6772 = vpack.c.bf16 %v6770, %v6770
    %6773 = vst.msk [vmem:[#allocation2 + $0x70] sm:$0xf] %vm486, %v6741
    %6774 = vst.msk [vmem:[#allocation2 + $0x74] sm:$0xf] %vm486, %v6742
    %6775 = vst.msk [vmem:[#allocation2 + $0x78] sm:$0xf] %vm486, %v6771
    %6776 = vst.msk [vmem:[#allocation2 + $0x7c] sm:$0xf] %vm486, %v6772
    %s6777 = scalar_lea.vmem [#allocation7], 256
    %v6778 = vld [vmem:[%s6777] sm:$0xf]
    %v6779 = vld [vmem:[%s6777 + $0x4] sm:$0xf]
    %v6780 = vld [vmem:[%s6777 + $0x8] sm:$0xf]
    %v6781 = vld [vmem:[%s6777 + $0xc] sm:$0xf]
    %v6782 = vld [vmem:[%s6777 + $0x10] sm:$0xf]
    %v6783 = vld [vmem:[%s6777 + $0x14] sm:$0xf]
    %v6784 = vld [vmem:[%s6777 + $0x18] sm:$0xf]
    %v6785 = vld [vmem:[%s6777 + $0x1c] sm:$0xf]
    %s6786 = scalar_lea.vmem [#allocation9], 256
    %v6787 = vld [vmem:[%s6786] sm:$0xf]
    %v6788 = vld [vmem:[%s6786 + $0x4] sm:$0xf]
    %v6789 = vld [vmem:[%s6786 + $0x8] sm:$0xf]
    %v6790 = vld [vmem:[%s6786 + $0xc] sm:$0xf]
    %v6791 = vld [vmem:[%s6786 + $0x10] sm:$0xf]
    %v6792 = vld [vmem:[%s6786 + $0x14] sm:$0xf]
    %v6793 = vld [vmem:[%s6786 + $0x18] sm:$0xf]
    %v6794 = vld [vmem:[%s6786 + $0x1c] sm:$0xf]
    %s6795 = scalar_lea.vmem [#allocation10], 8
    %v6796 = vld [vmem:[%s6795] sm:$0x1]
    %v6797 = vld [vmem:[#allocation2] sm:$0xf]
    %v6798 = vld [vmem:[#allocation2 + $0x4] sm:$0xf]
    %v6799 = vld [vmem:[#allocation2 + $0x8] sm:$0xf]
    %v6800 = vld [vmem:[#allocation2 + $0xc] sm:$0xf]
    %v6801 = vld [vmem:[#allocation2 + $0x10] sm:$0xf]
    %v6802 = vld [vmem:[#allocation2 + $0x14] sm:$0xf]
    %v6803 = vld [vmem:[#allocation2 + $0x18] sm:$0xf]
    %v6804 = vld [vmem:[#allocation2 + $0x1c] sm:$0xf]
    %v6805 = vld [vmem:[#allocation2 + $0x20] sm:$0xf]
    %v6806 = vld [vmem:[#allocation2 + $0x24] sm:$0xf]
    %v6807 = vld [vmem:[#allocation2 + $0x28] sm:$0xf]
    %v6808 = vld [vmem:[#allocation2 + $0x2c] sm:$0xf]
    %v6809 = vld [vmem:[#allocation2 + $0x30] sm:$0xf]
    %v6810 = vld [vmem:[#allocation2 + $0x34] sm:$0xf]
    %v6811 = vld [vmem:[#allocation2 + $0x38] sm:$0xf]
    %v6812 = vld [vmem:[#allocation2 + $0x3c] sm:$0xf]
    %v6813 = vld [vmem:[#allocation2 + $0x40] sm:$0xf]
    %v6814 = vld [vmem:[#allocation2 + $0x44] sm:$0xf]
    %v6815 = vld [vmem:[#allocation2 + $0x48] sm:$0xf]
    %v6816 = vld [vmem:[#allocation2 + $0x4c] sm:$0xf]
    %v6817 = vld [vmem:[#allocation2 + $0x50] sm:$0xf]
    %v6818 = vld [vmem:[#allocation2 + $0x54] sm:$0xf]
    %v6819 = vld [vmem:[#allocation2 + $0x58] sm:$0xf]
    %v6820 = vld [vmem:[#allocation2 + $0x5c] sm:$0xf]
    %v6821 = vld [vmem:[#allocation2 + $0x60] sm:$0xf]
    %v6822 = vld [vmem:[#allocation2 + $0x64] sm:$0xf]
    %v6823 = vld [vmem:[#allocation2 + $0x68] sm:$0xf]
    %v6824 = vld [vmem:[#allocation2 + $0x6c] sm:$0xf]
    %v6825 = vld [vmem:[#allocation2 + $0x70] sm:$0xf]
    %v6826 = vld [vmem:[#allocation2 + $0x74] sm:$0xf]
    %v6827 = vld [vmem:[#allocation2 + $0x78] sm:$0xf]
    %v6828 = vld [vmem:[#allocation2 + $0x7c] sm:$0xf]
    %v6830 = vperm.slane %v6796, 0
    %v6864 = vunpack.c.l.b16 %v6797
    %v6865 = vunpack.c.l.b16 %v6798
    %v6866 = vunpack.c.l.b16 %v6799
    %v6867 = vunpack.c.l.b16 %v6800
    %v6868 = vunpack.c.l.b16 %v6801
    %v6869 = vunpack.c.l.b16 %v6802
    %v6870 = vunpack.c.l.b16 %v6803
    %v6871 = vunpack.c.l.b16 %v6804
    %v6872 = vunpack.c.l.b16 %v6805
    %v6873 = vunpack.c.l.b16 %v6806
    %v6874 = vunpack.c.l.b16 %v6807
    %v6875 = vunpack.c.l.b16 %v6808
    %v6876 = vunpack.c.l.b16 %v6809
    %v6877 = vunpack.c.l.b16 %v6810
    %v6878 = vunpack.c.l.b16 %v6811
    %v6879 = vunpack.c.l.b16 %v6812
    %v6880 = vunpack.c.l.b16 %v6813
    %v6881 = vunpack.c.l.b16 %v6814
    %v6882 = vunpack.c.l.b16 %v6815
    %v6883 = vunpack.c.l.b16 %v6816
    %v6884 = vunpack.c.l.b16 %v6817
    %v6885 = vunpack.c.l.b16 %v6818
    %v6886 = vunpack.c.l.b16 %v6819
    %v6887 = vunpack.c.l.b16 %v6820
    %v6888 = vunpack.c.l.b16 %v6821
    %v6889 = vunpack.c.l.b16 %v6822
    %v6890 = vunpack.c.l.b16 %v6823
    %v6891 = vunpack.c.l.b16 %v6824
    %v6892 = vunpack.c.l.b16 %v6825
    %v6893 = vunpack.c.l.b16 %v6826
    %v6894 = vunpack.c.l.b16 %v6827
    %v6895 = vunpack.c.l.b16 %v6828
    %v6896 = vpack.c.b16 %v6865, %v6864
    %v6897 = vpack.c.b16 %v6867, %v6866
    %v6898 = vpack.c.b16 %v6869, %v6868
    %v6899 = vpack.c.b16 %v6871, %v6870
    %v6900 = vpack.c.b16 %v6873, %v6872
    %v6901 = vpack.c.b16 %v6875, %v6874
    %v6902 = vpack.c.b16 %v6877, %v6876
    %v6903 = vpack.c.b16 %v6879, %v6878
    %v6904 = vpack.c.b16 %v6881, %v6880
    %v6905 = vpack.c.b16 %v6883, %v6882
    %v6906 = vpack.c.b16 %v6885, %v6884
    %v6907 = vpack.c.b16 %v6887, %v6886
    %v6908 = vpack.c.b16 %v6889, %v6888
    %v6909 = vpack.c.b16 %v6891, %v6890
    %v6910 = vpack.c.b16 %v6893, %v6892
    %v6911 = vpack.c.b16 %v6895, %v6894
    %v6920 = vunpack.c.l.b16 %v6778
    %v6921 = vunpack.c.l.b16 %v6779
    %v6922 = vunpack.c.l.b16 %v6780
    %v6923 = vunpack.c.l.b16 %v6781
    %v6924 = vunpack.c.l.b16 %v6782
    %v6925 = vunpack.c.l.b16 %v6783
    %v6926 = vunpack.c.l.b16 %v6784
    %v6927 = vunpack.c.l.b16 %v6785
    %v6928 = vpack.c.b16 %v6921, %v6920
    %v6929 = vpack.c.b16 %v6923, %v6922
    %v6930 = vpack.c.b16 %v6925, %v6924
    %v6931 = vpack.c.b16 %v6927, %v6926
    %v6937 = vsel %vm259, %v6896, 0
    %v6940 = vsel %vm259, %v6897, 0
    %v6943 = vsel %vm259, %v6898, 0
    %v6946 = vsel %vm259, %v6899, 0
    %v6949 = vsel %vm259, %v6900, 0
    %v6952 = vsel %vm259, %v6901, 0
    %v6955 = vsel %vm259, %v6902, 0
    %v6958 = vsel %vm259, %v6903, 0
    %v6961 = vsel %vm259, %v6904, 0
    %v6964 = vsel %vm259, %v6905, 0
    %v6967 = vsel %vm259, %v6906, 0
    %v6970 = vsel %vm259, %v6907, 0
    %v6973 = vsel %vm259, %v6908, 0
    %v6976 = vsel %vm259, %v6909, 0
    %v6979 = vsel %vm259, %v6910, 0
    %v6982 = vsel %vm259, %v6911, 0
    %6984 = vmatpush.bf16.msra.mxu0 0
    %6985 = vmatpush.bf16.msra.mxu0 0
    %6986 = vmatpush.bf16.msra.mxu0 0
    %6987 = vmatpush.bf16.msra.mxu0 0
    %6988 = vmatpush.bf16.msra.mxu0 %v6931
    %6989 = vmatpush.bf16.msra.mxu0 %v6930
    %6990 = vmatpush.bf16.msra.mxu0 %v6929
    %6991 = vmatpush.bf16.msra.mxu0 %v6928
    %6992 = vmatmul.bf16.gmra.mxu0 %v6937
    %v6993 = vpop.f32.mrf.mxu0
    %v6994 = vadd.f32 %v6830, %v6993
    %v6995 = vpop.f32.mrf.mxu0
    %v6996 = vadd.f32 %v6830, %v6995
    %6997 = vmatmul.bf16.gmra.mxu0 %v6940
    %v6998 = vpop.f32.mrf.mxu0
    %v6999 = vadd.f32 %v6830, %v6998
    %v7000 = vpop.f32.mrf.mxu0
    %v7001 = vadd.f32 %v6830, %v7000
    %7002 = vmatmul.bf16.gmra.mxu0 %v6943
    %v7003 = vpop.f32.mrf.mxu0
    %v7004 = vadd.f32 %v6830, %v7003
    %v7005 = vpop.f32.mrf.mxu0
    %v7006 = vadd.f32 %v6830, %v7005
    %7007 = vmatmul.bf16.gmra.mxu0 %v6946
    %v7008 = vpop.f32.mrf.mxu0
    %v7009 = vadd.f32 %v6830, %v7008
    %v7010 = vpop.f32.mrf.mxu0
    %v7011 = vadd.f32 %v6830, %v7010
    %7012 = vmatmul.bf16.gmra.mxu0 %v6949
    %v7013 = vpop.f32.mrf.mxu0
    %v7014 = vadd.f32 %v6830, %v7013
    %v7015 = vpop.f32.mrf.mxu0
    %v7016 = vadd.f32 %v6830, %v7015
    %7017 = vmatmul.bf16.gmra.mxu0 %v6952
    %v7018 = vpop.f32.mrf.mxu0
    %v7019 = vadd.f32 %v6830, %v7018
    %v7020 = vpop.f32.mrf.mxu0
    %v7021 = vadd.f32 %v6830, %v7020
    %7022 = vmatmul.bf16.gmra.mxu0 %v6955
    %v7023 = vpop.f32.mrf.mxu0
    %v7024 = vadd.f32 %v6830, %v7023
    %v7025 = vpop.f32.mrf.mxu0
    %v7026 = vadd.f32 %v6830, %v7025
    %7027 = vmatmul.bf16.gmra.mxu0 %v6958
    %v7028 = vpop.f32.mrf.mxu0
    %v7029 = vadd.f32 %v6830, %v7028
    %v7030 = vpop.f32.mrf.mxu0
    %v7031 = vadd.f32 %v6830, %v7030
    %7032 = vmatmul.bf16.gmra.mxu0 %v6961
    %v7033 = vpop.f32.mrf.mxu0
    %v7034 = vadd.f32 %v6830, %v7033
    %v7035 = vpop.f32.mrf.mxu0
    %v7036 = vadd.f32 %v6830, %v7035
    %7037 = vmatmul.bf16.gmra.mxu0 %v6964
    %v7038 = vpop.f32.mrf.mxu0
    %v7039 = vadd.f32 %v6830, %v7038
    %v7040 = vpop.f32.mrf.mxu0
    %v7041 = vadd.f32 %v6830, %v7040
    %7042 = vmatmul.bf16.gmra.mxu0 %v6967
    %v7043 = vpop.f32.mrf.mxu0
    %v7044 = vadd.f32 %v6830, %v7043
    %v7045 = vpop.f32.mrf.mxu0
    %v7046 = vadd.f32 %v6830, %v7045
    %7047 = vmatmul.bf16.gmra.mxu0 %v6970
    %v7048 = vpop.f32.mrf.mxu0
    %v7049 = vadd.f32 %v6830, %v7048
    %v7050 = vpop.f32.mrf.mxu0
    %v7051 = vadd.f32 %v6830, %v7050
    %7052 = vmatmul.bf16.gmra.mxu0 %v6973
    %v7053 = vpop.f32.mrf.mxu0
    %v7054 = vadd.f32 %v6830, %v7053
    %v7055 = vpop.f32.mrf.mxu0
    %v7056 = vadd.f32 %v6830, %v7055
    %7057 = vmatmul.bf16.gmra.mxu0 %v6976
    %v7058 = vpop.f32.mrf.mxu0
    %v7059 = vadd.f32 %v6830, %v7058
    %v7060 = vpop.f32.mrf.mxu0
    %v7061 = vadd.f32 %v6830, %v7060
    %7062 = vmatmul.bf16.gmra.mxu0 %v6979
    %v7063 = vpop.f32.mrf.mxu0
    %v7064 = vadd.f32 %v6830, %v7063
    %v7065 = vpop.f32.mrf.mxu0
    %v7066 = vadd.f32 %v6830, %v7065
    %7067 = vmatmul.bf16.gmra.mxu0 %v6982
    %v7068 = vpop.f32.mrf.mxu0
    %v7069 = vadd.f32 %v6830, %v7068
    %v7070 = vpop.f32.mrf.mxu0
    %v7071 = vadd.f32 %v6830, %v7070
    %7072 = vdwg.mxu0
    %7073 = vst.msk [vmem:[#allocation3] sm:$0xff] %vm259, %v6994
    %7074 = vst.msk [vmem:[#allocation3 + $0x8] sm:$0xff] %vm259, %v6996
    %7075 = vst.msk [vmem:[#allocation3 + $0x10] sm:$0xff] %vm259, %v6999
    %7076 = vst.msk [vmem:[#allocation3 + $0x18] sm:$0xff] %vm259, %v7001
    %7077 = vst.msk [vmem:[#allocation3 + $0x20] sm:$0xff] %vm259, %v7004
    %7078 = vst.msk [vmem:[#allocation3 + $0x28] sm:$0xff] %vm259, %v7006
    %7079 = vst.msk [vmem:[#allocation3 + $0x30] sm:$0xff] %vm259, %v7009
    %7080 = vst.msk [vmem:[#allocation3 + $0x38] sm:$0xff] %vm259, %v7011
    %7081 = vst.msk [vmem:[#allocation3 + $0x40] sm:$0xff] %vm259, %v7014
    %7082 = vst.msk [vmem:[#allocation3 + $0x48] sm:$0xff] %vm259, %v7016
    %7083 = vst.msk [vmem:[#allocation3 + $0x50] sm:$0xff] %vm259, %v7019
    %7084 = vst.msk [vmem:[#allocation3 + $0x58] sm:$0xff] %vm259, %v7021
    %7085 = vst.msk [vmem:[#allocation3 + $0x60] sm:$0xff] %vm259, %v7024
    %7086 = vst.msk [vmem:[#allocation3 + $0x68] sm:$0xff] %vm259, %v7026
    %7087 = vst.msk [vmem:[#allocation3 + $0x70] sm:$0xff] %vm259, %v7029
    %7088 = vst.msk [vmem:[#allocation3 + $0x78] sm:$0xff] %vm259, %v7031
    %7089 = vst.msk [vmem:[#allocation3 + $0x80] sm:$0xff] %vm259, %v7034
    %7090 = vst.msk [vmem:[#allocation3 + $0x88] sm:$0xff] %vm259, %v7036
    %7091 = vst.msk [vmem:[#allocation3 + $0x90] sm:$0xff] %vm259, %v7039
    %7092 = vst.msk [vmem:[#allocation3 + $0x98] sm:$0xff] %vm259, %v7041
    %7093 = vst.msk [vmem:[#allocation3 + $0xa0] sm:$0xff] %vm259, %v7044
    %7094 = vst.msk [vmem:[#allocation3 + $0xa8] sm:$0xff] %vm259, %v7046
    %7095 = vst.msk [vmem:[#allocation3 + $0xb0] sm:$0xff] %vm259, %v7049
    %7096 = vst.msk [vmem:[#allocation3 + $0xb8] sm:$0xff] %vm259, %v7051
    %7097 = vst.msk [vmem:[#allocation3 + $0xc0] sm:$0xff] %vm259, %v7054
    %7098 = vst.msk [vmem:[#allocation3 + $0xc8] sm:$0xff] %vm259, %v7056
    %7099 = vst.msk [vmem:[#allocation3 + $0xd0] sm:$0xff] %vm259, %v7059
    %7100 = vst.msk [vmem:[#allocation3 + $0xd8] sm:$0xff] %vm259, %v7061
    %7101 = vst.msk [vmem:[#allocation3 + $0xe0] sm:$0xff] %vm259, %v7064
    %7102 = vst.msk [vmem:[#allocation3 + $0xe8] sm:$0xff] %vm259, %v7066
    %7103 = vst.msk [vmem:[#allocation3 + $0xf0] sm:$0xff] %vm259, %v7069
    %7104 = vst.msk [vmem:[#allocation3 + $0xf8] sm:$0xff] %vm259, %v7071
    %v7105 = vld [vmem:[#allocation3] sm:$0xff]
    %v7106 = vld [vmem:[#allocation3 + $0x8] sm:$0xff]
    %v7115 = vunpack.c.l.b16 %v6787
    %v7116 = vunpack.c.l.b16 %v6788
    %v7117 = vunpack.c.l.b16 %v6789
    %v7118 = vunpack.c.l.b16 %v6790
    %v7119 = vunpack.c.l.b16 %v6791
    %v7120 = vunpack.c.l.b16 %v6792
    %v7121 = vunpack.c.l.b16 %v6793
    %v7122 = vunpack.c.l.b16 %v6794
    %v7123 = vpack.c.b16 %v7116, %v7115
    %v7124 = vpack.c.b16 %v7118, %v7117
    %v7125 = vpack.c.b16 %v7120, %v7119
    %v7126 = vpack.c.b16 %v7122, %v7121
    %7131 = vmatpush.bf16.msra.mxu0 0
    %7132 = vmatpush.bf16.msra.mxu0 0
    %7133 = vmatpush.bf16.msra.mxu0 0
    %7134 = vmatpush.bf16.msra.mxu0 0
    %7135 = vmatpush.bf16.msra.mxu0 %v7126
    %7136 = vmatpush.bf16.msra.mxu0 %v7125
    %7137 = vmatpush.bf16.msra.mxu0 %v7124
    %7138 = vmatpush.bf16.msra.mxu0 %v7123
    %7139 = vmatmul.bf16.gmra.mxu0 %v456
    %v7140 = vpop.f32.mrf.mxu0
    %v7141 = vadd.f32 0.0, %v7140
    %v7142 = vpop.f32.mrf.mxu0
    %v7143 = vadd.f32 0.0, %v7142
    %7144 = vdwg.mxu0
    %v7145 = vadd.f32 %v7105, %v7141
    %v7146 = vadd.f32 %v7106, %v7143
    %v7147 = vtanh.pop %v7145
    %v7148 = vtanh.pop %v7146
    %v7149 = vpack.c.bf16 %v7147, %v7147
    %v7150 = vpack.c.bf16 %v7148, %v7148
    %v7151 = vld [vmem:[#allocation3 + $0x10] sm:$0xff]
    %v7152 = vld [vmem:[#allocation3 + $0x18] sm:$0xff]
    %v7153 = vadd.f32 %v7151, %v7141
    %v7154 = vadd.f32 %v7152, %v7143
    %v7155 = vtanh.pop %v7153
    %v7156 = vtanh.pop %v7154
    %v7157 = vpack.c.bf16 %v7155, %v7155
    %v7158 = vpack.c.bf16 %v7156, %v7156
    %7159 = vst.msk [vmem:[#allocation2] sm:$0xf] %vm486, %v7149
    %7160 = vst.msk [vmem:[#allocation2 + $0x4] sm:$0xf] %vm486, %v7150
    %7161 = vst.msk [vmem:[#allocation2 + $0x8] sm:$0xf] %vm486, %v7157
    %7162 = vst.msk [vmem:[#allocation2 + $0xc] sm:$0xf] %vm486, %v7158
    %v7163 = vld [vmem:[#allocation3 + $0x20] sm:$0xff]
    %v7164 = vld [vmem:[#allocation3 + $0x28] sm:$0xff]
    %v7167 = vunpack.c.l.b16 %v7149
    %v7168 = vunpack.c.l.b16 %v7150
    %v7169 = vpack.c.b16 %v7168, %v7167
    %v7171 = vsel %vm259, %v7169, 0
    %7173 = vmatpush.bf16.msra.mxu0 0
    %7174 = vmatpush.bf16.msra.mxu0 0
    %7175 = vmatpush.bf16.msra.mxu0 0
    %7176 = vmatpush.bf16.msra.mxu0 0
    %7177 = vmatpush.bf16.msra.mxu0 %v7126
    %7178 = vmatpush.bf16.msra.mxu0 %v7125
    %7179 = vmatpush.bf16.msra.mxu0 %v7124
    %7180 = vmatpush.bf16.msra.mxu0 %v7123
    %7181 = vmatmul.bf16.gmra.mxu0 %v7171
    %v7182 = vpop.f32.mrf.mxu0
    %v7183 = vadd.f32 0.0, %v7182
    %v7184 = vpop.f32.mrf.mxu0
    %v7185 = vadd.f32 0.0, %v7184
    %7186 = vdwg.mxu0
    %v7187 = vadd.f32 %v7163, %v7183
    %v7188 = vadd.f32 %v7164, %v7185
    %v7189 = vtanh.pop %v7187
    %v7190 = vtanh.pop %v7188
    %v7191 = vpack.c.bf16 %v7189, %v7189
    %v7192 = vpack.c.bf16 %v7190, %v7190
    %v7193 = vld [vmem:[#allocation3 + $0x30] sm:$0xff]
    %v7194 = vld [vmem:[#allocation3 + $0x38] sm:$0xff]
    %v7197 = vunpack.c.l.b16 %v7157
    %v7198 = vunpack.c.l.b16 %v7158
    %v7199 = vpack.c.b16 %v7198, %v7197
    %v7201 = vsel %vm259, %v7199, 0
    %7203 = vmatpush.bf16.msra.mxu0 0
    %7204 = vmatpush.bf16.msra.mxu0 0
    %7205 = vmatpush.bf16.msra.mxu0 0
    %7206 = vmatpush.bf16.msra.mxu0 0
    %7207 = vmatpush.bf16.msra.mxu0 %v7126
    %7208 = vmatpush.bf16.msra.mxu0 %v7125
    %7209 = vmatpush.bf16.msra.mxu0 %v7124
    %7210 = vmatpush.bf16.msra.mxu0 %v7123
    %7211 = vmatmul.bf16.gmra.mxu0 %v7201
    %v7212 = vpop.f32.mrf.mxu0
    %v7213 = vadd.f32 0.0, %v7212
    %v7214 = vpop.f32.mrf.mxu0
    %v7215 = vadd.f32 0.0, %v7214
    %7216 = vdwg.mxu0
    %v7217 = vadd.f32 %v7193, %v7213
    %v7218 = vadd.f32 %v7194, %v7215
    %v7219 = vtanh.pop %v7217
    %v7220 = vtanh.pop %v7218
    %v7221 = vpack.c.bf16 %v7219, %v7219
    %v7222 = vpack.c.bf16 %v7220, %v7220
    %7223 = vst.msk [vmem:[#allocation2 + $0x10] sm:$0xf] %vm486, %v7191
    %7224 = vst.msk [vmem:[#allocation2 + $0x14] sm:$0xf] %vm486, %v7192
    %7225 = vst.msk [vmem:[#allocation2 + $0x18] sm:$0xf] %vm486, %v7221
    %7226 = vst.msk [vmem:[#allocation2 + $0x1c] sm:$0xf] %vm486, %v7222
    %v7227 = vld [vmem:[#allocation3 + $0x40] sm:$0xff]
    %v7228 = vld [vmem:[#allocation3 + $0x48] sm:$0xff]
    %v7231 = vunpack.c.l.b16 %v7191
    %v7232 = vunpack.c.l.b16 %v7192
    %v7233 = vpack.c.b16 %v7232, %v7231
    %v7235 = vsel %vm259, %v7233, 0
    %7237 = vmatpush.bf16.msra.mxu0 0
    %7238 = vmatpush.bf16.msra.mxu0 0
    %7239 = vmatpush.bf16.msra.mxu0 0
    %7240 = vmatpush.bf16.msra.mxu0 0
    %7241 = vmatpush.bf16.msra.mxu0 %v7126
    %7242 = vmatpush.bf16.msra.mxu0 %v7125
    %7243 = vmatpush.bf16.msra.mxu0 %v7124
    %7244 = vmatpush.bf16.msra.mxu0 %v7123
    %7245 = vmatmul.bf16.gmra.mxu0 %v7235
    %v7246 = vpop.f32.mrf.mxu0
    %v7247 = vadd.f32 0.0, %v7246
    %v7248 = vpop.f32.mrf.mxu0
    %v7249 = vadd.f32 0.0, %v7248
    %7250 = vdwg.mxu0
    %v7251 = vadd.f32 %v7227, %v7247
    %v7252 = vadd.f32 %v7228, %v7249
    %v7253 = vtanh.pop %v7251
    %v7254 = vtanh.pop %v7252
    %v7255 = vpack.c.bf16 %v7253, %v7253
    %v7256 = vpack.c.bf16 %v7254, %v7254
    %v7257 = vld [vmem:[#allocation3 + $0x50] sm:$0xff]
    %v7258 = vld [vmem:[#allocation3 + $0x58] sm:$0xff]
    %v7261 = vunpack.c.l.b16 %v7221
    %v7262 = vunpack.c.l.b16 %v7222
    %v7263 = vpack.c.b16 %v7262, %v7261
    %v7265 = vsel %vm259, %v7263, 0
    %7267 = vmatpush.bf16.msra.mxu0 0
    %7268 = vmatpush.bf16.msra.mxu0 0
    %7269 = vmatpush.bf16.msra.mxu0 0
    %7270 = vmatpush.bf16.msra.mxu0 0
    %7271 = vmatpush.bf16.msra.mxu0 %v7126
    %7272 = vmatpush.bf16.msra.mxu0 %v7125
    %7273 = vmatpush.bf16.msra.mxu0 %v7124
    %7274 = vmatpush.bf16.msra.mxu0 %v7123
    %7275 = vmatmul.bf16.gmra.mxu0 %v7265
    %v7276 = vpop.f32.mrf.mxu0
    %v7277 = vadd.f32 0.0, %v7276
    %v7278 = vpop.f32.mrf.mxu0
    %v7279 = vadd.f32 0.0, %v7278
    %7280 = vdwg.mxu0
    %v7281 = vadd.f32 %v7257, %v7277
    %v7282 = vadd.f32 %v7258, %v7279
    %v7283 = vtanh.pop %v7281
    %v7284 = vtanh.pop %v7282
    %v7285 = vpack.c.bf16 %v7283, %v7283
    %v7286 = vpack.c.bf16 %v7284, %v7284
    %7287 = vst.msk [vmem:[#allocation2 + $0x20] sm:$0xf] %vm486, %v7255
    %7288 = vst.msk [vmem:[#allocation2 + $0x24] sm:$0xf] %vm486, %v7256
    %7289 = vst.msk [vmem:[#allocation2 + $0x28] sm:$0xf] %vm486, %v7285
    %7290 = vst.msk [vmem:[#allocation2 + $0x2c] sm:$0xf] %vm486, %v7286
    %v7291 = vld [vmem:[#allocation3 + $0x60] sm:$0xff]
    %v7292 = vld [vmem:[#allocation3 + $0x68] sm:$0xff]
    %v7295 = vunpack.c.l.b16 %v7255
    %v7296 = vunpack.c.l.b16 %v7256
    %v7297 = vpack.c.b16 %v7296, %v7295
    %v7299 = vsel %vm259, %v7297, 0
    %7301 = vmatpush.bf16.msra.mxu0 0
    %7302 = vmatpush.bf16.msra.mxu0 0
    %7303 = vmatpush.bf16.msra.mxu0 0
    %7304 = vmatpush.bf16.msra.mxu0 0
    %7305 = vmatpush.bf16.msra.mxu0 %v7126
    %7306 = vmatpush.bf16.msra.mxu0 %v7125
    %7307 = vmatpush.bf16.msra.mxu0 %v7124
    %7308 = vmatpush.bf16.msra.mxu0 %v7123
    %7309 = vmatmul.bf16.gmra.mxu0 %v7299
    %v7310 = vpop.f32.mrf.mxu0
    %v7311 = vadd.f32 0.0, %v7310
    %v7312 = vpop.f32.mrf.mxu0
    %v7313 = vadd.f32 0.0, %v7312
    %7314 = vdwg.mxu0
    %v7315 = vadd.f32 %v7291, %v7311
    %v7316 = vadd.f32 %v7292, %v7313
    %v7317 = vtanh.pop %v7315
    %v7318 = vtanh.pop %v7316
    %v7319 = vpack.c.bf16 %v7317, %v7317
    %v7320 = vpack.c.bf16 %v7318, %v7318
    %v7321 = vld [vmem:[#allocation3 + $0x70] sm:$0xff]
    %v7322 = vld [vmem:[#allocation3 + $0x78] sm:$0xff]
    %v7325 = vunpack.c.l.b16 %v7285
    %v7326 = vunpack.c.l.b16 %v7286
    %v7327 = vpack.c.b16 %v7326, %v7325
    %v7329 = vsel %vm259, %v7327, 0
    %7331 = vmatpush.bf16.msra.mxu0 0
    %7332 = vmatpush.bf16.msra.mxu0 0
    %7333 = vmatpush.bf16.msra.mxu0 0
    %7334 = vmatpush.bf16.msra.mxu0 0
    %7335 = vmatpush.bf16.msra.mxu0 %v7126
    %7336 = vmatpush.bf16.msra.mxu0 %v7125
    %7337 = vmatpush.bf16.msra.mxu0 %v7124
    %7338 = vmatpush.bf16.msra.mxu0 %v7123
    %7339 = vmatmul.bf16.gmra.mxu0 %v7329
    %v7340 = vpop.f32.mrf.mxu0
    %v7341 = vadd.f32 0.0, %v7340
    %v7342 = vpop.f32.mrf.mxu0
    %v7343 = vadd.f32 0.0, %v7342
    %7344 = vdwg.mxu0
    %v7345 = vadd.f32 %v7321, %v7341
    %v7346 = vadd.f32 %v7322, %v7343
    %v7347 = vtanh.pop %v7345
    %v7348 = vtanh.pop %v7346
    %v7349 = vpack.c.bf16 %v7347, %v7347
    %v7350 = vpack.c.bf16 %v7348, %v7348
    %7351 = vst.msk [vmem:[#allocation2 + $0x30] sm:$0xf] %vm486, %v7319
    %7352 = vst.msk [vmem:[#allocation2 + $0x34] sm:$0xf] %vm486, %v7320
    %7353 = vst.msk [vmem:[#allocation2 + $0x38] sm:$0xf] %vm486, %v7349
    %7354 = vst.msk [vmem:[#allocation2 + $0x3c] sm:$0xf] %vm486, %v7350
    %v7355 = vld [vmem:[#allocation3 + $0x80] sm:$0xff]
    %v7356 = vld [vmem:[#allocation3 + $0x88] sm:$0xff]
    %v7359 = vunpack.c.l.b16 %v7319
    %v7360 = vunpack.c.l.b16 %v7320
    %v7361 = vpack.c.b16 %v7360, %v7359
    %v7363 = vsel %vm259, %v7361, 0
    %7365 = vmatpush.bf16.msra.mxu0 0
    %7366 = vmatpush.bf16.msra.mxu0 0
    %7367 = vmatpush.bf16.msra.mxu0 0
    %7368 = vmatpush.bf16.msra.mxu0 0
    %7369 = vmatpush.bf16.msra.mxu0 %v7126
    %7370 = vmatpush.bf16.msra.mxu0 %v7125
    %7371 = vmatpush.bf16.msra.mxu0 %v7124
    %7372 = vmatpush.bf16.msra.mxu0 %v7123
    %7373 = vmatmul.bf16.gmra.mxu0 %v7363
    %v7374 = vpop.f32.mrf.mxu0
    %v7375 = vadd.f32 0.0, %v7374
    %v7376 = vpop.f32.mrf.mxu0
    %v7377 = vadd.f32 0.0, %v7376
    %7378 = vdwg.mxu0
    %v7379 = vadd.f32 %v7355, %v7375
    %v7380 = vadd.f32 %v7356, %v7377
    %v7381 = vtanh.pop %v7379
    %v7382 = vtanh.pop %v7380
    %v7383 = vpack.c.bf16 %v7381, %v7381
    %v7384 = vpack.c.bf16 %v7382, %v7382
    %v7385 = vld [vmem:[#allocation3 + $0x90] sm:$0xff]
    %v7386 = vld [vmem:[#allocation3 + $0x98] sm:$0xff]
    %v7389 = vunpack.c.l.b16 %v7349
    %v7390 = vunpack.c.l.b16 %v7350
    %v7391 = vpack.c.b16 %v7390, %v7389
    %v7393 = vsel %vm259, %v7391, 0
    %7395 = vmatpush.bf16.msra.mxu0 0
    %7396 = vmatpush.bf16.msra.mxu0 0
    %7397 = vmatpush.bf16.msra.mxu0 0
    %7398 = vmatpush.bf16.msra.mxu0 0
    %7399 = vmatpush.bf16.msra.mxu0 %v7126
    %7400 = vmatpush.bf16.msra.mxu0 %v7125
    %7401 = vmatpush.bf16.msra.mxu0 %v7124
    %7402 = vmatpush.bf16.msra.mxu0 %v7123
    %7403 = vmatmul.bf16.gmra.mxu0 %v7393
    %v7404 = vpop.f32.mrf.mxu0
    %v7405 = vadd.f32 0.0, %v7404
    %v7406 = vpop.f32.mrf.mxu0
    %v7407 = vadd.f32 0.0, %v7406
    %7408 = vdwg.mxu0
    %v7409 = vadd.f32 %v7385, %v7405
    %v7410 = vadd.f32 %v7386, %v7407
    %v7411 = vtanh.pop %v7409
    %v7412 = vtanh.pop %v7410
    %v7413 = vpack.c.bf16 %v7411, %v7411
    %v7414 = vpack.c.bf16 %v7412, %v7412
    %7415 = vst.msk [vmem:[#allocation2 + $0x40] sm:$0xf] %vm486, %v7383
    %7416 = vst.msk [vmem:[#allocation2 + $0x44] sm:$0xf] %vm486, %v7384
    %7417 = vst.msk [vmem:[#allocation2 + $0x48] sm:$0xf] %vm486, %v7413
    %7418 = vst.msk [vmem:[#allocation2 + $0x4c] sm:$0xf] %vm486, %v7414
    %v7419 = vld [vmem:[#allocation3 + $0xa0] sm:$0xff]
    %v7420 = vld [vmem:[#allocation3 + $0xa8] sm:$0xff]
    %v7423 = vunpack.c.l.b16 %v7383
    %v7424 = vunpack.c.l.b16 %v7384
    %v7425 = vpack.c.b16 %v7424, %v7423
    %v7427 = vsel %vm259, %v7425, 0
    %7429 = vmatpush.bf16.msra.mxu0 0
    %7430 = vmatpush.bf16.msra.mxu0 0
    %7431 = vmatpush.bf16.msra.mxu0 0
    %7432 = vmatpush.bf16.msra.mxu0 0
    %7433 = vmatpush.bf16.msra.mxu0 %v7126
    %7434 = vmatpush.bf16.msra.mxu0 %v7125
    %7435 = vmatpush.bf16.msra.mxu0 %v7124
    %7436 = vmatpush.bf16.msra.mxu0 %v7123
    %7437 = vmatmul.bf16.gmra.mxu0 %v7427
    %v7438 = vpop.f32.mrf.mxu0
    %v7439 = vadd.f32 0.0, %v7438
    %v7440 = vpop.f32.mrf.mxu0
    %v7441 = vadd.f32 0.0, %v7440
    %7442 = vdwg.mxu0
    %v7443 = vadd.f32 %v7419, %v7439
    %v7444 = vadd.f32 %v7420, %v7441
    %v7445 = vtanh.pop %v7443
    %v7446 = vtanh.pop %v7444
    %v7447 = vpack.c.bf16 %v7445, %v7445
    %v7448 = vpack.c.bf16 %v7446, %v7446
    %v7449 = vld [vmem:[#allocation3 + $0xb0] sm:$0xff]
    %v7450 = vld [vmem:[#allocation3 + $0xb8] sm:$0xff]
    %v7453 = vunpack.c.l.b16 %v7413
    %v7454 = vunpack.c.l.b16 %v7414
    %v7455 = vpack.c.b16 %v7454, %v7453
    %v7457 = vsel %vm259, %v7455, 0
    %7459 = vmatpush.bf16.msra.mxu0 0
    %7460 = vmatpush.bf16.msra.mxu0 0
    %7461 = vmatpush.bf16.msra.mxu0 0
    %7462 = vmatpush.bf16.msra.mxu0 0
    %7463 = vmatpush.bf16.msra.mxu0 %v7126
    %7464 = vmatpush.bf16.msra.mxu0 %v7125
    %7465 = vmatpush.bf16.msra.mxu0 %v7124
    %7466 = vmatpush.bf16.msra.mxu0 %v7123
    %7467 = vmatmul.bf16.gmra.mxu0 %v7457
    %v7468 = vpop.f32.mrf.mxu0
    %v7469 = vadd.f32 0.0, %v7468
    %v7470 = vpop.f32.mrf.mxu0
    %v7471 = vadd.f32 0.0, %v7470
    %7472 = vdwg.mxu0
    %v7473 = vadd.f32 %v7449, %v7469
    %v7474 = vadd.f32 %v7450, %v7471
    %v7475 = vtanh.pop %v7473
    %v7476 = vtanh.pop %v7474
    %v7477 = vpack.c.bf16 %v7475, %v7475
    %v7478 = vpack.c.bf16 %v7476, %v7476
    %7479 = vst.msk [vmem:[#allocation2 + $0x50] sm:$0xf] %vm486, %v7447
    %7480 = vst.msk [vmem:[#allocation2 + $0x54] sm:$0xf] %vm486, %v7448
    %7481 = vst.msk [vmem:[#allocation2 + $0x58] sm:$0xf] %vm486, %v7477
    %7482 = vst.msk [vmem:[#allocation2 + $0x5c] sm:$0xf] %vm486, %v7478
    %v7483 = vld [vmem:[#allocation3 + $0xc0] sm:$0xff]
    %v7484 = vld [vmem:[#allocation3 + $0xc8] sm:$0xff]
    %v7487 = vunpack.c.l.b16 %v7447
    %v7488 = vunpack.c.l.b16 %v7448
    %v7489 = vpack.c.b16 %v7488, %v7487
    %v7491 = vsel %vm259, %v7489, 0
    %7493 = vmatpush.bf16.msra.mxu0 0
    %7494 = vmatpush.bf16.msra.mxu0 0
    %7495 = vmatpush.bf16.msra.mxu0 0
    %7496 = vmatpush.bf16.msra.mxu0 0
    %7497 = vmatpush.bf16.msra.mxu0 %v7126
    %7498 = vmatpush.bf16.msra.mxu0 %v7125
    %7499 = vmatpush.bf16.msra.mxu0 %v7124
    %7500 = vmatpush.bf16.msra.mxu0 %v7123
    %7501 = vmatmul.bf16.gmra.mxu0 %v7491
    %v7502 = vpop.f32.mrf.mxu0
    %v7503 = vadd.f32 0.0, %v7502
    %v7504 = vpop.f32.mrf.mxu0
    %v7505 = vadd.f32 0.0, %v7504
    %7506 = vdwg.mxu0
    %v7507 = vadd.f32 %v7483, %v7503
    %v7508 = vadd.f32 %v7484, %v7505
    %v7509 = vtanh.pop %v7507
    %v7510 = vtanh.pop %v7508
    %v7511 = vpack.c.bf16 %v7509, %v7509
    %v7512 = vpack.c.bf16 %v7510, %v7510
    %v7513 = vld [vmem:[#allocation3 + $0xd0] sm:$0xff]
    %v7514 = vld [vmem:[#allocation3 + $0xd8] sm:$0xff]
    %v7517 = vunpack.c.l.b16 %v7477
    %v7518 = vunpack.c.l.b16 %v7478
    %v7519 = vpack.c.b16 %v7518, %v7517
    %v7521 = vsel %vm259, %v7519, 0
    %7523 = vmatpush.bf16.msra.mxu0 0
    %7524 = vmatpush.bf16.msra.mxu0 0
    %7525 = vmatpush.bf16.msra.mxu0 0
    %7526 = vmatpush.bf16.msra.mxu0 0
    %7527 = vmatpush.bf16.msra.mxu0 %v7126
    %7528 = vmatpush.bf16.msra.mxu0 %v7125
    %7529 = vmatpush.bf16.msra.mxu0 %v7124
    %7530 = vmatpush.bf16.msra.mxu0 %v7123
    %7531 = vmatmul.bf16.gmra.mxu0 %v7521
    %v7532 = vpop.f32.mrf.mxu0
    %v7533 = vadd.f32 0.0, %v7532
    %v7534 = vpop.f32.mrf.mxu0
    %v7535 = vadd.f32 0.0, %v7534
    %7536 = vdwg.mxu0
    %v7537 = vadd.f32 %v7513, %v7533
    %v7538 = vadd.f32 %v7514, %v7535
    %v7539 = vtanh.pop %v7537
    %v7540 = vtanh.pop %v7538
    %v7541 = vpack.c.bf16 %v7539, %v7539
    %v7542 = vpack.c.bf16 %v7540, %v7540
    %7543 = vst.msk [vmem:[#allocation2 + $0x60] sm:$0xf] %vm486, %v7511
    %7544 = vst.msk [vmem:[#allocation2 + $0x64] sm:$0xf] %vm486, %v7512
    %7545 = vst.msk [vmem:[#allocation2 + $0x68] sm:$0xf] %vm486, %v7541
    %7546 = vst.msk [vmem:[#allocation2 + $0x6c] sm:$0xf] %vm486, %v7542
    %v7547 = vld [vmem:[#allocation3 + $0xe0] sm:$0xff]
    %v7548 = vld [vmem:[#allocation3 + $0xe8] sm:$0xff]
    %v7551 = vunpack.c.l.b16 %v7511
    %v7552 = vunpack.c.l.b16 %v7512
    %v7553 = vpack.c.b16 %v7552, %v7551
    %v7555 = vsel %vm259, %v7553, 0
    %7557 = vmatpush.bf16.msra.mxu0 0
    %7558 = vmatpush.bf16.msra.mxu0 0
    %7559 = vmatpush.bf16.msra.mxu0 0
    %7560 = vmatpush.bf16.msra.mxu0 0
    %7561 = vmatpush.bf16.msra.mxu0 %v7126
    %7562 = vmatpush.bf16.msra.mxu0 %v7125
    %7563 = vmatpush.bf16.msra.mxu0 %v7124
    %7564 = vmatpush.bf16.msra.mxu0 %v7123
    %7565 = vmatmul.bf16.gmra.mxu0 %v7555
    %v7566 = vpop.f32.mrf.mxu0
    %v7567 = vadd.f32 0.0, %v7566
    %v7568 = vpop.f32.mrf.mxu0
    %v7569 = vadd.f32 0.0, %v7568
    %7570 = vdwg.mxu0
    %v7571 = vadd.f32 %v7547, %v7567
    %v7572 = vadd.f32 %v7548, %v7569
    %v7573 = vtanh.pop %v7571
    %v7574 = vtanh.pop %v7572
    %v7575 = vpack.c.bf16 %v7573, %v7573
    %v7576 = vpack.c.bf16 %v7574, %v7574
    %v7577 = vld [vmem:[#allocation3 + $0xf0] sm:$0xff]
    %v7578 = vld [vmem:[#allocation3 + $0xf8] sm:$0xff]
    %v7581 = vunpack.c.l.b16 %v7541
    %v7582 = vunpack.c.l.b16 %v7542
    %v7583 = vpack.c.b16 %v7582, %v7581
    %v7585 = vsel %vm259, %v7583, 0
    %7587 = vmatpush.bf16.msra.mxu0 0
    %7588 = vmatpush.bf16.msra.mxu0 0
    %7589 = vmatpush.bf16.msra.mxu0 0
    %7590 = vmatpush.bf16.msra.mxu0 0
    %7591 = vmatpush.bf16.msra.mxu0 %v7126
    %7592 = vmatpush.bf16.msra.mxu0 %v7125
    %7593 = vmatpush.bf16.msra.mxu0 %v7124
    %7594 = vmatpush.bf16.msra.mxu0 %v7123
    %7595 = vmatmul.bf16.gmra.mxu0 %v7585
    %v7596 = vpop.f32.mrf.mxu0
    %v7597 = vadd.f32 0.0, %v7596
    %v7598 = vpop.f32.mrf.mxu0
    %v7599 = vadd.f32 0.0, %v7598
    %7600 = vdwg.mxu0
    %v7601 = vadd.f32 %v7577, %v7597
    %v7602 = vadd.f32 %v7578, %v7599
    %v7603 = vtanh.pop %v7601
    %v7604 = vtanh.pop %v7602
    %v7605 = vpack.c.bf16 %v7603, %v7603
    %v7606 = vpack.c.bf16 %v7604, %v7604
    %7607 = vst.msk [vmem:[#allocation2 + $0x70] sm:$0xf] %vm486, %v7575
    %7608 = vst.msk [vmem:[#allocation2 + $0x74] sm:$0xf] %vm486, %v7576
    %7609 = vst.msk [vmem:[#allocation2 + $0x78] sm:$0xf] %vm486, %v7605
    %7610 = vst.msk [vmem:[#allocation2 + $0x7c] sm:$0xf] %vm486, %v7606
    %v7611 = vld [vmem:[#allocation2 + $0x70] sm:$0xf]
    %v7612 = vld [vmem:[#allocation2 + $0x74] sm:$0xf]
    %v7613 = vld [vmem:[#allocation2 + $0x78] sm:$0xf]
    %v7614 = vld [vmem:[#allocation2 + $0x7c] sm:$0xf]
    %v7615 = vld [vmem:[#allocation12] sm:$0xf]
    %v7616 = vld [vmem:[#allocation12 + $0x4] sm:$0xf]
    %v7617 = vld [vmem:[#allocation12 + $0x8] sm:$0xf]
    %v7618 = vld [vmem:[#allocation12 + $0xc] sm:$0xf]
    %v7619 = vld [vmem:[#allocation12 + $0x10] sm:$0xf]
    %v7620 = vld [vmem:[#allocation12 + $0x14] sm:$0xf]
    %v7621 = vld [vmem:[#allocation12 + $0x18] sm:$0xf]
    %v7622 = vld [vmem:[#allocation12 + $0x1c] sm:$0xf]
    %v7623 = vld [vmem:[%s5] sm:$0x1]
    %v7625 = vperm.slane %v7623, 0
    %v7631 = vunpack.c.l.b16 %v7611
    %v7632 = vunpack.c.l.b16 %v7612
    %v7633 = vunpack.c.l.b16 %v7613
    %v7634 = vunpack.c.l.b16 %v7614
    %v7635 = vpack.c.b16 %v7632, %v7631
    %v7636 = vpack.c.b16 %v7634, %v7633
    %v7645 = vunpack.c.l.b16 %v7615
    %v7646 = vunpack.c.l.b16 %v7616
    %v7647 = vunpack.c.l.b16 %v7617
    %v7648 = vunpack.c.l.b16 %v7618
    %v7649 = vunpack.c.l.b16 %v7619
    %v7650 = vunpack.c.l.b16 %v7620
    %v7651 = vunpack.c.l.b16 %v7621
    %v7652 = vunpack.c.l.b16 %v7622
    %v7653 = vpack.c.b16 %v7646, %v7645
    %v7654 = vpack.c.b16 %v7648, %v7647
    %v7655 = vpack.c.b16 %v7650, %v7649
    %v7656 = vpack.c.b16 %v7652, %v7651
    %v7662 = vsel %vm259, %v7635, 0
    %v7665 = vsel %vm259, %v7636, 0
    %7667 = vmatpush.bf16.msra.mxu0 0
    %7668 = vmatpush.bf16.msra.mxu0 0
    %7669 = vmatpush.bf16.msra.mxu0 0
    %7670 = vmatpush.bf16.msra.mxu0 0
    %7671 = vmatpush.bf16.msra.mxu0 %v7656
    %7672 = vmatpush.bf16.msra.mxu0 %v7655
    %7673 = vmatpush.bf16.msra.mxu0 %v7654
    %7674 = vmatpush.bf16.msra.mxu0 %v7653
    %7675 = vmatmul.bf16.gmra.mxu0 %v7662
    %v7676 = vpop.f32.mrf.mxu0
    %v7677 = vadd.f32 %v7625, %v7676
    %v7678 = vpop.f32.mrf.mxu0
    %v7679 = vadd.f32 %v7625, %v7678
    %7680 = vmatmul.bf16.gmra.mxu0 %v7665
    %v7681 = vpop.f32.mrf.mxu0
    %v7682 = vadd.f32 %v7625, %v7681
    %v7683 = vpop.f32.mrf.mxu0
    %v7684 = vadd.f32 %v7625, %v7683
    %7685 = vdwg.mxu0
    %7686 = vst [vmem:[#allocation13] sm:$0xff] %v7677
    %7687 = vst [vmem:[#allocation13 + $0x8] sm:$0xff] %v7679
    %7688 = vst [vmem:[#allocation13 + $0x10] sm:$0xff] %v7682
    %7689 = vst [vmem:[#allocation13 + $0x18] sm:$0xff] %v7684
    // Predicated region
    $region46: #{tpu_custom_call.1} parent=1 // pred_check
      _
    $region47: #{tpu_custom_call.1} parent=1 // pred_check_branch
      %7691 = sbr.rel (0) target = $region49
    $region48: #{tpu_custom_call.1} parent=1 // pred_region
      %7693 = vsyncadd [#allocation6], 0
      %s7694 = sshll.u32 [#allocation13], 4
      %s7695 = int_to_ptr.vmem [resolvable:$true] %s7694
      %s7696 = sshll.u32 %s6, 4
      %s7697 = int_to_ptr.hbm [resolvable:$true] %s7696
      %7702 = dma.vmem_to_hbm [thread:$0]  %s7695, 512, %s7697, [#allocation6], 128, 128, 8
    $region49: #{tpu_custom_call.1} parent=1 // pred_fallthru
      _
    // Predicated region
    $region50: #{tpu_custom_call.1} parent=1 // pred_check
      _
    $region51: #{tpu_custom_call.1} parent=1 // pred_check_branch
      %7704 = sbr.rel (0) target = $region53
    $region52: #{tpu_custom_call.1} parent=1 // pred_region
      %7706 = dma.done [#allocation6], 512
    $region53: #{tpu_custom_call.1} parent=1 // pred_fallthru
      _
    %7707 = vsyncpa [#allocation5], 1
    %7708 = vsyncpa [#allocation8], 1
    %7709 = vsyncpa [#allocation11], 1
    %7710 = vsyncpa [#allocation6], 1

</llo_original>
